<compile_context>
chip_gen: v7x
topology: tpu7x:2x2x1
jax: 0.10.0
libtpu: 0.0.40
codegen_flags: <defaults>
</compile_context>

<pallas_src>
import functools

import jax
import jax.numpy as jnp
from jax import lax
from jax.experimental import pallas as pl
from jax.experimental.pallas import tpu as pltpu

K = 7          # depthwise kernel size
PAD = 3        # spatial padding
EXPANSION = 4  # inverted-bottleneck expansion
EPS = 1e-6     # LayerNorm eps


def _inverted_bottleneck_kernel(x_ref, dw_w_ref, dw_b_ref, ln_w_ref, ln_b_ref,
                                w1_ref, b1_ref, w2_ref, b2_ref, gamma_ref,
                                o_ref, xp_ref, *, row_tile, act_dtype):
    # x_ref : (1, H, W, C)        un-padded input (single HBM read; residual too)
    # xp_ref: (H+6, W+6, C) f32   VMEM scratch: zero-padded copy for the 7x7 halo
    H, W, C = x_ref.shape[1], x_ref.shape[2], x_ref.shape[3]

    # ---- build the zero-padded image once per grid step.  The scratch is
    # zeroed every step (cheap vs. the 49-tap conv) rather than gated on
    # program_id == 0: with the batch axis marked "parallel" each TensorCore
    # owns its own scratch instance and may never execute step 0.
    xp_ref[...] = jnp.zeros_like(xp_ref)
    xp_ref[pl.ds(PAD, H), pl.ds(PAD, W), :] = x_ref[0].astype(jnp.float32)

    # Hoisted parameter loads (loop-invariant).
    dww = dw_w_ref[...]                           # (7, 7, C) f32
    dwb = dw_b_ref[0, 0, :]                       # (C,)      f32
    lnw = ln_w_ref[0, 0, :]                       # (C,)      f32
    lnb = ln_b_ref[0, 0, :]                       # (C,)      f32
    w1 = w1_ref[...]                              # (C, 4C)   bf16 for MXU
    b1 = b1_ref[0, :]                             # (4C,)     f32
    w2 = w2_ref[...]                              # (4C, C)   bf16 for MXU
    b2 = b2_ref[0, :]                             # (C,)      f32
    gamma = gamma_ref[0, 0, :]                    # (C,)      f32

    n_bands = H // row_tile

    # ---- fused dwconv + LayerNorm + MLP + layerscale + residual per row band.
    def band_body(i, carry):
        h0 = pl.multiple_of(i * row_tile, row_tile)

        # Padded rows needed by this band of outputs: [h0, h0 + row_tile + 6).
        band = xp_ref[pl.ds(h0, row_tile + 2 * PAD), :, :]   # (bh+6, W+6, C)

        # Depthwise 7x7 conv (groups = dim): shift-and-accumulate on the VPU.
        # The accumulator is band-sized, so it stays register-resident across
        # the 49 taps (no per-tap VMEM round trip of a full-image buffer).
        acc = jnp.zeros((row_tile, W, C), jnp.float32)
        for kh in range(K):
            rows = band[kh:kh + row_tile, :, :]               # (bh, W+6, C)
            for kw in range(K):
                acc = acc + rows[:, kw:kw + W, :] * dww[kh, kw, :]
        acc = acc + dwb

        # Channel-first LayerNorm:  (x - mean) / (sqrt(var) + eps) * w + b
        # (this module's definition; note sqrt(var) + eps, not sqrt(var + eps))
        mean = jnp.mean(acc, axis=-1, keepdims=True)
        var = jnp.mean(jnp.square(acc - mean), axis=-1, keepdims=True)
        y = (acc - mean) / (jnp.sqrt(var) + EPS)
        y = y * lnw + lnb

        # pwconv1 (1x1 conv == channel matmul), bf16 operands -> f32 accumulate
        yc = y.reshape(row_tile * W, C).astype(jnp.bfloat16)
        z = jnp.dot(yc, w1, preferred_element_type=jnp.float32) + b1

        # QuickGELU: z * sigmoid(1.702 z); exp + approx reciprocal -> EUP slot.
        # act_dtype=bf16 halves EUP work on v6e/v7x; keep f32 on v5e.
        zq = z.astype(act_dtype)
        sig = pl.reciprocal(1.0 + jnp.exp(-1.702 * zq), approx=True)
        z = z * sig.astype(jnp.float32)

        # pwconv2 back to dim
        out = jnp.dot(z.astype(jnp.bfloat16), w2,
                      preferred_element_type=jnp.float32) + b2
        out = out.reshape(row_tile, W, C) * gamma             # layerscale

        # residual from the same un-padded block (DropPath(0.0) == Identity)
        identity = x_ref[0, pl.ds(h0, row_tile), :, :].astype(jnp.float32)
        o_ref[0, pl.ds(h0, row_tile), :, :] = (identity + out).astype(o_ref.dtype)
        return carry

    lax.fori_loop(0, n_bands, band_body, 0, unroll=n_bands <= 8)


def _pick_row_tile(H, W, C, target_positions):
    """Largest divisor of H s.t. rows*W <= min(target, vreg budget for f32 acc)."""
    vreg_budget = max(1, (128 * 1024) // (4 * C))   # ~32 vregs for the accumulator
    target = max(W, min(target_positions, vreg_budget))
    best = 1
    for d in range(1, H + 1):
        if H % d == 0 and d * W <= target:
            best = d
    return best


def inverted_bottleneck(x_nchw, params, *, m_tile=256, act_dtype=jnp.float32,
                        vmem_limit_bytes=48 * 1024 * 1024):
    """x_nchw: (N, C, H, W) float32.  Returns (N, C, H, W).

    m_tile:   target spatial positions per fused band (256 suits v6e/v7x MXU
              tiles; use 128 on v5e).
    act_dtype: dtype for the QuickGELU elementwise path (bf16 on v6e/v7x,
              f32 on v5e).
    vmem_limit_bytes: keep <= ~56 MiB for v7x; can be raised toward ~96-110 MiB
              on v5e/v6e for bigger bands / deeper buffering.
    """
    N, C, H, W = x_nchw.shape
    Ce = C * EXPANSION
    Hp, Wp = H + 2 * PAD, W + 2 * PAD

    x = jnp.transpose(x_nchw, (0, 2, 3, 1))       # NHWC; no wrapper-side pad

    row_tile = _pick_row_tile(H, W, C, m_tile)

    dw_w = params["dw_w"]                         # (7, 7, C) f32
    dw_b = params["dw_b"].reshape(1, 1, C)
    ln_w = params["ln_w"].reshape(1, 1, C)
    ln_b = params["ln_b"].reshape(1, 1, C)
    w1 = params["w1"].astype(jnp.bfloat16)        # (C, 4C)  bf16 for MXU
    b1 = params["b1"].reshape(1, Ce)
    w2 = params["w2"].astype(jnp.bfloat16)        # (4C, C)  bf16 for MXU
    b2 = params["b2"].reshape(1, C)
    gamma = params["gamma"].reshape(1, 1, C)

    kernel = functools.partial(_inverted_bottleneck_kernel,
                               row_tile=row_tile, act_dtype=act_dtype)

    out_nhwc = pl.pallas_call(
        kernel,
        out_shape=jax.ShapeDtypeStruct((N, H, W, C), x.dtype),
        grid_spec=pltpu.PrefetchScalarGridSpec(
            num_scalar_prefetch=0,
            grid=(N,),
            in_specs=[
                pl.BlockSpec((1, H, W, C), lambda n: (n, 0, 0, 0)),    # x
                pl.BlockSpec((K, K, C), lambda n: (0, 0, 0)),          # dw_w
                pl.BlockSpec((1, 1, C), lambda n: (0, 0, 0)),          # dw_b
                pl.BlockSpec((1, 1, C), lambda n: (0, 0, 0)),          # ln_w
                pl.BlockSpec((1, 1, C), lambda n: (0, 0, 0)),          # ln_b
                pl.BlockSpec((C, Ce), lambda n: (0, 0)),               # w1
                pl.BlockSpec((1, Ce), lambda n: (0, 0)),               # b1
                pl.BlockSpec((Ce, C), lambda n: (0, 0)),               # w2
                pl.BlockSpec((1, C), lambda n: (0, 0)),                # b2
                pl.BlockSpec((1, 1, C), lambda n: (0, 0, 0)),          # gamma
            ],
            out_specs=pl.BlockSpec((1, H, W, C), lambda n: (n, 0, 0, 0)),
            # Single padded-image f32 scratch (the only full-image temporary).
            scratch_shapes=[pltpu.VMEM((Hp, Wp, C), jnp.float32)],
        ),
        compiler_params=pltpu.CompilerParams(
            dimension_semantics=("parallel",),
            vmem_limit_bytes=vmem_limit_bytes,
        ),
    )(x, dw_w, dw_b, ln_w, ln_b, w1, b1, w2, b2, gamma)

    return jnp.transpose(out_nhwc, (0, 3, 1, 2))


def _reference(x_nchw, params):
    """Pure-JAX f32 reference (mirrors the PyTorch forward) for validation."""
    N, C, H, W = x_nchw.shape
    x = jnp.transpose(x_nchw, (0, 2, 3, 1))
    xp = jnp.pad(x, ((0, 0), (PAD, PAD), (PAD, PAD), (0, 0)))
    acc = jnp.zeros((N, H, W, C), jnp.float32)
    for kh in range(K):
        for kw in range(K):
            acc = acc + xp[:, kh:kh + H, kw:kw + W, :] * params["dw_w"][kh, kw, :]
    acc = acc + params["dw_b"]
    mean = jnp.mean(acc, axis=-1, keepdims=True)
    var = jnp.mean((acc - mean) ** 2, axis=-1, keepdims=True)
    y = (acc - mean) / (jnp.sqrt(var) + EPS)
    y = y * params["ln_w"] + params["ln_b"]
    h = jnp.einsum("nhwc,ce->nhwe", y, params["w1"]) + params["b1"]
    h = h * jax.nn.sigmoid(1.702 * h)
    out = jnp.einsum("nhwe,ec->nhwc", h, params["w2"]) + params["b2"]
    out = out * params["gamma"]
    out = x + out
    return jnp.transpose(out, (0, 3, 1, 2))


if __name__ == "__main__":
    N, dim, H, W = 2, 4, 16, 16
    Ce = dim * EXPANSION
    # layerscale init chosen so the MLP branch contributes visibly (the check
    # exercises the whole fused path, not just the residual).
    layerscale_init_value = 0.1
    # dp_rate = 0.0  ->  DropPath is Identity (nothing to implement)

    key = jax.random.PRNGKey(0)
    keys = jax.random.split(key, 8)
    x = jax.random.normal(keys[0], (N, dim, H, W), jnp.float32)

    params = {
        "dw_w": 0.1 * jax.random.normal(keys[1], (K, K, dim), jnp.float32),
        "dw_b": 0.1 * jax.random.normal(keys[2], (dim,), jnp.float32),
        "ln_w": jnp.ones((dim,), jnp.float32),
        "ln_b": jnp.zeros((dim,), jnp.float32),
        "w1": 0.1 * jax.random.normal(keys[3], (dim, Ce), jnp.float32),
        "b1": 0.1 * jax.random.normal(keys[4], (Ce,), jnp.float32),
        "w2": 0.1 * jax.random.normal(keys[5], (Ce, dim), jnp.float32),
        "b2": 0.1 * jax.random.normal(keys[6], (dim,), jnp.float32),
        "gamma": layerscale_init_value * jnp.ones((dim,), jnp.float32),
    }

    # m_tile=128 -> row_tile=8 -> 2 fused bands per image (exercises the
    # banded/dynamic-index path even at this small demo size).
    out = inverted_bottleneck(x, params, m_tile=128)
    out = jax.block_until_ready(out)

    ref = _reference(x, params)
    assert out.shape == (N, dim, H, W)
    max_err = float(jnp.max(jnp.abs(out - ref)))
    assert jnp.allclose(out, ref, atol=1e-3, rtol=1e-3), max_err

    print("KERNEL_OK")
</pallas_src>

<mosaic_0001>
module attributes {stable_mosaic.version = 11 : i64} {
  func.func @_inverted_bottleneck_kernel(%arg0: i32, %arg1: memref<1x16x16x4xf32, #tpu.memory_space<vmem>>, %arg2: memref<7x7x4xf32, #tpu.memory_space<vmem>>, %arg3: memref<1x1x4xf32, #tpu.memory_space<vmem>>, %arg4: memref<1x1x4xf32, #tpu.memory_space<vmem>>, %arg5: memref<1x1x4xf32, #tpu.memory_space<vmem>>, %arg6: memref<4x16xbf16, #tpu.memory_space<vmem>>, %arg7: memref<1x16xf32, #tpu.memory_space<vmem>>, %arg8: memref<16x4xbf16, #tpu.memory_space<vmem>>, %arg9: memref<1x4xf32, #tpu.memory_space<vmem>>, %arg10: memref<1x1x4xf32, #tpu.memory_space<vmem>>, %arg11: memref<1x16x16x4xf32, #tpu.memory_space<vmem>>, %arg12: memref<22x22x4xf32, #tpu.memory_space<vmem>>) attributes {dimension_semantics = [#tpu.dimension_semantics<parallel>], iteration_bounds = array<i64: 2>, scalar_prefetch = 0 : i64, scratch_operands = 1 : i64, tpu.core_type = #tpu.core_type<tc>, window_params = [{transform_indices = @transform_0, window_bounds = array<i64: 1, 16, 16, 4>}, {pipeline_mode = #tpu.pipeline_mode<synchronous>, transform_indices = @transform_1, window_bounds = array<i64: 7, 7, 4>}, {pipeline_mode = #tpu.pipeline_mode<synchronous>, transform_indices = @transform_2, window_bounds = array<i64: 1, 1, 4>}, {pipeline_mode = #tpu.pipeline_mode<synchronous>, transform_indices = @transform_3, window_bounds = array<i64: 1, 1, 4>}, {pipeline_mode = #tpu.pipeline_mode<synchronous>, transform_indices = @transform_4, window_bounds = array<i64: 1, 1, 4>}, {pipeline_mode = #tpu.pipeline_mode<synchronous>, transform_indices = @transform_5, window_bounds = array<i64: 4, 16>}, {pipeline_mode = #tpu.pipeline_mode<synchronous>, transform_indices = @transform_6, window_bounds = array<i64: 1, 16>}, {pipeline_mode = #tpu.pipeline_mode<synchronous>, transform_indices = @transform_7, window_bounds = array<i64: 16, 4>}, {pipeline_mode = #tpu.pipeline_mode<synchronous>, transform_indices = @transform_8, window_bounds = array<i64: 1, 4>}, {pipeline_mode = #tpu.pipeline_mode<synchronous>, transform_indices = @transform_9, window_bounds = array<i64: 1, 1, 4>}, {transform_indices = @transform_10, window_bounds = array<i64: 1, 16, 16, 4>}]} {
    %cst = arith.constant 0.000000e+00 : f32
    %0 = vector.broadcast %cst : f32 to vector<22x22x4xf32>
    %c0 = arith.constant 0 : index
    %c0_0 = arith.constant 0 : index
    %c0_1 = arith.constant 0 : index
    %1 = vector.load %arg12[%c0, %c0_0, %c0_1] : memref<22x22x4xf32, #tpu.memory_space<vmem>>, vector<22x22x4xf32>
    tpu.vector_store %arg12[%c0, %c0_0, %c0_1], %0 {strides = array<i32>} : memref<22x22x4xf32, #tpu.memory_space<vmem>>, vector<22x22x4xf32>,
    %c0_2 = arith.constant 0 : index
    %c0_3 = arith.constant 0 : index
    %c0_4 = arith.constant 0 : index
    %c0_5 = arith.constant 0 : index
    %2 = vector.load %arg1[%c0_2, %c0_3, %c0_4, %c0_5] : memref<1x16x16x4xf32, #tpu.memory_space<vmem>>, vector<1x16x16x4xf32>
    %3 = vector.shape_cast %2 : vector<1x16x16x4xf32> to vector<16x16x4xf32>
    %c3 = arith.constant 3 : index
    %c3_6 = arith.constant 3 : index
    %c0_7 = arith.constant 0 : index
    %4 = vector.load %arg12[%c3, %c3_6, %c0_7] : memref<22x22x4xf32, #tpu.memory_space<vmem>>, vector<16x16x4xf32>
    tpu.vector_store %arg12[%c3, %c3_6, %c0_7], %3 {strides = array<i32>} : memref<22x22x4xf32, #tpu.memory_space<vmem>>, vector<16x16x4xf32>,
    %c0_8 = arith.constant 0 : index
    %c0_9 = arith.constant 0 : index
    %c0_10 = arith.constant 0 : index
    %5 = vector.load %arg2[%c0_8, %c0_9, %c0_10] : memref<7x7x4xf32, #tpu.memory_space<vmem>>, vector<7x7x4xf32>
    %c0_11 = arith.constant 0 : index
    %c0_12 = arith.constant 0 : index
    %c0_13 = arith.constant 0 : index
    %6 = vector.load %arg3[%c0_11, %c0_12, %c0_13] : memref<1x1x4xf32, #tpu.memory_space<vmem>>, vector<1x1x4xf32>
    %7 = vector.shape_cast %6 : vector<1x1x4xf32> to vector<4xf32>
    %c0_14 = arith.constant 0 : index
    %c0_15 = arith.constant 0 : index
    %c0_16 = arith.constant 0 : index
    %8 = vector.load %arg4[%c0_14, %c0_15, %c0_16] : memref<1x1x4xf32, #tpu.memory_space<vmem>>, vector<1x1x4xf32>
    %9 = vector.shape_cast %8 : vector<1x1x4xf32> to vector<4xf32>
    %c0_17 = arith.constant 0 : index
    %c0_18 = arith.constant 0 : index
    %c0_19 = arith.constant 0 : index
    %10 = vector.load %arg5[%c0_17, %c0_18, %c0_19] : memref<1x1x4xf32, #tpu.memory_space<vmem>>, vector<1x1x4xf32>
    %11 = vector.shape_cast %10 : vector<1x1x4xf32> to vector<4xf32>
    %c0_20 = arith.constant 0 : index
    %c0_21 = arith.constant 0 : index
    %12 = vector.load %arg6[%c0_20, %c0_21] : memref<4x16xbf16, #tpu.memory_space<vmem>>, vector<4x16xbf16>
    %c0_22 = arith.constant 0 : index
    %c0_23 = arith.constant 0 : index
    %13 = vector.load %arg7[%c0_22, %c0_23] : memref<1x16xf32, #tpu.memory_space<vmem>>, vector<1x16xf32>
    %14 = vector.shape_cast %13 : vector<1x16xf32> to vector<16xf32>
    %c0_24 = arith.constant 0 : index
    %c0_25 = arith.constant 0 : index
    %15 = vector.load %arg8[%c0_24, %c0_25] : memref<16x4xbf16, #tpu.memory_space<vmem>>, vector<16x4xbf16>
    %c0_26 = arith.constant 0 : index
    %c0_27 = arith.constant 0 : index
    %16 = vector.load %arg9[%c0_26, %c0_27] : memref<1x4xf32, #tpu.memory_space<vmem>>, vector<1x4xf32>
    %17 = vector.shape_cast %16 : vector<1x4xf32> to vector<4xf32>
    %c0_28 = arith.constant 0 : index
    %c0_29 = arith.constant 0 : index
    %c0_30 = arith.constant 0 : index
    %18 = vector.load %arg10[%c0_28, %c0_29, %c0_30] : memref<1x1x4xf32, #tpu.memory_space<vmem>>, vector<1x1x4xf32>
    %19 = vector.shape_cast %18 : vector<1x1x4xf32> to vector<4xf32>
    %c0_i32 = arith.constant 0 : i32
    %c8_i32 = arith.constant 8 : i32
    %20 = arith.muli %c0_i32, %c8_i32 : i32
    %21 = tpu.assume_multiple %20, 8 : i32
    %22 = arith.index_cast %21 : i32 to index
    %c0_31 = arith.constant 0 : index
    %c0_32 = arith.constant 0 : index
    %23 = vector.load %arg12[%22, %c0_31, %c0_32] : memref<22x22x4xf32, #tpu.memory_space<vmem>>, vector<14x22x4xf32>
    %cst_33 = arith.constant 0.000000e+00 : f32
    %24 = vector.broadcast %cst_33 : f32 to vector<8x16x4xf32>
    %25 = vector.extract_strided_slice %23 {offsets = [0, 0, 0], sizes = [8, 22, 4], strides = [1, 1, 1]} : vector<14x22x4xf32> to vector<8x22x4xf32>
    %26 = vector.extract_strided_slice %25 {offsets = [0, 0, 0], sizes = [8, 16, 4], strides = [1, 1, 1]} : vector<8x22x4xf32> to vector<8x16x4xf32>
    %27 = vector.extract_strided_slice %5 {offsets = [0, 0, 0], sizes = [1, 1, 4], strides = [1, 1, 1]} : vector<7x7x4xf32> to vector<1x1x4xf32>
    %28 = vector.shape_cast %27 : vector<1x1x4xf32> to vector<4xf32>
    %29 = vector.shape_cast %28 : vector<4xf32> to vector<1x1x4xf32>
    %30 = vector.broadcast %29 : vector<1x1x4xf32> to vector<8x16x4xf32>
    %31 = arith.mulf %26, %30 : vector<8x16x4xf32>
    %32 = arith.addf %24, %31 : vector<8x16x4xf32>
    %33 = vector.extract_strided_slice %25 {offsets = [0, 1, 0], sizes = [8, 16, 4], strides = [1, 1, 1]} : vector<8x22x4xf32> to vector<8x16x4xf32>
    %34 = vector.extract_strided_slice %5 {offsets = [0, 1, 0], sizes = [1, 1, 4], strides = [1, 1, 1]} : vector<7x7x4xf32> to vector<1x1x4xf32>
    %35 = vector.shape_cast %34 : vector<1x1x4xf32> to vector<4xf32>
    %36 = vector.shape_cast %35 : vector<4xf32> to vector<1x1x4xf32>
    %37 = vector.broadcast %36 : vector<1x1x4xf32> to vector<8x16x4xf32>
    %38 = arith.mulf %33, %37 : vector<8x16x4xf32>
    %39 = arith.addf %32, %38 : vector<8x16x4xf32>
    %40 = vector.extract_strided_slice %25 {offsets = [0, 2, 0], sizes = [8, 16, 4], strides = [1, 1, 1]} : vector<8x22x4xf32> to vector<8x16x4xf32>
    %41 = vector.extract_strided_slice %5 {offsets = [0, 2, 0], sizes = [1, 1, 4], strides = [1, 1, 1]} : vector<7x7x4xf32> to vector<1x1x4xf32>
    %42 = vector.shape_cast %41 : vector<1x1x4xf32> to vector<4xf32>
    %43 = vector.shape_cast %42 : vector<4xf32> to vector<1x1x4xf32>
    %44 = vector.broadcast %43 : vector<1x1x4xf32> to vector<8x16x4xf32>
    %45 = arith.mulf %40, %44 : vector<8x16x4xf32>
    %46 = arith.addf %39, %45 : vector<8x16x4xf32>
    %47 = vector.extract_strided_slice %25 {offsets = [0, 3, 0], sizes = [8, 16, 4], strides = [1, 1, 1]} : vector<8x22x4xf32> to vector<8x16x4xf32>
    %48 = vector.extract_strided_slice %5 {offsets = [0, 3, 0], sizes = [1, 1, 4], strides = [1, 1, 1]} : vector<7x7x4xf32> to vector<1x1x4xf32>
    %49 = vector.shape_cast %48 : vector<1x1x4xf32> to vector<4xf32>
    %50 = vector.shape_cast %49 : vector<4xf32> to vector<1x1x4xf32>
    %51 = vector.broadcast %50 : vector<1x1x4xf32> to vector<8x16x4xf32>
    %52 = arith.mulf %47, %51 : vector<8x16x4xf32>
    %53 = arith.addf %46, %52 : vector<8x16x4xf32>
    %54 = vector.extract_strided_slice %25 {offsets = [0, 4, 0], sizes = [8, 16, 4], strides = [1, 1, 1]} : vector<8x22x4xf32> to vector<8x16x4xf32>
    %55 = vector.extract_strided_slice %5 {offsets = [0, 4, 0], sizes = [1, 1, 4], strides = [1, 1, 1]} : vector<7x7x4xf32> to vector<1x1x4xf32>
    %56 = vector.shape_cast %55 : vector<1x1x4xf32> to vector<4xf32>
    %57 = vector.shape_cast %56 : vector<4xf32> to vector<1x1x4xf32>
    %58 = vector.broadcast %57 : vector<1x1x4xf32> to vector<8x16x4xf32>
    %59 = arith.mulf %54, %58 : vector<8x16x4xf32>
    %60 = arith.addf %53, %59 : vector<8x16x4xf32>
    %61 = vector.extract_strided_slice %25 {offsets = [0, 5, 0], sizes = [8, 16, 4], strides = [1, 1, 1]} : vector<8x22x4xf32> to vector<8x16x4xf32>
    %62 = vector.extract_strided_slice %5 {offsets = [0, 5, 0], sizes = [1, 1, 4], strides = [1, 1, 1]} : vector<7x7x4xf32> to vector<1x1x4xf32>
    %63 = vector.shape_cast %62 : vector<1x1x4xf32> to vector<4xf32>
    %64 = vector.shape_cast %63 : vector<4xf32> to vector<1x1x4xf32>
    %65 = vector.broadcast %64 : vector<1x1x4xf32> to vector<8x16x4xf32>
    %66 = arith.mulf %61, %65 : vector<8x16x4xf32>
    %67 = arith.addf %60, %66 : vector<8x16x4xf32>
    %68 = vector.extract_strided_slice %25 {offsets = [0, 6, 0], sizes = [8, 16, 4], strides = [1, 1, 1]} : vector<8x22x4xf32> to vector<8x16x4xf32>
    %69 = vector.extract_strided_slice %5 {offsets = [0, 6, 0], sizes = [1, 1, 4], strides = [1, 1, 1]} : vector<7x7x4xf32> to vector<1x1x4xf32>
    %70 = vector.shape_cast %69 : vector<1x1x4xf32> to vector<4xf32>
    %71 = vector.shape_cast %70 : vector<4xf32> to vector<1x1x4xf32>
    %72 = vector.broadcast %71 : vector<1x1x4xf32> to vector<8x16x4xf32>
    %73 = arith.mulf %68, %72 : vector<8x16x4xf32>
    %74 = arith.addf %67, %73 : vector<8x16x4xf32>
    %75 = vector.extract_strided_slice %23 {offsets = [1, 0, 0], sizes = [8, 22, 4], strides = [1, 1, 1]} : vector<14x22x4xf32> to vector<8x22x4xf32>
    %76 = vector.extract_strided_slice %75 {offsets = [0, 0, 0], sizes = [8, 16, 4], strides = [1, 1, 1]} : vector<8x22x4xf32> to vector<8x16x4xf32>
    %77 = vector.extract_strided_slice %5 {offsets = [1, 0, 0], sizes = [1, 1, 4], strides = [1, 1, 1]} : vector<7x7x4xf32> to vector<1x1x4xf32>
    %78 = vector.shape_cast %77 : vector<1x1x4xf32> to vector<4xf32>
    %79 = vector.shape_cast %78 : vector<4xf32> to vector<1x1x4xf32>
    %80 = vector.broadcast %79 : vector<1x1x4xf32> to vector<8x16x4xf32>
    %81 = arith.mulf %76, %80 : vector<8x16x4xf32>
    %82 = arith.addf %74, %81 : vector<8x16x4xf32>
    %83 = vector.extract_strided_slice %75 {offsets = [0, 1, 0], sizes = [8, 16, 4], strides = [1, 1, 1]} : vector<8x22x4xf32> to vector<8x16x4xf32>
    %84 = vector.extract_strided_slice %5 {offsets = [1, 1, 0], sizes = [1, 1, 4], strides = [1, 1, 1]} : vector<7x7x4xf32> to vector<1x1x4xf32>
    %85 = vector.shape_cast %84 : vector<1x1x4xf32> to vector<4xf32>
    %86 = vector.shape_cast %85 : vector<4xf32> to vector<1x1x4xf32>
    %87 = vector.broadcast %86 : vector<1x1x4xf32> to vector<8x16x4xf32>
    %88 = arith.mulf %83, %87 : vector<8x16x4xf32>
    %89 = arith.addf %82, %88 : vector<8x16x4xf32>
    %90 = vector.extract_strided_slice %75 {offsets = [0, 2, 0], sizes = [8, 16, 4], strides = [1, 1, 1]} : vector<8x22x4xf32> to vector<8x16x4xf32>
    %91 = vector.extract_strided_slice %5 {offsets = [1, 2, 0], sizes = [1, 1, 4], strides = [1, 1, 1]} : vector<7x7x4xf32> to vector<1x1x4xf32>
    %92 = vector.shape_cast %91 : vector<1x1x4xf32> to vector<4xf32>
    %93 = vector.shape_cast %92 : vector<4xf32> to vector<1x1x4xf32>
    %94 = vector.broadcast %93 : vector<1x1x4xf32> to vector<8x16x4xf32>
    %95 = arith.mulf %90, %94 : vector<8x16x4xf32>
    %96 = arith.addf %89, %95 : vector<8x16x4xf32>
    %97 = vector.extract_strided_slice %75 {offsets = [0, 3, 0], sizes = [8, 16, 4], strides = [1, 1, 1]} : vector<8x22x4xf32> to vector<8x16x4xf32>
    %98 = vector.extract_strided_slice %5 {offsets = [1, 3, 0], sizes = [1, 1, 4], strides = [1, 1, 1]} : vector<7x7x4xf32> to vector<1x1x4xf32>
    %99 = vector.shape_cast %98 : vector<1x1x4xf32> to vector<4xf32>
    %100 = vector.shape_cast %99 : vector<4xf32> to vector<1x1x4xf32>
    %101 = vector.broadcast %100 : vector<1x1x4xf32> to vector<8x16x4xf32>
    %102 = arith.mulf %97, %101 : vector<8x16x4xf32>
    %103 = arith.addf %96, %102 : vector<8x16x4xf32>
    %104 = vector.extract_strided_slice %75 {offsets = [0, 4, 0], sizes = [8, 16, 4], strides = [1, 1, 1]} : vector<8x22x4xf32> to vector<8x16x4xf32>
    %105 = vector.extract_strided_slice %5 {offsets = [1, 4, 0], sizes = [1, 1, 4], strides = [1, 1, 1]} : vector<7x7x4xf32> to vector<1x1x4xf32>
    %106 = vector.shape_cast %105 : vector<1x1x4xf32> to vector<4xf32>
    %107 = vector.shape_cast %106 : vector<4xf32> to vector<1x1x4xf32>
    %108 = vector.broadcast %107 : vector<1x1x4xf32> to vector<8x16x4xf32>
    %109 = arith.mulf %104, %108 : vector<8x16x4xf32>
    %110 = arith.addf %103, %109 : vector<8x16x4xf32>
    %111 = vector.extract_strided_slice %75 {offsets = [0, 5, 0], sizes = [8, 16, 4], strides = [1, 1, 1]} : vector<8x22x4xf32> to vector<8x16x4xf32>
    %112 = vector.extract_strided_slice %5 {offsets = [1, 5, 0], sizes = [1, 1, 4], strides = [1, 1, 1]} : vector<7x7x4xf32> to vector<1x1x4xf32>
    %113 = vector.shape_cast %112 : vector<1x1x4xf32> to vector<4xf32>
    %114 = vector.shape_cast %113 : vector<4xf32> to vector<1x1x4xf32>
    %115 = vector.broadcast %114 : vector<1x1x4xf32> to vector<8x16x4xf32>
    %116 = arith.mulf %111, %115 : vector<8x16x4xf32>
    %117 = arith.addf %110, %116 : vector<8x16x4xf32>
    %118 = vector.extract_strided_slice %75 {offsets = [0, 6, 0], sizes = [8, 16, 4], strides = [1, 1, 1]} : vector<8x22x4xf32> to vector<8x16x4xf32>
    %119 = vector.extract_strided_slice %5 {offsets = [1, 6, 0], sizes = [1, 1, 4], strides = [1, 1, 1]} : vector<7x7x4xf32> to vector<1x1x4xf32>
    %120 = vector.shape_cast %119 : vector<1x1x4xf32> to vector<4xf32>
    %121 = vector.shape_cast %120 : vector<4xf32> to vector<1x1x4xf32>
    %122 = vector.broadcast %121 : vector<1x1x4xf32> to vector<8x16x4xf32>
    %123 = arith.mulf %118, %122 : vector<8x16x4xf32>
    %124 = arith.addf %117, %123 : vector<8x16x4xf32>
    %125 = vector.extract_strided_slice %23 {offsets = [2, 0, 0], sizes = [8, 22, 4], strides = [1, 1, 1]} : vector<14x22x4xf32> to vector<8x22x4xf32>
    %126 = vector.extract_strided_slice %125 {offsets = [0, 0, 0], sizes = [8, 16, 4], strides = [1, 1, 1]} : vector<8x22x4xf32> to vector<8x16x4xf32>
    %127 = vector.extract_strided_slice %5 {offsets = [2, 0, 0], sizes = [1, 1, 4], strides = [1, 1, 1]} : vector<7x7x4xf32> to vector<1x1x4xf32>
    %128 = vector.shape_cast %127 : vector<1x1x4xf32> to vector<4xf32>
    %129 = vector.shape_cast %128 : vector<4xf32> to vector<1x1x4xf32>
    %130 = vector.broadcast %129 : vector<1x1x4xf32> to vector<8x16x4xf32>
    %131 = arith.mulf %126, %130 : vector<8x16x4xf32>
    %132 = arith.addf %124, %131 : vector<8x16x4xf32>
    %133 = vector.extract_strided_slice %125 {offsets = [0, 1, 0], sizes = [8, 16, 4], strides = [1, 1, 1]} : vector<8x22x4xf32> to vector<8x16x4xf32>
    %134 = vector.extract_strided_slice %5 {offsets = [2, 1, 0], sizes = [1, 1, 4], strides = [1, 1, 1]} : vector<7x7x4xf32> to vector<1x1x4xf32>
    %135 = vector.shape_cast %134 : vector<1x1x4xf32> to vector<4xf32>
    %136 = vector.shape_cast %135 : vector<4xf32> to vector<1x1x4xf32>
    %137 = vector.broadcast %136 : vector<1x1x4xf32> to vector<8x16x4xf32>
    %138 = arith.mulf %133, %137 : vector<8x16x4xf32>
    %139 = arith.addf %132, %138 : vector<8x16x4xf32>
    %140 = vector.extract_strided_slice %125 {offsets = [0, 2, 0], sizes = [8, 16, 4], strides = [1, 1, 1]} : vector<8x22x4xf32> to vector<8x16x4xf32>
    %141 = vector.extract_strided_slice %5 {offsets = [2, 2, 0], sizes = [1, 1, 4], strides = [1, 1, 1]} : vector<7x7x4xf32> to vector<1x1x4xf32>
    %142 = vector.shape_cast %141 : vector<1x1x4xf32> to vector<4xf32>
    %143 = vector.shape_cast %142 : vector<4xf32> to vector<1x1x4xf32>
    %144 = vector.broadcast %143 : vector<1x1x4xf32> to vector<8x16x4xf32>
    %145 = arith.mulf %140, %144 : vector<8x16x4xf32>
    %146 = arith.addf %139, %145 : vector<8x16x4xf32>
    %147 = vector.extract_strided_slice %125 {offsets = [0, 3, 0], sizes = [8, 16, 4], strides = [1, 1, 1]} : vector<8x22x4xf32> to vector<8x16x4xf32>
    %148 = vector.extract_strided_slice %5 {offsets = [2, 3, 0], sizes = [1, 1, 4], strides = [1, 1, 1]} : vector<7x7x4xf32> to vector<1x1x4xf32>
    %149 = vector.shape_cast %148 : vector<1x1x4xf32> to vector<4xf32>
    %150 = vector.shape_cast %149 : vector<4xf32> to vector<1x1x4xf32>
    %151 = vector.broadcast %150 : vector<1x1x4xf32> to vector<8x16x4xf32>
    %152 = arith.mulf %147, %151 : vector<8x16x4xf32>
    %153 = arith.addf %146, %152 : vector<8x16x4xf32>
    %154 = vector.extract_strided_slice %125 {offsets = [0, 4, 0], sizes = [8, 16, 4], strides = [1, 1, 1]} : vector<8x22x4xf32> to vector<8x16x4xf32>
    %155 = vector.extract_strided_slice %5 {offsets = [2, 4, 0], sizes = [1, 1, 4], strides = [1, 1, 1]} : vector<7x7x4xf32> to vector<1x1x4xf32>
    %156 = vector.shape_cast %155 : vector<1x1x4xf32> to vector<4xf32>
    %157 = vector.shape_cast %156 : vector<4xf32> to vector<1x1x4xf32>
    %158 = vector.broadcast %157 : vector<1x1x4xf32> to vector<8x16x4xf32>
    %159 = arith.mulf %154, %158 : vector<8x16x4xf32>
    %160 = arith.addf %153, %159 : vector<8x16x4xf32>
    %161 = vector.extract_strided_slice %125 {offsets = [0, 5, 0], sizes = [8, 16, 4], strides = [1, 1, 1]} : vector<8x22x4xf32> to vector<8x16x4xf32>
    %162 = vector.extract_strided_slice %5 {offsets = [2, 5, 0], sizes = [1, 1, 4], strides = [1, 1, 1]} : vector<7x7x4xf32> to vector<1x1x4xf32>
    %163 = vector.shape_cast %162 : vector<1x1x4xf32> to vector<4xf32>
    %164 = vector.shape_cast %163 : vector<4xf32> to vector<1x1x4xf32>
    %165 = vector.broadcast %164 : vector<1x1x4xf32> to vector<8x16x4xf32>
    %166 = arith.mulf %161, %165 : vector<8x16x4xf32>
    %167 = arith.addf %160, %166 : vector<8x16x4xf32>
    %168 = vector.extract_strided_slice %125 {offsets = [0, 6, 0], sizes = [8, 16, 4], strides = [1, 1, 1]} : vector<8x22x4xf32> to vector<8x16x4xf32>
    %169 = vector.extract_strided_slice %5 {offsets = [2, 6, 0], sizes = [1, 1, 4], strides = [1, 1, 1]} : vector<7x7x4xf32> to vector<1x1x4xf32>
    %170 = vector.shape_cast %169 : vector<1x1x4xf32> to vector<4xf32>
    %171 = vector.shape_cast %170 : vector<4xf32> to vector<1x1x4xf32>
    %172 = vector.broadcast %171 : vector<1x1x4xf32> to vector<8x16x4xf32>
    %173 = arith.mulf %168, %172 : vector<8x16x4xf32>
    %174 = arith.addf %167, %173 : vector<8x16x4xf32>
    %175 = vector.extract_strided_slice %23 {offsets = [3, 0, 0], sizes = [8, 22, 4], strides = [1, 1, 1]} : vector<14x22x4xf32> to vector<8x22x4xf32>
    %176 = vector.extract_strided_slice %175 {offsets = [0, 0, 0], sizes = [8, 16, 4], strides = [1, 1, 1]} : vector<8x22x4xf32> to vector<8x16x4xf32>
    %177 = vector.extract_strided_slice %5 {offsets = [3, 0, 0], sizes = [1, 1, 4], strides = [1, 1, 1]} : vector<7x7x4xf32> to vector<1x1x4xf32>
    %178 = vector.shape_cast %177 : vector<1x1x4xf32> to vector<4xf32>
    %179 = vector.shape_cast %178 : vector<4xf32> to vector<1x1x4xf32>
    %180 = vector.broadcast %179 : vector<1x1x4xf32> to vector<8x16x4xf32>
    %181 = arith.mulf %176, %180 : vector<8x16x4xf32>
    %182 = arith.addf %174, %181 : vector<8x16x4xf32>
    %183 = vector.extract_strided_slice %175 {offsets = [0, 1, 0], sizes = [8, 16, 4], strides = [1, 1, 1]} : vector<8x22x4xf32> to vector<8x16x4xf32>
    %184 = vector.extract_strided_slice %5 {offsets = [3, 1, 0], sizes = [1, 1, 4], strides = [1, 1, 1]} : vector<7x7x4xf32> to vector<1x1x4xf32>
    %185 = vector.shape_cast %184 : vector<1x1x4xf32> to vector<4xf32>
    %186 = vector.shape_cast %185 : vector<4xf32> to vector<1x1x4xf32>
    %187 = vector.broadcast %186 : vector<1x1x4xf32> to vector<8x16x4xf32>
    %188 = arith.mulf %183, %187 : vector<8x16x4xf32>
    %189 = arith.addf %182, %188 : vector<8x16x4xf32>
    %190 = vector.extract_strided_slice %175 {offsets = [0, 2, 0], sizes = [8, 16, 4], strides = [1, 1, 1]} : vector<8x22x4xf32> to vector<8x16x4xf32>
    %191 = vector.extract_strided_slice %5 {offsets = [3, 2, 0], sizes = [1, 1, 4], strides = [1, 1, 1]} : vector<7x7x4xf32> to vector<1x1x4xf32>
    %192 = vector.shape_cast %191 : vector<1x1x4xf32> to vector<4xf32>
    %193 = vector.shape_cast %192 : vector<4xf32> to vector<1x1x4xf32>
    %194 = vector.broadcast %193 : vector<1x1x4xf32> to vector<8x16x4xf32>
    %195 = arith.mulf %190, %194 : vector<8x16x4xf32>
    %196 = arith.addf %189, %195 : vector<8x16x4xf32>
    %197 = vector.extract_strided_slice %175 {offsets = [0, 3, 0], sizes = [8, 16, 4], strides = [1, 1, 1]} : vector<8x22x4xf32> to vector<8x16x4xf32>
    %198 = vector.extract_strided_slice %5 {offsets = [3, 3, 0], sizes = [1, 1, 4], strides = [1, 1, 1]} : vector<7x7x4xf32> to vector<1x1x4xf32>
    %199 = vector.shape_cast %198 : vector<1x1x4xf32> to vector<4xf32>
    %200 = vector.shape_cast %199 : vector<4xf32> to vector<1x1x4xf32>
    %201 = vector.broadcast %200 : vector<1x1x4xf32> to vector<8x16x4xf32>
    %202 = arith.mulf %197, %201 : vector<8x16x4xf32>
    %203 = arith.addf %196, %202 : vector<8x16x4xf32>
    %204 = vector.extract_strided_slice %175 {offsets = [0, 4, 0], sizes = [8, 16, 4], strides = [1, 1, 1]} : vector<8x22x4xf32> to vector<8x16x4xf32>
    %205 = vector.extract_strided_slice %5 {offsets = [3, 4, 0], sizes = [1, 1, 4], strides = [1, 1, 1]} : vector<7x7x4xf32> to vector<1x1x4xf32>
    %206 = vector.shape_cast %205 : vector<1x1x4xf32> to vector<4xf32>
    %207 = vector.shape_cast %206 : vector<4xf32> to vector<1x1x4xf32>
    %208 = vector.broadcast %207 : vector<1x1x4xf32> to vector<8x16x4xf32>
    %209 = arith.mulf %204, %208 : vector<8x16x4xf32>
    %210 = arith.addf %203, %209 : vector<8x16x4xf32>
    %211 = vector.extract_strided_slice %175 {offsets = [0, 5, 0], sizes = [8, 16, 4], strides = [1, 1, 1]} : vector<8x22x4xf32> to vector<8x16x4xf32>
    %212 = vector.extract_strided_slice %5 {offsets = [3, 5, 0], sizes = [1, 1, 4], strides = [1, 1, 1]} : vector<7x7x4xf32> to vector<1x1x4xf32>
    %213 = vector.shape_cast %212 : vector<1x1x4xf32> to vector<4xf32>
    %214 = vector.shape_cast %213 : vector<4xf32> to vector<1x1x4xf32>
    %215 = vector.broadcast %214 : vector<1x1x4xf32> to vector<8x16x4xf32>
    %216 = arith.mulf %211, %215 : vector<8x16x4xf32>
    %217 = arith.addf %210, %216 : vector<8x16x4xf32>
    %218 = vector.extract_strided_slice %175 {offsets = [0, 6, 0], sizes = [8, 16, 4], strides = [1, 1, 1]} : vector<8x22x4xf32> to vector<8x16x4xf32>
    %219 = vector.extract_strided_slice %5 {offsets = [3, 6, 0], sizes = [1, 1, 4], strides = [1, 1, 1]} : vector<7x7x4xf32> to vector<1x1x4xf32>
    %220 = vector.shape_cast %219 : vector<1x1x4xf32> to vector<4xf32>
    %221 = vector.shape_cast %220 : vector<4xf32> to vector<1x1x4xf32>
    %222 = vector.broadcast %221 : vector<1x1x4xf32> to vector<8x16x4xf32>
    %223 = arith.mulf %218, %222 : vector<8x16x4xf32>
    %224 = arith.addf %217, %223 : vector<8x16x4xf32>
    %225 = vector.extract_strided_slice %23 {offsets = [4, 0, 0], sizes = [8, 22, 4], strides = [1, 1, 1]} : vector<14x22x4xf32> to vector<8x22x4xf32>
    %226 = vector.extract_strided_slice %225 {offsets = [0, 0, 0], sizes = [8, 16, 4], strides = [1, 1, 1]} : vector<8x22x4xf32> to vector<8x16x4xf32>
    %227 = vector.extract_strided_slice %5 {offsets = [4, 0, 0], sizes = [1, 1, 4], strides = [1, 1, 1]} : vector<7x7x4xf32> to vector<1x1x4xf32>
    %228 = vector.shape_cast %227 : vector<1x1x4xf32> to vector<4xf32>
    %229 = vector.shape_cast %228 : vector<4xf32> to vector<1x1x4xf32>
    %230 = vector.broadcast %229 : vector<1x1x4xf32> to vector<8x16x4xf32>
    %231 = arith.mulf %226, %230 : vector<8x16x4xf32>
    %232 = arith.addf %224, %231 : vector<8x16x4xf32>
    %233 = vector.extract_strided_slice %225 {offsets = [0, 1, 0], sizes = [8, 16, 4], strides = [1, 1, 1]} : vector<8x22x4xf32> to vector<8x16x4xf32>
    %234 = vector.extract_strided_slice %5 {offsets = [4, 1, 0], sizes = [1, 1, 4], strides = [1, 1, 1]} : vector<7x7x4xf32> to vector<1x1x4xf32>
    %235 = vector.shape_cast %234 : vector<1x1x4xf32> to vector<4xf32>
    %236 = vector.shape_cast %235 : vector<4xf32> to vector<1x1x4xf32>
    %237 = vector.broadcast %236 : vector<1x1x4xf32> to vector<8x16x4xf32>
    %238 = arith.mulf %233, %237 : vector<8x16x4xf32>
    %239 = arith.addf %232, %238 : vector<8x16x4xf32>
    %240 = vector.extract_strided_slice %225 {offsets = [0, 2, 0], sizes = [8, 16, 4], strides = [1, 1, 1]} : vector<8x22x4xf32> to vector<8x16x4xf32>
    %241 = vector.extract_strided_slice %5 {offsets = [4, 2, 0], sizes = [1, 1, 4], strides = [1, 1, 1]} : vector<7x7x4xf32> to vector<1x1x4xf32>
    %242 = vector.shape_cast %241 : vector<1x1x4xf32> to vector<4xf32>
    %243 = vector.shape_cast %242 : vector<4xf32> to vector<1x1x4xf32>
    %244 = vector.broadcast %243 : vector<1x1x4xf32> to vector<8x16x4xf32>
    %245 = arith.mulf %240, %244 : vector<8x16x4xf32>
    %246 = arith.addf %239, %245 : vector<8x16x4xf32>
    %247 = vector.extract_strided_slice %225 {offsets = [0, 3, 0], sizes = [8, 16, 4], strides = [1, 1, 1]} : vector<8x22x4xf32> to vector<8x16x4xf32>
    %248 = vector.extract_strided_slice %5 {offsets = [4, 3, 0], sizes = [1, 1, 4], strides = [1, 1, 1]} : vector<7x7x4xf32> to vector<1x1x4xf32>
    %249 = vector.shape_cast %248 : vector<1x1x4xf32> to vector<4xf32>
    %250 = vector.shape_cast %249 : vector<4xf32> to vector<1x1x4xf32>
    %251 = vector.broadcast %250 : vector<1x1x4xf32> to vector<8x16x4xf32>
    %252 = arith.mulf %247, %251 : vector<8x16x4xf32>
    %253 = arith.addf %246, %252 : vector<8x16x4xf32>
    %254 = vector.extract_strided_slice %225 {offsets = [0, 4, 0], sizes = [8, 16, 4], strides = [1, 1, 1]} : vector<8x22x4xf32> to vector<8x16x4xf32>
    %255 = vector.extract_strided_slice %5 {offsets = [4, 4, 0], sizes = [1, 1, 4], strides = [1, 1, 1]} : vector<7x7x4xf32> to vector<1x1x4xf32>
    %256 = vector.shape_cast %255 : vector<1x1x4xf32> to vector<4xf32>
    %257 = vector.shape_cast %256 : vector<4xf32> to vector<1x1x4xf32>
    %258 = vector.broadcast %257 : vector<1x1x4xf32> to vector<8x16x4xf32>
    %259 = arith.mulf %254, %258 : vector<8x16x4xf32>
    %260 = arith.addf %253, %259 : vector<8x16x4xf32>
    %261 = vector.extract_strided_slice %225 {offsets = [0, 5, 0], sizes = [8, 16, 4], strides = [1, 1, 1]} : vector<8x22x4xf32> to vector<8x16x4xf32>
    %262 = vector.extract_strided_slice %5 {offsets = [4, 5, 0], sizes = [1, 1, 4], strides = [1, 1, 1]} : vector<7x7x4xf32> to vector<1x1x4xf32>
    %263 = vector.shape_cast %262 : vector<1x1x4xf32> to vector<4xf32>
    %264 = vector.shape_cast %263 : vector<4xf32> to vector<1x1x4xf32>
    %265 = vector.broadcast %264 : vector<1x1x4xf32> to vector<8x16x4xf32>
    %266 = arith.mulf %261, %265 : vector<8x16x4xf32>
    %267 = arith.addf %260, %266 : vector<8x16x4xf32>
    %268 = vector.extract_strided_slice %225 {offsets = [0, 6, 0], sizes = [8, 16, 4], strides = [1, 1, 1]} : vector<8x22x4xf32> to vector<8x16x4xf32>
    %269 = vector.extract_strided_slice %5 {offsets = [4, 6, 0], sizes = [1, 1, 4], strides = [1, 1, 1]} : vector<7x7x4xf32> to vector<1x1x4xf32>
    %270 = vector.shape_cast %269 : vector<1x1x4xf32> to vector<4xf32>
    %271 = vector.shape_cast %270 : vector<4xf32> to vector<1x1x4xf32>
    %272 = vector.broadcast %271 : vector<1x1x4xf32> to vector<8x16x4xf32>
    %273 = arith.mulf %268, %272 : vector<8x16x4xf32>
    %274 = arith.addf %267, %273 : vector<8x16x4xf32>
    %275 = vector.extract_strided_slice %23 {offsets = [5, 0, 0], sizes = [8, 22, 4], strides = [1, 1, 1]} : vector<14x22x4xf32> to vector<8x22x4xf32>
    %276 = vector.extract_strided_slice %275 {offsets = [0, 0, 0], sizes = [8, 16, 4], strides = [1, 1, 1]} : vector<8x22x4xf32> to vector<8x16x4xf32>
    %277 = vector.extract_strided_slice %5 {offsets = [5, 0, 0], sizes = [1, 1, 4], strides = [1, 1, 1]} : vector<7x7x4xf32> to vector<1x1x4xf32>
    %278 = vector.shape_cast %277 : vector<1x1x4xf32> to vector<4xf32>
    %279 = vector.shape_cast %278 : vector<4xf32> to vector<1x1x4xf32>
    %280 = vector.broadcast %279 : vector<1x1x4xf32> to vector<8x16x4xf32>
    %281 = arith.mulf %276, %280 : vector<8x16x4xf32>
    %282 = arith.addf %274, %281 : vector<8x16x4xf32>
    %283 = vector.extract_strided_slice %275 {offsets = [0, 1, 0], sizes = [8, 16, 4], strides = [1, 1, 1]} : vector<8x22x4xf32> to vector<8x16x4xf32>
    %284 = vector.extract_strided_slice %5 {offsets = [5, 1, 0], sizes = [1, 1, 4], strides = [1, 1, 1]} : vector<7x7x4xf32> to vector<1x1x4xf32>
    %285 = vector.shape_cast %284 : vector<1x1x4xf32> to vector<4xf32>
    %286 = vector.shape_cast %285 : vector<4xf32> to vector<1x1x4xf32>
    %287 = vector.broadcast %286 : vector<1x1x4xf32> to vector<8x16x4xf32>
    %288 = arith.mulf %283, %287 : vector<8x16x4xf32>
    %289 = arith.addf %282, %288 : vector<8x16x4xf32>
    %290 = vector.extract_strided_slice %275 {offsets = [0, 2, 0], sizes = [8, 16, 4], strides = [1, 1, 1]} : vector<8x22x4xf32> to vector<8x16x4xf32>
    %291 = vector.extract_strided_slice %5 {offsets = [5, 2, 0], sizes = [1, 1, 4], strides = [1, 1, 1]} : vector<7x7x4xf32> to vector<1x1x4xf32>
    %292 = vector.shape_cast %291 : vector<1x1x4xf32> to vector<4xf32>
    %293 = vector.shape_cast %292 : vector<4xf32> to vector<1x1x4xf32>
    %294 = vector.broadcast %293 : vector<1x1x4xf32> to vector<8x16x4xf32>
    %295 = arith.mulf %290, %294 : vector<8x16x4xf32>
    %296 = arith.addf %289, %295 : vector<8x16x4xf32>
    %297 = vector.extract_strided_slice %275 {offsets = [0, 3, 0], sizes = [8, 16, 4], strides = [1, 1, 1]} : vector<8x22x4xf32> to vector<8x16x4xf32>
    %298 = vector.extract_strided_slice %5 {offsets = [5, 3, 0], sizes = [1, 1, 4], strides = [1, 1, 1]} : vector<7x7x4xf32> to vector<1x1x4xf32>
    %299 = vector.shape_cast %298 : vector<1x1x4xf32> to vector<4xf32>
    %300 = vector.shape_cast %299 : vector<4xf32> to vector<1x1x4xf32>
    %301 = vector.broadcast %300 : vector<1x1x4xf32> to vector<8x16x4xf32>
    %302 = arith.mulf %297, %301 : vector<8x16x4xf32>
    %303 = arith.addf %296, %302 : vector<8x16x4xf32>
    %304 = vector.extract_strided_slice %275 {offsets = [0, 4, 0], sizes = [8, 16, 4], strides = [1, 1, 1]} : vector<8x22x4xf32> to vector<8x16x4xf32>
    %305 = vector.extract_strided_slice %5 {offsets = [5, 4, 0], sizes = [1, 1, 4], strides = [1, 1, 1]} : vector<7x7x4xf32> to vector<1x1x4xf32>
    %306 = vector.shape_cast %305 : vector<1x1x4xf32> to vector<4xf32>
    %307 = vector.shape_cast %306 : vector<4xf32> to vector<1x1x4xf32>
    %308 = vector.broadcast %307 : vector<1x1x4xf32> to vector<8x16x4xf32>
    %309 = arith.mulf %304, %308 : vector<8x16x4xf32>
    %310 = arith.addf %303, %309 : vector<8x16x4xf32>
    %311 = vector.extract_strided_slice %275 {offsets = [0, 5, 0], sizes = [8, 16, 4], strides = [1, 1, 1]} : vector<8x22x4xf32> to vector<8x16x4xf32>
    %312 = vector.extract_strided_slice %5 {offsets = [5, 5, 0], sizes = [1, 1, 4], strides = [1, 1, 1]} : vector<7x7x4xf32> to vector<1x1x4xf32>
    %313 = vector.shape_cast %312 : vector<1x1x4xf32> to vector<4xf32>
    %314 = vector.shape_cast %313 : vector<4xf32> to vector<1x1x4xf32>
    %315 = vector.broadcast %314 : vector<1x1x4xf32> to vector<8x16x4xf32>
    %316 = arith.mulf %311, %315 : vector<8x16x4xf32>
    %317 = arith.addf %310, %316 : vector<8x16x4xf32>
    %318 = vector.extract_strided_slice %275 {offsets = [0, 6, 0], sizes = [8, 16, 4], strides = [1, 1, 1]} : vector<8x22x4xf32> to vector<8x16x4xf32>
    %319 = vector.extract_strided_slice %5 {offsets = [5, 6, 0], sizes = [1, 1, 4], strides = [1, 1, 1]} : vector<7x7x4xf32> to vector<1x1x4xf32>
    %320 = vector.shape_cast %319 : vector<1x1x4xf32> to vector<4xf32>
    %321 = vector.shape_cast %320 : vector<4xf32> to vector<1x1x4xf32>
    %322 = vector.broadcast %321 : vector<1x1x4xf32> to vector<8x16x4xf32>
    %323 = arith.mulf %318, %322 : vector<8x16x4xf32>
    %324 = arith.addf %317, %323 : vector<8x16x4xf32>
    %325 = vector.extract_strided_slice %23 {offsets = [6, 0, 0], sizes = [8, 22, 4], strides = [1, 1, 1]} : vector<14x22x4xf32> to vector<8x22x4xf32>
    %326 = vector.extract_strided_slice %325 {offsets = [0, 0, 0], sizes = [8, 16, 4], strides = [1, 1, 1]} : vector<8x22x4xf32> to vector<8x16x4xf32>
    %327 = vector.extract_strided_slice %5 {offsets = [6, 0, 0], sizes = [1, 1, 4], strides = [1, 1, 1]} : vector<7x7x4xf32> to vector<1x1x4xf32>
    %328 = vector.shape_cast %327 : vector<1x1x4xf32> to vector<4xf32>
    %329 = vector.shape_cast %328 : vector<4xf32> to vector<1x1x4xf32>
    %330 = vector.broadcast %329 : vector<1x1x4xf32> to vector<8x16x4xf32>
    %331 = arith.mulf %326, %330 : vector<8x16x4xf32>
    %332 = arith.addf %324, %331 : vector<8x16x4xf32>
    %333 = vector.extract_strided_slice %325 {offsets = [0, 1, 0], sizes = [8, 16, 4], strides = [1, 1, 1]} : vector<8x22x4xf32> to vector<8x16x4xf32>
    %334 = vector.extract_strided_slice %5 {offsets = [6, 1, 0], sizes = [1, 1, 4], strides = [1, 1, 1]} : vector<7x7x4xf32> to vector<1x1x4xf32>
    %335 = vector.shape_cast %334 : vector<1x1x4xf32> to vector<4xf32>
    %336 = vector.shape_cast %335 : vector<4xf32> to vector<1x1x4xf32>
    %337 = vector.broadcast %336 : vector<1x1x4xf32> to vector<8x16x4xf32>
    %338 = arith.mulf %333, %337 : vector<8x16x4xf32>
    %339 = arith.addf %332, %338 : vector<8x16x4xf32>
    %340 = vector.extract_strided_slice %325 {offsets = [0, 2, 0], sizes = [8, 16, 4], strides = [1, 1, 1]} : vector<8x22x4xf32> to vector<8x16x4xf32>
    %341 = vector.extract_strided_slice %5 {offsets = [6, 2, 0], sizes = [1, 1, 4], strides = [1, 1, 1]} : vector<7x7x4xf32> to vector<1x1x4xf32>
    %342 = vector.shape_cast %341 : vector<1x1x4xf32> to vector<4xf32>
    %343 = vector.shape_cast %342 : vector<4xf32> to vector<1x1x4xf32>
    %344 = vector.broadcast %343 : vector<1x1x4xf32> to vector<8x16x4xf32>
    %345 = arith.mulf %340, %344 : vector<8x16x4xf32>
    %346 = arith.addf %339, %345 : vector<8x16x4xf32>
    %347 = vector.extract_strided_slice %325 {offsets = [0, 3, 0], sizes = [8, 16, 4], strides = [1, 1, 1]} : vector<8x22x4xf32> to vector<8x16x4xf32>
    %348 = vector.extract_strided_slice %5 {offsets = [6, 3, 0], sizes = [1, 1, 4], strides = [1, 1, 1]} : vector<7x7x4xf32> to vector<1x1x4xf32>
    %349 = vector.shape_cast %348 : vector<1x1x4xf32> to vector<4xf32>
    %350 = vector.shape_cast %349 : vector<4xf32> to vector<1x1x4xf32>
    %351 = vector.broadcast %350 : vector<1x1x4xf32> to vector<8x16x4xf32>
    %352 = arith.mulf %347, %351 : vector<8x16x4xf32>
    %353 = arith.addf %346, %352 : vector<8x16x4xf32>
    %354 = vector.extract_strided_slice %325 {offsets = [0, 4, 0], sizes = [8, 16, 4], strides = [1, 1, 1]} : vector<8x22x4xf32> to vector<8x16x4xf32>
    %355 = vector.extract_strided_slice %5 {offsets = [6, 4, 0], sizes = [1, 1, 4], strides = [1, 1, 1]} : vector<7x7x4xf32> to vector<1x1x4xf32>
    %356 = vector.shape_cast %355 : vector<1x1x4xf32> to vector<4xf32>
    %357 = vector.shape_cast %356 : vector<4xf32> to vector<1x1x4xf32>
    %358 = vector.broadcast %357 : vector<1x1x4xf32> to vector<8x16x4xf32>
    %359 = arith.mulf %354, %358 : vector<8x16x4xf32>
    %360 = arith.addf %353, %359 : vector<8x16x4xf32>
    %361 = vector.extract_strided_slice %325 {offsets = [0, 5, 0], sizes = [8, 16, 4], strides = [1, 1, 1]} : vector<8x22x4xf32> to vector<8x16x4xf32>
    %362 = vector.extract_strided_slice %5 {offsets = [6, 5, 0], sizes = [1, 1, 4], strides = [1, 1, 1]} : vector<7x7x4xf32> to vector<1x1x4xf32>
    %363 = vector.shape_cast %362 : vector<1x1x4xf32> to vector<4xf32>
    %364 = vector.shape_cast %363 : vector<4xf32> to vector<1x1x4xf32>
    %365 = vector.broadcast %364 : vector<1x1x4xf32> to vector<8x16x4xf32>
    %366 = arith.mulf %361, %365 : vector<8x16x4xf32>
    %367 = arith.addf %360, %366 : vector<8x16x4xf32>
    %368 = vector.extract_strided_slice %325 {offsets = [0, 6, 0], sizes = [8, 16, 4], strides = [1, 1, 1]} : vector<8x22x4xf32> to vector<8x16x4xf32>
    %369 = vector.extract_strided_slice %5 {offsets = [6, 6, 0], sizes = [1, 1, 4], strides = [1, 1, 1]} : vector<7x7x4xf32> to vector<1x1x4xf32>
    %370 = vector.shape_cast %369 : vector<1x1x4xf32> to vector<4xf32>
    %371 = vector.shape_cast %370 : vector<4xf32> to vector<1x1x4xf32>
    %372 = vector.broadcast %371 : vector<1x1x4xf32> to vector<8x16x4xf32>
    %373 = arith.mulf %368, %372 : vector<8x16x4xf32>
    %374 = arith.addf %367, %373 : vector<8x16x4xf32>
    %375 = vector.shape_cast %7 : vector<4xf32> to vector<1x1x4xf32>
    %376 = vector.broadcast %375 : vector<1x1x4xf32> to vector<8x16x4xf32>
    %377 = arith.addf %374, %376 : vector<8x16x4xf32>
    %cst_34 = arith.constant dense<0.000000e+00> : vector<8x16xf32>
    %378 = vector.multi_reduction <add>, %377, %cst_34 [2] : vector<8x16x4xf32> to vector<8x16xf32>
    %379 = vector.shape_cast %378 : vector<8x16xf32> to vector<8x16x1xf32>
    %cst_35 = arith.constant 4.000000e+00 : f32
    %380 = vector.broadcast %cst_35 : f32 to vector<8x16x1xf32>
    %381 = arith.divf %379, %380 : vector<8x16x1xf32>
    %382 = vector.broadcast %381 : vector<8x16x1xf32> to vector<8x16x4xf32>
    %383 = arith.subf %377, %382 : vector<8x16x4xf32>
    %384 = arith.mulf %383, %383 : vector<8x16x4xf32>
    %cst_36 = arith.constant dense<0.000000e+00> : vector<8x16xf32>
    %385 = vector.multi_reduction <add>, %384, %cst_36 [2] : vector<8x16x4xf32> to vector<8x16xf32>
    %386 = vector.shape_cast %385 : vector<8x16xf32> to vector<8x16x1xf32>
    %cst_37 = arith.constant 4.000000e+00 : f32
    %387 = vector.broadcast %cst_37 : f32 to vector<8x16x1xf32>
    %388 = arith.divf %386, %387 : vector<8x16x1xf32>
    %389 = vector.broadcast %381 : vector<8x16x1xf32> to vector<8x16x4xf32>
    %390 = arith.subf %377, %389 : vector<8x16x4xf32>
    %391 = math.sqrt %388 : vector<8x16x1xf32>
    %cst_38 = arith.constant 9.99999997E-7 : f32
    %392 = vector.broadcast %cst_38 : f32 to vector<8x16x1xf32>
    %393 = arith.addf %391, %392 : vector<8x16x1xf32>
    %394 = vector.broadcast %393 : vector<8x16x1xf32> to vector<8x16x4xf32>
    %395 = arith.divf %390, %394 : vector<8x16x4xf32>
    %396 = vector.shape_cast %9 : vector<4xf32> to vector<1x1x4xf32>
    %397 = vector.broadcast %396 : vector<1x1x4xf32> to vector<8x16x4xf32>
    %398 = arith.mulf %395, %397 : vector<8x16x4xf32>
    %399 = vector.shape_cast %11 : vector<4xf32> to vector<1x1x4xf32>
    %400 = vector.broadcast %399 : vector<1x1x4xf32> to vector<8x16x4xf32>
    %401 = arith.addf %398, %400 : vector<8x16x4xf32>
    %402 = vector.shape_cast %401 : vector<8x16x4xf32> to vector<128x4xf32>
    %403 = arith.truncf %402 : vector<128x4xf32> to vector<128x4xbf16>
    %cst_39 = arith.constant dense<0.000000e+00> : vector<128x16xf32>
    %404 = tpu.matmul %403, %12, %cst_39 {dimension_numbers = #tpu.dot_dimension_numbers<[1], [0], [0], [1], [0, 0, 1, 1], [], []>} : vector<128x4xbf16>, vector<4x16xbf16>, vector<128x16xf32> -> vector<128x16xf32>
    %405 = vector.shape_cast %14 : vector<16xf32> to vector<1x16xf32>
    %406 = vector.broadcast %405 : vector<1x16xf32> to vector<128x16xf32>
    %407 = arith.addf %404, %406 : vector<128x16xf32>
    %cst_40 = arith.constant -1.702000e+00 : f32
    %408 = vector.broadcast %cst_40 : f32 to vector<128x16xf32>
    %409 = arith.mulf %408, %407 : vector<128x16xf32>
    %410 = math.exp %409 : vector<128x16xf32>
    %cst_41 = arith.constant 1.000000e+00 : f32
    %411 = vector.broadcast %cst_41 : f32 to vector<128x16xf32>
    %412 = arith.addf %411, %410 : vector<128x16xf32>
    %413 = tpu.reciprocal %412 {approx = true} : vector<128x16xf32> -> vector<128x16xf32>
    %414 = arith.mulf %407, %413 : vector<128x16xf32>
    %415 = arith.truncf %414 : vector<128x16xf32> to vector<128x16xbf16>
    %cst_42 = arith.constant dense<0.000000e+00> : vector<128x4xf32>
    %416 = tpu.matmul %415, %15, %cst_42 {dimension_numbers = #tpu.dot_dimension_numbers<[1], [0], [0], [1], [0, 0, 1, 1], [], []>} : vector<128x16xbf16>, vector<16x4xbf16>, vector<128x4xf32> -> vector<128x4xf32>
    %417 = vector.shape_cast %17 : vector<4xf32> to vector<1x4xf32>
    %418 = vector.broadcast %417 : vector<1x4xf32> to vector<128x4xf32>
    %419 = arith.addf %416, %418 : vector<128x4xf32>
    %420 = vector.shape_cast %419 : vector<128x4xf32> to vector<8x16x4xf32>
    %421 = vector.shape_cast %19 : vector<4xf32> to vector<1x1x4xf32>
    %422 = vector.broadcast %421 : vector<1x1x4xf32> to vector<8x16x4xf32>
    %423 = arith.mulf %420, %422 : vector<8x16x4xf32>
    %c0_43 = arith.constant 0 : index
    %424 = arith.index_cast %21 : i32 to index
    %c0_44 = arith.constant 0 : index
    %c0_45 = arith.constant 0 : index
    %425 = vector.load %arg1[%c0_43, %424, %c0_44, %c0_45] : memref<1x16x16x4xf32, #tpu.memory_space<vmem>>, vector<1x8x16x4xf32>
    %426 = vector.shape_cast %425 : vector<1x8x16x4xf32> to vector<8x16x4xf32>
    %427 = arith.addf %426, %423 : vector<8x16x4xf32>
    %c0_46 = arith.constant 0 : index
    %428 = arith.index_cast %21 : i32 to index
    %c0_47 = arith.constant 0 : index
    %c0_48 = arith.constant 0 : index
    %429 = vector.load %arg11[%c0_46, %428, %c0_47, %c0_48] : memref<1x16x16x4xf32, #tpu.memory_space<vmem>>, vector<1x8x16x4xf32>
    %430 = vector.shape_cast %429 : vector<1x8x16x4xf32> to vector<8x16x4xf32>
    %431 = vector.shape_cast %427 : vector<8x16x4xf32> to vector<1x8x16x4xf32>
    tpu.vector_store %arg11[%c0_46, %428, %c0_47, %c0_48], %431 {strides = array<i32>} : memref<1x16x16x4xf32, #tpu.memory_space<vmem>>, vector<1x8x16x4xf32>,
    %c1_i32 = arith.constant 1 : i32
    %c8_i32_49 = arith.constant 8 : i32
    %432 = arith.muli %c1_i32, %c8_i32_49 : i32
    %433 = tpu.assume_multiple %432, 8 : i32
    %434 = arith.index_cast %433 : i32 to index
    %c0_50 = arith.constant 0 : index
    %c0_51 = arith.constant 0 : index
    %435 = vector.load %arg12[%434, %c0_50, %c0_51] : memref<22x22x4xf32, #tpu.memory_space<vmem>>, vector<14x22x4xf32>
    %cst_52 = arith.constant 0.000000e+00 : f32
    %436 = vector.broadcast %cst_52 : f32 to vector<8x16x4xf32>
    %437 = vector.extract_strided_slice %435 {offsets = [0, 0, 0], sizes = [8, 22, 4], strides = [1, 1, 1]} : vector<14x22x4xf32> to vector<8x22x4xf32>
    %438 = vector.extract_strided_slice %437 {offsets = [0, 0, 0], sizes = [8, 16, 4], strides = [1, 1, 1]} : vector<8x22x4xf32> to vector<8x16x4xf32>
    %439 = vector.extract_strided_slice %5 {offsets = [0, 0, 0], sizes = [1, 1, 4], strides = [1, 1, 1]} : vector<7x7x4xf32> to vector<1x1x4xf32>
    %440 = vector.shape_cast %439 : vector<1x1x4xf32> to vector<4xf32>
    %441 = vector.shape_cast %440 : vector<4xf32> to vector<1x1x4xf32>
    %442 = vector.broadcast %441 : vector<1x1x4xf32> to vector<8x16x4xf32>
    %443 = arith.mulf %438, %442 : vector<8x16x4xf32>
    %444 = arith.addf %436, %443 : vector<8x16x4xf32>
    %445 = vector.extract_strided_slice %437 {offsets = [0, 1, 0], sizes = [8, 16, 4], strides = [1, 1, 1]} : vector<8x22x4xf32> to vector<8x16x4xf32>
    %446 = vector.extract_strided_slice %5 {offsets = [0, 1, 0], sizes = [1, 1, 4], strides = [1, 1, 1]} : vector<7x7x4xf32> to vector<1x1x4xf32>
    %447 = vector.shape_cast %446 : vector<1x1x4xf32> to vector<4xf32>
    %448 = vector.shape_cast %447 : vector<4xf32> to vector<1x1x4xf32>
    %449 = vector.broadcast %448 : vector<1x1x4xf32> to vector<8x16x4xf32>
    %450 = arith.mulf %445, %449 : vector<8x16x4xf32>
    %451 = arith.addf %444, %450 : vector<8x16x4xf32>
    %452 = vector.extract_strided_slice %437 {offsets = [0, 2, 0], sizes = [8, 16, 4], strides = [1, 1, 1]} : vector<8x22x4xf32> to vector<8x16x4xf32>
    %453 = vector.extract_strided_slice %5 {offsets = [0, 2, 0], sizes = [1, 1, 4], strides = [1, 1, 1]} : vector<7x7x4xf32> to vector<1x1x4xf32>
    %454 = vector.shape_cast %453 : vector<1x1x4xf32> to vector<4xf32>
    %455 = vector.shape_cast %454 : vector<4xf32> to vector<1x1x4xf32>
    %456 = vector.broadcast %455 : vector<1x1x4xf32> to vector<8x16x4xf32>
    %457 = arith.mulf %452, %456 : vector<8x16x4xf32>
    %458 = arith.addf %451, %457 : vector<8x16x4xf32>
    %459 = vector.extract_strided_slice %437 {offsets = [0, 3, 0], sizes = [8, 16, 4], strides = [1, 1, 1]} : vector<8x22x4xf32> to vector<8x16x4xf32>
    %460 = vector.extract_strided_slice %5 {offsets = [0, 3, 0], sizes = [1, 1, 4], strides = [1, 1, 1]} : vector<7x7x4xf32> to vector<1x1x4xf32>
    %461 = vector.shape_cast %460 : vector<1x1x4xf32> to vector<4xf32>
    %462 = vector.shape_cast %461 : vector<4xf32> to vector<1x1x4xf32>
    %463 = vector.broadcast %462 : vector<1x1x4xf32> to vector<8x16x4xf32>
    %464 = arith.mulf %459, %463 : vector<8x16x4xf32>
    %465 = arith.addf %458, %464 : vector<8x16x4xf32>
    %466 = vector.extract_strided_slice %437 {offsets = [0, 4, 0], sizes = [8, 16, 4], strides = [1, 1, 1]} : vector<8x22x4xf32> to vector<8x16x4xf32>
    %467 = vector.extract_strided_slice %5 {offsets = [0, 4, 0], sizes = [1, 1, 4], strides = [1, 1, 1]} : vector<7x7x4xf32> to vector<1x1x4xf32>
    %468 = vector.shape_cast %467 : vector<1x1x4xf32> to vector<4xf32>
    %469 = vector.shape_cast %468 : vector<4xf32> to vector<1x1x4xf32>
    %470 = vector.broadcast %469 : vector<1x1x4xf32> to vector<8x16x4xf32>
    %471 = arith.mulf %466, %470 : vector<8x16x4xf32>
    %472 = arith.addf %465, %471 : vector<8x16x4xf32>
    %473 = vector.extract_strided_slice %437 {offsets = [0, 5, 0], sizes = [8, 16, 4], strides = [1, 1, 1]} : vector<8x22x4xf32> to vector<8x16x4xf32>
    %474 = vector.extract_strided_slice %5 {offsets = [0, 5, 0], sizes = [1, 1, 4], strides = [1, 1, 1]} : vector<7x7x4xf32> to vector<1x1x4xf32>
    %475 = vector.shape_cast %474 : vector<1x1x4xf32> to vector<4xf32>
    %476 = vector.shape_cast %475 : vector<4xf32> to vector<1x1x4xf32>
    %477 = vector.broadcast %476 : vector<1x1x4xf32> to vector<8x16x4xf32>
    %478 = arith.mulf %473, %477 : vector<8x16x4xf32>
    %479 = arith.addf %472, %478 : vector<8x16x4xf32>
    %480 = vector.extract_strided_slice %437 {offsets = [0, 6, 0], sizes = [8, 16, 4], strides = [1, 1, 1]} : vector<8x22x4xf32> to vector<8x16x4xf32>
    %481 = vector.extract_strided_slice %5 {offsets = [0, 6, 0], sizes = [1, 1, 4], strides = [1, 1, 1]} : vector<7x7x4xf32> to vector<1x1x4xf32>
    %482 = vector.shape_cast %481 : vector<1x1x4xf32> to vector<4xf32>
    %483 = vector.shape_cast %482 : vector<4xf32> to vector<1x1x4xf32>
    %484 = vector.broadcast %483 : vector<1x1x4xf32> to vector<8x16x4xf32>
    %485 = arith.mulf %480, %484 : vector<8x16x4xf32>
    %486 = arith.addf %479, %485 : vector<8x16x4xf32>
    %487 = vector.extract_strided_slice %435 {offsets = [1, 0, 0], sizes = [8, 22, 4], strides = [1, 1, 1]} : vector<14x22x4xf32> to vector<8x22x4xf32>
    %488 = vector.extract_strided_slice %487 {offsets = [0, 0, 0], sizes = [8, 16, 4], strides = [1, 1, 1]} : vector<8x22x4xf32> to vector<8x16x4xf32>
    %489 = vector.extract_strided_slice %5 {offsets = [1, 0, 0], sizes = [1, 1, 4], strides = [1, 1, 1]} : vector<7x7x4xf32> to vector<1x1x4xf32>
    %490 = vector.shape_cast %489 : vector<1x1x4xf32> to vector<4xf32>
    %491 = vector.shape_cast %490 : vector<4xf32> to vector<1x1x4xf32>
    %492 = vector.broadcast %491 : vector<1x1x4xf32> to vector<8x16x4xf32>
    %493 = arith.mulf %488, %492 : vector<8x16x4xf32>
    %494 = arith.addf %486, %493 : vector<8x16x4xf32>
    %495 = vector.extract_strided_slice %487 {offsets = [0, 1, 0], sizes = [8, 16, 4], strides = [1, 1, 1]} : vector<8x22x4xf32> to vector<8x16x4xf32>
    %496 = vector.extract_strided_slice %5 {offsets = [1, 1, 0], sizes = [1, 1, 4], strides = [1, 1, 1]} : vector<7x7x4xf32> to vector<1x1x4xf32>
    %497 = vector.shape_cast %496 : vector<1x1x4xf32> to vector<4xf32>
    %498 = vector.shape_cast %497 : vector<4xf32> to vector<1x1x4xf32>
    %499 = vector.broadcast %498 : vector<1x1x4xf32> to vector<8x16x4xf32>
    %500 = arith.mulf %495, %499 : vector<8x16x4xf32>
    %501 = arith.addf %494, %500 : vector<8x16x4xf32>
    %502 = vector.extract_strided_slice %487 {offsets = [0, 2, 0], sizes = [8, 16, 4], strides = [1, 1, 1]} : vector<8x22x4xf32> to vector<8x16x4xf32>
    %503 = vector.extract_strided_slice %5 {offsets = [1, 2, 0], sizes = [1, 1, 4], strides = [1, 1, 1]} : vector<7x7x4xf32> to vector<1x1x4xf32>
    %504 = vector.shape_cast %503 : vector<1x1x4xf32> to vector<4xf32>
    %505 = vector.shape_cast %504 : vector<4xf32> to vector<1x1x4xf32>
    %506 = vector.broadcast %505 : vector<1x1x4xf32> to vector<8x16x4xf32>
    %507 = arith.mulf %502, %506 : vector<8x16x4xf32>
    %508 = arith.addf %501, %507 : vector<8x16x4xf32>
    %509 = vector.extract_strided_slice %487 {offsets = [0, 3, 0], sizes = [8, 16, 4], strides = [1, 1, 1]} : vector<8x22x4xf32> to vector<8x16x4xf32>
    %510 = vector.extract_strided_slice %5 {offsets = [1, 3, 0], sizes = [1, 1, 4], strides = [1, 1, 1]} : vector<7x7x4xf32> to vector<1x1x4xf32>
    %511 = vector.shape_cast %510 : vector<1x1x4xf32> to vector<4xf32>
    %512 = vector.shape_cast %511 : vector<4xf32> to vector<1x1x4xf32>
    %513 = vector.broadcast %512 : vector<1x1x4xf32> to vector<8x16x4xf32>
    %514 = arith.mulf %509, %513 : vector<8x16x4xf32>
    %515 = arith.addf %508, %514 : vector<8x16x4xf32>
    %516 = vector.extract_strided_slice %487 {offsets = [0, 4, 0], sizes = [8, 16, 4], strides = [1, 1, 1]} : vector<8x22x4xf32> to vector<8x16x4xf32>
    %517 = vector.extract_strided_slice %5 {offsets = [1, 4, 0], sizes = [1, 1, 4], strides = [1, 1, 1]} : vector<7x7x4xf32> to vector<1x1x4xf32>
    %518 = vector.shape_cast %517 : vector<1x1x4xf32> to vector<4xf32>
    %519 = vector.shape_cast %518 : vector<4xf32> to vector<1x1x4xf32>
    %520 = vector.broadcast %519 : vector<1x1x4xf32> to vector<8x16x4xf32>
    %521 = arith.mulf %516, %520 : vector<8x16x4xf32>
    %522 = arith.addf %515, %521 : vector<8x16x4xf32>
    %523 = vector.extract_strided_slice %487 {offsets = [0, 5, 0], sizes = [8, 16, 4], strides = [1, 1, 1]} : vector<8x22x4xf32> to vector<8x16x4xf32>
    %524 = vector.extract_strided_slice %5 {offsets = [1, 5, 0], sizes = [1, 1, 4], strides = [1, 1, 1]} : vector<7x7x4xf32> to vector<1x1x4xf32>
    %525 = vector.shape_cast %524 : vector<1x1x4xf32> to vector<4xf32>
    %526 = vector.shape_cast %525 : vector<4xf32> to vector<1x1x4xf32>
    %527 = vector.broadcast %526 : vector<1x1x4xf32> to vector<8x16x4xf32>
    %528 = arith.mulf %523, %527 : vector<8x16x4xf32>
    %529 = arith.addf %522, %528 : vector<8x16x4xf32>
    %530 = vector.extract_strided_slice %487 {offsets = [0, 6, 0], sizes = [8, 16, 4], strides = [1, 1, 1]} : vector<8x22x4xf32> to vector<8x16x4xf32>
    %531 = vector.extract_strided_slice %5 {offsets = [1, 6, 0], sizes = [1, 1, 4], strides = [1, 1, 1]} : vector<7x7x4xf32> to vector<1x1x4xf32>
    %532 = vector.shape_cast %531 : vector<1x1x4xf32> to vector<4xf32>
    %533 = vector.shape_cast %532 : vector<4xf32> to vector<1x1x4xf32>
    %534 = vector.broadcast %533 : vector<1x1x4xf32> to vector<8x16x4xf32>
    %535 = arith.mulf %530, %534 : vector<8x16x4xf32>
    %536 = arith.addf %529, %535 : vector<8x16x4xf32>
    %537 = vector.extract_strided_slice %435 {offsets = [2, 0, 0], sizes = [8, 22, 4], strides = [1, 1, 1]} : vector<14x22x4xf32> to vector<8x22x4xf32>
    %538 = vector.extract_strided_slice %537 {offsets = [0, 0, 0], sizes = [8, 16, 4], strides = [1, 1, 1]} : vector<8x22x4xf32> to vector<8x16x4xf32>
    %539 = vector.extract_strided_slice %5 {offsets = [2, 0, 0], sizes = [1, 1, 4], strides = [1, 1, 1]} : vector<7x7x4xf32> to vector<1x1x4xf32>
    %540 = vector.shape_cast %539 : vector<1x1x4xf32> to vector<4xf32>
    %541 = vector.shape_cast %540 : vector<4xf32> to vector<1x1x4xf32>
    %542 = vector.broadcast %541 : vector<1x1x4xf32> to vector<8x16x4xf32>
    %543 = arith.mulf %538, %542 : vector<8x16x4xf32>
    %544 = arith.addf %536, %543 : vector<8x16x4xf32>
    %545 = vector.extract_strided_slice %537 {offsets = [0, 1, 0], sizes = [8, 16, 4], strides = [1, 1, 1]} : vector<8x22x4xf32> to vector<8x16x4xf32>
    %546 = vector.extract_strided_slice %5 {offsets = [2, 1, 0], sizes = [1, 1, 4], strides = [1, 1, 1]} : vector<7x7x4xf32> to vector<1x1x4xf32>
    %547 = vector.shape_cast %546 : vector<1x1x4xf32> to vector<4xf32>
    %548 = vector.shape_cast %547 : vector<4xf32> to vector<1x1x4xf32>
    %549 = vector.broadcast %548 : vector<1x1x4xf32> to vector<8x16x4xf32>
    %550 = arith.mulf %545, %549 : vector<8x16x4xf32>
    %551 = arith.addf %544, %550 : vector<8x16x4xf32>
    %552 = vector.extract_strided_slice %537 {offsets = [0, 2, 0], sizes = [8, 16, 4], strides = [1, 1, 1]} : vector<8x22x4xf32> to vector<8x16x4xf32>
    %553 = vector.extract_strided_slice %5 {offsets = [2, 2, 0], sizes = [1, 1, 4], strides = [1, 1, 1]} : vector<7x7x4xf32> to vector<1x1x4xf32>
    %554 = vector.shape_cast %553 : vector<1x1x4xf32> to vector<4xf32>
    %555 = vector.shape_cast %554 : vector<4xf32> to vector<1x1x4xf32>
    %556 = vector.broadcast %555 : vector<1x1x4xf32> to vector<8x16x4xf32>
    %557 = arith.mulf %552, %556 : vector<8x16x4xf32>
    %558 = arith.addf %551, %557 : vector<8x16x4xf32>
    %559 = vector.extract_strided_slice %537 {offsets = [0, 3, 0], sizes = [8, 16, 4], strides = [1, 1, 1]} : vector<8x22x4xf32> to vector<8x16x4xf32>
    %560 = vector.extract_strided_slice %5 {offsets = [2, 3, 0], sizes = [1, 1, 4], strides = [1, 1, 1]} : vector<7x7x4xf32> to vector<1x1x4xf32>
    %561 = vector.shape_cast %560 : vector<1x1x4xf32> to vector<4xf32>
    %562 = vector.shape_cast %561 : vector<4xf32> to vector<1x1x4xf32>
    %563 = vector.broadcast %562 : vector<1x1x4xf32> to vector<8x16x4xf32>
    %564 = arith.mulf %559, %563 : vector<8x16x4xf32>
    %565 = arith.addf %558, %564 : vector<8x16x4xf32>
    %566 = vector.extract_strided_slice %537 {offsets = [0, 4, 0], sizes = [8, 16, 4], strides = [1, 1, 1]} : vector<8x22x4xf32> to vector<8x16x4xf32>
    %567 = vector.extract_strided_slice %5 {offsets = [2, 4, 0], sizes = [1, 1, 4], strides = [1, 1, 1]} : vector<7x7x4xf32> to vector<1x1x4xf32>
    %568 = vector.shape_cast %567 : vector<1x1x4xf32> to vector<4xf32>
    %569 = vector.shape_cast %568 : vector<4xf32> to vector<1x1x4xf32>
    %570 = vector.broadcast %569 : vector<1x1x4xf32> to vector<8x16x4xf32>
    %571 = arith.mulf %566, %570 : vector<8x16x4xf32>
    %572 = arith.addf %565, %571 : vector<8x16x4xf32>
    %573 = vector.extract_strided_slice %537 {offsets = [0, 5, 0], sizes = [8, 16, 4], strides = [1, 1, 1]} : vector<8x22x4xf32> to vector<8x16x4xf32>
    %574 = vector.extract_strided_slice %5 {offsets = [2, 5, 0], sizes = [1, 1, 4], strides = [1, 1, 1]} : vector<7x7x4xf32> to vector<1x1x4xf32>
    %575 = vector.shape_cast %574 : vector<1x1x4xf32> to vector<4xf32>
    %576 = vector.shape_cast %575 : vector<4xf32> to vector<1x1x4xf32>
    %577 = vector.broadcast %576 : vector<1x1x4xf32> to vector<8x16x4xf32>
    %578 = arith.mulf %573, %577 : vector<8x16x4xf32>
    %579 = arith.addf %572, %578 : vector<8x16x4xf32>
    %580 = vector.extract_strided_slice %537 {offsets = [0, 6, 0], sizes = [8, 16, 4], strides = [1, 1, 1]} : vector<8x22x4xf32> to vector<8x16x4xf32>
    %581 = vector.extract_strided_slice %5 {offsets = [2, 6, 0], sizes = [1, 1, 4], strides = [1, 1, 1]} : vector<7x7x4xf32> to vector<1x1x4xf32>
    %582 = vector.shape_cast %581 : vector<1x1x4xf32> to vector<4xf32>
    %583 = vector.shape_cast %582 : vector<4xf32> to vector<1x1x4xf32>
    %584 = vector.broadcast %583 : vector<1x1x4xf32> to vector<8x16x4xf32>
    %585 = arith.mulf %580, %584 : vector<8x16x4xf32>
    %586 = arith.addf %579, %585 : vector<8x16x4xf32>
    %587 = vector.extract_strided_slice %435 {offsets = [3, 0, 0], sizes = [8, 22, 4], strides = [1, 1, 1]} : vector<14x22x4xf32> to vector<8x22x4xf32>
    %588 = vector.extract_strided_slice %587 {offsets = [0, 0, 0], sizes = [8, 16, 4], strides = [1, 1, 1]} : vector<8x22x4xf32> to vector<8x16x4xf32>
    %589 = vector.extract_strided_slice %5 {offsets = [3, 0, 0], sizes = [1, 1, 4], strides = [1, 1, 1]} : vector<7x7x4xf32> to vector<1x1x4xf32>
    %590 = vector.shape_cast %589 : vector<1x1x4xf32> to vector<4xf32>
    %591 = vector.shape_cast %590 : vector<4xf32> to vector<1x1x4xf32>
    %592 = vector.broadcast %591 : vector<1x1x4xf32> to vector<8x16x4xf32>
    %593 = arith.mulf %588, %592 : vector<8x16x4xf32>
    %594 = arith.addf %586, %593 : vector<8x16x4xf32>
    %595 = vector.extract_strided_slice %587 {offsets = [0, 1, 0], sizes = [8, 16, 4], strides = [1, 1, 1]} : vector<8x22x4xf32> to vector<8x16x4xf32>
    %596 = vector.extract_strided_slice %5 {offsets = [3, 1, 0], sizes = [1, 1, 4], strides = [1, 1, 1]} : vector<7x7x4xf32> to vector<1x1x4xf32>
    %597 = vector.shape_cast %596 : vector<1x1x4xf32> to vector<4xf32>
    %598 = vector.shape_cast %597 : vector<4xf32> to vector<1x1x4xf32>
    %599 = vector.broadcast %598 : vector<1x1x4xf32> to vector<8x16x4xf32>
    %600 = arith.mulf %595, %599 : vector<8x16x4xf32>
    %601 = arith.addf %594, %600 : vector<8x16x4xf32>
    %602 = vector.extract_strided_slice %587 {offsets = [0, 2, 0], sizes = [8, 16, 4], strides = [1, 1, 1]} : vector<8x22x4xf32> to vector<8x16x4xf32>
    %603 = vector.extract_strided_slice %5 {offsets = [3, 2, 0], sizes = [1, 1, 4], strides = [1, 1, 1]} : vector<7x7x4xf32> to vector<1x1x4xf32>
    %604 = vector.shape_cast %603 : vector<1x1x4xf32> to vector<4xf32>
    %605 = vector.shape_cast %604 : vector<4xf32> to vector<1x1x4xf32>
    %606 = vector.broadcast %605 : vector<1x1x4xf32> to vector<8x16x4xf32>
    %607 = arith.mulf %602, %606 : vector<8x16x4xf32>
    %608 = arith.addf %601, %607 : vector<8x16x4xf32>
    %609 = vector.extract_strided_slice %587 {offsets = [0, 3, 0], sizes = [8, 16, 4], strides = [1, 1, 1]} : vector<8x22x4xf32> to vector<8x16x4xf32>
    %610 = vector.extract_strided_slice %5 {offsets = [3, 3, 0], sizes = [1, 1, 4], strides = [1, 1, 1]} : vector<7x7x4xf32> to vector<1x1x4xf32>
    %611 = vector.shape_cast %610 : vector<1x1x4xf32> to vector<4xf32>
    %612 = vector.shape_cast %611 : vector<4xf32> to vector<1x1x4xf32>
    %613 = vector.broadcast %612 : vector<1x1x4xf32> to vector<8x16x4xf32>
    %614 = arith.mulf %609, %613 : vector<8x16x4xf32>
    %615 = arith.addf %608, %614 : vector<8x16x4xf32>
    %616 = vector.extract_strided_slice %587 {offsets = [0, 4, 0], sizes = [8, 16, 4], strides = [1, 1, 1]} : vector<8x22x4xf32> to vector<8x16x4xf32>
    %617 = vector.extract_strided_slice %5 {offsets = [3, 4, 0], sizes = [1, 1, 4], strides = [1, 1, 1]} : vector<7x7x4xf32> to vector<1x1x4xf32>
    %618 = vector.shape_cast %617 : vector<1x1x4xf32> to vector<4xf32>
    %619 = vector.shape_cast %618 : vector<4xf32> to vector<1x1x4xf32>
    %620 = vector.broadcast %619 : vector<1x1x4xf32> to vector<8x16x4xf32>
    %621 = arith.mulf %616, %620 : vector<8x16x4xf32>
    %622 = arith.addf %615, %621 : vector<8x16x4xf32>
    %623 = vector.extract_strided_slice %587 {offsets = [0, 5, 0], sizes = [8, 16, 4], strides = [1, 1, 1]} : vector<8x22x4xf32> to vector<8x16x4xf32>
    %624 = vector.extract_strided_slice %5 {offsets = [3, 5, 0], sizes = [1, 1, 4], strides = [1, 1, 1]} : vector<7x7x4xf32> to vector<1x1x4xf32>
    %625 = vector.shape_cast %624 : vector<1x1x4xf32> to vector<4xf32>
    %626 = vector.shape_cast %625 : vector<4xf32> to vector<1x1x4xf32>
    %627 = vector.broadcast %626 : vector<1x1x4xf32> to vector<8x16x4xf32>
    %628 = arith.mulf %623, %627 : vector<8x16x4xf32>
    %629 = arith.addf %622, %628 : vector<8x16x4xf32>
    %630 = vector.extract_strided_slice %587 {offsets = [0, 6, 0], sizes = [8, 16, 4], strides = [1, 1, 1]} : vector<8x22x4xf32> to vector<8x16x4xf32>
    %631 = vector.extract_strided_slice %5 {offsets = [3, 6, 0], sizes = [1, 1, 4], strides = [1, 1, 1]} : vector<7x7x4xf32> to vector<1x1x4xf32>
    %632 = vector.shape_cast %631 : vector<1x1x4xf32> to vector<4xf32>
    %633 = vector.shape_cast %632 : vector<4xf32> to vector<1x1x4xf32>
    %634 = vector.broadcast %633 : vector<1x1x4xf32> to vector<8x16x4xf32>
    %635 = arith.mulf %630, %634 : vector<8x16x4xf32>
    %636 = arith.addf %629, %635 : vector<8x16x4xf32>
    %637 = vector.extract_strided_slice %435 {offsets = [4, 0, 0], sizes = [8, 22, 4], strides = [1, 1, 1]} : vector<14x22x4xf32> to vector<8x22x4xf32>
    %638 = vector.extract_strided_slice %637 {offsets = [0, 0, 0], sizes = [8, 16, 4], strides = [1, 1, 1]} : vector<8x22x4xf32> to vector<8x16x4xf32>
    %639 = vector.extract_strided_slice %5 {offsets = [4, 0, 0], sizes = [1, 1, 4], strides = [1, 1, 1]} : vector<7x7x4xf32> to vector<1x1x4xf32>
    %640 = vector.shape_cast %639 : vector<1x1x4xf32> to vector<4xf32>
    %641 = vector.shape_cast %640 : vector<4xf32> to vector<1x1x4xf32>
    %642 = vector.broadcast %641 : vector<1x1x4xf32> to vector<8x16x4xf32>
    %643 = arith.mulf %638, %642 : vector<8x16x4xf32>
    %644 = arith.addf %636, %643 : vector<8x16x4xf32>
    %645 = vector.extract_strided_slice %637 {offsets = [0, 1, 0], sizes = [8, 16, 4], strides = [1, 1, 1]} : vector<8x22x4xf32> to vector<8x16x4xf32>
    %646 = vector.extract_strided_slice %5 {offsets = [4, 1, 0], sizes = [1, 1, 4], strides = [1, 1, 1]} : vector<7x7x4xf32> to vector<1x1x4xf32>
    %647 = vector.shape_cast %646 : vector<1x1x4xf32> to vector<4xf32>
    %648 = vector.shape_cast %647 : vector<4xf32> to vector<1x1x4xf32>
    %649 = vector.broadcast %648 : vector<1x1x4xf32> to vector<8x16x4xf32>
    %650 = arith.mulf %645, %649 : vector<8x16x4xf32>
    %651 = arith.addf %644, %650 : vector<8x16x4xf32>
    %652 = vector.extract_strided_slice %637 {offsets = [0, 2, 0], sizes = [8, 16, 4], strides = [1, 1, 1]} : vector<8x22x4xf32> to vector<8x16x4xf32>
    %653 = vector.extract_strided_slice %5 {offsets = [4, 2, 0], sizes = [1, 1, 4], strides = [1, 1, 1]} : vector<7x7x4xf32> to vector<1x1x4xf32>
    %654 = vector.shape_cast %653 : vector<1x1x4xf32> to vector<4xf32>
    %655 = vector.shape_cast %654 : vector<4xf32> to vector<1x1x4xf32>
    %656 = vector.broadcast %655 : vector<1x1x4xf32> to vector<8x16x4xf32>
    %657 = arith.mulf %652, %656 : vector<8x16x4xf32>
    %658 = arith.addf %651, %657 : vector<8x16x4xf32>
    %659 = vector.extract_strided_slice %637 {offsets = [0, 3, 0], sizes = [8, 16, 4], strides = [1, 1, 1]} : vector<8x22x4xf32> to vector<8x16x4xf32>
    %660 = vector.extract_strided_slice %5 {offsets = [4, 3, 0], sizes = [1, 1, 4], strides = [1, 1, 1]} : vector<7x7x4xf32> to vector<1x1x4xf32>
    %661 = vector.shape_cast %660 : vector<1x1x4xf32> to vector<4xf32>
    %662 = vector.shape_cast %661 : vector<4xf32> to vector<1x1x4xf32>
    %663 = vector.broadcast %662 : vector<1x1x4xf32> to vector<8x16x4xf32>
    %664 = arith.mulf %659, %663 : vector<8x16x4xf32>
    %665 = arith.addf %658, %664 : vector<8x16x4xf32>
    %666 = vector.extract_strided_slice %637 {offsets = [0, 4, 0], sizes = [8, 16, 4], strides = [1, 1, 1]} : vector<8x22x4xf32> to vector<8x16x4xf32>
    %667 = vector.extract_strided_slice %5 {offsets = [4, 4, 0], sizes = [1, 1, 4], strides = [1, 1, 1]} : vector<7x7x4xf32> to vector<1x1x4xf32>
    %668 = vector.shape_cast %667 : vector<1x1x4xf32> to vector<4xf32>
    %669 = vector.shape_cast %668 : vector<4xf32> to vector<1x1x4xf32>
    %670 = vector.broadcast %669 : vector<1x1x4xf32> to vector<8x16x4xf32>
    %671 = arith.mulf %666, %670 : vector<8x16x4xf32>
    %672 = arith.addf %665, %671 : vector<8x16x4xf32>
    %673 = vector.extract_strided_slice %637 {offsets = [0, 5, 0], sizes = [8, 16, 4], strides = [1, 1, 1]} : vector<8x22x4xf32> to vector<8x16x4xf32>
    %674 = vector.extract_strided_slice %5 {offsets = [4, 5, 0], sizes = [1, 1, 4], strides = [1, 1, 1]} : vector<7x7x4xf32> to vector<1x1x4xf32>
    %675 = vector.shape_cast %674 : vector<1x1x4xf32> to vector<4xf32>
    %676 = vector.shape_cast %675 : vector<4xf32> to vector<1x1x4xf32>
    %677 = vector.broadcast %676 : vector<1x1x4xf32> to vector<8x16x4xf32>
    %678 = arith.mulf %673, %677 : vector<8x16x4xf32>
    %679 = arith.addf %672, %678 : vector<8x16x4xf32>
    %680 = vector.extract_strided_slice %637 {offsets = [0, 6, 0], sizes = [8, 16, 4], strides = [1, 1, 1]} : vector<8x22x4xf32> to vector<8x16x4xf32>
    %681 = vector.extract_strided_slice %5 {offsets = [4, 6, 0], sizes = [1, 1, 4], strides = [1, 1, 1]} : vector<7x7x4xf32> to vector<1x1x4xf32>
    %682 = vector.shape_cast %681 : vector<1x1x4xf32> to vector<4xf32>
    %683 = vector.shape_cast %682 : vector<4xf32> to vector<1x1x4xf32>
    %684 = vector.broadcast %683 : vector<1x1x4xf32> to vector<8x16x4xf32>
    %685 = arith.mulf %680, %684 : vector<8x16x4xf32>
    %686 = arith.addf %679, %685 : vector<8x16x4xf32>
    %687 = vector.extract_strided_slice %435 {offsets = [5, 0, 0], sizes = [8, 22, 4], strides = [1, 1, 1]} : vector<14x22x4xf32> to vector<8x22x4xf32>
    %688 = vector.extract_strided_slice %687 {offsets = [0, 0, 0], sizes = [8, 16, 4], strides = [1, 1, 1]} : vector<8x22x4xf32> to vector<8x16x4xf32>
    %689 = vector.extract_strided_slice %5 {offsets = [5, 0, 0], sizes = [1, 1, 4], strides = [1, 1, 1]} : vector<7x7x4xf32> to vector<1x1x4xf32>
    %690 = vector.shape_cast %689 : vector<1x1x4xf32> to vector<4xf32>
    %691 = vector.shape_cast %690 : vector<4xf32> to vector<1x1x4xf32>
    %692 = vector.broadcast %691 : vector<1x1x4xf32> to vector<8x16x4xf32>
    %693 = arith.mulf %688, %692 : vector<8x16x4xf32>
    %694 = arith.addf %686, %693 : vector<8x16x4xf32>
    %695 = vector.extract_strided_slice %687 {offsets = [0, 1, 0], sizes = [8, 16, 4], strides = [1, 1, 1]} : vector<8x22x4xf32> to vector<8x16x4xf32>
    %696 = vector.extract_strided_slice %5 {offsets = [5, 1, 0], sizes = [1, 1, 4], strides = [1, 1, 1]} : vector<7x7x4xf32> to vector<1x1x4xf32>
    %697 = vector.shape_cast %696 : vector<1x1x4xf32> to vector<4xf32>
    %698 = vector.shape_cast %697 : vector<4xf32> to vector<1x1x4xf32>
    %699 = vector.broadcast %698 : vector<1x1x4xf32> to vector<8x16x4xf32>
    %700 = arith.mulf %695, %699 : vector<8x16x4xf32>
    %701 = arith.addf %694, %700 : vector<8x16x4xf32>
    %702 = vector.extract_strided_slice %687 {offsets = [0, 2, 0], sizes = [8, 16, 4], strides = [1, 1, 1]} : vector<8x22x4xf32> to vector<8x16x4xf32>
    %703 = vector.extract_strided_slice %5 {offsets = [5, 2, 0], sizes = [1, 1, 4], strides = [1, 1, 1]} : vector<7x7x4xf32> to vector<1x1x4xf32>
    %704 = vector.shape_cast %703 : vector<1x1x4xf32> to vector<4xf32>
    %705 = vector.shape_cast %704 : vector<4xf32> to vector<1x1x4xf32>
    %706 = vector.broadcast %705 : vector<1x1x4xf32> to vector<8x16x4xf32>
    %707 = arith.mulf %702, %706 : vector<8x16x4xf32>
    %708 = arith.addf %701, %707 : vector<8x16x4xf32>
    %709 = vector.extract_strided_slice %687 {offsets = [0, 3, 0], sizes = [8, 16, 4], strides = [1, 1, 1]} : vector<8x22x4xf32> to vector<8x16x4xf32>
    %710 = vector.extract_strided_slice %5 {offsets = [5, 3, 0], sizes = [1, 1, 4], strides = [1, 1, 1]} : vector<7x7x4xf32> to vector<1x1x4xf32>
    %711 = vector.shape_cast %710 : vector<1x1x4xf32> to vector<4xf32>
    %712 = vector.shape_cast %711 : vector<4xf32> to vector<1x1x4xf32>
    %713 = vector.broadcast %712 : vector<1x1x4xf32> to vector<8x16x4xf32>
    %714 = arith.mulf %709, %713 : vector<8x16x4xf32>
    %715 = arith.addf %708, %714 : vector<8x16x4xf32>
    %716 = vector.extract_strided_slice %687 {offsets = [0, 4, 0], sizes = [8, 16, 4], strides = [1, 1, 1]} : vector<8x22x4xf32> to vector<8x16x4xf32>
    %717 = vector.extract_strided_slice %5 {offsets = [5, 4, 0], sizes = [1, 1, 4], strides = [1, 1, 1]} : vector<7x7x4xf32> to vector<1x1x4xf32>
    %718 = vector.shape_cast %717 : vector<1x1x4xf32> to vector<4xf32>
    %719 = vector.shape_cast %718 : vector<4xf32> to vector<1x1x4xf32>
    %720 = vector.broadcast %719 : vector<1x1x4xf32> to vector<8x16x4xf32>
    %721 = arith.mulf %716, %720 : vector<8x16x4xf32>
    %722 = arith.addf %715, %721 : vector<8x16x4xf32>
    %723 = vector.extract_strided_slice %687 {offsets = [0, 5, 0], sizes = [8, 16, 4], strides = [1, 1, 1]} : vector<8x22x4xf32> to vector<8x16x4xf32>
    %724 = vector.extract_strided_slice %5 {offsets = [5, 5, 0], sizes = [1, 1, 4], strides = [1, 1, 1]} : vector<7x7x4xf32> to vector<1x1x4xf32>
    %725 = vector.shape_cast %724 : vector<1x1x4xf32> to vector<4xf32>
    %726 = vector.shape_cast %725 : vector<4xf32> to vector<1x1x4xf32>
    %727 = vector.broadcast %726 : vector<1x1x4xf32> to vector<8x16x4xf32>
    %728 = arith.mulf %723, %727 : vector<8x16x4xf32>
    %729 = arith.addf %722, %728 : vector<8x16x4xf32>
    %730 = vector.extract_strided_slice %687 {offsets = [0, 6, 0], sizes = [8, 16, 4], strides = [1, 1, 1]} : vector<8x22x4xf32> to vector<8x16x4xf32>
    %731 = vector.extract_strided_slice %5 {offsets = [5, 6, 0], sizes = [1, 1, 4], strides = [1, 1, 1]} : vector<7x7x4xf32> to vector<1x1x4xf32>
    %732 = vector.shape_cast %731 : vector<1x1x4xf32> to vector<4xf32>
    %733 = vector.shape_cast %732 : vector<4xf32> to vector<1x1x4xf32>
    %734 = vector.broadcast %733 : vector<1x1x4xf32> to vector<8x16x4xf32>
    %735 = arith.mulf %730, %734 : vector<8x16x4xf32>
    %736 = arith.addf %729, %735 : vector<8x16x4xf32>
    %737 = vector.extract_strided_slice %435 {offsets = [6, 0, 0], sizes = [8, 22, 4], strides = [1, 1, 1]} : vector<14x22x4xf32> to vector<8x22x4xf32>
    %738 = vector.extract_strided_slice %737 {offsets = [0, 0, 0], sizes = [8, 16, 4], strides = [1, 1, 1]} : vector<8x22x4xf32> to vector<8x16x4xf32>
    %739 = vector.extract_strided_slice %5 {offsets = [6, 0, 0], sizes = [1, 1, 4], strides = [1, 1, 1]} : vector<7x7x4xf32> to vector<1x1x4xf32>
    %740 = vector.shape_cast %739 : vector<1x1x4xf32> to vector<4xf32>
    %741 = vector.shape_cast %740 : vector<4xf32> to vector<1x1x4xf32>
    %742 = vector.broadcast %741 : vector<1x1x4xf32> to vector<8x16x4xf32>
    %743 = arith.mulf %738, %742 : vector<8x16x4xf32>
    %744 = arith.addf %736, %743 : vector<8x16x4xf32>
    %745 = vector.extract_strided_slice %737 {offsets = [0, 1, 0], sizes = [8, 16, 4], strides = [1, 1, 1]} : vector<8x22x4xf32> to vector<8x16x4xf32>
    %746 = vector.extract_strided_slice %5 {offsets = [6, 1, 0], sizes = [1, 1, 4], strides = [1, 1, 1]} : vector<7x7x4xf32> to vector<1x1x4xf32>
    %747 = vector.shape_cast %746 : vector<1x1x4xf32> to vector<4xf32>
    %748 = vector.shape_cast %747 : vector<4xf32> to vector<1x1x4xf32>
    %749 = vector.broadcast %748 : vector<1x1x4xf32> to vector<8x16x4xf32>
    %750 = arith.mulf %745, %749 : vector<8x16x4xf32>
    %751 = arith.addf %744, %750 : vector<8x16x4xf32>
    %752 = vector.extract_strided_slice %737 {offsets = [0, 2, 0], sizes = [8, 16, 4], strides = [1, 1, 1]} : vector<8x22x4xf32> to vector<8x16x4xf32>
    %753 = vector.extract_strided_slice %5 {offsets = [6, 2, 0], sizes = [1, 1, 4], strides = [1, 1, 1]} : vector<7x7x4xf32> to vector<1x1x4xf32>
    %754 = vector.shape_cast %753 : vector<1x1x4xf32> to vector<4xf32>
    %755 = vector.shape_cast %754 : vector<4xf32> to vector<1x1x4xf32>
    %756 = vector.broadcast %755 : vector<1x1x4xf32> to vector<8x16x4xf32>
    %757 = arith.mulf %752, %756 : vector<8x16x4xf32>
    %758 = arith.addf %751, %757 : vector<8x16x4xf32>
    %759 = vector.extract_strided_slice %737 {offsets = [0, 3, 0], sizes = [8, 16, 4], strides = [1, 1, 1]} : vector<8x22x4xf32> to vector<8x16x4xf32>
    %760 = vector.extract_strided_slice %5 {offsets = [6, 3, 0], sizes = [1, 1, 4], strides = [1, 1, 1]} : vector<7x7x4xf32> to vector<1x1x4xf32>
    %761 = vector.shape_cast %760 : vector<1x1x4xf32> to vector<4xf32>
    %762 = vector.shape_cast %761 : vector<4xf32> to vector<1x1x4xf32>
    %763 = vector.broadcast %762 : vector<1x1x4xf32> to vector<8x16x4xf32>
    %764 = arith.mulf %759, %763 : vector<8x16x4xf32>
    %765 = arith.addf %758, %764 : vector<8x16x4xf32>
    %766 = vector.extract_strided_slice %737 {offsets = [0, 4, 0], sizes = [8, 16, 4], strides = [1, 1, 1]} : vector<8x22x4xf32> to vector<8x16x4xf32>
    %767 = vector.extract_strided_slice %5 {offsets = [6, 4, 0], sizes = [1, 1, 4], strides = [1, 1, 1]} : vector<7x7x4xf32> to vector<1x1x4xf32>
    %768 = vector.shape_cast %767 : vector<1x1x4xf32> to vector<4xf32>
    %769 = vector.shape_cast %768 : vector<4xf32> to vector<1x1x4xf32>
    %770 = vector.broadcast %769 : vector<1x1x4xf32> to vector<8x16x4xf32>
    %771 = arith.mulf %766, %770 : vector<8x16x4xf32>
    %772 = arith.addf %765, %771 : vector<8x16x4xf32>
    %773 = vector.extract_strided_slice %737 {offsets = [0, 5, 0], sizes = [8, 16, 4], strides = [1, 1, 1]} : vector<8x22x4xf32> to vector<8x16x4xf32>
    %774 = vector.extract_strided_slice %5 {offsets = [6, 5, 0], sizes = [1, 1, 4], strides = [1, 1, 1]} : vector<7x7x4xf32> to vector<1x1x4xf32>
    %775 = vector.shape_cast %774 : vector<1x1x4xf32> to vector<4xf32>
    %776 = vector.shape_cast %775 : vector<4xf32> to vector<1x1x4xf32>
    %777 = vector.broadcast %776 : vector<1x1x4xf32> to vector<8x16x4xf32>
    %778 = arith.mulf %773, %777 : vector<8x16x4xf32>
    %779 = arith.addf %772, %778 : vector<8x16x4xf32>
    %780 = vector.extract_strided_slice %737 {offsets = [0, 6, 0], sizes = [8, 16, 4], strides = [1, 1, 1]} : vector<8x22x4xf32> to vector<8x16x4xf32>
    %781 = vector.extract_strided_slice %5 {offsets = [6, 6, 0], sizes = [1, 1, 4], strides = [1, 1, 1]} : vector<7x7x4xf32> to vector<1x1x4xf32>
    %782 = vector.shape_cast %781 : vector<1x1x4xf32> to vector<4xf32>
    %783 = vector.shape_cast %782 : vector<4xf32> to vector<1x1x4xf32>
    %784 = vector.broadcast %783 : vector<1x1x4xf32> to vector<8x16x4xf32>
    %785 = arith.mulf %780, %784 : vector<8x16x4xf32>
    %786 = arith.addf %779, %785 : vector<8x16x4xf32>
    %787 = vector.shape_cast %7 : vector<4xf32> to vector<1x1x4xf32>
    %788 = vector.broadcast %787 : vector<1x1x4xf32> to vector<8x16x4xf32>
    %789 = arith.addf %786, %788 : vector<8x16x4xf32>
    %cst_53 = arith.constant dense<0.000000e+00> : vector<8x16xf32>
    %790 = vector.multi_reduction <add>, %789, %cst_53 [2] : vector<8x16x4xf32> to vector<8x16xf32>
    %791 = vector.shape_cast %790 : vector<8x16xf32> to vector<8x16x1xf32>
    %cst_54 = arith.constant 4.000000e+00 : f32
    %792 = vector.broadcast %cst_54 : f32 to vector<8x16x1xf32>
    %793 = arith.divf %791, %792 : vector<8x16x1xf32>
    %794 = vector.broadcast %793 : vector<8x16x1xf32> to vector<8x16x4xf32>
    %795 = arith.subf %789, %794 : vector<8x16x4xf32>
    %796 = arith.mulf %795, %795 : vector<8x16x4xf32>
    %cst_55 = arith.constant dense<0.000000e+00> : vector<8x16xf32>
    %797 = vector.multi_reduction <add>, %796, %cst_55 [2] : vector<8x16x4xf32> to vector<8x16xf32>
    %798 = vector.shape_cast %797 : vector<8x16xf32> to vector<8x16x1xf32>
    %cst_56 = arith.constant 4.000000e+00 : f32
    %799 = vector.broadcast %cst_56 : f32 to vector<8x16x1xf32>
    %800 = arith.divf %798, %799 : vector<8x16x1xf32>
    %801 = vector.broadcast %793 : vector<8x16x1xf32> to vector<8x16x4xf32>
    %802 = arith.subf %789, %801 : vector<8x16x4xf32>
    %803 = math.sqrt %800 : vector<8x16x1xf32>
    %cst_57 = arith.constant 9.99999997E-7 : f32
    %804 = vector.broadcast %cst_57 : f32 to vector<8x16x1xf32>
    %805 = arith.addf %803, %804 : vector<8x16x1xf32>
    %806 = vector.broadcast %805 : vector<8x16x1xf32> to vector<8x16x4xf32>
    %807 = arith.divf %802, %806 : vector<8x16x4xf32>
    %808 = vector.shape_cast %9 : vector<4xf32> to vector<1x1x4xf32>
    %809 = vector.broadcast %808 : vector<1x1x4xf32> to vector<8x16x4xf32>
    %810 = arith.mulf %807, %809 : vector<8x16x4xf32>
    %811 = vector.shape_cast %11 : vector<4xf32> to vector<1x1x4xf32>
    %812 = vector.broadcast %811 : vector<1x1x4xf32> to vector<8x16x4xf32>
    %813 = arith.addf %810, %812 : vector<8x16x4xf32>
    %814 = vector.shape_cast %813 : vector<8x16x4xf32> to vector<128x4xf32>
    %815 = arith.truncf %814 : vector<128x4xf32> to vector<128x4xbf16>
    %cst_58 = arith.constant dense<0.000000e+00> : vector<128x16xf32>
    %816 = tpu.matmul %815, %12, %cst_58 {dimension_numbers = #tpu.dot_dimension_numbers<[1], [0], [0], [1], [0, 0, 1, 1], [], []>} : vector<128x4xbf16>, vector<4x16xbf16>, vector<128x16xf32> -> vector<128x16xf32>
    %817 = vector.shape_cast %14 : vector<16xf32> to vector<1x16xf32>
    %818 = vector.broadcast %817 : vector<1x16xf32> to vector<128x16xf32>
    %819 = arith.addf %816, %818 : vector<128x16xf32>
    %cst_59 = arith.constant -1.702000e+00 : f32
    %820 = vector.broadcast %cst_59 : f32 to vector<128x16xf32>
    %821 = arith.mulf %820, %819 : vector<128x16xf32>
    %822 = math.exp %821 : vector<128x16xf32>
    %cst_60 = arith.constant 1.000000e+00 : f32
    %823 = vector.broadcast %cst_60 : f32 to vector<128x16xf32>
    %824 = arith.addf %823, %822 : vector<128x16xf32>
    %825 = tpu.reciprocal %824 {approx = true} : vector<128x16xf32> -> vector<128x16xf32>
    %826 = arith.mulf %819, %825 : vector<128x16xf32>
    %827 = arith.truncf %826 : vector<128x16xf32> to vector<128x16xbf16>
    %cst_61 = arith.constant dense<0.000000e+00> : vector<128x4xf32>
    %828 = tpu.matmul %827, %15, %cst_61 {dimension_numbers = #tpu.dot_dimension_numbers<[1], [0], [0], [1], [0, 0, 1, 1], [], []>} : vector<128x16xbf16>, vector<16x4xbf16>, vector<128x4xf32> -> vector<128x4xf32>
    %829 = vector.shape_cast %17 : vector<4xf32> to vector<1x4xf32>
    %830 = vector.broadcast %829 : vector<1x4xf32> to vector<128x4xf32>
    %831 = arith.addf %828, %830 : vector<128x4xf32>
    %832 = vector.shape_cast %831 : vector<128x4xf32> to vector<8x16x4xf32>
    %833 = vector.shape_cast %19 : vector<4xf32> to vector<1x1x4xf32>
    %834 = vector.broadcast %833 : vector<1x1x4xf32> to vector<8x16x4xf32>
    %835 = arith.mulf %832, %834 : vector<8x16x4xf32>
    %c0_62 = arith.constant 0 : index
    %836 = arith.index_cast %433 : i32 to index
    %c0_63 = arith.constant 0 : index
    %c0_64 = arith.constant 0 : index
    %837 = vector.load %arg1[%c0_62, %836, %c0_63, %c0_64] : memref<1x16x16x4xf32, #tpu.memory_space<vmem>>, vector<1x8x16x4xf32>
    %838 = vector.shape_cast %837 : vector<1x8x16x4xf32> to vector<8x16x4xf32>
    %839 = arith.addf %838, %835 : vector<8x16x4xf32>
    %c0_65 = arith.constant 0 : index
    %840 = arith.index_cast %433 : i32 to index
    %c0_66 = arith.constant 0 : index
    %c0_67 = arith.constant 0 : index
    %841 = vector.load %arg11[%c0_65, %840, %c0_66, %c0_67] : memref<1x16x16x4xf32, #tpu.memory_space<vmem>>, vector<1x8x16x4xf32>
    %842 = vector.shape_cast %841 : vector<1x8x16x4xf32> to vector<8x16x4xf32>
    %843 = vector.shape_cast %839 : vector<8x16x4xf32> to vector<1x8x16x4xf32>
    tpu.vector_store %arg11[%c0_65, %840, %c0_66, %c0_67], %843 {strides = array<i32>} : memref<1x16x16x4xf32, #tpu.memory_space<vmem>>, vector<1x8x16x4xf32>,
    %c2_i32 = arith.constant 2 : i32
    return
  }
  func.func @transform_0(%arg0: i32) -> (i32, i32, i32, i32) {
    %c0_i32 = arith.constant 0 : i32
    %c0_i32_0 = arith.constant 0 : i32
    %c0_i32_1 = arith.constant 0 : i32
    %c0_i32_2 = arith.constant 0 : i32
    return %arg0, %c0_i32, %c0_i32_0, %c0_i32_1 : i32, i32, i32, i32
  }
  func.func @transform_1(%arg0: i32) -> (i32, i32, i32) {
    %c0_i32 = arith.constant 0 : i32
    %c0_i32_0 = arith.constant 0 : i32
    %c0_i32_1 = arith.constant 0 : i32
    %c0_i32_2 = arith.constant 0 : i32
    return %c0_i32, %c0_i32_0, %c0_i32_1 : i32, i32, i32
  }
  func.func @transform_2(%arg0: i32) -> (i32, i32, i32) {
    %c0_i32 = arith.constant 0 : i32
    %c0_i32_0 = arith.constant 0 : i32
    %c0_i32_1 = arith.constant 0 : i32
    %c0_i32_2 = arith.constant 0 : i32
    return %c0_i32, %c0_i32_0, %c0_i32_1 : i32, i32, i32
  }
  func.func @transform_3(%arg0: i32) -> (i32, i32, i32) {
    %c0_i32 = arith.constant 0 : i32
    %c0_i32_0 = arith.constant 0 : i32
    %c0_i32_1 = arith.constant 0 : i32
    %c0_i32_2 = arith.constant 0 : i32
    return %c0_i32, %c0_i32_0, %c0_i32_1 : i32, i32, i32
  }
  func.func @transform_4(%arg0: i32) -> (i32, i32, i32) {
    %c0_i32 = arith.constant 0 : i32
    %c0_i32_0 = arith.constant 0 : i32
    %c0_i32_1 = arith.constant 0 : i32
    %c0_i32_2 = arith.constant 0 : i32
    return %c0_i32, %c0_i32_0, %c0_i32_1 : i32, i32, i32
  }
  func.func @transform_5(%arg0: i32) -> (i32, i32) {
    %c0_i32 = arith.constant 0 : i32
    %c0_i32_0 = arith.constant 0 : i32
    %c0_i32_1 = arith.constant 0 : i32
    return %c0_i32, %c0_i32_0 : i32, i32
  }
  func.func @transform_6(%arg0: i32) -> (i32, i32) {
    %c0_i32 = arith.constant 0 : i32
    %c0_i32_0 = arith.constant 0 : i32
    %c0_i32_1 = arith.constant 0 : i32
    return %c0_i32, %c0_i32_0 : i32, i32
  }
  func.func @transform_7(%arg0: i32) -> (i32, i32) {
    %c0_i32 = arith.constant 0 : i32
    %c0_i32_0 = arith.constant 0 : i32
    %c0_i32_1 = arith.constant 0 : i32
    return %c0_i32, %c0_i32_0 : i32, i32
  }
  func.func @transform_8(%arg0: i32) -> (i32, i32) {
    %c0_i32 = arith.constant 0 : i32
    %c0_i32_0 = arith.constant 0 : i32
    %c0_i32_1 = arith.constant 0 : i32
    return %c0_i32, %c0_i32_0 : i32, i32
  }
  func.func @transform_9(%arg0: i32) -> (i32, i32, i32) {
    %c0_i32 = arith.constant 0 : i32
    %c0_i32_0 = arith.constant 0 : i32
    %c0_i32_1 = arith.constant 0 : i32
    %c0_i32_2 = arith.constant 0 : i32
    return %c0_i32, %c0_i32_0, %c0_i32_1 : i32, i32, i32
  }
  func.func @transform_10(%arg0: i32) -> (i32, i32, i32, i32) {
    %c0_i32 = arith.constant 0 : i32
    %c0_i32_0 = arith.constant 0 : i32
    %c0_i32_1 = arith.constant 0 : i32
    %c0_i32_2 = arith.constant 0 : i32
    return %arg0, %c0_i32, %c0_i32_0, %c0_i32_1 : i32, i32, i32, i32
  }
}

</mosaic_0001>

<llo_original>
// kernel: tpu_custom_call.1
$region0: #{tpu_custom_call.1}
  #allocation0 [shape = 'u32[]', space=smem, size = 0x4, offset = 0x4, fixed_abs, tag = 'smem constant byte address 0x4 - core index']
  #allocation1 [shape = 'u32[144,128]{1,0:T(1,128)}', space=vmem, size = 0x12000, scoped, tag = 'internal scratch']
  #allocation2 [shape = 'f32[22,22,4]{2,1,0:T(8,128)}', space=vmem, size = 0x42000, scoped, tag = 'scratch operand']
  %s0 = inlined_call_operand.vmem [shape: f32[2,16,16,4], index: 0, kind: input, shape index: {}]
  %s1 = inlined_call_operand.vmem [shape: f32[7,7,4], index: 1, kind: input, shape index: {}]
  %s2 = inlined_call_operand.vmem [shape: f32[1,1,4], index: 2, kind: input, shape index: {}]
  %s3 = inlined_call_operand.vmem [shape: f32[1,1,4], index: 3, kind: input, shape index: {}]
  %s4 = inlined_call_operand.vmem [shape: f32[1,1,4], index: 4, kind: input, shape index: {}]
  %s5 = inlined_call_operand.vmem [shape: bf16[4,16], index: 5, kind: input, shape index: {}]
  %s6 = inlined_call_operand.vmem [shape: f32[1,16], index: 6, kind: input, shape index: {}]
  %s7 = inlined_call_operand.vmem [shape: bf16[16,4], index: 7, kind: input, shape index: {}]
  %s8 = inlined_call_operand.vmem [shape: f32[1,4], index: 8, kind: input, shape index: {}]
  %s9 = inlined_call_operand.vmem [shape: f32[1,1,4], index: 9, kind: input, shape index: {}]
  %s10 = inlined_call_operand.vmem [shape: f32[2,16,16,4], index: 10, kind: output, shape index: {}]
  %s11 = sld [smem:[#allocation0]]
  $region73: #{tpu_custom_call.1} parent=0
    _
  %s13 = ssub.s32 1, %s11
  %s14 = scalar_select 0, %s13, %s11
  loop: start=0, step=1, limit=4
  $region2: #{tpu_custom_call.1} parent=0 // loop_pre_header
    _
  $region3: #{tpu_custom_call.1} parent=0 // loop_header
    %s16 = sphi 0, %s20
    %p17 = scmp.ge.s32.totalorder %s16, 4
    %s26 = sphi 0, %s28
    %s29 = sphi 0, %s26
    %s30 = sphi 0, %s29
    %s46 = sphi 0, %s30
    %s50 = sphi 0, %s50
    %s52 = sphi 0, %s50
    %s53 = sphi 0, %s52
    %s67 = sphi 0, %s53
    %s71 = sphi 0, %s71
    %s73 = sphi 0, %s71
    %s74 = sphi 0, %s73
    %s88 = sphi 0, %s74
    %s92 = sphi 0, %s92
    %s94 = sphi 0, %s92
    %s95 = sphi 0, %s94
    %s109 = sphi 0, %s95
    %s113 = sphi 0, %s113
    %s115 = sphi 0, %s113
    %s116 = sphi 0, %s115
    %s130 = sphi 0, %s116
    %s134 = sphi 0, %s134
    %s136 = sphi 0, %s134
    %s137 = sphi 0, %s136
    %s151 = sphi 0, %s137
    %s155 = sphi 0, %s155
    %s157 = sphi 0, %s155
    %s158 = sphi 0, %s157
    %s172 = sphi 0, %s158
    %s176 = sphi 0, %s176
    %s178 = sphi 0, %s176
    %s179 = sphi 0, %s178
    %s193 = sphi 0, %s179
    %s197 = sphi 0, %s197
    %s199 = sphi 0, %s197
    %s200 = sphi 0, %s199
    %s214 = sphi 0, %s200
    %s218 = sphi 0, %s218
    %s220 = sphi 0, %s218
    %s221 = sphi 0, %s220
    %s235 = sphi 0, %s221
    %s241 = sphi 0, %s243
    %s244 = sphi 0, %s241
    %s245 = sphi 0, %s244
    %s261 = sphi 0, %s245
  $region4: #{tpu_custom_call.1} parent=0 // loop_header_branch
    %19 = sbr.rel (%p17) target = $region8
  $region5: #{tpu_custom_call.1} parent=0 // loop_body
    %s21 = ssub.s32 %s16, 1
    %s22 = ssub.s32 %s16, 2
    %s23 = sadd.s32 %s16, 1
    %s24 = ssub.s32 %s16, %s23
    %p25 = scmp.eq.s32.totalorder %s24, 0
    %s27 = sadd.s32 %s26, 1
    %s28 = scalar_select %p25, %s26, %s27
    %p31 = pneg %p25
    %p32 = scmp.eq.s32.totalorder %s16, 1
    %p33 = por %p31, %p32
    %p34 = scmp.ne.s32.totalorder %s26, %s29
    %p35 = scmp.eq.s32.totalorder %s16, 0
    %p36 = por %p34, %p35
    %p37 = scmp.ne.s32.totalorder %s26, %s29
    %p38 = scmp.eq.s32.totalorder %s21, 1
    %p39 = por %p37, %p38
    %p40 = scmp.ne.s32.totalorder %s29, %s30
    %p41 = scmp.eq.s32.totalorder %s21, 0
    %p42 = por %p40, %p41
    %p43 = scmp.ne.s32.totalorder %s29, %s30
    %p44 = scmp.eq.s32.totalorder %s22, 1
    %p45 = por %p43, %p44
    %p47 = scmp.ne.s32.totalorder %s30, %s46
    %p48 = scmp.eq.s32.totalorder %s22, 0
    %p49 = por %p47, %p48
    %s51 = sadd.s32 %s50, 1
    %p54 = scmp.eq.s32.totalorder %s16, 1
    %p55 = scmp.ne.s32.totalorder %s50, %s52
    %p56 = scmp.eq.s32.totalorder %s16, 0
    %p57 = por %p55, %p56
    %p58 = scmp.ne.s32.totalorder %s50, %s52
    %p59 = scmp.eq.s32.totalorder %s21, 1
    %p60 = por %p58, %p59
    %p61 = scmp.ne.s32.totalorder %s52, %s53
    %p62 = scmp.eq.s32.totalorder %s21, 0
    %p63 = por %p61, %p62
    %p64 = scmp.ne.s32.totalorder %s52, %s53
    %p65 = scmp.eq.s32.totalorder %s22, 1
    %p66 = por %p64, %p65
    %p68 = scmp.ne.s32.totalorder %s53, %s67
    %p69 = scmp.eq.s32.totalorder %s22, 0
    %p70 = por %p68, %p69
    %s72 = sadd.s32 %s71, 1
    %p75 = scmp.eq.s32.totalorder %s16, 1
    %p76 = scmp.ne.s32.totalorder %s71, %s73
    %p77 = scmp.eq.s32.totalorder %s16, 0
    %p78 = por %p76, %p77
    %p79 = scmp.ne.s32.totalorder %s71, %s73
    %p80 = scmp.eq.s32.totalorder %s21, 1
    %p81 = por %p79, %p80
    %p82 = scmp.ne.s32.totalorder %s73, %s74
    %p83 = scmp.eq.s32.totalorder %s21, 0
    %p84 = por %p82, %p83
    %p85 = scmp.ne.s32.totalorder %s73, %s74
    %p86 = scmp.eq.s32.totalorder %s22, 1
    %p87 = por %p85, %p86
    %p89 = scmp.ne.s32.totalorder %s74, %s88
    %p90 = scmp.eq.s32.totalorder %s22, 0
    %p91 = por %p89, %p90
    %s93 = sadd.s32 %s92, 1
    %p96 = scmp.eq.s32.totalorder %s16, 1
    %p97 = scmp.ne.s32.totalorder %s92, %s94
    %p98 = scmp.eq.s32.totalorder %s16, 0
    %p99 = por %p97, %p98
    %p100 = scmp.ne.s32.totalorder %s92, %s94
    %p101 = scmp.eq.s32.totalorder %s21, 1
    %p102 = por %p100, %p101
    %p103 = scmp.ne.s32.totalorder %s94, %s95
    %p104 = scmp.eq.s32.totalorder %s21, 0
    %p105 = por %p103, %p104
    %p106 = scmp.ne.s32.totalorder %s94, %s95
    %p107 = scmp.eq.s32.totalorder %s22, 1
    %p108 = por %p106, %p107
    %p110 = scmp.ne.s32.totalorder %s95, %s109
    %p111 = scmp.eq.s32.totalorder %s22, 0
    %p112 = por %p110, %p111
    %s114 = sadd.s32 %s113, 1
    %p117 = scmp.eq.s32.totalorder %s16, 1
    %p118 = scmp.ne.s32.totalorder %s113, %s115
    %p119 = scmp.eq.s32.totalorder %s16, 0
    %p120 = por %p118, %p119
    %p121 = scmp.ne.s32.totalorder %s113, %s115
    %p122 = scmp.eq.s32.totalorder %s21, 1
    %p123 = por %p121, %p122
    %p124 = scmp.ne.s32.totalorder %s115, %s116
    %p125 = scmp.eq.s32.totalorder %s21, 0
    %p126 = por %p124, %p125
    %p127 = scmp.ne.s32.totalorder %s115, %s116
    %p128 = scmp.eq.s32.totalorder %s22, 1
    %p129 = por %p127, %p128
    %p131 = scmp.ne.s32.totalorder %s116, %s130
    %p132 = scmp.eq.s32.totalorder %s22, 0
    %p133 = por %p131, %p132
    %s135 = sadd.s32 %s134, 1
    %p138 = scmp.eq.s32.totalorder %s16, 1
    %p139 = scmp.ne.s32.totalorder %s134, %s136
    %p140 = scmp.eq.s32.totalorder %s16, 0
    %p141 = por %p139, %p140
    %p142 = scmp.ne.s32.totalorder %s134, %s136
    %p143 = scmp.eq.s32.totalorder %s21, 1
    %p144 = por %p142, %p143
    %p145 = scmp.ne.s32.totalorder %s136, %s137
    %p146 = scmp.eq.s32.totalorder %s21, 0
    %p147 = por %p145, %p146
    %p148 = scmp.ne.s32.totalorder %s136, %s137
    %p149 = scmp.eq.s32.totalorder %s22, 1
    %p150 = por %p148, %p149
    %p152 = scmp.ne.s32.totalorder %s137, %s151
    %p153 = scmp.eq.s32.totalorder %s22, 0
    %p154 = por %p152, %p153
    %s156 = sadd.s32 %s155, 1
    %p159 = scmp.eq.s32.totalorder %s16, 1
    %p160 = scmp.ne.s32.totalorder %s155, %s157
    %p161 = scmp.eq.s32.totalorder %s16, 0
    %p162 = por %p160, %p161
    %p163 = scmp.ne.s32.totalorder %s155, %s157
    %p164 = scmp.eq.s32.totalorder %s21, 1
    %p165 = por %p163, %p164
    %p166 = scmp.ne.s32.totalorder %s157, %s158
    %p167 = scmp.eq.s32.totalorder %s21, 0
    %p168 = por %p166, %p167
    %p169 = scmp.ne.s32.totalorder %s157, %s158
    %p170 = scmp.eq.s32.totalorder %s22, 1
    %p171 = por %p169, %p170
    %p173 = scmp.ne.s32.totalorder %s158, %s172
    %p174 = scmp.eq.s32.totalorder %s22, 0
    %p175 = por %p173, %p174
    %s177 = sadd.s32 %s176, 1
    %p180 = scmp.eq.s32.totalorder %s16, 1
    %p181 = scmp.ne.s32.totalorder %s176, %s178
    %p182 = scmp.eq.s32.totalorder %s16, 0
    %p183 = por %p181, %p182
    %p184 = scmp.ne.s32.totalorder %s176, %s178
    %p185 = scmp.eq.s32.totalorder %s21, 1
    %p186 = por %p184, %p185
    %p187 = scmp.ne.s32.totalorder %s178, %s179
    %p188 = scmp.eq.s32.totalorder %s21, 0
    %p189 = por %p187, %p188
    %p190 = scmp.ne.s32.totalorder %s178, %s179
    %p191 = scmp.eq.s32.totalorder %s22, 1
    %p192 = por %p190, %p191
    %p194 = scmp.ne.s32.totalorder %s179, %s193
    %p195 = scmp.eq.s32.totalorder %s22, 0
    %p196 = por %p194, %p195
    %s198 = sadd.s32 %s197, 1
    %p201 = scmp.eq.s32.totalorder %s16, 1
    %p202 = scmp.ne.s32.totalorder %s197, %s199
    %p203 = scmp.eq.s32.totalorder %s16, 0
    %p204 = por %p202, %p203
    %p205 = scmp.ne.s32.totalorder %s197, %s199
    %p206 = scmp.eq.s32.totalorder %s21, 1
    %p207 = por %p205, %p206
    %p208 = scmp.ne.s32.totalorder %s199, %s200
    %p209 = scmp.eq.s32.totalorder %s21, 0
    %p210 = por %p208, %p209
    %p211 = scmp.ne.s32.totalorder %s199, %s200
    %p212 = scmp.eq.s32.totalorder %s22, 1
    %p213 = por %p211, %p212
    %p215 = scmp.ne.s32.totalorder %s200, %s214
    %p216 = scmp.eq.s32.totalorder %s22, 0
    %p217 = por %p215, %p216
    %s219 = sadd.s32 %s218, 1
    %p222 = scmp.eq.s32.totalorder %s16, 1
    %p223 = scmp.ne.s32.totalorder %s218, %s220
    %p224 = scmp.eq.s32.totalorder %s16, 0
    %p225 = por %p223, %p224
    %p226 = scmp.ne.s32.totalorder %s218, %s220
    %p227 = scmp.eq.s32.totalorder %s21, 1
    %p228 = por %p226, %p227
    %p229 = scmp.ne.s32.totalorder %s220, %s221
    %p230 = scmp.eq.s32.totalorder %s21, 0
    %p231 = por %p229, %p230
    %p232 = scmp.ne.s32.totalorder %s220, %s221
    %p233 = scmp.eq.s32.totalorder %s22, 1
    %p234 = por %p232, %p233
    %p236 = scmp.ne.s32.totalorder %s221, %s235
    %p237 = scmp.eq.s32.totalorder %s22, 0
    %p238 = por %p236, %p237
    %s239 = ssub.s32 %s16, %s23
    %p240 = scmp.eq.s32.totalorder %s239, 0
    %s242 = sadd.s32 %s241, 1
    %s243 = scalar_select %p240, %s241, %s242
    %p246 = pneg %p240
    %p247 = scmp.eq.s32.totalorder %s16, 1
    %p248 = por %p246, %p247
    %p249 = scmp.ne.s32.totalorder %s241, %s244
    %p250 = scmp.eq.s32.totalorder %s16, 0
    %p251 = por %p249, %p250
    %p252 = scmp.ne.s32.totalorder %s241, %s244
    %p253 = scmp.eq.s32.totalorder %s21, 1
    %p254 = por %p252, %p253
    %p255 = scmp.ne.s32.totalorder %s244, %s245
    %p256 = scmp.eq.s32.totalorder %s21, 0
    %p257 = por %p255, %p256
    %p258 = scmp.ne.s32.totalorder %s244, %s245
    %p259 = scmp.eq.s32.totalorder %s22, 1
    %p260 = por %p258, %p259
    %p262 = scmp.ne.s32.totalorder %s245, %s261
    %p263 = scmp.eq.s32.totalorder %s22, 0
    %p264 = por %p262, %p263
    %p265 = scmp.le.s32.totalorder 1, %s16
    %p266 = scmp.lt.s32.totalorder %s16, 3
    %p267 = pnand %p265, %p266
    %p268 = pneg %p267
    // Predicated region
    $region9: #{tpu_custom_call.1} parent=5 // pred_check
      _
    $region10: #{tpu_custom_call.1} parent=5 // pred_check_branch
      %270 = sbr.rel (%p267) target = $region12
    $region11: #{tpu_custom_call.1} parent=5 // pred_region
      %s271 = ssub.s32 %s16, 1
      // Predicated region
      $region13: #{tpu_custom_call.1} parent=11 // pred_check
        %p272 = pneg %p63
      $region14: #{tpu_custom_call.1} parent=11 // pred_check_branch
        %274 = sbr.rel (%p272) target = $region16
      $region15: #{tpu_custom_call.1} parent=11 // pred_region
        _
      $region16: #{tpu_custom_call.1} parent=11 // pred_fallthru
        _
      // Predicated region
      $region17: #{tpu_custom_call.1} parent=11 // pred_check
        %p275 = pneg %p84
      $region18: #{tpu_custom_call.1} parent=11 // pred_check_branch
        %277 = sbr.rel (%p275) target = $region20
      $region19: #{tpu_custom_call.1} parent=11 // pred_region
        _
      $region20: #{tpu_custom_call.1} parent=11 // pred_fallthru
        _
      // Predicated region
      $region21: #{tpu_custom_call.1} parent=11 // pred_check
        %p278 = pneg %p105
      $region22: #{tpu_custom_call.1} parent=11 // pred_check_branch
        %280 = sbr.rel (%p278) target = $region24
      $region23: #{tpu_custom_call.1} parent=11 // pred_region
        _
      $region24: #{tpu_custom_call.1} parent=11 // pred_fallthru
        _
      // Predicated region
      $region25: #{tpu_custom_call.1} parent=11 // pred_check
        %p281 = pneg %p126
      $region26: #{tpu_custom_call.1} parent=11 // pred_check_branch
        %283 = sbr.rel (%p281) target = $region28
      $region27: #{tpu_custom_call.1} parent=11 // pred_region
        _
      $region28: #{tpu_custom_call.1} parent=11 // pred_fallthru
        _
      // Predicated region
      $region29: #{tpu_custom_call.1} parent=11 // pred_check
        %p284 = pneg %p147
      $region30: #{tpu_custom_call.1} parent=11 // pred_check_branch
        %286 = sbr.rel (%p284) target = $region32
      $region31: #{tpu_custom_call.1} parent=11 // pred_region
        _
      $region32: #{tpu_custom_call.1} parent=11 // pred_fallthru
        _
      // Predicated region
      $region33: #{tpu_custom_call.1} parent=11 // pred_check
        %p287 = pneg %p168
      $region34: #{tpu_custom_call.1} parent=11 // pred_check_branch
        %289 = sbr.rel (%p287) target = $region36
      $region35: #{tpu_custom_call.1} parent=11 // pred_region
        _
      $region36: #{tpu_custom_call.1} parent=11 // pred_fallthru
        _
      // Predicated region
      $region37: #{tpu_custom_call.1} parent=11 // pred_check
        %p290 = pneg %p189
      $region38: #{tpu_custom_call.1} parent=11 // pred_check_branch
        %292 = sbr.rel (%p290) target = $region40
      $region39: #{tpu_custom_call.1} parent=11 // pred_region
        _
      $region40: #{tpu_custom_call.1} parent=11 // pred_fallthru
        _
      // Predicated region
      $region41: #{tpu_custom_call.1} parent=11 // pred_check
        %p293 = pneg %p210
      $region42: #{tpu_custom_call.1} parent=11 // pred_check_branch
        %295 = sbr.rel (%p293) target = $region44
      $region43: #{tpu_custom_call.1} parent=11 // pred_region
        _
      $region44: #{tpu_custom_call.1} parent=11 // pred_fallthru
        _
      // Predicated region
      $region45: #{tpu_custom_call.1} parent=11 // pred_check
        %p296 = pneg %p231
      $region46: #{tpu_custom_call.1} parent=11 // pred_check_branch
        %298 = sbr.rel (%p296) target = $region48
      $region47: #{tpu_custom_call.1} parent=11 // pred_region
        _
      $region48: #{tpu_custom_call.1} parent=11 // pred_fallthru
        _
    $region12: #{tpu_custom_call.1} parent=5 // pred_fallthru
      _
    %p299 = scmp.lt.s32.totalorder %s16, 2
    // Predicated region
    $region49: #{tpu_custom_call.1} parent=5 // pred_check
      %p300 = pneg %p299
    $region50: #{tpu_custom_call.1} parent=5 // pred_check_branch
      %302 = sbr.rel (%p300) target = $region52
    $region51: #{tpu_custom_call.1} parent=5 // pred_region
      // Predicated region
      $region53: #{tpu_custom_call.1} parent=51 // pred_check
        %p303 = pneg %p36
      $region54: #{tpu_custom_call.1} parent=51 // pred_check_branch
        %305 = sbr.rel (%p303) target = $region56
      $region55: #{tpu_custom_call.1} parent=51 // pred_region
        %p306 = scmp.lt.s32.totalorder %s16, 1
        %s307 = scalar_select %p306, %s16, 1
        %s308 = smul.addr %s307, 32
        %s309 = smul.addr %s308, 8
        %s310 = scalar_lea.vmem %s0, %s309
      $region56: #{tpu_custom_call.1} parent=51 // pred_fallthru
        _
    $region52: #{tpu_custom_call.1} parent=5 // pred_fallthru
      _
    %p311 = scmp.le.s32.totalorder 1, %s16
    %p312 = scmp.lt.s32.totalorder %s16, 3
    %p313 = pnand %p311, %p312
    %p314 = pneg %p313
    // Predicated region
    $region57: #{tpu_custom_call.1} parent=5 // pred_check
      _
    $region58: #{tpu_custom_call.1} parent=5 // pred_check_branch
      %316 = sbr.rel (%p313) target = $region60
    $region59: #{tpu_custom_call.1} parent=5 // pred_region
      %s317 = ssub.s32 %s16, 1
      %p318 = scmp.lt.s32.totalorder %s21, 1
      %s319 = scalar_select %p318, %s21, 1
      %s320 = smul.addr %s319, 32
      %s321 = smul.addr %s320, 8
      %s322 = scalar_lea.vmem %s0, %s321
      %p323 = pneg %p42
      %p324 = pneg %p39
      %p325 = pneg %p63
      %p326 = pneg %p60
      %p327 = pneg %p84
      %p328 = pneg %p81
      %p329 = pneg %p105
      %p330 = pneg %p102
      %p331 = pneg %p126
      %p332 = pneg %p123
      %p333 = pneg %p147
      %p334 = pneg %p144
      %p335 = pneg %p168
      %p336 = pneg %p165
      %p337 = pneg %p189
      %p338 = pneg %p186
      %p339 = pneg %p210
      %p340 = pneg %p207
      %p341 = pneg %p231
      %p342 = pneg %p228
      %p343 = pneg %p257
      %p344 = pneg %p254
      %p345 = scmp.lt.s32.totalorder %s21, 1
      %s346 = scalar_select %p345, %s21, 1
      %s347 = smul.addr %s346, 32
      %s348 = smul.addr %s347, 8
      %s349 = scalar_lea.vmem %s10, %s348
      %p350 = scmp.lt.s32.totalorder %s21, 1
      %s351 = scalar_select %p350, %s21, 1
      %s352 = smul.addr %s351, 32
      %s353 = smul.addr %s352, 8
      %s354 = scalar_lea.vmem %s0, %s353
      %p355 = scmp.lt.s32.totalorder %s21, 1
      %s356 = scalar_select %p355, %s21, 1
      %s357 = smul.addr %s356, 32
      %s358 = smul.addr %s357, 8
      %s359 = scalar_lea.vmem %s10, %s358
      %vm361 = vcmask 31744
      %362 = vst.msk [vmem:[#allocation2] sm:$0xff] %vm361, 0.0
      %363 = vst.msk [vmem:[#allocation2 + $0x8] sm:$0xff] %vm361, 0.0
      %vm364 = vcmask 29696
      %365 = vst.msk [vmem:[#allocation2 + $0x10] sm:$0x3f] %vm364, 0.0
      %366 = vst.msk [vmem:[#allocation2 + $0x18] sm:$0xff] %vm361, 0.0
      %367 = vst.msk [vmem:[#allocation2 + $0x20] sm:$0xff] %vm361, 0.0
      %368 = vst.msk [vmem:[#allocation2 + $0x28] sm:$0x3f] %vm364, 0.0
      %369 = vst.msk [vmem:[#allocation2 + $0x30] sm:$0xff] %vm361, 0.0
      %370 = vst.msk [vmem:[#allocation2 + $0x38] sm:$0xff] %vm361, 0.0
      %371 = vst.msk [vmem:[#allocation2 + $0x40] sm:$0x3f] %vm364, 0.0
      %372 = vst.msk [vmem:[#allocation2 + $0x48] sm:$0xff] %vm361, 0.0
      %373 = vst.msk [vmem:[#allocation2 + $0x50] sm:$0xff] %vm361, 0.0
      %374 = vst.msk [vmem:[#allocation2 + $0x58] sm:$0x3f] %vm364, 0.0
      %375 = vst.msk [vmem:[#allocation2 + $0x60] sm:$0xff] %vm361, 0.0
      %376 = vst.msk [vmem:[#allocation2 + $0x68] sm:$0xff] %vm361, 0.0
      %377 = vst.msk [vmem:[#allocation2 + $0x70] sm:$0x3f] %vm364, 0.0
      %378 = vst.msk [vmem:[#allocation2 + $0x78] sm:$0xff] %vm361, 0.0
      %379 = vst.msk [vmem:[#allocation2 + $0x80] sm:$0xff] %vm361, 0.0
      %380 = vst.msk [vmem:[#allocation2 + $0x88] sm:$0x3f] %vm364, 0.0
      %381 = vst.msk [vmem:[#allocation2 + $0x90] sm:$0xff] %vm361, 0.0
      %382 = vst.msk [vmem:[#allocation2 + $0x98] sm:$0xff] %vm361, 0.0
      %383 = vst.msk [vmem:[#allocation2 + $0xa0] sm:$0x3f] %vm364, 0.0
      %384 = vst.msk [vmem:[#allocation2 + $0xa8] sm:$0xff] %vm361, 0.0
      %385 = vst.msk [vmem:[#allocation2 + $0xb0] sm:$0xff] %vm361, 0.0
      %386 = vst.msk [vmem:[#allocation2 + $0xb8] sm:$0x3f] %vm364, 0.0
      %387 = vst.msk [vmem:[#allocation2 + $0xc0] sm:$0xff] %vm361, 0.0
      %388 = vst.msk [vmem:[#allocation2 + $0xc8] sm:$0xff] %vm361, 0.0
      %389 = vst.msk [vmem:[#allocation2 + $0xd0] sm:$0x3f] %vm364, 0.0
      %390 = vst.msk [vmem:[#allocation2 + $0xd8] sm:$0xff] %vm361, 0.0
      %391 = vst.msk [vmem:[#allocation2 + $0xe0] sm:$0xff] %vm361, 0.0
      %392 = vst.msk [vmem:[#allocation2 + $0xe8] sm:$0x3f] %vm364, 0.0
      %393 = vst.msk [vmem:[#allocation2 + $0xf0] sm:$0xff] %vm361, 0.0
      %394 = vst.msk [vmem:[#allocation2 + $0xf8] sm:$0xff] %vm361, 0.0
      %395 = vst.msk [vmem:[#allocation2 + $0x100] sm:$0x3f] %vm364, 0.0
      %396 = vst.msk [vmem:[#allocation2 + $0x108] sm:$0xff] %vm361, 0.0
      %397 = vst.msk [vmem:[#allocation2 + $0x110] sm:$0xff] %vm361, 0.0
      %398 = vst.msk [vmem:[#allocation2 + $0x118] sm:$0x3f] %vm364, 0.0
      %399 = vst.msk [vmem:[#allocation2 + $0x120] sm:$0xff] %vm361, 0.0
      %400 = vst.msk [vmem:[#allocation2 + $0x128] sm:$0xff] %vm361, 0.0
      %401 = vst.msk [vmem:[#allocation2 + $0x130] sm:$0x3f] %vm364, 0.0
      %402 = vst.msk [vmem:[#allocation2 + $0x138] sm:$0xff] %vm361, 0.0
      %403 = vst.msk [vmem:[#allocation2 + $0x140] sm:$0xff] %vm361, 0.0
      %404 = vst.msk [vmem:[#allocation2 + $0x148] sm:$0x3f] %vm364, 0.0
      %405 = vst.msk [vmem:[#allocation2 + $0x150] sm:$0xff] %vm361, 0.0
      %406 = vst.msk [vmem:[#allocation2 + $0x158] sm:$0xff] %vm361, 0.0
      %407 = vst.msk [vmem:[#allocation2 + $0x160] sm:$0x3f] %vm364, 0.0
      %408 = vst.msk [vmem:[#allocation2 + $0x168] sm:$0xff] %vm361, 0.0
      %409 = vst.msk [vmem:[#allocation2 + $0x170] sm:$0xff] %vm361, 0.0
      %410 = vst.msk [vmem:[#allocation2 + $0x178] sm:$0x3f] %vm364, 0.0
      %411 = vst.msk [vmem:[#allocation2 + $0x180] sm:$0xff] %vm361, 0.0
      %412 = vst.msk [vmem:[#allocation2 + $0x188] sm:$0xff] %vm361, 0.0
      %413 = vst.msk [vmem:[#allocation2 + $0x190] sm:$0x3f] %vm364, 0.0
      %414 = vst.msk [vmem:[#allocation2 + $0x198] sm:$0xff] %vm361, 0.0
      %415 = vst.msk [vmem:[#allocation2 + $0x1a0] sm:$0xff] %vm361, 0.0
      %416 = vst.msk [vmem:[#allocation2 + $0x1a8] sm:$0x3f] %vm364, 0.0
      %417 = vst.msk [vmem:[#allocation2 + $0x1b0] sm:$0xff] %vm361, 0.0
      %418 = vst.msk [vmem:[#allocation2 + $0x1b8] sm:$0xff] %vm361, 0.0
      %419 = vst.msk [vmem:[#allocation2 + $0x1c0] sm:$0x3f] %vm364, 0.0
      %420 = vst.msk [vmem:[#allocation2 + $0x1c8] sm:$0xff] %vm361, 0.0
      %421 = vst.msk [vmem:[#allocation2 + $0x1d0] sm:$0xff] %vm361, 0.0
      %422 = vst.msk [vmem:[#allocation2 + $0x1d8] sm:$0x3f] %vm364, 0.0
      %423 = vst.msk [vmem:[#allocation2 + $0x1e0] sm:$0xff] %vm361, 0.0
      %424 = vst.msk [vmem:[#allocation2 + $0x1e8] sm:$0xff] %vm361, 0.0
      %425 = vst.msk [vmem:[#allocation2 + $0x1f0] sm:$0x3f] %vm364, 0.0
      %426 = vst.msk [vmem:[#allocation2 + $0x1f8] sm:$0xff] %vm361, 0.0
      %427 = vst.msk [vmem:[#allocation2 + $0x200] sm:$0xff] %vm361, 0.0
      %428 = vst.msk [vmem:[#allocation2 + $0x208] sm:$0x3f] %vm364, 0.0
      %v429 = vld [vmem:[%s354] sm:$0xff]
      %v430 = vld [vmem:[%s354 + $0x8] sm:$0xff]
      %v431 = vld [vmem:[%s354 + $0x10] sm:$0xff]
      %v432 = vld [vmem:[%s354 + $0x18] sm:$0xff]
      %v433 = vld [vmem:[%s354 + $0x20] sm:$0xff]
      %v434 = vld [vmem:[%s354 + $0x28] sm:$0xff]
      %v435 = vld [vmem:[%s354 + $0x30] sm:$0xff]
      %v436 = vld [vmem:[%s354 + $0x38] sm:$0xff]
      %v437 = vld [vmem:[%s354 + $0x40] sm:$0xff]
      %v438 = vld [vmem:[%s354 + $0x48] sm:$0xff]
      %v439 = vld [vmem:[%s354 + $0x50] sm:$0xff]
      %v440 = vld [vmem:[%s354 + $0x58] sm:$0xff]
      %v441 = vld [vmem:[%s354 + $0x60] sm:$0xff]
      %v442 = vld [vmem:[%s354 + $0x68] sm:$0xff]
      %v443 = vld [vmem:[%s354 + $0x70] sm:$0xff]
      %v444 = vld [vmem:[%s354 + $0x78] sm:$0xff]
      %v445 = vld [vmem:[%s354 + $0x80] sm:$0xff]
      %v446 = vld [vmem:[%s354 + $0x88] sm:$0xff]
      %v447 = vld [vmem:[%s354 + $0x90] sm:$0xff]
      %v448 = vld [vmem:[%s354 + $0x98] sm:$0xff]
      %v449 = vld [vmem:[%s354 + $0xa0] sm:$0xff]
      %v450 = vld [vmem:[%s354 + $0xa8] sm:$0xff]
      %v451 = vld [vmem:[%s354 + $0xb0] sm:$0xff]
      %v452 = vld [vmem:[%s354 + $0xb8] sm:$0xff]
      %v453 = vld [vmem:[%s354 + $0xc0] sm:$0xff]
      %v454 = vld [vmem:[%s354 + $0xc8] sm:$0xff]
      %v455 = vld [vmem:[%s354 + $0xd0] sm:$0xff]
      %v456 = vld [vmem:[%s354 + $0xd8] sm:$0xff]
      %v457 = vld [vmem:[%s354 + $0xe0] sm:$0xff]
      %v458 = vld [vmem:[%s354 + $0xe8] sm:$0xff]
      %v459 = vld [vmem:[%s354 + $0xf0] sm:$0xff]
      %v460 = vld [vmem:[%s354 + $0xf8] sm:$0xff]
      %s461 = scalar_lea.vmem [#allocation2], 72
      %462 = vst.msk [vmem:[%s461 + $0x3] sm:$0xff] %vm361, %v429
      %463 = vst.msk [vmem:[%s461 + $0xb] sm:$0xff] %vm361, %v430
      %464 = vst.msk [vmem:[%s461 + $0x1b] sm:$0xff] %vm361, %v431
      %465 = vst.msk [vmem:[%s461 + $0x23] sm:$0xff] %vm361, %v432
      %466 = vst.msk [vmem:[%s461 + $0x33] sm:$0xff] %vm361, %v433
      %467 = vst.msk [vmem:[%s461 + $0x3b] sm:$0xff] %vm361, %v434
      %468 = vst.msk [vmem:[%s461 + $0x4b] sm:$0xff] %vm361, %v435
      %469 = vst.msk [vmem:[%s461 + $0x53] sm:$0xff] %vm361, %v436
      %470 = vst.msk [vmem:[%s461 + $0x63] sm:$0xff] %vm361, %v437
      %471 = vst.msk [vmem:[%s461 + $0x6b] sm:$0xff] %vm361, %v438
      %472 = vst.msk [vmem:[%s461 + $0x7b] sm:$0xff] %vm361, %v439
      %473 = vst.msk [vmem:[%s461 + $0x83] sm:$0xff] %vm361, %v440
      %474 = vst.msk [vmem:[%s461 + $0x93] sm:$0xff] %vm361, %v441
      %475 = vst.msk [vmem:[%s461 + $0x9b] sm:$0xff] %vm361, %v442
      %476 = vst.msk [vmem:[%s461 + $0xab] sm:$0xff] %vm361, %v443
      %477 = vst.msk [vmem:[%s461 + $0xb3] sm:$0xff] %vm361, %v444
      %478 = vst.msk [vmem:[%s461 + $0xc3] sm:$0xff] %vm361, %v445
      %479 = vst.msk [vmem:[%s461 + $0xcb] sm:$0xff] %vm361, %v446
      %480 = vst.msk [vmem:[%s461 + $0xdb] sm:$0xff] %vm361, %v447
      %481 = vst.msk [vmem:[%s461 + $0xe3] sm:$0xff] %vm361, %v448
      %482 = vst.msk [vmem:[%s461 + $0xf3] sm:$0xff] %vm361, %v449
      %483 = vst.msk [vmem:[%s461 + $0xfb] sm:$0xff] %vm361, %v450
      %484 = vst.msk [vmem:[%s461 + $0x10b] sm:$0xff] %vm361, %v451
      %485 = vst.msk [vmem:[%s461 + $0x113] sm:$0xff] %vm361, %v452
      %486 = vst.msk [vmem:[%s461 + $0x123] sm:$0xff] %vm361, %v453
      %487 = vst.msk [vmem:[%s461 + $0x12b] sm:$0xff] %vm361, %v454
      %488 = vst.msk [vmem:[%s461 + $0x13b] sm:$0xff] %vm361, %v455
      %489 = vst.msk [vmem:[%s461 + $0x143] sm:$0xff] %vm361, %v456
      %490 = vst.msk [vmem:[%s461 + $0x153] sm:$0xff] %vm361, %v457
      %491 = vst.msk [vmem:[%s461 + $0x15b] sm:$0xff] %vm361, %v458
      %492 = vst.msk [vmem:[%s461 + $0x16b] sm:$0xff] %vm361, %v459
      %493 = vst.msk [vmem:[%s461 + $0x173] sm:$0xff] %vm361, %v460
      %v494 = vld [vmem:[%s1] sm:$0x7f]
      %v495 = vld [vmem:[%s1 + $0x8] sm:$0x7f]
      %v496 = vld [vmem:[%s1 + $0x10] sm:$0x7f]
      %v497 = vld [vmem:[%s1 + $0x18] sm:$0x7f]
      %v498 = vld [vmem:[%s1 + $0x20] sm:$0x7f]
      %v499 = vld [vmem:[%s1 + $0x28] sm:$0x7f]
      %v500 = vld [vmem:[%s1 + $0x30] sm:$0x7f]
      %v501 = vld [vmem:[%s2] sm:$0x1]
      %v502 = vld [vmem:[%s3] sm:$0x1]
      %v503 = vld [vmem:[%s4] sm:$0x1]
      %v504 = vld [vmem:[%s5] sm:$0x3]
      %v505 = vld [vmem:[%s6] sm:$0x1]
      %v506 = vld [vmem:[%s7] sm:$0xf]
      %v507 = vld [vmem:[%s7 + $0x4] sm:$0xf]
      %v508 = vld [vmem:[%s8] sm:$0x1]
      %v509 = vld [vmem:[%s9] sm:$0x1]
      %s510 = smul.u32 0, 24
      %s511 = scalar_lea.vmem [#allocation2], %s510
      %v512 = vld [vmem:[%s511] sm:$0xff]
      %v513 = vld [vmem:[%s511 + $0x8] sm:$0xff]
      %v514 = vld [vmem:[%s511 + $0x10] sm:$0x3f]
      %v515 = vld [vmem:[%s511 + $0x18] sm:$0xff]
      %v516 = vld [vmem:[%s511 + $0x20] sm:$0xff]
      %v517 = vld [vmem:[%s511 + $0x28] sm:$0x3f]
      %v518 = vld [vmem:[%s511 + $0x30] sm:$0xff]
      %v519 = vld [vmem:[%s511 + $0x38] sm:$0xff]
      %v520 = vld [vmem:[%s511 + $0x40] sm:$0x3f]
      %v521 = vld [vmem:[%s511 + $0x48] sm:$0xff]
      %v522 = vld [vmem:[%s511 + $0x50] sm:$0xff]
      %v523 = vld [vmem:[%s511 + $0x58] sm:$0x3f]
      %v524 = vld [vmem:[%s511 + $0x60] sm:$0xff]
      %v525 = vld [vmem:[%s511 + $0x68] sm:$0xff]
      %v526 = vld [vmem:[%s511 + $0x70] sm:$0x3f]
      %v527 = vld [vmem:[%s511 + $0x78] sm:$0xff]
      %v528 = vld [vmem:[%s511 + $0x80] sm:$0xff]
      %v529 = vld [vmem:[%s511 + $0x88] sm:$0x3f]
      %v530 = vld [vmem:[%s511 + $0x90] sm:$0xff]
      %v531 = vld [vmem:[%s511 + $0x98] sm:$0xff]
      %v532 = vld [vmem:[%s511 + $0xa0] sm:$0x3f]
      %v533 = vld [vmem:[%s511 + $0xa8] sm:$0xff]
      %v534 = vld [vmem:[%s511 + $0xb0] sm:$0xff]
      %v535 = vld [vmem:[%s511 + $0xb8] sm:$0x3f]
      %v536 = vld [vmem:[%s511 + $0xc0] sm:$0xff]
      %v537 = vld [vmem:[%s511 + $0xc8] sm:$0xff]
      %v538 = vld [vmem:[%s511 + $0xd0] sm:$0x3f]
      %v539 = vld [vmem:[%s511 + $0xd8] sm:$0xff]
      %v540 = vld [vmem:[%s511 + $0xe0] sm:$0xff]
      %v541 = vld [vmem:[%s511 + $0xe8] sm:$0x3f]
      %v542 = vld [vmem:[%s511 + $0xf0] sm:$0xff]
      %v543 = vld [vmem:[%s511 + $0xf8] sm:$0xff]
      %v544 = vld [vmem:[%s511 + $0x100] sm:$0x3f]
      %v545 = vld [vmem:[%s511 + $0x108] sm:$0xff]
      %v546 = vld [vmem:[%s511 + $0x110] sm:$0xff]
      %v547 = vld [vmem:[%s511 + $0x118] sm:$0x3f]
      %v548 = vld [vmem:[%s511 + $0x120] sm:$0xff]
      %v549 = vld [vmem:[%s511 + $0x128] sm:$0xff]
      %v550 = vld [vmem:[%s511 + $0x130] sm:$0x3f]
      %v551 = vld [vmem:[%s511 + $0x138] sm:$0xff]
      %v552 = vld [vmem:[%s511 + $0x140] sm:$0xff]
      %v553 = vld [vmem:[%s511 + $0x148] sm:$0x3f]
      %v554 = vlaneseq
      %v555 = vshrl.u32 %v554, 7
      %v556 = vsub.s32 0, %v555
      %v557 = vrot.slane %v494, %v556
      %v558 = vmul.f32 %v512, %v557
      %v559 = vmul.f32 %v513, %v557
      %v560 = vmul.f32 %v515, %v557
      %v561 = vmul.f32 %v516, %v557
      %v562 = vmul.f32 %v518, %v557
      %v563 = vmul.f32 %v519, %v557
      %v564 = vmul.f32 %v521, %v557
      %v565 = vmul.f32 %v522, %v557
      %v566 = vmul.f32 %v524, %v557
      %v567 = vmul.f32 %v525, %v557
      %v568 = vmul.f32 %v527, %v557
      %v569 = vmul.f32 %v528, %v557
      %v570 = vmul.f32 %v530, %v557
      %v571 = vmul.f32 %v531, %v557
      %v572 = vmul.f32 %v533, %v557
      %v573 = vmul.f32 %v534, %v557
      %v574 = vadd.f32 %v558, 0.0
      %v575 = vadd.f32 %v559, 0.0
      %v576 = vadd.f32 %v560, 0.0
      %v577 = vadd.f32 %v561, 0.0
      %v578 = vadd.f32 %v562, 0.0
      %v579 = vadd.f32 %v563, 0.0
      %v580 = vadd.f32 %v564, 0.0
      %v581 = vadd.f32 %v565, 0.0
      %v582 = vadd.f32 %v566, 0.0
      %v583 = vadd.f32 %v567, 0.0
      %v584 = vadd.f32 %v568, 0.0
      %v585 = vadd.f32 %v569, 0.0
      %v586 = vadd.f32 %v570, 0.0
      %v587 = vadd.f32 %v571, 0.0
      %v588 = vadd.f32 %v572, 0.0
      %v589 = vadd.f32 %v573, 0.0
      %v590 = vlaneseq
      %v591 = vshrl.u32 %v590, 7
      %v592 = vsub.s32 1, %v591
      %v593 = vrot.slane %v494, %v592
      %v594 = vmul.f32 %v512, %v593
      %v595 = vmul.f32 %v513, %v593
      %v596 = vmul.f32 %v514, %v593
      %v597 = vmul.f32 %v515, %v593
      %v598 = vmul.f32 %v516, %v593
      %v599 = vmul.f32 %v517, %v593
      %v600 = vmul.f32 %v518, %v593
      %v601 = vmul.f32 %v519, %v593
      %v602 = vmul.f32 %v520, %v593
      %v603 = vmul.f32 %v521, %v593
      %v604 = vmul.f32 %v522, %v593
      %v605 = vmul.f32 %v523, %v593
      %v606 = vmul.f32 %v524, %v593
      %v607 = vmul.f32 %v525, %v593
      %v608 = vmul.f32 %v526, %v593
      %v609 = vmul.f32 %v527, %v593
      %v610 = vmul.f32 %v528, %v593
      %v611 = vmul.f32 %v529, %v593
      %v612 = vmul.f32 %v530, %v593
      %v613 = vmul.f32 %v531, %v593
      %v614 = vmul.f32 %v532, %v593
      %v615 = vmul.f32 %v533, %v593
      %v616 = vmul.f32 %v534, %v593
      %v617 = vmul.f32 %v535, %v593
      %vm642 = vcmask 1046528
      %v643 = vrot.slane %v594, 1
      %v644 = vrot.slane %v595, 1
      %v645 = vsel %vm642, %v643, %v644
      %v646 = vrot.slane %v596, 1
      %v647 = vsel %vm642, %v644, %v646
      %v648 = vrot.slane %v597, 1
      %v649 = vrot.slane %v598, 1
      %v650 = vsel %vm642, %v648, %v649
      %v651 = vrot.slane %v599, 1
      %v652 = vsel %vm642, %v649, %v651
      %v653 = vrot.slane %v600, 1
      %v654 = vrot.slane %v601, 1
      %v655 = vsel %vm642, %v653, %v654
      %v656 = vrot.slane %v602, 1
      %v657 = vsel %vm642, %v654, %v656
      %v658 = vrot.slane %v603, 1
      %v659 = vrot.slane %v604, 1
      %v660 = vsel %vm642, %v658, %v659
      %v661 = vrot.slane %v605, 1
      %v662 = vsel %vm642, %v659, %v661
      %v663 = vrot.slane %v606, 1
      %v664 = vrot.slane %v607, 1
      %v665 = vsel %vm642, %v663, %v664
      %v666 = vrot.slane %v608, 1
      %v667 = vsel %vm642, %v664, %v666
      %v668 = vrot.slane %v609, 1
      %v669 = vrot.slane %v610, 1
      %v670 = vsel %vm642, %v668, %v669
      %v671 = vrot.slane %v611, 1
      %v672 = vsel %vm642, %v669, %v671
      %v673 = vrot.slane %v612, 1
      %v674 = vrot.slane %v613, 1
      %v675 = vsel %vm642, %v673, %v674
      %v676 = vrot.slane %v614, 1
      %v677 = vsel %vm642, %v674, %v676
      %v678 = vrot.slane %v615, 1
      %v679 = vrot.slane %v616, 1
      %v680 = vsel %vm642, %v678, %v679
      %v681 = vrot.slane %v617, 1
      %v682 = vsel %vm642, %v679, %v681
      %v699 = vadd.f32 %v574, %v645
      %v700 = vadd.f32 %v575, %v647
      %v701 = vadd.f32 %v576, %v650
      %v702 = vadd.f32 %v577, %v652
      %v703 = vadd.f32 %v578, %v655
      %v704 = vadd.f32 %v579, %v657
      %v705 = vadd.f32 %v580, %v660
      %v706 = vadd.f32 %v581, %v662
      %v707 = vadd.f32 %v582, %v665
      %v708 = vadd.f32 %v583, %v667
      %v709 = vadd.f32 %v584, %v670
      %v710 = vadd.f32 %v585, %v672
      %v711 = vadd.f32 %v586, %v675
      %v712 = vadd.f32 %v587, %v677
      %v713 = vadd.f32 %v588, %v680
      %v714 = vadd.f32 %v589, %v682
      %v715 = vlaneseq
      %v716 = vshrl.u32 %v715, 7
      %v717 = vsub.s32 2, %v716
      %v718 = vrot.slane %v494, %v717
      %v719 = vmul.f32 %v512, %v718
      %v720 = vmul.f32 %v513, %v718
      %v721 = vmul.f32 %v514, %v718
      %v722 = vmul.f32 %v515, %v718
      %v723 = vmul.f32 %v516, %v718
      %v724 = vmul.f32 %v517, %v718
      %v725 = vmul.f32 %v518, %v718
      %v726 = vmul.f32 %v519, %v718
      %v727 = vmul.f32 %v520, %v718
      %v728 = vmul.f32 %v521, %v718
      %v729 = vmul.f32 %v522, %v718
      %v730 = vmul.f32 %v523, %v718
      %v731 = vmul.f32 %v524, %v718
      %v732 = vmul.f32 %v525, %v718
      %v733 = vmul.f32 %v526, %v718
      %v734 = vmul.f32 %v527, %v718
      %v735 = vmul.f32 %v528, %v718
      %v736 = vmul.f32 %v529, %v718
      %v737 = vmul.f32 %v530, %v718
      %v738 = vmul.f32 %v531, %v718
      %v739 = vmul.f32 %v532, %v718
      %v740 = vmul.f32 %v533, %v718
      %v741 = vmul.f32 %v534, %v718
      %v742 = vmul.f32 %v535, %v718
      %vm767 = vcmask 1045504
      %v768 = vrot.slane %v719, 2
      %v769 = vrot.slane %v720, 2
      %v770 = vsel %vm767, %v768, %v769
      %v771 = vrot.slane %v721, 2
      %v772 = vsel %vm767, %v769, %v771
      %v773 = vrot.slane %v722, 2
      %v774 = vrot.slane %v723, 2
      %v775 = vsel %vm767, %v773, %v774
      %v776 = vrot.slane %v724, 2
      %v777 = vsel %vm767, %v774, %v776
      %v778 = vrot.slane %v725, 2
      %v779 = vrot.slane %v726, 2
      %v780 = vsel %vm767, %v778, %v779
      %v781 = vrot.slane %v727, 2
      %v782 = vsel %vm767, %v779, %v781
      %v783 = vrot.slane %v728, 2
      %v784 = vrot.slane %v729, 2
      %v785 = vsel %vm767, %v783, %v784
      %v786 = vrot.slane %v730, 2
      %v787 = vsel %vm767, %v784, %v786
      %v788 = vrot.slane %v731, 2
      %v789 = vrot.slane %v732, 2
      %v790 = vsel %vm767, %v788, %v789
      %v791 = vrot.slane %v733, 2
      %v792 = vsel %vm767, %v789, %v791
      %v793 = vrot.slane %v734, 2
      %v794 = vrot.slane %v735, 2
      %v795 = vsel %vm767, %v793, %v794
      %v796 = vrot.slane %v736, 2
      %v797 = vsel %vm767, %v794, %v796
      %v798 = vrot.slane %v737, 2
      %v799 = vrot.slane %v738, 2
      %v800 = vsel %vm767, %v798, %v799
      %v801 = vrot.slane %v739, 2
      %v802 = vsel %vm767, %v799, %v801
      %v803 = vrot.slane %v740, 2
      %v804 = vrot.slane %v741, 2
      %v805 = vsel %vm767, %v803, %v804
      %v806 = vrot.slane %v742, 2
      %v807 = vsel %vm767, %v804, %v806
      %v824 = vadd.f32 %v699, %v770
      %v825 = vadd.f32 %v700, %v772
      %v826 = vadd.f32 %v701, %v775
      %v827 = vadd.f32 %v702, %v777
      %v828 = vadd.f32 %v703, %v780
      %v829 = vadd.f32 %v704, %v782
      %v830 = vadd.f32 %v705, %v785
      %v831 = vadd.f32 %v706, %v787
      %v832 = vadd.f32 %v707, %v790
      %v833 = vadd.f32 %v708, %v792
      %v834 = vadd.f32 %v709, %v795
      %v835 = vadd.f32 %v710, %v797
      %v836 = vadd.f32 %v711, %v800
      %v837 = vadd.f32 %v712, %v802
      %v838 = vadd.f32 %v713, %v805
      %v839 = vadd.f32 %v714, %v807
      %v840 = vlaneseq
      %v841 = vshrl.u32 %v840, 7
      %v842 = vsub.s32 3, %v841
      %v843 = vrot.slane %v494, %v842
      %v844 = vmul.f32 %v512, %v843
      %v845 = vmul.f32 %v513, %v843
      %v846 = vmul.f32 %v514, %v843
      %v847 = vmul.f32 %v515, %v843
      %v848 = vmul.f32 %v516, %v843
      %v849 = vmul.f32 %v517, %v843
      %v850 = vmul.f32 %v518, %v843
      %v851 = vmul.f32 %v519, %v843
      %v852 = vmul.f32 %v520, %v843
      %v853 = vmul.f32 %v521, %v843
      %v854 = vmul.f32 %v522, %v843
      %v855 = vmul.f32 %v523, %v843
      %v856 = vmul.f32 %v524, %v843
      %v857 = vmul.f32 %v525, %v843
      %v858 = vmul.f32 %v526, %v843
      %v859 = vmul.f32 %v527, %v843
      %v860 = vmul.f32 %v528, %v843
      %v861 = vmul.f32 %v529, %v843
      %v862 = vmul.f32 %v530, %v843
      %v863 = vmul.f32 %v531, %v843
      %v864 = vmul.f32 %v532, %v843
      %v865 = vmul.f32 %v533, %v843
      %v866 = vmul.f32 %v534, %v843
      %v867 = vmul.f32 %v535, %v843
      %vm892 = vcmask 1044480
      %v893 = vrot.slane %v844, 3
      %v894 = vrot.slane %v845, 3
      %v895 = vsel %vm892, %v893, %v894
      %v896 = vrot.slane %v846, 3
      %v897 = vsel %vm892, %v894, %v896
      %v898 = vrot.slane %v847, 3
      %v899 = vrot.slane %v848, 3
      %v900 = vsel %vm892, %v898, %v899
      %v901 = vrot.slane %v849, 3
      %v902 = vsel %vm892, %v899, %v901
      %v903 = vrot.slane %v850, 3
      %v904 = vrot.slane %v851, 3
      %v905 = vsel %vm892, %v903, %v904
      %v906 = vrot.slane %v852, 3
      %v907 = vsel %vm892, %v904, %v906
      %v908 = vrot.slane %v853, 3
      %v909 = vrot.slane %v854, 3
      %v910 = vsel %vm892, %v908, %v909
      %v911 = vrot.slane %v855, 3
      %v912 = vsel %vm892, %v909, %v911
      %v913 = vrot.slane %v856, 3
      %v914 = vrot.slane %v857, 3
      %v915 = vsel %vm892, %v913, %v914
      %v916 = vrot.slane %v858, 3
      %v917 = vsel %vm892, %v914, %v916
      %v918 = vrot.slane %v859, 3
      %v919 = vrot.slane %v860, 3
      %v920 = vsel %vm892, %v918, %v919
      %v921 = vrot.slane %v861, 3
      %v922 = vsel %vm892, %v919, %v921
      %v923 = vrot.slane %v862, 3
      %v924 = vrot.slane %v863, 3
      %v925 = vsel %vm892, %v923, %v924
      %v926 = vrot.slane %v864, 3
      %v927 = vsel %vm892, %v924, %v926
      %v928 = vrot.slane %v865, 3
      %v929 = vrot.slane %v866, 3
      %v930 = vsel %vm892, %v928, %v929
      %v931 = vrot.slane %v867, 3
      %v932 = vsel %vm892, %v929, %v931
      %v949 = vadd.f32 %v824, %v895
      %v950 = vadd.f32 %v825, %v897
      %v951 = vadd.f32 %v826, %v900
      %v952 = vadd.f32 %v827, %v902
      %v953 = vadd.f32 %v828, %v905
      %v954 = vadd.f32 %v829, %v907
      %v955 = vadd.f32 %v830, %v910
      %v956 = vadd.f32 %v831, %v912
      %v957 = vadd.f32 %v832, %v915
      %v958 = vadd.f32 %v833, %v917
      %v959 = vadd.f32 %v834, %v920
      %v960 = vadd.f32 %v835, %v922
      %v961 = vadd.f32 %v836, %v925
      %v962 = vadd.f32 %v837, %v927
      %v963 = vadd.f32 %v838, %v930
      %v964 = vadd.f32 %v839, %v932
      %v965 = vlaneseq
      %v966 = vshrl.u32 %v965, 7
      %v967 = vsub.s32 4, %v966
      %v968 = vrot.slane %v494, %v967
      %v969 = vmul.f32 %v512, %v968
      %v970 = vmul.f32 %v513, %v968
      %v971 = vmul.f32 %v514, %v968
      %v972 = vmul.f32 %v515, %v968
      %v973 = vmul.f32 %v516, %v968
      %v974 = vmul.f32 %v517, %v968
      %v975 = vmul.f32 %v518, %v968
      %v976 = vmul.f32 %v519, %v968
      %v977 = vmul.f32 %v520, %v968
      %v978 = vmul.f32 %v521, %v968
      %v979 = vmul.f32 %v522, %v968
      %v980 = vmul.f32 %v523, %v968
      %v981 = vmul.f32 %v524, %v968
      %v982 = vmul.f32 %v525, %v968
      %v983 = vmul.f32 %v526, %v968
      %v984 = vmul.f32 %v527, %v968
      %v985 = vmul.f32 %v528, %v968
      %v986 = vmul.f32 %v529, %v968
      %v987 = vmul.f32 %v530, %v968
      %v988 = vmul.f32 %v531, %v968
      %v989 = vmul.f32 %v532, %v968
      %v990 = vmul.f32 %v533, %v968
      %v991 = vmul.f32 %v534, %v968
      %v992 = vmul.f32 %v535, %v968
      %vm1017 = vcmask 1043456
      %v1018 = vrot.slane %v969, 4
      %v1019 = vrot.slane %v970, 4
      %v1020 = vsel %vm1017, %v1018, %v1019
      %v1021 = vrot.slane %v971, 4
      %v1022 = vsel %vm1017, %v1019, %v1021
      %v1023 = vrot.slane %v972, 4
      %v1024 = vrot.slane %v973, 4
      %v1025 = vsel %vm1017, %v1023, %v1024
      %v1026 = vrot.slane %v974, 4
      %v1027 = vsel %vm1017, %v1024, %v1026
      %v1028 = vrot.slane %v975, 4
      %v1029 = vrot.slane %v976, 4
      %v1030 = vsel %vm1017, %v1028, %v1029
      %v1031 = vrot.slane %v977, 4
      %v1032 = vsel %vm1017, %v1029, %v1031
      %v1033 = vrot.slane %v978, 4
      %v1034 = vrot.slane %v979, 4
      %v1035 = vsel %vm1017, %v1033, %v1034
      %v1036 = vrot.slane %v980, 4
      %v1037 = vsel %vm1017, %v1034, %v1036
      %v1038 = vrot.slane %v981, 4
      %v1039 = vrot.slane %v982, 4
      %v1040 = vsel %vm1017, %v1038, %v1039
      %v1041 = vrot.slane %v983, 4
      %v1042 = vsel %vm1017, %v1039, %v1041
      %v1043 = vrot.slane %v984, 4
      %v1044 = vrot.slane %v985, 4
      %v1045 = vsel %vm1017, %v1043, %v1044
      %v1046 = vrot.slane %v986, 4
      %v1047 = vsel %vm1017, %v1044, %v1046
      %v1048 = vrot.slane %v987, 4
      %v1049 = vrot.slane %v988, 4
      %v1050 = vsel %vm1017, %v1048, %v1049
      %v1051 = vrot.slane %v989, 4
      %v1052 = vsel %vm1017, %v1049, %v1051
      %v1053 = vrot.slane %v990, 4
      %v1054 = vrot.slane %v991, 4
      %v1055 = vsel %vm1017, %v1053, %v1054
      %v1056 = vrot.slane %v992, 4
      %v1057 = vsel %vm1017, %v1054, %v1056
      %v1074 = vadd.f32 %v949, %v1020
      %v1075 = vadd.f32 %v950, %v1022
      %v1076 = vadd.f32 %v951, %v1025
      %v1077 = vadd.f32 %v952, %v1027
      %v1078 = vadd.f32 %v953, %v1030
      %v1079 = vadd.f32 %v954, %v1032
      %v1080 = vadd.f32 %v955, %v1035
      %v1081 = vadd.f32 %v956, %v1037
      %v1082 = vadd.f32 %v957, %v1040
      %v1083 = vadd.f32 %v958, %v1042
      %v1084 = vadd.f32 %v959, %v1045
      %v1085 = vadd.f32 %v960, %v1047
      %v1086 = vadd.f32 %v961, %v1050
      %v1087 = vadd.f32 %v962, %v1052
      %v1088 = vadd.f32 %v963, %v1055
      %v1089 = vadd.f32 %v964, %v1057
      %v1090 = vlaneseq
      %v1091 = vshrl.u32 %v1090, 7
      %v1092 = vsub.s32 5, %v1091
      %v1093 = vrot.slane %v494, %v1092
      %v1094 = vmul.f32 %v512, %v1093
      %v1095 = vmul.f32 %v513, %v1093
      %v1096 = vmul.f32 %v514, %v1093
      %v1097 = vmul.f32 %v515, %v1093
      %v1098 = vmul.f32 %v516, %v1093
      %v1099 = vmul.f32 %v517, %v1093
      %v1100 = vmul.f32 %v518, %v1093
      %v1101 = vmul.f32 %v519, %v1093
      %v1102 = vmul.f32 %v520, %v1093
      %v1103 = vmul.f32 %v521, %v1093
      %v1104 = vmul.f32 %v522, %v1093
      %v1105 = vmul.f32 %v523, %v1093
      %v1106 = vmul.f32 %v524, %v1093
      %v1107 = vmul.f32 %v525, %v1093
      %v1108 = vmul.f32 %v526, %v1093
      %v1109 = vmul.f32 %v527, %v1093
      %v1110 = vmul.f32 %v528, %v1093
      %v1111 = vmul.f32 %v529, %v1093
      %v1112 = vmul.f32 %v530, %v1093
      %v1113 = vmul.f32 %v531, %v1093
      %v1114 = vmul.f32 %v532, %v1093
      %v1115 = vmul.f32 %v533, %v1093
      %v1116 = vmul.f32 %v534, %v1093
      %v1117 = vmul.f32 %v535, %v1093
      %vm1142 = vcmask 1042432
      %v1143 = vrot.slane %v1094, 5
      %v1144 = vrot.slane %v1095, 5
      %v1145 = vsel %vm1142, %v1143, %v1144
      %v1146 = vrot.slane %v1096, 5
      %v1147 = vsel %vm1142, %v1144, %v1146
      %v1148 = vrot.slane %v1097, 5
      %v1149 = vrot.slane %v1098, 5
      %v1150 = vsel %vm1142, %v1148, %v1149
      %v1151 = vrot.slane %v1099, 5
      %v1152 = vsel %vm1142, %v1149, %v1151
      %v1153 = vrot.slane %v1100, 5
      %v1154 = vrot.slane %v1101, 5
      %v1155 = vsel %vm1142, %v1153, %v1154
      %v1156 = vrot.slane %v1102, 5
      %v1157 = vsel %vm1142, %v1154, %v1156
      %v1158 = vrot.slane %v1103, 5
      %v1159 = vrot.slane %v1104, 5
      %v1160 = vsel %vm1142, %v1158, %v1159
      %v1161 = vrot.slane %v1105, 5
      %v1162 = vsel %vm1142, %v1159, %v1161
      %v1163 = vrot.slane %v1106, 5
      %v1164 = vrot.slane %v1107, 5
      %v1165 = vsel %vm1142, %v1163, %v1164
      %v1166 = vrot.slane %v1108, 5
      %v1167 = vsel %vm1142, %v1164, %v1166
      %v1168 = vrot.slane %v1109, 5
      %v1169 = vrot.slane %v1110, 5
      %v1170 = vsel %vm1142, %v1168, %v1169
      %v1171 = vrot.slane %v1111, 5
      %v1172 = vsel %vm1142, %v1169, %v1171
      %v1173 = vrot.slane %v1112, 5
      %v1174 = vrot.slane %v1113, 5
      %v1175 = vsel %vm1142, %v1173, %v1174
      %v1176 = vrot.slane %v1114, 5
      %v1177 = vsel %vm1142, %v1174, %v1176
      %v1178 = vrot.slane %v1115, 5
      %v1179 = vrot.slane %v1116, 5
      %v1180 = vsel %vm1142, %v1178, %v1179
      %v1181 = vrot.slane %v1117, 5
      %v1182 = vsel %vm1142, %v1179, %v1181
      %v1199 = vadd.f32 %v1074, %v1145
      %v1200 = vadd.f32 %v1075, %v1147
      %v1201 = vadd.f32 %v1076, %v1150
      %v1202 = vadd.f32 %v1077, %v1152
      %v1203 = vadd.f32 %v1078, %v1155
      %v1204 = vadd.f32 %v1079, %v1157
      %v1205 = vadd.f32 %v1080, %v1160
      %v1206 = vadd.f32 %v1081, %v1162
      %v1207 = vadd.f32 %v1082, %v1165
      %v1208 = vadd.f32 %v1083, %v1167
      %v1209 = vadd.f32 %v1084, %v1170
      %v1210 = vadd.f32 %v1085, %v1172
      %v1211 = vadd.f32 %v1086, %v1175
      %v1212 = vadd.f32 %v1087, %v1177
      %v1213 = vadd.f32 %v1088, %v1180
      %v1214 = vadd.f32 %v1089, %v1182
      %v1215 = vlaneseq
      %v1216 = vshrl.u32 %v1215, 7
      %v1217 = vsub.s32 6, %v1216
      %v1218 = vrot.slane %v494, %v1217
      %v1219 = vmul.f32 %v512, %v1218
      %v1220 = vmul.f32 %v513, %v1218
      %v1221 = vmul.f32 %v514, %v1218
      %v1222 = vmul.f32 %v515, %v1218
      %v1223 = vmul.f32 %v516, %v1218
      %v1224 = vmul.f32 %v517, %v1218
      %v1225 = vmul.f32 %v518, %v1218
      %v1226 = vmul.f32 %v519, %v1218
      %v1227 = vmul.f32 %v520, %v1218
      %v1228 = vmul.f32 %v521, %v1218
      %v1229 = vmul.f32 %v522, %v1218
      %v1230 = vmul.f32 %v523, %v1218
      %v1231 = vmul.f32 %v524, %v1218
      %v1232 = vmul.f32 %v525, %v1218
      %v1233 = vmul.f32 %v526, %v1218
      %v1234 = vmul.f32 %v527, %v1218
      %v1235 = vmul.f32 %v528, %v1218
      %v1236 = vmul.f32 %v529, %v1218
      %v1237 = vmul.f32 %v530, %v1218
      %v1238 = vmul.f32 %v531, %v1218
      %v1239 = vmul.f32 %v532, %v1218
      %v1240 = vmul.f32 %v533, %v1218
      %v1241 = vmul.f32 %v534, %v1218
      %v1242 = vmul.f32 %v535, %v1218
      %vm1267 = vcmask 1041408
      %v1268 = vrot.slane %v1219, 6
      %v1269 = vrot.slane %v1220, 6
      %v1270 = vsel %vm1267, %v1268, %v1269
      %v1271 = vrot.slane %v1221, 6
      %v1272 = vsel %vm1267, %v1269, %v1271
      %v1273 = vrot.slane %v1222, 6
      %v1274 = vrot.slane %v1223, 6
      %v1275 = vsel %vm1267, %v1273, %v1274
      %v1276 = vrot.slane %v1224, 6
      %v1277 = vsel %vm1267, %v1274, %v1276
      %v1278 = vrot.slane %v1225, 6
      %v1279 = vrot.slane %v1226, 6
      %v1280 = vsel %vm1267, %v1278, %v1279
      %v1281 = vrot.slane %v1227, 6
      %v1282 = vsel %vm1267, %v1279, %v1281
      %v1283 = vrot.slane %v1228, 6
      %v1284 = vrot.slane %v1229, 6
      %v1285 = vsel %vm1267, %v1283, %v1284
      %v1286 = vrot.slane %v1230, 6
      %v1287 = vsel %vm1267, %v1284, %v1286
      %v1288 = vrot.slane %v1231, 6
      %v1289 = vrot.slane %v1232, 6
      %v1290 = vsel %vm1267, %v1288, %v1289
      %v1291 = vrot.slane %v1233, 6
      %v1292 = vsel %vm1267, %v1289, %v1291
      %v1293 = vrot.slane %v1234, 6
      %v1294 = vrot.slane %v1235, 6
      %v1295 = vsel %vm1267, %v1293, %v1294
      %v1296 = vrot.slane %v1236, 6
      %v1297 = vsel %vm1267, %v1294, %v1296
      %v1298 = vrot.slane %v1237, 6
      %v1299 = vrot.slane %v1238, 6
      %v1300 = vsel %vm1267, %v1298, %v1299
      %v1301 = vrot.slane %v1239, 6
      %v1302 = vsel %vm1267, %v1299, %v1301
      %v1303 = vrot.slane %v1240, 6
      %v1304 = vrot.slane %v1241, 6
      %v1305 = vsel %vm1267, %v1303, %v1304
      %v1306 = vrot.slane %v1242, 6
      %v1307 = vsel %vm1267, %v1304, %v1306
      %v1324 = vadd.f32 %v1199, %v1270
      %v1325 = vadd.f32 %v1200, %v1272
      %v1326 = vadd.f32 %v1201, %v1275
      %v1327 = vadd.f32 %v1202, %v1277
      %v1328 = vadd.f32 %v1203, %v1280
      %v1329 = vadd.f32 %v1204, %v1282
      %v1330 = vadd.f32 %v1205, %v1285
      %v1331 = vadd.f32 %v1206, %v1287
      %v1332 = vadd.f32 %v1207, %v1290
      %v1333 = vadd.f32 %v1208, %v1292
      %v1334 = vadd.f32 %v1209, %v1295
      %v1335 = vadd.f32 %v1210, %v1297
      %v1336 = vadd.f32 %v1211, %v1300
      %v1337 = vadd.f32 %v1212, %v1302
      %v1338 = vadd.f32 %v1213, %v1305
      %v1339 = vadd.f32 %v1214, %v1307
      %v1340 = vlaneseq
      %v1341 = vshrl.u32 %v1340, 7
      %v1342 = vsub.s32 0, %v1341
      %v1343 = vrot.slane %v495, %v1342
      %v1344 = vmul.f32 %v515, %v1343
      %v1345 = vmul.f32 %v516, %v1343
      %v1346 = vmul.f32 %v518, %v1343
      %v1347 = vmul.f32 %v519, %v1343
      %v1348 = vmul.f32 %v521, %v1343
      %v1349 = vmul.f32 %v522, %v1343
      %v1350 = vmul.f32 %v524, %v1343
      %v1351 = vmul.f32 %v525, %v1343
      %v1352 = vmul.f32 %v527, %v1343
      %v1353 = vmul.f32 %v528, %v1343
      %v1354 = vmul.f32 %v530, %v1343
      %v1355 = vmul.f32 %v531, %v1343
      %v1356 = vmul.f32 %v533, %v1343
      %v1357 = vmul.f32 %v534, %v1343
      %v1358 = vmul.f32 %v536, %v1343
      %v1359 = vmul.f32 %v537, %v1343
      %v1360 = vadd.f32 %v1324, %v1344
      %v1361 = vadd.f32 %v1325, %v1345
      %v1362 = vadd.f32 %v1326, %v1346
      %v1363 = vadd.f32 %v1327, %v1347
      %v1364 = vadd.f32 %v1328, %v1348
      %v1365 = vadd.f32 %v1329, %v1349
      %v1366 = vadd.f32 %v1330, %v1350
      %v1367 = vadd.f32 %v1331, %v1351
      %v1368 = vadd.f32 %v1332, %v1352
      %v1369 = vadd.f32 %v1333, %v1353
      %v1370 = vadd.f32 %v1334, %v1354
      %v1371 = vadd.f32 %v1335, %v1355
      %v1372 = vadd.f32 %v1336, %v1356
      %v1373 = vadd.f32 %v1337, %v1357
      %v1374 = vadd.f32 %v1338, %v1358
      %v1375 = vadd.f32 %v1339, %v1359
      %v1376 = vlaneseq
      %v1377 = vshrl.u32 %v1376, 7
      %v1378 = vsub.s32 1, %v1377
      %v1379 = vrot.slane %v495, %v1378
      %v1380 = vmul.f32 %v515, %v1379
      %v1381 = vmul.f32 %v516, %v1379
      %v1382 = vmul.f32 %v517, %v1379
      %v1383 = vmul.f32 %v518, %v1379
      %v1384 = vmul.f32 %v519, %v1379
      %v1385 = vmul.f32 %v520, %v1379
      %v1386 = vmul.f32 %v521, %v1379
      %v1387 = vmul.f32 %v522, %v1379
      %v1388 = vmul.f32 %v523, %v1379
      %v1389 = vmul.f32 %v524, %v1379
      %v1390 = vmul.f32 %v525, %v1379
      %v1391 = vmul.f32 %v526, %v1379
      %v1392 = vmul.f32 %v527, %v1379
      %v1393 = vmul.f32 %v528, %v1379
      %v1394 = vmul.f32 %v529, %v1379
      %v1395 = vmul.f32 %v530, %v1379
      %v1396 = vmul.f32 %v531, %v1379
      %v1397 = vmul.f32 %v532, %v1379
      %v1398 = vmul.f32 %v533, %v1379
      %v1399 = vmul.f32 %v534, %v1379
      %v1400 = vmul.f32 %v535, %v1379
      %v1401 = vmul.f32 %v536, %v1379
      %v1402 = vmul.f32 %v537, %v1379
      %v1403 = vmul.f32 %v538, %v1379
      %v1428 = vrot.slane %v1380, 1
      %v1429 = vrot.slane %v1381, 1
      %v1430 = vsel %vm642, %v1428, %v1429
      %v1431 = vrot.slane %v1382, 1
      %v1432 = vsel %vm642, %v1429, %v1431
      %v1433 = vrot.slane %v1383, 1
      %v1434 = vrot.slane %v1384, 1
      %v1435 = vsel %vm642, %v1433, %v1434
      %v1436 = vrot.slane %v1385, 1
      %v1437 = vsel %vm642, %v1434, %v1436
      %v1438 = vrot.slane %v1386, 1
      %v1439 = vrot.slane %v1387, 1
      %v1440 = vsel %vm642, %v1438, %v1439
      %v1441 = vrot.slane %v1388, 1
      %v1442 = vsel %vm642, %v1439, %v1441
      %v1443 = vrot.slane %v1389, 1
      %v1444 = vrot.slane %v1390, 1
      %v1445 = vsel %vm642, %v1443, %v1444
      %v1446 = vrot.slane %v1391, 1
      %v1447 = vsel %vm642, %v1444, %v1446
      %v1448 = vrot.slane %v1392, 1
      %v1449 = vrot.slane %v1393, 1
      %v1450 = vsel %vm642, %v1448, %v1449
      %v1451 = vrot.slane %v1394, 1
      %v1452 = vsel %vm642, %v1449, %v1451
      %v1453 = vrot.slane %v1395, 1
      %v1454 = vrot.slane %v1396, 1
      %v1455 = vsel %vm642, %v1453, %v1454
      %v1456 = vrot.slane %v1397, 1
      %v1457 = vsel %vm642, %v1454, %v1456
      %v1458 = vrot.slane %v1398, 1
      %v1459 = vrot.slane %v1399, 1
      %v1460 = vsel %vm642, %v1458, %v1459
      %v1461 = vrot.slane %v1400, 1
      %v1462 = vsel %vm642, %v1459, %v1461
      %v1463 = vrot.slane %v1401, 1
      %v1464 = vrot.slane %v1402, 1
      %v1465 = vsel %vm642, %v1463, %v1464
      %v1466 = vrot.slane %v1403, 1
      %v1467 = vsel %vm642, %v1464, %v1466
      %v1484 = vadd.f32 %v1360, %v1430
      %v1485 = vadd.f32 %v1361, %v1432
      %v1486 = vadd.f32 %v1362, %v1435
      %v1487 = vadd.f32 %v1363, %v1437
      %v1488 = vadd.f32 %v1364, %v1440
      %v1489 = vadd.f32 %v1365, %v1442
      %v1490 = vadd.f32 %v1366, %v1445
      %v1491 = vadd.f32 %v1367, %v1447
      %v1492 = vadd.f32 %v1368, %v1450
      %v1493 = vadd.f32 %v1369, %v1452
      %v1494 = vadd.f32 %v1370, %v1455
      %v1495 = vadd.f32 %v1371, %v1457
      %v1496 = vadd.f32 %v1372, %v1460
      %v1497 = vadd.f32 %v1373, %v1462
      %v1498 = vadd.f32 %v1374, %v1465
      %v1499 = vadd.f32 %v1375, %v1467
      %v1500 = vlaneseq
      %v1501 = vshrl.u32 %v1500, 7
      %v1502 = vsub.s32 2, %v1501
      %v1503 = vrot.slane %v495, %v1502
      %v1504 = vmul.f32 %v515, %v1503
      %v1505 = vmul.f32 %v516, %v1503
      %v1506 = vmul.f32 %v517, %v1503
      %v1507 = vmul.f32 %v518, %v1503
      %v1508 = vmul.f32 %v519, %v1503
      %v1509 = vmul.f32 %v520, %v1503
      %v1510 = vmul.f32 %v521, %v1503
      %v1511 = vmul.f32 %v522, %v1503
      %v1512 = vmul.f32 %v523, %v1503
      %v1513 = vmul.f32 %v524, %v1503
      %v1514 = vmul.f32 %v525, %v1503
      %v1515 = vmul.f32 %v526, %v1503
      %v1516 = vmul.f32 %v527, %v1503
      %v1517 = vmul.f32 %v528, %v1503
      %v1518 = vmul.f32 %v529, %v1503
      %v1519 = vmul.f32 %v530, %v1503
      %v1520 = vmul.f32 %v531, %v1503
      %v1521 = vmul.f32 %v532, %v1503
      %v1522 = vmul.f32 %v533, %v1503
      %v1523 = vmul.f32 %v534, %v1503
      %v1524 = vmul.f32 %v535, %v1503
      %v1525 = vmul.f32 %v536, %v1503
      %v1526 = vmul.f32 %v537, %v1503
      %v1527 = vmul.f32 %v538, %v1503
      %v1552 = vrot.slane %v1504, 2
      %v1553 = vrot.slane %v1505, 2
      %v1554 = vsel %vm767, %v1552, %v1553
      %v1555 = vrot.slane %v1506, 2
      %v1556 = vsel %vm767, %v1553, %v1555
      %v1557 = vrot.slane %v1507, 2
      %v1558 = vrot.slane %v1508, 2
      %v1559 = vsel %vm767, %v1557, %v1558
      %v1560 = vrot.slane %v1509, 2
      %v1561 = vsel %vm767, %v1558, %v1560
      %v1562 = vrot.slane %v1510, 2
      %v1563 = vrot.slane %v1511, 2
      %v1564 = vsel %vm767, %v1562, %v1563
      %v1565 = vrot.slane %v1512, 2
      %v1566 = vsel %vm767, %v1563, %v1565
      %v1567 = vrot.slane %v1513, 2
      %v1568 = vrot.slane %v1514, 2
      %v1569 = vsel %vm767, %v1567, %v1568
      %v1570 = vrot.slane %v1515, 2
      %v1571 = vsel %vm767, %v1568, %v1570
      %v1572 = vrot.slane %v1516, 2
      %v1573 = vrot.slane %v1517, 2
      %v1574 = vsel %vm767, %v1572, %v1573
      %v1575 = vrot.slane %v1518, 2
      %v1576 = vsel %vm767, %v1573, %v1575
      %v1577 = vrot.slane %v1519, 2
      %v1578 = vrot.slane %v1520, 2
      %v1579 = vsel %vm767, %v1577, %v1578
      %v1580 = vrot.slane %v1521, 2
      %v1581 = vsel %vm767, %v1578, %v1580
      %v1582 = vrot.slane %v1522, 2
      %v1583 = vrot.slane %v1523, 2
      %v1584 = vsel %vm767, %v1582, %v1583
      %v1585 = vrot.slane %v1524, 2
      %v1586 = vsel %vm767, %v1583, %v1585
      %v1587 = vrot.slane %v1525, 2
      %v1588 = vrot.slane %v1526, 2
      %v1589 = vsel %vm767, %v1587, %v1588
      %v1590 = vrot.slane %v1527, 2
      %v1591 = vsel %vm767, %v1588, %v1590
      %v1608 = vadd.f32 %v1484, %v1554
      %v1609 = vadd.f32 %v1485, %v1556
      %v1610 = vadd.f32 %v1486, %v1559
      %v1611 = vadd.f32 %v1487, %v1561
      %v1612 = vadd.f32 %v1488, %v1564
      %v1613 = vadd.f32 %v1489, %v1566
      %v1614 = vadd.f32 %v1490, %v1569
      %v1615 = vadd.f32 %v1491, %v1571
      %v1616 = vadd.f32 %v1492, %v1574
      %v1617 = vadd.f32 %v1493, %v1576
      %v1618 = vadd.f32 %v1494, %v1579
      %v1619 = vadd.f32 %v1495, %v1581
      %v1620 = vadd.f32 %v1496, %v1584
      %v1621 = vadd.f32 %v1497, %v1586
      %v1622 = vadd.f32 %v1498, %v1589
      %v1623 = vadd.f32 %v1499, %v1591
      %v1624 = vlaneseq
      %v1625 = vshrl.u32 %v1624, 7
      %v1626 = vsub.s32 3, %v1625
      %v1627 = vrot.slane %v495, %v1626
      %v1628 = vmul.f32 %v515, %v1627
      %v1629 = vmul.f32 %v516, %v1627
      %v1630 = vmul.f32 %v517, %v1627
      %v1631 = vmul.f32 %v518, %v1627
      %v1632 = vmul.f32 %v519, %v1627
      %v1633 = vmul.f32 %v520, %v1627
      %v1634 = vmul.f32 %v521, %v1627
      %v1635 = vmul.f32 %v522, %v1627
      %v1636 = vmul.f32 %v523, %v1627
      %v1637 = vmul.f32 %v524, %v1627
      %v1638 = vmul.f32 %v525, %v1627
      %v1639 = vmul.f32 %v526, %v1627
      %v1640 = vmul.f32 %v527, %v1627
      %v1641 = vmul.f32 %v528, %v1627
      %v1642 = vmul.f32 %v529, %v1627
      %v1643 = vmul.f32 %v530, %v1627
      %v1644 = vmul.f32 %v531, %v1627
      %v1645 = vmul.f32 %v532, %v1627
      %v1646 = vmul.f32 %v533, %v1627
      %v1647 = vmul.f32 %v534, %v1627
      %v1648 = vmul.f32 %v535, %v1627
      %v1649 = vmul.f32 %v536, %v1627
      %v1650 = vmul.f32 %v537, %v1627
      %v1651 = vmul.f32 %v538, %v1627
      %v1676 = vrot.slane %v1628, 3
      %v1677 = vrot.slane %v1629, 3
      %v1678 = vsel %vm892, %v1676, %v1677
      %v1679 = vrot.slane %v1630, 3
      %v1680 = vsel %vm892, %v1677, %v1679
      %v1681 = vrot.slane %v1631, 3
      %v1682 = vrot.slane %v1632, 3
      %v1683 = vsel %vm892, %v1681, %v1682
      %v1684 = vrot.slane %v1633, 3
      %v1685 = vsel %vm892, %v1682, %v1684
      %v1686 = vrot.slane %v1634, 3
      %v1687 = vrot.slane %v1635, 3
      %v1688 = vsel %vm892, %v1686, %v1687
      %v1689 = vrot.slane %v1636, 3
      %v1690 = vsel %vm892, %v1687, %v1689
      %v1691 = vrot.slane %v1637, 3
      %v1692 = vrot.slane %v1638, 3
      %v1693 = vsel %vm892, %v1691, %v1692
      %v1694 = vrot.slane %v1639, 3
      %v1695 = vsel %vm892, %v1692, %v1694
      %v1696 = vrot.slane %v1640, 3
      %v1697 = vrot.slane %v1641, 3
      %v1698 = vsel %vm892, %v1696, %v1697
      %v1699 = vrot.slane %v1642, 3
      %v1700 = vsel %vm892, %v1697, %v1699
      %v1701 = vrot.slane %v1643, 3
      %v1702 = vrot.slane %v1644, 3
      %v1703 = vsel %vm892, %v1701, %v1702
      %v1704 = vrot.slane %v1645, 3
      %v1705 = vsel %vm892, %v1702, %v1704
      %v1706 = vrot.slane %v1646, 3
      %v1707 = vrot.slane %v1647, 3
      %v1708 = vsel %vm892, %v1706, %v1707
      %v1709 = vrot.slane %v1648, 3
      %v1710 = vsel %vm892, %v1707, %v1709
      %v1711 = vrot.slane %v1649, 3
      %v1712 = vrot.slane %v1650, 3
      %v1713 = vsel %vm892, %v1711, %v1712
      %v1714 = vrot.slane %v1651, 3
      %v1715 = vsel %vm892, %v1712, %v1714
      %v1732 = vadd.f32 %v1608, %v1678
      %v1733 = vadd.f32 %v1609, %v1680
      %v1734 = vadd.f32 %v1610, %v1683
      %v1735 = vadd.f32 %v1611, %v1685
      %v1736 = vadd.f32 %v1612, %v1688
      %v1737 = vadd.f32 %v1613, %v1690
      %v1738 = vadd.f32 %v1614, %v1693
      %v1739 = vadd.f32 %v1615, %v1695
      %v1740 = vadd.f32 %v1616, %v1698
      %v1741 = vadd.f32 %v1617, %v1700
      %v1742 = vadd.f32 %v1618, %v1703
      %v1743 = vadd.f32 %v1619, %v1705
      %v1744 = vadd.f32 %v1620, %v1708
      %v1745 = vadd.f32 %v1621, %v1710
      %v1746 = vadd.f32 %v1622, %v1713
      %v1747 = vadd.f32 %v1623, %v1715
      %v1748 = vlaneseq
      %v1749 = vshrl.u32 %v1748, 7
      %v1750 = vsub.s32 4, %v1749
      %v1751 = vrot.slane %v495, %v1750
      %v1752 = vmul.f32 %v515, %v1751
      %v1753 = vmul.f32 %v516, %v1751
      %v1754 = vmul.f32 %v517, %v1751
      %v1755 = vmul.f32 %v518, %v1751
      %v1756 = vmul.f32 %v519, %v1751
      %v1757 = vmul.f32 %v520, %v1751
      %v1758 = vmul.f32 %v521, %v1751
      %v1759 = vmul.f32 %v522, %v1751
      %v1760 = vmul.f32 %v523, %v1751
      %v1761 = vmul.f32 %v524, %v1751
      %v1762 = vmul.f32 %v525, %v1751
      %v1763 = vmul.f32 %v526, %v1751
      %v1764 = vmul.f32 %v527, %v1751
      %v1765 = vmul.f32 %v528, %v1751
      %v1766 = vmul.f32 %v529, %v1751
      %v1767 = vmul.f32 %v530, %v1751
      %v1768 = vmul.f32 %v531, %v1751
      %v1769 = vmul.f32 %v532, %v1751
      %v1770 = vmul.f32 %v533, %v1751
      %v1771 = vmul.f32 %v534, %v1751
      %v1772 = vmul.f32 %v535, %v1751
      %v1773 = vmul.f32 %v536, %v1751
      %v1774 = vmul.f32 %v537, %v1751
      %v1775 = vmul.f32 %v538, %v1751
      %v1800 = vrot.slane %v1752, 4
      %v1801 = vrot.slane %v1753, 4
      %v1802 = vsel %vm1017, %v1800, %v1801
      %v1803 = vrot.slane %v1754, 4
      %v1804 = vsel %vm1017, %v1801, %v1803
      %v1805 = vrot.slane %v1755, 4
      %v1806 = vrot.slane %v1756, 4
      %v1807 = vsel %vm1017, %v1805, %v1806
      %v1808 = vrot.slane %v1757, 4
      %v1809 = vsel %vm1017, %v1806, %v1808
      %v1810 = vrot.slane %v1758, 4
      %v1811 = vrot.slane %v1759, 4
      %v1812 = vsel %vm1017, %v1810, %v1811
      %v1813 = vrot.slane %v1760, 4
      %v1814 = vsel %vm1017, %v1811, %v1813
      %v1815 = vrot.slane %v1761, 4
      %v1816 = vrot.slane %v1762, 4
      %v1817 = vsel %vm1017, %v1815, %v1816
      %v1818 = vrot.slane %v1763, 4
      %v1819 = vsel %vm1017, %v1816, %v1818
      %v1820 = vrot.slane %v1764, 4
      %v1821 = vrot.slane %v1765, 4
      %v1822 = vsel %vm1017, %v1820, %v1821
      %v1823 = vrot.slane %v1766, 4
      %v1824 = vsel %vm1017, %v1821, %v1823
      %v1825 = vrot.slane %v1767, 4
      %v1826 = vrot.slane %v1768, 4
      %v1827 = vsel %vm1017, %v1825, %v1826
      %v1828 = vrot.slane %v1769, 4
      %v1829 = vsel %vm1017, %v1826, %v1828
      %v1830 = vrot.slane %v1770, 4
      %v1831 = vrot.slane %v1771, 4
      %v1832 = vsel %vm1017, %v1830, %v1831
      %v1833 = vrot.slane %v1772, 4
      %v1834 = vsel %vm1017, %v1831, %v1833
      %v1835 = vrot.slane %v1773, 4
      %v1836 = vrot.slane %v1774, 4
      %v1837 = vsel %vm1017, %v1835, %v1836
      %v1838 = vrot.slane %v1775, 4
      %v1839 = vsel %vm1017, %v1836, %v1838
      %v1856 = vadd.f32 %v1732, %v1802
      %v1857 = vadd.f32 %v1733, %v1804
      %v1858 = vadd.f32 %v1734, %v1807
      %v1859 = vadd.f32 %v1735, %v1809
      %v1860 = vadd.f32 %v1736, %v1812
      %v1861 = vadd.f32 %v1737, %v1814
      %v1862 = vadd.f32 %v1738, %v1817
      %v1863 = vadd.f32 %v1739, %v1819
      %v1864 = vadd.f32 %v1740, %v1822
      %v1865 = vadd.f32 %v1741, %v1824
      %v1866 = vadd.f32 %v1742, %v1827
      %v1867 = vadd.f32 %v1743, %v1829
      %v1868 = vadd.f32 %v1744, %v1832
      %v1869 = vadd.f32 %v1745, %v1834
      %v1870 = vadd.f32 %v1746, %v1837
      %v1871 = vadd.f32 %v1747, %v1839
      %v1872 = vlaneseq
      %v1873 = vshrl.u32 %v1872, 7
      %v1874 = vsub.s32 5, %v1873
      %v1875 = vrot.slane %v495, %v1874
      %v1876 = vmul.f32 %v515, %v1875
      %v1877 = vmul.f32 %v516, %v1875
      %v1878 = vmul.f32 %v517, %v1875
      %v1879 = vmul.f32 %v518, %v1875
      %v1880 = vmul.f32 %v519, %v1875
      %v1881 = vmul.f32 %v520, %v1875
      %v1882 = vmul.f32 %v521, %v1875
      %v1883 = vmul.f32 %v522, %v1875
      %v1884 = vmul.f32 %v523, %v1875
      %v1885 = vmul.f32 %v524, %v1875
      %v1886 = vmul.f32 %v525, %v1875
      %v1887 = vmul.f32 %v526, %v1875
      %v1888 = vmul.f32 %v527, %v1875
      %v1889 = vmul.f32 %v528, %v1875
      %v1890 = vmul.f32 %v529, %v1875
      %v1891 = vmul.f32 %v530, %v1875
      %v1892 = vmul.f32 %v531, %v1875
      %v1893 = vmul.f32 %v532, %v1875
      %v1894 = vmul.f32 %v533, %v1875
      %v1895 = vmul.f32 %v534, %v1875
      %v1896 = vmul.f32 %v535, %v1875
      %v1897 = vmul.f32 %v536, %v1875
      %v1898 = vmul.f32 %v537, %v1875
      %v1899 = vmul.f32 %v538, %v1875
      %v1924 = vrot.slane %v1876, 5
      %v1925 = vrot.slane %v1877, 5
      %v1926 = vsel %vm1142, %v1924, %v1925
      %v1927 = vrot.slane %v1878, 5
      %v1928 = vsel %vm1142, %v1925, %v1927
      %v1929 = vrot.slane %v1879, 5
      %v1930 = vrot.slane %v1880, 5
      %v1931 = vsel %vm1142, %v1929, %v1930
      %v1932 = vrot.slane %v1881, 5
      %v1933 = vsel %vm1142, %v1930, %v1932
      %v1934 = vrot.slane %v1882, 5
      %v1935 = vrot.slane %v1883, 5
      %v1936 = vsel %vm1142, %v1934, %v1935
      %v1937 = vrot.slane %v1884, 5
      %v1938 = vsel %vm1142, %v1935, %v1937
      %v1939 = vrot.slane %v1885, 5
      %v1940 = vrot.slane %v1886, 5
      %v1941 = vsel %vm1142, %v1939, %v1940
      %v1942 = vrot.slane %v1887, 5
      %v1943 = vsel %vm1142, %v1940, %v1942
      %v1944 = vrot.slane %v1888, 5
      %v1945 = vrot.slane %v1889, 5
      %v1946 = vsel %vm1142, %v1944, %v1945
      %v1947 = vrot.slane %v1890, 5
      %v1948 = vsel %vm1142, %v1945, %v1947
      %v1949 = vrot.slane %v1891, 5
      %v1950 = vrot.slane %v1892, 5
      %v1951 = vsel %vm1142, %v1949, %v1950
      %v1952 = vrot.slane %v1893, 5
      %v1953 = vsel %vm1142, %v1950, %v1952
      %v1954 = vrot.slane %v1894, 5
      %v1955 = vrot.slane %v1895, 5
      %v1956 = vsel %vm1142, %v1954, %v1955
      %v1957 = vrot.slane %v1896, 5
      %v1958 = vsel %vm1142, %v1955, %v1957
      %v1959 = vrot.slane %v1897, 5
      %v1960 = vrot.slane %v1898, 5
      %v1961 = vsel %vm1142, %v1959, %v1960
      %v1962 = vrot.slane %v1899, 5
      %v1963 = vsel %vm1142, %v1960, %v1962
      %v1980 = vadd.f32 %v1856, %v1926
      %v1981 = vadd.f32 %v1857, %v1928
      %v1982 = vadd.f32 %v1858, %v1931
      %v1983 = vadd.f32 %v1859, %v1933
      %v1984 = vadd.f32 %v1860, %v1936
      %v1985 = vadd.f32 %v1861, %v1938
      %v1986 = vadd.f32 %v1862, %v1941
      %v1987 = vadd.f32 %v1863, %v1943
      %v1988 = vadd.f32 %v1864, %v1946
      %v1989 = vadd.f32 %v1865, %v1948
      %v1990 = vadd.f32 %v1866, %v1951
      %v1991 = vadd.f32 %v1867, %v1953
      %v1992 = vadd.f32 %v1868, %v1956
      %v1993 = vadd.f32 %v1869, %v1958
      %v1994 = vadd.f32 %v1870, %v1961
      %v1995 = vadd.f32 %v1871, %v1963
      %v1996 = vlaneseq
      %v1997 = vshrl.u32 %v1996, 7
      %v1998 = vsub.s32 6, %v1997
      %v1999 = vrot.slane %v495, %v1998
      %v2000 = vmul.f32 %v515, %v1999
      %v2001 = vmul.f32 %v516, %v1999
      %v2002 = vmul.f32 %v517, %v1999
      %v2003 = vmul.f32 %v518, %v1999
      %v2004 = vmul.f32 %v519, %v1999
      %v2005 = vmul.f32 %v520, %v1999
      %v2006 = vmul.f32 %v521, %v1999
      %v2007 = vmul.f32 %v522, %v1999
      %v2008 = vmul.f32 %v523, %v1999
      %v2009 = vmul.f32 %v524, %v1999
      %v2010 = vmul.f32 %v525, %v1999
      %v2011 = vmul.f32 %v526, %v1999
      %v2012 = vmul.f32 %v527, %v1999
      %v2013 = vmul.f32 %v528, %v1999
      %v2014 = vmul.f32 %v529, %v1999
      %v2015 = vmul.f32 %v530, %v1999
      %v2016 = vmul.f32 %v531, %v1999
      %v2017 = vmul.f32 %v532, %v1999
      %v2018 = vmul.f32 %v533, %v1999
      %v2019 = vmul.f32 %v534, %v1999
      %v2020 = vmul.f32 %v535, %v1999
      %v2021 = vmul.f32 %v536, %v1999
      %v2022 = vmul.f32 %v537, %v1999
      %v2023 = vmul.f32 %v538, %v1999
      %v2048 = vrot.slane %v2000, 6
      %v2049 = vrot.slane %v2001, 6
      %v2050 = vsel %vm1267, %v2048, %v2049
      %v2051 = vrot.slane %v2002, 6
      %v2052 = vsel %vm1267, %v2049, %v2051
      %v2053 = vrot.slane %v2003, 6
      %v2054 = vrot.slane %v2004, 6
      %v2055 = vsel %vm1267, %v2053, %v2054
      %v2056 = vrot.slane %v2005, 6
      %v2057 = vsel %vm1267, %v2054, %v2056
      %v2058 = vrot.slane %v2006, 6
      %v2059 = vrot.slane %v2007, 6
      %v2060 = vsel %vm1267, %v2058, %v2059
      %v2061 = vrot.slane %v2008, 6
      %v2062 = vsel %vm1267, %v2059, %v2061
      %v2063 = vrot.slane %v2009, 6
      %v2064 = vrot.slane %v2010, 6
      %v2065 = vsel %vm1267, %v2063, %v2064
      %v2066 = vrot.slane %v2011, 6
      %v2067 = vsel %vm1267, %v2064, %v2066
      %v2068 = vrot.slane %v2012, 6
      %v2069 = vrot.slane %v2013, 6
      %v2070 = vsel %vm1267, %v2068, %v2069
      %v2071 = vrot.slane %v2014, 6
      %v2072 = vsel %vm1267, %v2069, %v2071
      %v2073 = vrot.slane %v2015, 6
      %v2074 = vrot.slane %v2016, 6
      %v2075 = vsel %vm1267, %v2073, %v2074
      %v2076 = vrot.slane %v2017, 6
      %v2077 = vsel %vm1267, %v2074, %v2076
      %v2078 = vrot.slane %v2018, 6
      %v2079 = vrot.slane %v2019, 6
      %v2080 = vsel %vm1267, %v2078, %v2079
      %v2081 = vrot.slane %v2020, 6
      %v2082 = vsel %vm1267, %v2079, %v2081
      %v2083 = vrot.slane %v2021, 6
      %v2084 = vrot.slane %v2022, 6
      %v2085 = vsel %vm1267, %v2083, %v2084
      %v2086 = vrot.slane %v2023, 6
      %v2087 = vsel %vm1267, %v2084, %v2086
      %v2104 = vadd.f32 %v1980, %v2050
      %v2105 = vadd.f32 %v1981, %v2052
      %v2106 = vadd.f32 %v1982, %v2055
      %v2107 = vadd.f32 %v1983, %v2057
      %v2108 = vadd.f32 %v1984, %v2060
      %v2109 = vadd.f32 %v1985, %v2062
      %v2110 = vadd.f32 %v1986, %v2065
      %v2111 = vadd.f32 %v1987, %v2067
      %v2112 = vadd.f32 %v1988, %v2070
      %v2113 = vadd.f32 %v1989, %v2072
      %v2114 = vadd.f32 %v1990, %v2075
      %v2115 = vadd.f32 %v1991, %v2077
      %v2116 = vadd.f32 %v1992, %v2080
      %v2117 = vadd.f32 %v1993, %v2082
      %v2118 = vadd.f32 %v1994, %v2085
      %v2119 = vadd.f32 %v1995, %v2087
      %v2120 = vlaneseq
      %v2121 = vshrl.u32 %v2120, 7
      %v2122 = vsub.s32 0, %v2121
      %v2123 = vrot.slane %v496, %v2122
      %v2124 = vmul.f32 %v518, %v2123
      %v2125 = vmul.f32 %v519, %v2123
      %v2126 = vmul.f32 %v521, %v2123
      %v2127 = vmul.f32 %v522, %v2123
      %v2128 = vmul.f32 %v524, %v2123
      %v2129 = vmul.f32 %v525, %v2123
      %v2130 = vmul.f32 %v527, %v2123
      %v2131 = vmul.f32 %v528, %v2123
      %v2132 = vmul.f32 %v530, %v2123
      %v2133 = vmul.f32 %v531, %v2123
      %v2134 = vmul.f32 %v533, %v2123
      %v2135 = vmul.f32 %v534, %v2123
      %v2136 = vmul.f32 %v536, %v2123
      %v2137 = vmul.f32 %v537, %v2123
      %v2138 = vmul.f32 %v539, %v2123
      %v2139 = vmul.f32 %v540, %v2123
      %v2140 = vadd.f32 %v2104, %v2124
      %v2141 = vadd.f32 %v2105, %v2125
      %v2142 = vadd.f32 %v2106, %v2126
      %v2143 = vadd.f32 %v2107, %v2127
      %v2144 = vadd.f32 %v2108, %v2128
      %v2145 = vadd.f32 %v2109, %v2129
      %v2146 = vadd.f32 %v2110, %v2130
      %v2147 = vadd.f32 %v2111, %v2131
      %v2148 = vadd.f32 %v2112, %v2132
      %v2149 = vadd.f32 %v2113, %v2133
      %v2150 = vadd.f32 %v2114, %v2134
      %v2151 = vadd.f32 %v2115, %v2135
      %v2152 = vadd.f32 %v2116, %v2136
      %v2153 = vadd.f32 %v2117, %v2137
      %v2154 = vadd.f32 %v2118, %v2138
      %v2155 = vadd.f32 %v2119, %v2139
      %v2156 = vlaneseq
      %v2157 = vshrl.u32 %v2156, 7
      %v2158 = vsub.s32 1, %v2157
      %v2159 = vrot.slane %v496, %v2158
      %v2160 = vmul.f32 %v518, %v2159
      %v2161 = vmul.f32 %v519, %v2159
      %v2162 = vmul.f32 %v520, %v2159
      %v2163 = vmul.f32 %v521, %v2159
      %v2164 = vmul.f32 %v522, %v2159
      %v2165 = vmul.f32 %v523, %v2159
      %v2166 = vmul.f32 %v524, %v2159
      %v2167 = vmul.f32 %v525, %v2159
      %v2168 = vmul.f32 %v526, %v2159
      %v2169 = vmul.f32 %v527, %v2159
      %v2170 = vmul.f32 %v528, %v2159
      %v2171 = vmul.f32 %v529, %v2159
      %v2172 = vmul.f32 %v530, %v2159
      %v2173 = vmul.f32 %v531, %v2159
      %v2174 = vmul.f32 %v532, %v2159
      %v2175 = vmul.f32 %v533, %v2159
      %v2176 = vmul.f32 %v534, %v2159
      %v2177 = vmul.f32 %v535, %v2159
      %v2178 = vmul.f32 %v536, %v2159
      %v2179 = vmul.f32 %v537, %v2159
      %v2180 = vmul.f32 %v538, %v2159
      %v2181 = vmul.f32 %v539, %v2159
      %v2182 = vmul.f32 %v540, %v2159
      %v2183 = vmul.f32 %v541, %v2159
      %v2208 = vrot.slane %v2160, 1
      %v2209 = vrot.slane %v2161, 1
      %v2210 = vsel %vm642, %v2208, %v2209
      %v2211 = vrot.slane %v2162, 1
      %v2212 = vsel %vm642, %v2209, %v2211
      %v2213 = vrot.slane %v2163, 1
      %v2214 = vrot.slane %v2164, 1
      %v2215 = vsel %vm642, %v2213, %v2214
      %v2216 = vrot.slane %v2165, 1
      %v2217 = vsel %vm642, %v2214, %v2216
      %v2218 = vrot.slane %v2166, 1
      %v2219 = vrot.slane %v2167, 1
      %v2220 = vsel %vm642, %v2218, %v2219
      %v2221 = vrot.slane %v2168, 1
      %v2222 = vsel %vm642, %v2219, %v2221
      %v2223 = vrot.slane %v2169, 1
      %v2224 = vrot.slane %v2170, 1
      %v2225 = vsel %vm642, %v2223, %v2224
      %v2226 = vrot.slane %v2171, 1
      %v2227 = vsel %vm642, %v2224, %v2226
      %v2228 = vrot.slane %v2172, 1
      %v2229 = vrot.slane %v2173, 1
      %v2230 = vsel %vm642, %v2228, %v2229
      %v2231 = vrot.slane %v2174, 1
      %v2232 = vsel %vm642, %v2229, %v2231
      %v2233 = vrot.slane %v2175, 1
      %v2234 = vrot.slane %v2176, 1
      %v2235 = vsel %vm642, %v2233, %v2234
      %v2236 = vrot.slane %v2177, 1
      %v2237 = vsel %vm642, %v2234, %v2236
      %v2238 = vrot.slane %v2178, 1
      %v2239 = vrot.slane %v2179, 1
      %v2240 = vsel %vm642, %v2238, %v2239
      %v2241 = vrot.slane %v2180, 1
      %v2242 = vsel %vm642, %v2239, %v2241
      %v2243 = vrot.slane %v2181, 1
      %v2244 = vrot.slane %v2182, 1
      %v2245 = vsel %vm642, %v2243, %v2244
      %v2246 = vrot.slane %v2183, 1
      %v2247 = vsel %vm642, %v2244, %v2246
      %v2264 = vadd.f32 %v2140, %v2210
      %v2265 = vadd.f32 %v2141, %v2212
      %v2266 = vadd.f32 %v2142, %v2215
      %v2267 = vadd.f32 %v2143, %v2217
      %v2268 = vadd.f32 %v2144, %v2220
      %v2269 = vadd.f32 %v2145, %v2222
      %v2270 = vadd.f32 %v2146, %v2225
      %v2271 = vadd.f32 %v2147, %v2227
      %v2272 = vadd.f32 %v2148, %v2230
      %v2273 = vadd.f32 %v2149, %v2232
      %v2274 = vadd.f32 %v2150, %v2235
      %v2275 = vadd.f32 %v2151, %v2237
      %v2276 = vadd.f32 %v2152, %v2240
      %v2277 = vadd.f32 %v2153, %v2242
      %v2278 = vadd.f32 %v2154, %v2245
      %v2279 = vadd.f32 %v2155, %v2247
      %v2280 = vlaneseq
      %v2281 = vshrl.u32 %v2280, 7
      %v2282 = vsub.s32 2, %v2281
      %v2283 = vrot.slane %v496, %v2282
      %v2284 = vmul.f32 %v518, %v2283
      %v2285 = vmul.f32 %v519, %v2283
      %v2286 = vmul.f32 %v520, %v2283
      %v2287 = vmul.f32 %v521, %v2283
      %v2288 = vmul.f32 %v522, %v2283
      %v2289 = vmul.f32 %v523, %v2283
      %v2290 = vmul.f32 %v524, %v2283
      %v2291 = vmul.f32 %v525, %v2283
      %v2292 = vmul.f32 %v526, %v2283
      %v2293 = vmul.f32 %v527, %v2283
      %v2294 = vmul.f32 %v528, %v2283
      %v2295 = vmul.f32 %v529, %v2283
      %v2296 = vmul.f32 %v530, %v2283
      %v2297 = vmul.f32 %v531, %v2283
      %v2298 = vmul.f32 %v532, %v2283
      %v2299 = vmul.f32 %v533, %v2283
      %v2300 = vmul.f32 %v534, %v2283
      %v2301 = vmul.f32 %v535, %v2283
      %v2302 = vmul.f32 %v536, %v2283
      %v2303 = vmul.f32 %v537, %v2283
      %v2304 = vmul.f32 %v538, %v2283
      %v2305 = vmul.f32 %v539, %v2283
      %v2306 = vmul.f32 %v540, %v2283
      %v2307 = vmul.f32 %v541, %v2283
      %v2332 = vrot.slane %v2284, 2
      %v2333 = vrot.slane %v2285, 2
      %v2334 = vsel %vm767, %v2332, %v2333
      %v2335 = vrot.slane %v2286, 2
      %v2336 = vsel %vm767, %v2333, %v2335
      %v2337 = vrot.slane %v2287, 2
      %v2338 = vrot.slane %v2288, 2
      %v2339 = vsel %vm767, %v2337, %v2338
      %v2340 = vrot.slane %v2289, 2
      %v2341 = vsel %vm767, %v2338, %v2340
      %v2342 = vrot.slane %v2290, 2
      %v2343 = vrot.slane %v2291, 2
      %v2344 = vsel %vm767, %v2342, %v2343
      %v2345 = vrot.slane %v2292, 2
      %v2346 = vsel %vm767, %v2343, %v2345
      %v2347 = vrot.slane %v2293, 2
      %v2348 = vrot.slane %v2294, 2
      %v2349 = vsel %vm767, %v2347, %v2348
      %v2350 = vrot.slane %v2295, 2
      %v2351 = vsel %vm767, %v2348, %v2350
      %v2352 = vrot.slane %v2296, 2
      %v2353 = vrot.slane %v2297, 2
      %v2354 = vsel %vm767, %v2352, %v2353
      %v2355 = vrot.slane %v2298, 2
      %v2356 = vsel %vm767, %v2353, %v2355
      %v2357 = vrot.slane %v2299, 2
      %v2358 = vrot.slane %v2300, 2
      %v2359 = vsel %vm767, %v2357, %v2358
      %v2360 = vrot.slane %v2301, 2
      %v2361 = vsel %vm767, %v2358, %v2360
      %v2362 = vrot.slane %v2302, 2
      %v2363 = vrot.slane %v2303, 2
      %v2364 = vsel %vm767, %v2362, %v2363
      %v2365 = vrot.slane %v2304, 2
      %v2366 = vsel %vm767, %v2363, %v2365
      %v2367 = vrot.slane %v2305, 2
      %v2368 = vrot.slane %v2306, 2
      %v2369 = vsel %vm767, %v2367, %v2368
      %v2370 = vrot.slane %v2307, 2
      %v2371 = vsel %vm767, %v2368, %v2370
      %v2388 = vadd.f32 %v2264, %v2334
      %v2389 = vadd.f32 %v2265, %v2336
      %v2390 = vadd.f32 %v2266, %v2339
      %v2391 = vadd.f32 %v2267, %v2341
      %v2392 = vadd.f32 %v2268, %v2344
      %v2393 = vadd.f32 %v2269, %v2346
      %v2394 = vadd.f32 %v2270, %v2349
      %v2395 = vadd.f32 %v2271, %v2351
      %v2396 = vadd.f32 %v2272, %v2354
      %v2397 = vadd.f32 %v2273, %v2356
      %v2398 = vadd.f32 %v2274, %v2359
      %v2399 = vadd.f32 %v2275, %v2361
      %v2400 = vadd.f32 %v2276, %v2364
      %v2401 = vadd.f32 %v2277, %v2366
      %v2402 = vadd.f32 %v2278, %v2369
      %v2403 = vadd.f32 %v2279, %v2371
      %v2404 = vlaneseq
      %v2405 = vshrl.u32 %v2404, 7
      %v2406 = vsub.s32 3, %v2405
      %v2407 = vrot.slane %v496, %v2406
      %v2408 = vmul.f32 %v518, %v2407
      %v2409 = vmul.f32 %v519, %v2407
      %v2410 = vmul.f32 %v520, %v2407
      %v2411 = vmul.f32 %v521, %v2407
      %v2412 = vmul.f32 %v522, %v2407
      %v2413 = vmul.f32 %v523, %v2407
      %v2414 = vmul.f32 %v524, %v2407
      %v2415 = vmul.f32 %v525, %v2407
      %v2416 = vmul.f32 %v526, %v2407
      %v2417 = vmul.f32 %v527, %v2407
      %v2418 = vmul.f32 %v528, %v2407
      %v2419 = vmul.f32 %v529, %v2407
      %v2420 = vmul.f32 %v530, %v2407
      %v2421 = vmul.f32 %v531, %v2407
      %v2422 = vmul.f32 %v532, %v2407
      %v2423 = vmul.f32 %v533, %v2407
      %v2424 = vmul.f32 %v534, %v2407
      %v2425 = vmul.f32 %v535, %v2407
      %v2426 = vmul.f32 %v536, %v2407
      %v2427 = vmul.f32 %v537, %v2407
      %v2428 = vmul.f32 %v538, %v2407
      %v2429 = vmul.f32 %v539, %v2407
      %v2430 = vmul.f32 %v540, %v2407
      %v2431 = vmul.f32 %v541, %v2407
      %v2456 = vrot.slane %v2408, 3
      %v2457 = vrot.slane %v2409, 3
      %v2458 = vsel %vm892, %v2456, %v2457
      %v2459 = vrot.slane %v2410, 3
      %v2460 = vsel %vm892, %v2457, %v2459
      %v2461 = vrot.slane %v2411, 3
      %v2462 = vrot.slane %v2412, 3
      %v2463 = vsel %vm892, %v2461, %v2462
      %v2464 = vrot.slane %v2413, 3
      %v2465 = vsel %vm892, %v2462, %v2464
      %v2466 = vrot.slane %v2414, 3
      %v2467 = vrot.slane %v2415, 3
      %v2468 = vsel %vm892, %v2466, %v2467
      %v2469 = vrot.slane %v2416, 3
      %v2470 = vsel %vm892, %v2467, %v2469
      %v2471 = vrot.slane %v2417, 3
      %v2472 = vrot.slane %v2418, 3
      %v2473 = vsel %vm892, %v2471, %v2472
      %v2474 = vrot.slane %v2419, 3
      %v2475 = vsel %vm892, %v2472, %v2474
      %v2476 = vrot.slane %v2420, 3
      %v2477 = vrot.slane %v2421, 3
      %v2478 = vsel %vm892, %v2476, %v2477
      %v2479 = vrot.slane %v2422, 3
      %v2480 = vsel %vm892, %v2477, %v2479
      %v2481 = vrot.slane %v2423, 3
      %v2482 = vrot.slane %v2424, 3
      %v2483 = vsel %vm892, %v2481, %v2482
      %v2484 = vrot.slane %v2425, 3
      %v2485 = vsel %vm892, %v2482, %v2484
      %v2486 = vrot.slane %v2426, 3
      %v2487 = vrot.slane %v2427, 3
      %v2488 = vsel %vm892, %v2486, %v2487
      %v2489 = vrot.slane %v2428, 3
      %v2490 = vsel %vm892, %v2487, %v2489
      %v2491 = vrot.slane %v2429, 3
      %v2492 = vrot.slane %v2430, 3
      %v2493 = vsel %vm892, %v2491, %v2492
      %v2494 = vrot.slane %v2431, 3
      %v2495 = vsel %vm892, %v2492, %v2494
      %v2512 = vadd.f32 %v2388, %v2458
      %v2513 = vadd.f32 %v2389, %v2460
      %v2514 = vadd.f32 %v2390, %v2463
      %v2515 = vadd.f32 %v2391, %v2465
      %v2516 = vadd.f32 %v2392, %v2468
      %v2517 = vadd.f32 %v2393, %v2470
      %v2518 = vadd.f32 %v2394, %v2473
      %v2519 = vadd.f32 %v2395, %v2475
      %v2520 = vadd.f32 %v2396, %v2478
      %v2521 = vadd.f32 %v2397, %v2480
      %v2522 = vadd.f32 %v2398, %v2483
      %v2523 = vadd.f32 %v2399, %v2485
      %v2524 = vadd.f32 %v2400, %v2488
      %v2525 = vadd.f32 %v2401, %v2490
      %v2526 = vadd.f32 %v2402, %v2493
      %v2527 = vadd.f32 %v2403, %v2495
      %v2528 = vlaneseq
      %v2529 = vshrl.u32 %v2528, 7
      %v2530 = vsub.s32 4, %v2529
      %v2531 = vrot.slane %v496, %v2530
      %v2532 = vmul.f32 %v518, %v2531
      %v2533 = vmul.f32 %v519, %v2531
      %v2534 = vmul.f32 %v520, %v2531
      %v2535 = vmul.f32 %v521, %v2531
      %v2536 = vmul.f32 %v522, %v2531
      %v2537 = vmul.f32 %v523, %v2531
      %v2538 = vmul.f32 %v524, %v2531
      %v2539 = vmul.f32 %v525, %v2531
      %v2540 = vmul.f32 %v526, %v2531
      %v2541 = vmul.f32 %v527, %v2531
      %v2542 = vmul.f32 %v528, %v2531
      %v2543 = vmul.f32 %v529, %v2531
      %v2544 = vmul.f32 %v530, %v2531
      %v2545 = vmul.f32 %v531, %v2531
      %v2546 = vmul.f32 %v532, %v2531
      %v2547 = vmul.f32 %v533, %v2531
      %v2548 = vmul.f32 %v534, %v2531
      %v2549 = vmul.f32 %v535, %v2531
      %v2550 = vmul.f32 %v536, %v2531
      %v2551 = vmul.f32 %v537, %v2531
      %v2552 = vmul.f32 %v538, %v2531
      %v2553 = vmul.f32 %v539, %v2531
      %v2554 = vmul.f32 %v540, %v2531
      %v2555 = vmul.f32 %v541, %v2531
      %v2580 = vrot.slane %v2532, 4
      %v2581 = vrot.slane %v2533, 4
      %v2582 = vsel %vm1017, %v2580, %v2581
      %v2583 = vrot.slane %v2534, 4
      %v2584 = vsel %vm1017, %v2581, %v2583
      %v2585 = vrot.slane %v2535, 4
      %v2586 = vrot.slane %v2536, 4
      %v2587 = vsel %vm1017, %v2585, %v2586
      %v2588 = vrot.slane %v2537, 4
      %v2589 = vsel %vm1017, %v2586, %v2588
      %v2590 = vrot.slane %v2538, 4
      %v2591 = vrot.slane %v2539, 4
      %v2592 = vsel %vm1017, %v2590, %v2591
      %v2593 = vrot.slane %v2540, 4
      %v2594 = vsel %vm1017, %v2591, %v2593
      %v2595 = vrot.slane %v2541, 4
      %v2596 = vrot.slane %v2542, 4
      %v2597 = vsel %vm1017, %v2595, %v2596
      %v2598 = vrot.slane %v2543, 4
      %v2599 = vsel %vm1017, %v2596, %v2598
      %v2600 = vrot.slane %v2544, 4
      %v2601 = vrot.slane %v2545, 4
      %v2602 = vsel %vm1017, %v2600, %v2601
      %v2603 = vrot.slane %v2546, 4
      %v2604 = vsel %vm1017, %v2601, %v2603
      %v2605 = vrot.slane %v2547, 4
      %v2606 = vrot.slane %v2548, 4
      %v2607 = vsel %vm1017, %v2605, %v2606
      %v2608 = vrot.slane %v2549, 4
      %v2609 = vsel %vm1017, %v2606, %v2608
      %v2610 = vrot.slane %v2550, 4
      %v2611 = vrot.slane %v2551, 4
      %v2612 = vsel %vm1017, %v2610, %v2611
      %v2613 = vrot.slane %v2552, 4
      %v2614 = vsel %vm1017, %v2611, %v2613
      %v2615 = vrot.slane %v2553, 4
      %v2616 = vrot.slane %v2554, 4
      %v2617 = vsel %vm1017, %v2615, %v2616
      %v2618 = vrot.slane %v2555, 4
      %v2619 = vsel %vm1017, %v2616, %v2618
      %v2636 = vadd.f32 %v2512, %v2582
      %v2637 = vadd.f32 %v2513, %v2584
      %v2638 = vadd.f32 %v2514, %v2587
      %v2639 = vadd.f32 %v2515, %v2589
      %v2640 = vadd.f32 %v2516, %v2592
      %v2641 = vadd.f32 %v2517, %v2594
      %v2642 = vadd.f32 %v2518, %v2597
      %v2643 = vadd.f32 %v2519, %v2599
      %v2644 = vadd.f32 %v2520, %v2602
      %v2645 = vadd.f32 %v2521, %v2604
      %v2646 = vadd.f32 %v2522, %v2607
      %v2647 = vadd.f32 %v2523, %v2609
      %v2648 = vadd.f32 %v2524, %v2612
      %v2649 = vadd.f32 %v2525, %v2614
      %v2650 = vadd.f32 %v2526, %v2617
      %v2651 = vadd.f32 %v2527, %v2619
      %v2652 = vlaneseq
      %v2653 = vshrl.u32 %v2652, 7
      %v2654 = vsub.s32 5, %v2653
      %v2655 = vrot.slane %v496, %v2654
      %v2656 = vmul.f32 %v518, %v2655
      %v2657 = vmul.f32 %v519, %v2655
      %v2658 = vmul.f32 %v520, %v2655
      %v2659 = vmul.f32 %v521, %v2655
      %v2660 = vmul.f32 %v522, %v2655
      %v2661 = vmul.f32 %v523, %v2655
      %v2662 = vmul.f32 %v524, %v2655
      %v2663 = vmul.f32 %v525, %v2655
      %v2664 = vmul.f32 %v526, %v2655
      %v2665 = vmul.f32 %v527, %v2655
      %v2666 = vmul.f32 %v528, %v2655
      %v2667 = vmul.f32 %v529, %v2655
      %v2668 = vmul.f32 %v530, %v2655
      %v2669 = vmul.f32 %v531, %v2655
      %v2670 = vmul.f32 %v532, %v2655
      %v2671 = vmul.f32 %v533, %v2655
      %v2672 = vmul.f32 %v534, %v2655
      %v2673 = vmul.f32 %v535, %v2655
      %v2674 = vmul.f32 %v536, %v2655
      %v2675 = vmul.f32 %v537, %v2655
      %v2676 = vmul.f32 %v538, %v2655
      %v2677 = vmul.f32 %v539, %v2655
      %v2678 = vmul.f32 %v540, %v2655
      %v2679 = vmul.f32 %v541, %v2655
      %v2704 = vrot.slane %v2656, 5
      %v2705 = vrot.slane %v2657, 5
      %v2706 = vsel %vm1142, %v2704, %v2705
      %v2707 = vrot.slane %v2658, 5
      %v2708 = vsel %vm1142, %v2705, %v2707
      %v2709 = vrot.slane %v2659, 5
      %v2710 = vrot.slane %v2660, 5
      %v2711 = vsel %vm1142, %v2709, %v2710
      %v2712 = vrot.slane %v2661, 5
      %v2713 = vsel %vm1142, %v2710, %v2712
      %v2714 = vrot.slane %v2662, 5
      %v2715 = vrot.slane %v2663, 5
      %v2716 = vsel %vm1142, %v2714, %v2715
      %v2717 = vrot.slane %v2664, 5
      %v2718 = vsel %vm1142, %v2715, %v2717
      %v2719 = vrot.slane %v2665, 5
      %v2720 = vrot.slane %v2666, 5
      %v2721 = vsel %vm1142, %v2719, %v2720
      %v2722 = vrot.slane %v2667, 5
      %v2723 = vsel %vm1142, %v2720, %v2722
      %v2724 = vrot.slane %v2668, 5
      %v2725 = vrot.slane %v2669, 5
      %v2726 = vsel %vm1142, %v2724, %v2725
      %v2727 = vrot.slane %v2670, 5
      %v2728 = vsel %vm1142, %v2725, %v2727
      %v2729 = vrot.slane %v2671, 5
      %v2730 = vrot.slane %v2672, 5
      %v2731 = vsel %vm1142, %v2729, %v2730
      %v2732 = vrot.slane %v2673, 5
      %v2733 = vsel %vm1142, %v2730, %v2732
      %v2734 = vrot.slane %v2674, 5
      %v2735 = vrot.slane %v2675, 5
      %v2736 = vsel %vm1142, %v2734, %v2735
      %v2737 = vrot.slane %v2676, 5
      %v2738 = vsel %vm1142, %v2735, %v2737
      %v2739 = vrot.slane %v2677, 5
      %v2740 = vrot.slane %v2678, 5
      %v2741 = vsel %vm1142, %v2739, %v2740
      %v2742 = vrot.slane %v2679, 5
      %v2743 = vsel %vm1142, %v2740, %v2742
      %v2760 = vadd.f32 %v2636, %v2706
      %v2761 = vadd.f32 %v2637, %v2708
      %v2762 = vadd.f32 %v2638, %v2711
      %v2763 = vadd.f32 %v2639, %v2713
      %v2764 = vadd.f32 %v2640, %v2716
      %v2765 = vadd.f32 %v2641, %v2718
      %v2766 = vadd.f32 %v2642, %v2721
      %v2767 = vadd.f32 %v2643, %v2723
      %v2768 = vadd.f32 %v2644, %v2726
      %v2769 = vadd.f32 %v2645, %v2728
      %v2770 = vadd.f32 %v2646, %v2731
      %v2771 = vadd.f32 %v2647, %v2733
      %v2772 = vadd.f32 %v2648, %v2736
      %v2773 = vadd.f32 %v2649, %v2738
      %v2774 = vadd.f32 %v2650, %v2741
      %v2775 = vadd.f32 %v2651, %v2743
      %v2776 = vlaneseq
      %v2777 = vshrl.u32 %v2776, 7
      %v2778 = vsub.s32 6, %v2777
      %v2779 = vrot.slane %v496, %v2778
      %v2780 = vmul.f32 %v518, %v2779
      %v2781 = vmul.f32 %v519, %v2779
      %v2782 = vmul.f32 %v520, %v2779
      %v2783 = vmul.f32 %v521, %v2779
      %v2784 = vmul.f32 %v522, %v2779
      %v2785 = vmul.f32 %v523, %v2779
      %v2786 = vmul.f32 %v524, %v2779
      %v2787 = vmul.f32 %v525, %v2779
      %v2788 = vmul.f32 %v526, %v2779
      %v2789 = vmul.f32 %v527, %v2779
      %v2790 = vmul.f32 %v528, %v2779
      %v2791 = vmul.f32 %v529, %v2779
      %v2792 = vmul.f32 %v530, %v2779
      %v2793 = vmul.f32 %v531, %v2779
      %v2794 = vmul.f32 %v532, %v2779
      %v2795 = vmul.f32 %v533, %v2779
      %v2796 = vmul.f32 %v534, %v2779
      %v2797 = vmul.f32 %v535, %v2779
      %v2798 = vmul.f32 %v536, %v2779
      %v2799 = vmul.f32 %v537, %v2779
      %v2800 = vmul.f32 %v538, %v2779
      %v2801 = vmul.f32 %v539, %v2779
      %v2802 = vmul.f32 %v540, %v2779
      %v2803 = vmul.f32 %v541, %v2779
      %v2828 = vrot.slane %v2780, 6
      %v2829 = vrot.slane %v2781, 6
      %v2830 = vsel %vm1267, %v2828, %v2829
      %v2831 = vrot.slane %v2782, 6
      %v2832 = vsel %vm1267, %v2829, %v2831
      %v2833 = vrot.slane %v2783, 6
      %v2834 = vrot.slane %v2784, 6
      %v2835 = vsel %vm1267, %v2833, %v2834
      %v2836 = vrot.slane %v2785, 6
      %v2837 = vsel %vm1267, %v2834, %v2836
      %v2838 = vrot.slane %v2786, 6
      %v2839 = vrot.slane %v2787, 6
      %v2840 = vsel %vm1267, %v2838, %v2839
      %v2841 = vrot.slane %v2788, 6
      %v2842 = vsel %vm1267, %v2839, %v2841
      %v2843 = vrot.slane %v2789, 6
      %v2844 = vrot.slane %v2790, 6
      %v2845 = vsel %vm1267, %v2843, %v2844
      %v2846 = vrot.slane %v2791, 6
      %v2847 = vsel %vm1267, %v2844, %v2846
      %v2848 = vrot.slane %v2792, 6
      %v2849 = vrot.slane %v2793, 6
      %v2850 = vsel %vm1267, %v2848, %v2849
      %v2851 = vrot.slane %v2794, 6
      %v2852 = vsel %vm1267, %v2849, %v2851
      %v2853 = vrot.slane %v2795, 6
      %v2854 = vrot.slane %v2796, 6
      %v2855 = vsel %vm1267, %v2853, %v2854
      %v2856 = vrot.slane %v2797, 6
      %v2857 = vsel %vm1267, %v2854, %v2856
      %v2858 = vrot.slane %v2798, 6
      %v2859 = vrot.slane %v2799, 6
      %v2860 = vsel %vm1267, %v2858, %v2859
      %v2861 = vrot.slane %v2800, 6
      %v2862 = vsel %vm1267, %v2859, %v2861
      %v2863 = vrot.slane %v2801, 6
      %v2864 = vrot.slane %v2802, 6
      %v2865 = vsel %vm1267, %v2863, %v2864
      %v2866 = vrot.slane %v2803, 6
      %v2867 = vsel %vm1267, %v2864, %v2866
      %v2884 = vadd.f32 %v2760, %v2830
      %v2885 = vadd.f32 %v2761, %v2832
      %v2886 = vadd.f32 %v2762, %v2835
      %v2887 = vadd.f32 %v2763, %v2837
      %v2888 = vadd.f32 %v2764, %v2840
      %v2889 = vadd.f32 %v2765, %v2842
      %v2890 = vadd.f32 %v2766, %v2845
      %v2891 = vadd.f32 %v2767, %v2847
      %v2892 = vadd.f32 %v2768, %v2850
      %v2893 = vadd.f32 %v2769, %v2852
      %v2894 = vadd.f32 %v2770, %v2855
      %v2895 = vadd.f32 %v2771, %v2857
      %v2896 = vadd.f32 %v2772, %v2860
      %v2897 = vadd.f32 %v2773, %v2862
      %v2898 = vadd.f32 %v2774, %v2865
      %v2899 = vadd.f32 %v2775, %v2867
      %v2900 = vlaneseq
      %v2901 = vshrl.u32 %v2900, 7
      %v2902 = vsub.s32 0, %v2901
      %v2903 = vrot.slane %v497, %v2902
      %v2904 = vmul.f32 %v521, %v2903
      %v2905 = vmul.f32 %v522, %v2903
      %v2906 = vmul.f32 %v524, %v2903
      %v2907 = vmul.f32 %v525, %v2903
      %v2908 = vmul.f32 %v527, %v2903
      %v2909 = vmul.f32 %v528, %v2903
      %v2910 = vmul.f32 %v530, %v2903
      %v2911 = vmul.f32 %v531, %v2903
      %v2912 = vmul.f32 %v533, %v2903
      %v2913 = vmul.f32 %v534, %v2903
      %v2914 = vmul.f32 %v536, %v2903
      %v2915 = vmul.f32 %v537, %v2903
      %v2916 = vmul.f32 %v539, %v2903
      %v2917 = vmul.f32 %v540, %v2903
      %v2918 = vmul.f32 %v542, %v2903
      %v2919 = vmul.f32 %v543, %v2903
      %v2920 = vadd.f32 %v2884, %v2904
      %v2921 = vadd.f32 %v2885, %v2905
      %v2922 = vadd.f32 %v2886, %v2906
      %v2923 = vadd.f32 %v2887, %v2907
      %v2924 = vadd.f32 %v2888, %v2908
      %v2925 = vadd.f32 %v2889, %v2909
      %v2926 = vadd.f32 %v2890, %v2910
      %v2927 = vadd.f32 %v2891, %v2911
      %v2928 = vadd.f32 %v2892, %v2912
      %v2929 = vadd.f32 %v2893, %v2913
      %v2930 = vadd.f32 %v2894, %v2914
      %v2931 = vadd.f32 %v2895, %v2915
      %v2932 = vadd.f32 %v2896, %v2916
      %v2933 = vadd.f32 %v2897, %v2917
      %v2934 = vadd.f32 %v2898, %v2918
      %v2935 = vadd.f32 %v2899, %v2919
      %v2936 = vlaneseq
      %v2937 = vshrl.u32 %v2936, 7
      %v2938 = vsub.s32 1, %v2937
      %v2939 = vrot.slane %v497, %v2938
      %v2940 = vmul.f32 %v521, %v2939
      %v2941 = vmul.f32 %v522, %v2939
      %v2942 = vmul.f32 %v523, %v2939
      %v2943 = vmul.f32 %v524, %v2939
      %v2944 = vmul.f32 %v525, %v2939
      %v2945 = vmul.f32 %v526, %v2939
      %v2946 = vmul.f32 %v527, %v2939
      %v2947 = vmul.f32 %v528, %v2939
      %v2948 = vmul.f32 %v529, %v2939
      %v2949 = vmul.f32 %v530, %v2939
      %v2950 = vmul.f32 %v531, %v2939
      %v2951 = vmul.f32 %v532, %v2939
      %v2952 = vmul.f32 %v533, %v2939
      %v2953 = vmul.f32 %v534, %v2939
      %v2954 = vmul.f32 %v535, %v2939
      %v2955 = vmul.f32 %v536, %v2939
      %v2956 = vmul.f32 %v537, %v2939
      %v2957 = vmul.f32 %v538, %v2939
      %v2958 = vmul.f32 %v539, %v2939
      %v2959 = vmul.f32 %v540, %v2939
      %v2960 = vmul.f32 %v541, %v2939
      %v2961 = vmul.f32 %v542, %v2939
      %v2962 = vmul.f32 %v543, %v2939
      %v2963 = vmul.f32 %v544, %v2939
      %v2988 = vrot.slane %v2940, 1
      %v2989 = vrot.slane %v2941, 1
      %v2990 = vsel %vm642, %v2988, %v2989
      %v2991 = vrot.slane %v2942, 1
      %v2992 = vsel %vm642, %v2989, %v2991
      %v2993 = vrot.slane %v2943, 1
      %v2994 = vrot.slane %v2944, 1
      %v2995 = vsel %vm642, %v2993, %v2994
      %v2996 = vrot.slane %v2945, 1
      %v2997 = vsel %vm642, %v2994, %v2996
      %v2998 = vrot.slane %v2946, 1
      %v2999 = vrot.slane %v2947, 1
      %v3000 = vsel %vm642, %v2998, %v2999
      %v3001 = vrot.slane %v2948, 1
      %v3002 = vsel %vm642, %v2999, %v3001
      %v3003 = vrot.slane %v2949, 1
      %v3004 = vrot.slane %v2950, 1
      %v3005 = vsel %vm642, %v3003, %v3004
      %v3006 = vrot.slane %v2951, 1
      %v3007 = vsel %vm642, %v3004, %v3006
      %v3008 = vrot.slane %v2952, 1
      %v3009 = vrot.slane %v2953, 1
      %v3010 = vsel %vm642, %v3008, %v3009
      %v3011 = vrot.slane %v2954, 1
      %v3012 = vsel %vm642, %v3009, %v3011
      %v3013 = vrot.slane %v2955, 1
      %v3014 = vrot.slane %v2956, 1
      %v3015 = vsel %vm642, %v3013, %v3014
      %v3016 = vrot.slane %v2957, 1
      %v3017 = vsel %vm642, %v3014, %v3016
      %v3018 = vrot.slane %v2958, 1
      %v3019 = vrot.slane %v2959, 1
      %v3020 = vsel %vm642, %v3018, %v3019
      %v3021 = vrot.slane %v2960, 1
      %v3022 = vsel %vm642, %v3019, %v3021
      %v3023 = vrot.slane %v2961, 1
      %v3024 = vrot.slane %v2962, 1
      %v3025 = vsel %vm642, %v3023, %v3024
      %v3026 = vrot.slane %v2963, 1
      %v3027 = vsel %vm642, %v3024, %v3026
      %v3044 = vadd.f32 %v2920, %v2990
      %v3045 = vadd.f32 %v2921, %v2992
      %v3046 = vadd.f32 %v2922, %v2995
      %v3047 = vadd.f32 %v2923, %v2997
      %v3048 = vadd.f32 %v2924, %v3000
      %v3049 = vadd.f32 %v2925, %v3002
      %v3050 = vadd.f32 %v2926, %v3005
      %v3051 = vadd.f32 %v2927, %v3007
      %v3052 = vadd.f32 %v2928, %v3010
      %v3053 = vadd.f32 %v2929, %v3012
      %v3054 = vadd.f32 %v2930, %v3015
      %v3055 = vadd.f32 %v2931, %v3017
      %v3056 = vadd.f32 %v2932, %v3020
      %v3057 = vadd.f32 %v2933, %v3022
      %v3058 = vadd.f32 %v2934, %v3025
      %v3059 = vadd.f32 %v2935, %v3027
      %v3060 = vlaneseq
      %v3061 = vshrl.u32 %v3060, 7
      %v3062 = vsub.s32 2, %v3061
      %v3063 = vrot.slane %v497, %v3062
      %v3064 = vmul.f32 %v521, %v3063
      %v3065 = vmul.f32 %v522, %v3063
      %v3066 = vmul.f32 %v523, %v3063
      %v3067 = vmul.f32 %v524, %v3063
      %v3068 = vmul.f32 %v525, %v3063
      %v3069 = vmul.f32 %v526, %v3063
      %v3070 = vmul.f32 %v527, %v3063
      %v3071 = vmul.f32 %v528, %v3063
      %v3072 = vmul.f32 %v529, %v3063
      %v3073 = vmul.f32 %v530, %v3063
      %v3074 = vmul.f32 %v531, %v3063
      %v3075 = vmul.f32 %v532, %v3063
      %v3076 = vmul.f32 %v533, %v3063
      %v3077 = vmul.f32 %v534, %v3063
      %v3078 = vmul.f32 %v535, %v3063
      %v3079 = vmul.f32 %v536, %v3063
      %v3080 = vmul.f32 %v537, %v3063
      %v3081 = vmul.f32 %v538, %v3063
      %v3082 = vmul.f32 %v539, %v3063
      %v3083 = vmul.f32 %v540, %v3063
      %v3084 = vmul.f32 %v541, %v3063
      %v3085 = vmul.f32 %v542, %v3063
      %v3086 = vmul.f32 %v543, %v3063
      %v3087 = vmul.f32 %v544, %v3063
      %v3112 = vrot.slane %v3064, 2
      %v3113 = vrot.slane %v3065, 2
      %v3114 = vsel %vm767, %v3112, %v3113
      %v3115 = vrot.slane %v3066, 2
      %v3116 = vsel %vm767, %v3113, %v3115
      %v3117 = vrot.slane %v3067, 2
      %v3118 = vrot.slane %v3068, 2
      %v3119 = vsel %vm767, %v3117, %v3118
      %v3120 = vrot.slane %v3069, 2
      %v3121 = vsel %vm767, %v3118, %v3120
      %v3122 = vrot.slane %v3070, 2
      %v3123 = vrot.slane %v3071, 2
      %v3124 = vsel %vm767, %v3122, %v3123
      %v3125 = vrot.slane %v3072, 2
      %v3126 = vsel %vm767, %v3123, %v3125
      %v3127 = vrot.slane %v3073, 2
      %v3128 = vrot.slane %v3074, 2
      %v3129 = vsel %vm767, %v3127, %v3128
      %v3130 = vrot.slane %v3075, 2
      %v3131 = vsel %vm767, %v3128, %v3130
      %v3132 = vrot.slane %v3076, 2
      %v3133 = vrot.slane %v3077, 2
      %v3134 = vsel %vm767, %v3132, %v3133
      %v3135 = vrot.slane %v3078, 2
      %v3136 = vsel %vm767, %v3133, %v3135
      %v3137 = vrot.slane %v3079, 2
      %v3138 = vrot.slane %v3080, 2
      %v3139 = vsel %vm767, %v3137, %v3138
      %v3140 = vrot.slane %v3081, 2
      %v3141 = vsel %vm767, %v3138, %v3140
      %v3142 = vrot.slane %v3082, 2
      %v3143 = vrot.slane %v3083, 2
      %v3144 = vsel %vm767, %v3142, %v3143
      %v3145 = vrot.slane %v3084, 2
      %v3146 = vsel %vm767, %v3143, %v3145
      %v3147 = vrot.slane %v3085, 2
      %v3148 = vrot.slane %v3086, 2
      %v3149 = vsel %vm767, %v3147, %v3148
      %v3150 = vrot.slane %v3087, 2
      %v3151 = vsel %vm767, %v3148, %v3150
      %v3168 = vadd.f32 %v3044, %v3114
      %v3169 = vadd.f32 %v3045, %v3116
      %v3170 = vadd.f32 %v3046, %v3119
      %v3171 = vadd.f32 %v3047, %v3121
      %v3172 = vadd.f32 %v3048, %v3124
      %v3173 = vadd.f32 %v3049, %v3126
      %v3174 = vadd.f32 %v3050, %v3129
      %v3175 = vadd.f32 %v3051, %v3131
      %v3176 = vadd.f32 %v3052, %v3134
      %v3177 = vadd.f32 %v3053, %v3136
      %v3178 = vadd.f32 %v3054, %v3139
      %v3179 = vadd.f32 %v3055, %v3141
      %v3180 = vadd.f32 %v3056, %v3144
      %v3181 = vadd.f32 %v3057, %v3146
      %v3182 = vadd.f32 %v3058, %v3149
      %v3183 = vadd.f32 %v3059, %v3151
      %v3184 = vlaneseq
      %v3185 = vshrl.u32 %v3184, 7
      %v3186 = vsub.s32 3, %v3185
      %v3187 = vrot.slane %v497, %v3186
      %v3188 = vmul.f32 %v521, %v3187
      %v3189 = vmul.f32 %v522, %v3187
      %v3190 = vmul.f32 %v523, %v3187
      %v3191 = vmul.f32 %v524, %v3187
      %v3192 = vmul.f32 %v525, %v3187
      %v3193 = vmul.f32 %v526, %v3187
      %v3194 = vmul.f32 %v527, %v3187
      %v3195 = vmul.f32 %v528, %v3187
      %v3196 = vmul.f32 %v529, %v3187
      %v3197 = vmul.f32 %v530, %v3187
      %v3198 = vmul.f32 %v531, %v3187
      %v3199 = vmul.f32 %v532, %v3187
      %v3200 = vmul.f32 %v533, %v3187
      %v3201 = vmul.f32 %v534, %v3187
      %v3202 = vmul.f32 %v535, %v3187
      %v3203 = vmul.f32 %v536, %v3187
      %v3204 = vmul.f32 %v537, %v3187
      %v3205 = vmul.f32 %v538, %v3187
      %v3206 = vmul.f32 %v539, %v3187
      %v3207 = vmul.f32 %v540, %v3187
      %v3208 = vmul.f32 %v541, %v3187
      %v3209 = vmul.f32 %v542, %v3187
      %v3210 = vmul.f32 %v543, %v3187
      %v3211 = vmul.f32 %v544, %v3187
      %v3236 = vrot.slane %v3188, 3
      %v3237 = vrot.slane %v3189, 3
      %v3238 = vsel %vm892, %v3236, %v3237
      %v3239 = vrot.slane %v3190, 3
      %v3240 = vsel %vm892, %v3237, %v3239
      %v3241 = vrot.slane %v3191, 3
      %v3242 = vrot.slane %v3192, 3
      %v3243 = vsel %vm892, %v3241, %v3242
      %v3244 = vrot.slane %v3193, 3
      %v3245 = vsel %vm892, %v3242, %v3244
      %v3246 = vrot.slane %v3194, 3
      %v3247 = vrot.slane %v3195, 3
      %v3248 = vsel %vm892, %v3246, %v3247
      %v3249 = vrot.slane %v3196, 3
      %v3250 = vsel %vm892, %v3247, %v3249
      %v3251 = vrot.slane %v3197, 3
      %v3252 = vrot.slane %v3198, 3
      %v3253 = vsel %vm892, %v3251, %v3252
      %v3254 = vrot.slane %v3199, 3
      %v3255 = vsel %vm892, %v3252, %v3254
      %v3256 = vrot.slane %v3200, 3
      %v3257 = vrot.slane %v3201, 3
      %v3258 = vsel %vm892, %v3256, %v3257
      %v3259 = vrot.slane %v3202, 3
      %v3260 = vsel %vm892, %v3257, %v3259
      %v3261 = vrot.slane %v3203, 3
      %v3262 = vrot.slane %v3204, 3
      %v3263 = vsel %vm892, %v3261, %v3262
      %v3264 = vrot.slane %v3205, 3
      %v3265 = vsel %vm892, %v3262, %v3264
      %v3266 = vrot.slane %v3206, 3
      %v3267 = vrot.slane %v3207, 3
      %v3268 = vsel %vm892, %v3266, %v3267
      %v3269 = vrot.slane %v3208, 3
      %v3270 = vsel %vm892, %v3267, %v3269
      %v3271 = vrot.slane %v3209, 3
      %v3272 = vrot.slane %v3210, 3
      %v3273 = vsel %vm892, %v3271, %v3272
      %v3274 = vrot.slane %v3211, 3
      %v3275 = vsel %vm892, %v3272, %v3274
      %v3292 = vadd.f32 %v3168, %v3238
      %v3293 = vadd.f32 %v3169, %v3240
      %v3294 = vadd.f32 %v3170, %v3243
      %v3295 = vadd.f32 %v3171, %v3245
      %v3296 = vadd.f32 %v3172, %v3248
      %v3297 = vadd.f32 %v3173, %v3250
      %v3298 = vadd.f32 %v3174, %v3253
      %v3299 = vadd.f32 %v3175, %v3255
      %v3300 = vadd.f32 %v3176, %v3258
      %v3301 = vadd.f32 %v3177, %v3260
      %v3302 = vadd.f32 %v3178, %v3263
      %v3303 = vadd.f32 %v3179, %v3265
      %v3304 = vadd.f32 %v3180, %v3268
      %v3305 = vadd.f32 %v3181, %v3270
      %v3306 = vadd.f32 %v3182, %v3273
      %v3307 = vadd.f32 %v3183, %v3275
      %v3308 = vlaneseq
      %v3309 = vshrl.u32 %v3308, 7
      %v3310 = vsub.s32 4, %v3309
      %v3311 = vrot.slane %v497, %v3310
      %v3312 = vmul.f32 %v521, %v3311
      %v3313 = vmul.f32 %v522, %v3311
      %v3314 = vmul.f32 %v523, %v3311
      %v3315 = vmul.f32 %v524, %v3311
      %v3316 = vmul.f32 %v525, %v3311
      %v3317 = vmul.f32 %v526, %v3311
      %v3318 = vmul.f32 %v527, %v3311
      %v3319 = vmul.f32 %v528, %v3311
      %v3320 = vmul.f32 %v529, %v3311
      %v3321 = vmul.f32 %v530, %v3311
      %v3322 = vmul.f32 %v531, %v3311
      %v3323 = vmul.f32 %v532, %v3311
      %v3324 = vmul.f32 %v533, %v3311
      %v3325 = vmul.f32 %v534, %v3311
      %v3326 = vmul.f32 %v535, %v3311
      %v3327 = vmul.f32 %v536, %v3311
      %v3328 = vmul.f32 %v537, %v3311
      %v3329 = vmul.f32 %v538, %v3311
      %v3330 = vmul.f32 %v539, %v3311
      %v3331 = vmul.f32 %v540, %v3311
      %v3332 = vmul.f32 %v541, %v3311
      %v3333 = vmul.f32 %v542, %v3311
      %v3334 = vmul.f32 %v543, %v3311
      %v3335 = vmul.f32 %v544, %v3311
      %v3360 = vrot.slane %v3312, 4
      %v3361 = vrot.slane %v3313, 4
      %v3362 = vsel %vm1017, %v3360, %v3361
      %v3363 = vrot.slane %v3314, 4
      %v3364 = vsel %vm1017, %v3361, %v3363
      %v3365 = vrot.slane %v3315, 4
      %v3366 = vrot.slane %v3316, 4
      %v3367 = vsel %vm1017, %v3365, %v3366
      %v3368 = vrot.slane %v3317, 4
      %v3369 = vsel %vm1017, %v3366, %v3368
      %v3370 = vrot.slane %v3318, 4
      %v3371 = vrot.slane %v3319, 4
      %v3372 = vsel %vm1017, %v3370, %v3371
      %v3373 = vrot.slane %v3320, 4
      %v3374 = vsel %vm1017, %v3371, %v3373
      %v3375 = vrot.slane %v3321, 4
      %v3376 = vrot.slane %v3322, 4
      %v3377 = vsel %vm1017, %v3375, %v3376
      %v3378 = vrot.slane %v3323, 4
      %v3379 = vsel %vm1017, %v3376, %v3378
      %v3380 = vrot.slane %v3324, 4
      %v3381 = vrot.slane %v3325, 4
      %v3382 = vsel %vm1017, %v3380, %v3381
      %v3383 = vrot.slane %v3326, 4
      %v3384 = vsel %vm1017, %v3381, %v3383
      %v3385 = vrot.slane %v3327, 4
      %v3386 = vrot.slane %v3328, 4
      %v3387 = vsel %vm1017, %v3385, %v3386
      %v3388 = vrot.slane %v3329, 4
      %v3389 = vsel %vm1017, %v3386, %v3388
      %v3390 = vrot.slane %v3330, 4
      %v3391 = vrot.slane %v3331, 4
      %v3392 = vsel %vm1017, %v3390, %v3391
      %v3393 = vrot.slane %v3332, 4
      %v3394 = vsel %vm1017, %v3391, %v3393
      %v3395 = vrot.slane %v3333, 4
      %v3396 = vrot.slane %v3334, 4
      %v3397 = vsel %vm1017, %v3395, %v3396
      %v3398 = vrot.slane %v3335, 4
      %v3399 = vsel %vm1017, %v3396, %v3398
      %v3416 = vadd.f32 %v3292, %v3362
      %v3417 = vadd.f32 %v3293, %v3364
      %v3418 = vadd.f32 %v3294, %v3367
      %v3419 = vadd.f32 %v3295, %v3369
      %v3420 = vadd.f32 %v3296, %v3372
      %v3421 = vadd.f32 %v3297, %v3374
      %v3422 = vadd.f32 %v3298, %v3377
      %v3423 = vadd.f32 %v3299, %v3379
      %v3424 = vadd.f32 %v3300, %v3382
      %v3425 = vadd.f32 %v3301, %v3384
      %v3426 = vadd.f32 %v3302, %v3387
      %v3427 = vadd.f32 %v3303, %v3389
      %v3428 = vadd.f32 %v3304, %v3392
      %v3429 = vadd.f32 %v3305, %v3394
      %v3430 = vadd.f32 %v3306, %v3397
      %v3431 = vadd.f32 %v3307, %v3399
      %v3432 = vlaneseq
      %v3433 = vshrl.u32 %v3432, 7
      %v3434 = vsub.s32 5, %v3433
      %v3435 = vrot.slane %v497, %v3434
      %v3436 = vmul.f32 %v521, %v3435
      %v3437 = vmul.f32 %v522, %v3435
      %v3438 = vmul.f32 %v523, %v3435
      %v3439 = vmul.f32 %v524, %v3435
      %v3440 = vmul.f32 %v525, %v3435
      %v3441 = vmul.f32 %v526, %v3435
      %v3442 = vmul.f32 %v527, %v3435
      %v3443 = vmul.f32 %v528, %v3435
      %v3444 = vmul.f32 %v529, %v3435
      %v3445 = vmul.f32 %v530, %v3435
      %v3446 = vmul.f32 %v531, %v3435
      %v3447 = vmul.f32 %v532, %v3435
      %v3448 = vmul.f32 %v533, %v3435
      %v3449 = vmul.f32 %v534, %v3435
      %v3450 = vmul.f32 %v535, %v3435
      %v3451 = vmul.f32 %v536, %v3435
      %v3452 = vmul.f32 %v537, %v3435
      %v3453 = vmul.f32 %v538, %v3435
      %v3454 = vmul.f32 %v539, %v3435
      %v3455 = vmul.f32 %v540, %v3435
      %v3456 = vmul.f32 %v541, %v3435
      %v3457 = vmul.f32 %v542, %v3435
      %v3458 = vmul.f32 %v543, %v3435
      %v3459 = vmul.f32 %v544, %v3435
      %v3484 = vrot.slane %v3436, 5
      %v3485 = vrot.slane %v3437, 5
      %v3486 = vsel %vm1142, %v3484, %v3485
      %v3487 = vrot.slane %v3438, 5
      %v3488 = vsel %vm1142, %v3485, %v3487
      %v3489 = vrot.slane %v3439, 5
      %v3490 = vrot.slane %v3440, 5
      %v3491 = vsel %vm1142, %v3489, %v3490
      %v3492 = vrot.slane %v3441, 5
      %v3493 = vsel %vm1142, %v3490, %v3492
      %v3494 = vrot.slane %v3442, 5
      %v3495 = vrot.slane %v3443, 5
      %v3496 = vsel %vm1142, %v3494, %v3495
      %v3497 = vrot.slane %v3444, 5
      %v3498 = vsel %vm1142, %v3495, %v3497
      %v3499 = vrot.slane %v3445, 5
      %v3500 = vrot.slane %v3446, 5
      %v3501 = vsel %vm1142, %v3499, %v3500
      %v3502 = vrot.slane %v3447, 5
      %v3503 = vsel %vm1142, %v3500, %v3502
      %v3504 = vrot.slane %v3448, 5
      %v3505 = vrot.slane %v3449, 5
      %v3506 = vsel %vm1142, %v3504, %v3505
      %v3507 = vrot.slane %v3450, 5
      %v3508 = vsel %vm1142, %v3505, %v3507
      %v3509 = vrot.slane %v3451, 5
      %v3510 = vrot.slane %v3452, 5
      %v3511 = vsel %vm1142, %v3509, %v3510
      %v3512 = vrot.slane %v3453, 5
      %v3513 = vsel %vm1142, %v3510, %v3512
      %v3514 = vrot.slane %v3454, 5
      %v3515 = vrot.slane %v3455, 5
      %v3516 = vsel %vm1142, %v3514, %v3515
      %v3517 = vrot.slane %v3456, 5
      %v3518 = vsel %vm1142, %v3515, %v3517
      %v3519 = vrot.slane %v3457, 5
      %v3520 = vrot.slane %v3458, 5
      %v3521 = vsel %vm1142, %v3519, %v3520
      %v3522 = vrot.slane %v3459, 5
      %v3523 = vsel %vm1142, %v3520, %v3522
      %v3540 = vadd.f32 %v3416, %v3486
      %v3541 = vadd.f32 %v3417, %v3488
      %v3542 = vadd.f32 %v3418, %v3491
      %v3543 = vadd.f32 %v3419, %v3493
      %v3544 = vadd.f32 %v3420, %v3496
      %v3545 = vadd.f32 %v3421, %v3498
      %v3546 = vadd.f32 %v3422, %v3501
      %v3547 = vadd.f32 %v3423, %v3503
      %v3548 = vadd.f32 %v3424, %v3506
      %v3549 = vadd.f32 %v3425, %v3508
      %v3550 = vadd.f32 %v3426, %v3511
      %v3551 = vadd.f32 %v3427, %v3513
      %v3552 = vadd.f32 %v3428, %v3516
      %v3553 = vadd.f32 %v3429, %v3518
      %v3554 = vadd.f32 %v3430, %v3521
      %v3555 = vadd.f32 %v3431, %v3523
      %v3556 = vlaneseq
      %v3557 = vshrl.u32 %v3556, 7
      %v3558 = vsub.s32 6, %v3557
      %v3559 = vrot.slane %v497, %v3558
      %v3560 = vmul.f32 %v521, %v3559
      %v3561 = vmul.f32 %v522, %v3559
      %v3562 = vmul.f32 %v523, %v3559
      %v3563 = vmul.f32 %v524, %v3559
      %v3564 = vmul.f32 %v525, %v3559
      %v3565 = vmul.f32 %v526, %v3559
      %v3566 = vmul.f32 %v527, %v3559
      %v3567 = vmul.f32 %v528, %v3559
      %v3568 = vmul.f32 %v529, %v3559
      %v3569 = vmul.f32 %v530, %v3559
      %v3570 = vmul.f32 %v531, %v3559
      %v3571 = vmul.f32 %v532, %v3559
      %v3572 = vmul.f32 %v533, %v3559
      %v3573 = vmul.f32 %v534, %v3559
      %v3574 = vmul.f32 %v535, %v3559
      %v3575 = vmul.f32 %v536, %v3559
      %v3576 = vmul.f32 %v537, %v3559
      %v3577 = vmul.f32 %v538, %v3559
      %v3578 = vmul.f32 %v539, %v3559
      %v3579 = vmul.f32 %v540, %v3559
      %v3580 = vmul.f32 %v541, %v3559
      %v3581 = vmul.f32 %v542, %v3559
      %v3582 = vmul.f32 %v543, %v3559
      %v3583 = vmul.f32 %v544, %v3559
      %v3608 = vrot.slane %v3560, 6
      %v3609 = vrot.slane %v3561, 6
      %v3610 = vsel %vm1267, %v3608, %v3609
      %v3611 = vrot.slane %v3562, 6
      %v3612 = vsel %vm1267, %v3609, %v3611
      %v3613 = vrot.slane %v3563, 6
      %v3614 = vrot.slane %v3564, 6
      %v3615 = vsel %vm1267, %v3613, %v3614
      %v3616 = vrot.slane %v3565, 6
      %v3617 = vsel %vm1267, %v3614, %v3616
      %v3618 = vrot.slane %v3566, 6
      %v3619 = vrot.slane %v3567, 6
      %v3620 = vsel %vm1267, %v3618, %v3619
      %v3621 = vrot.slane %v3568, 6
      %v3622 = vsel %vm1267, %v3619, %v3621
      %v3623 = vrot.slane %v3569, 6
      %v3624 = vrot.slane %v3570, 6
      %v3625 = vsel %vm1267, %v3623, %v3624
      %v3626 = vrot.slane %v3571, 6
      %v3627 = vsel %vm1267, %v3624, %v3626
      %v3628 = vrot.slane %v3572, 6
      %v3629 = vrot.slane %v3573, 6
      %v3630 = vsel %vm1267, %v3628, %v3629
      %v3631 = vrot.slane %v3574, 6
      %v3632 = vsel %vm1267, %v3629, %v3631
      %v3633 = vrot.slane %v3575, 6
      %v3634 = vrot.slane %v3576, 6
      %v3635 = vsel %vm1267, %v3633, %v3634
      %v3636 = vrot.slane %v3577, 6
      %v3637 = vsel %vm1267, %v3634, %v3636
      %v3638 = vrot.slane %v3578, 6
      %v3639 = vrot.slane %v3579, 6
      %v3640 = vsel %vm1267, %v3638, %v3639
      %v3641 = vrot.slane %v3580, 6
      %v3642 = vsel %vm1267, %v3639, %v3641
      %v3643 = vrot.slane %v3581, 6
      %v3644 = vrot.slane %v3582, 6
      %v3645 = vsel %vm1267, %v3643, %v3644
      %v3646 = vrot.slane %v3583, 6
      %v3647 = vsel %vm1267, %v3644, %v3646
      %v3664 = vadd.f32 %v3540, %v3610
      %v3665 = vadd.f32 %v3541, %v3612
      %v3666 = vadd.f32 %v3542, %v3615
      %v3667 = vadd.f32 %v3543, %v3617
      %v3668 = vadd.f32 %v3544, %v3620
      %v3669 = vadd.f32 %v3545, %v3622
      %v3670 = vadd.f32 %v3546, %v3625
      %v3671 = vadd.f32 %v3547, %v3627
      %v3672 = vadd.f32 %v3548, %v3630
      %v3673 = vadd.f32 %v3549, %v3632
      %v3674 = vadd.f32 %v3550, %v3635
      %v3675 = vadd.f32 %v3551, %v3637
      %v3676 = vadd.f32 %v3552, %v3640
      %v3677 = vadd.f32 %v3553, %v3642
      %v3678 = vadd.f32 %v3554, %v3645
      %v3679 = vadd.f32 %v3555, %v3647
      %v3680 = vlaneseq
      %v3681 = vshrl.u32 %v3680, 7
      %v3682 = vsub.s32 0, %v3681
      %v3683 = vrot.slane %v498, %v3682
      %v3684 = vmul.f32 %v524, %v3683
      %v3685 = vmul.f32 %v525, %v3683
      %v3686 = vmul.f32 %v527, %v3683
      %v3687 = vmul.f32 %v528, %v3683
      %v3688 = vmul.f32 %v530, %v3683
      %v3689 = vmul.f32 %v531, %v3683
      %v3690 = vmul.f32 %v533, %v3683
      %v3691 = vmul.f32 %v534, %v3683
      %v3692 = vmul.f32 %v536, %v3683
      %v3693 = vmul.f32 %v537, %v3683
      %v3694 = vmul.f32 %v539, %v3683
      %v3695 = vmul.f32 %v540, %v3683
      %v3696 = vmul.f32 %v542, %v3683
      %v3697 = vmul.f32 %v543, %v3683
      %v3698 = vmul.f32 %v545, %v3683
      %v3699 = vmul.f32 %v546, %v3683
      %v3700 = vadd.f32 %v3664, %v3684
      %v3701 = vadd.f32 %v3665, %v3685
      %v3702 = vadd.f32 %v3666, %v3686
      %v3703 = vadd.f32 %v3667, %v3687
      %v3704 = vadd.f32 %v3668, %v3688
      %v3705 = vadd.f32 %v3669, %v3689
      %v3706 = vadd.f32 %v3670, %v3690
      %v3707 = vadd.f32 %v3671, %v3691
      %v3708 = vadd.f32 %v3672, %v3692
      %v3709 = vadd.f32 %v3673, %v3693
      %v3710 = vadd.f32 %v3674, %v3694
      %v3711 = vadd.f32 %v3675, %v3695
      %v3712 = vadd.f32 %v3676, %v3696
      %v3713 = vadd.f32 %v3677, %v3697
      %v3714 = vadd.f32 %v3678, %v3698
      %v3715 = vadd.f32 %v3679, %v3699
      %v3716 = vlaneseq
      %v3717 = vshrl.u32 %v3716, 7
      %v3718 = vsub.s32 1, %v3717
      %v3719 = vrot.slane %v498, %v3718
      %v3720 = vmul.f32 %v524, %v3719
      %v3721 = vmul.f32 %v525, %v3719
      %v3722 = vmul.f32 %v526, %v3719
      %v3723 = vmul.f32 %v527, %v3719
      %v3724 = vmul.f32 %v528, %v3719
      %v3725 = vmul.f32 %v529, %v3719
      %v3726 = vmul.f32 %v530, %v3719
      %v3727 = vmul.f32 %v531, %v3719
      %v3728 = vmul.f32 %v532, %v3719
      %v3729 = vmul.f32 %v533, %v3719
      %v3730 = vmul.f32 %v534, %v3719
      %v3731 = vmul.f32 %v535, %v3719
      %v3732 = vmul.f32 %v536, %v3719
      %v3733 = vmul.f32 %v537, %v3719
      %v3734 = vmul.f32 %v538, %v3719
      %v3735 = vmul.f32 %v539, %v3719
      %v3736 = vmul.f32 %v540, %v3719
      %v3737 = vmul.f32 %v541, %v3719
      %v3738 = vmul.f32 %v542, %v3719
      %v3739 = vmul.f32 %v543, %v3719
      %v3740 = vmul.f32 %v544, %v3719
      %v3741 = vmul.f32 %v545, %v3719
      %v3742 = vmul.f32 %v546, %v3719
      %v3743 = vmul.f32 %v547, %v3719
      %v3768 = vrot.slane %v3720, 1
      %v3769 = vrot.slane %v3721, 1
      %v3770 = vsel %vm642, %v3768, %v3769
      %v3771 = vrot.slane %v3722, 1
      %v3772 = vsel %vm642, %v3769, %v3771
      %v3773 = vrot.slane %v3723, 1
      %v3774 = vrot.slane %v3724, 1
      %v3775 = vsel %vm642, %v3773, %v3774
      %v3776 = vrot.slane %v3725, 1
      %v3777 = vsel %vm642, %v3774, %v3776
      %v3778 = vrot.slane %v3726, 1
      %v3779 = vrot.slane %v3727, 1
      %v3780 = vsel %vm642, %v3778, %v3779
      %v3781 = vrot.slane %v3728, 1
      %v3782 = vsel %vm642, %v3779, %v3781
      %v3783 = vrot.slane %v3729, 1
      %v3784 = vrot.slane %v3730, 1
      %v3785 = vsel %vm642, %v3783, %v3784
      %v3786 = vrot.slane %v3731, 1
      %v3787 = vsel %vm642, %v3784, %v3786
      %v3788 = vrot.slane %v3732, 1
      %v3789 = vrot.slane %v3733, 1
      %v3790 = vsel %vm642, %v3788, %v3789
      %v3791 = vrot.slane %v3734, 1
      %v3792 = vsel %vm642, %v3789, %v3791
      %v3793 = vrot.slane %v3735, 1
      %v3794 = vrot.slane %v3736, 1
      %v3795 = vsel %vm642, %v3793, %v3794
      %v3796 = vrot.slane %v3737, 1
      %v3797 = vsel %vm642, %v3794, %v3796
      %v3798 = vrot.slane %v3738, 1
      %v3799 = vrot.slane %v3739, 1
      %v3800 = vsel %vm642, %v3798, %v3799
      %v3801 = vrot.slane %v3740, 1
      %v3802 = vsel %vm642, %v3799, %v3801
      %v3803 = vrot.slane %v3741, 1
      %v3804 = vrot.slane %v3742, 1
      %v3805 = vsel %vm642, %v3803, %v3804
      %v3806 = vrot.slane %v3743, 1
      %v3807 = vsel %vm642, %v3804, %v3806
      %v3824 = vadd.f32 %v3700, %v3770
      %v3825 = vadd.f32 %v3701, %v3772
      %v3826 = vadd.f32 %v3702, %v3775
      %v3827 = vadd.f32 %v3703, %v3777
      %v3828 = vadd.f32 %v3704, %v3780
      %v3829 = vadd.f32 %v3705, %v3782
      %v3830 = vadd.f32 %v3706, %v3785
      %v3831 = vadd.f32 %v3707, %v3787
      %v3832 = vadd.f32 %v3708, %v3790
      %v3833 = vadd.f32 %v3709, %v3792
      %v3834 = vadd.f32 %v3710, %v3795
      %v3835 = vadd.f32 %v3711, %v3797
      %v3836 = vadd.f32 %v3712, %v3800
      %v3837 = vadd.f32 %v3713, %v3802
      %v3838 = vadd.f32 %v3714, %v3805
      %v3839 = vadd.f32 %v3715, %v3807
      %v3840 = vlaneseq
      %v3841 = vshrl.u32 %v3840, 7
      %v3842 = vsub.s32 2, %v3841
      %v3843 = vrot.slane %v498, %v3842
      %v3844 = vmul.f32 %v524, %v3843
      %v3845 = vmul.f32 %v525, %v3843
      %v3846 = vmul.f32 %v526, %v3843
      %v3847 = vmul.f32 %v527, %v3843
      %v3848 = vmul.f32 %v528, %v3843
      %v3849 = vmul.f32 %v529, %v3843
      %v3850 = vmul.f32 %v530, %v3843
      %v3851 = vmul.f32 %v531, %v3843
      %v3852 = vmul.f32 %v532, %v3843
      %v3853 = vmul.f32 %v533, %v3843
      %v3854 = vmul.f32 %v534, %v3843
      %v3855 = vmul.f32 %v535, %v3843
      %v3856 = vmul.f32 %v536, %v3843
      %v3857 = vmul.f32 %v537, %v3843
      %v3858 = vmul.f32 %v538, %v3843
      %v3859 = vmul.f32 %v539, %v3843
      %v3860 = vmul.f32 %v540, %v3843
      %v3861 = vmul.f32 %v541, %v3843
      %v3862 = vmul.f32 %v542, %v3843
      %v3863 = vmul.f32 %v543, %v3843
      %v3864 = vmul.f32 %v544, %v3843
      %v3865 = vmul.f32 %v545, %v3843
      %v3866 = vmul.f32 %v546, %v3843
      %v3867 = vmul.f32 %v547, %v3843
      %v3892 = vrot.slane %v3844, 2
      %v3893 = vrot.slane %v3845, 2
      %v3894 = vsel %vm767, %v3892, %v3893
      %v3895 = vrot.slane %v3846, 2
      %v3896 = vsel %vm767, %v3893, %v3895
      %v3897 = vrot.slane %v3847, 2
      %v3898 = vrot.slane %v3848, 2
      %v3899 = vsel %vm767, %v3897, %v3898
      %v3900 = vrot.slane %v3849, 2
      %v3901 = vsel %vm767, %v3898, %v3900
      %v3902 = vrot.slane %v3850, 2
      %v3903 = vrot.slane %v3851, 2
      %v3904 = vsel %vm767, %v3902, %v3903
      %v3905 = vrot.slane %v3852, 2
      %v3906 = vsel %vm767, %v3903, %v3905
      %v3907 = vrot.slane %v3853, 2
      %v3908 = vrot.slane %v3854, 2
      %v3909 = vsel %vm767, %v3907, %v3908
      %v3910 = vrot.slane %v3855, 2
      %v3911 = vsel %vm767, %v3908, %v3910
      %v3912 = vrot.slane %v3856, 2
      %v3913 = vrot.slane %v3857, 2
      %v3914 = vsel %vm767, %v3912, %v3913
      %v3915 = vrot.slane %v3858, 2
      %v3916 = vsel %vm767, %v3913, %v3915
      %v3917 = vrot.slane %v3859, 2
      %v3918 = vrot.slane %v3860, 2
      %v3919 = vsel %vm767, %v3917, %v3918
      %v3920 = vrot.slane %v3861, 2
      %v3921 = vsel %vm767, %v3918, %v3920
      %v3922 = vrot.slane %v3862, 2
      %v3923 = vrot.slane %v3863, 2
      %v3924 = vsel %vm767, %v3922, %v3923
      %v3925 = vrot.slane %v3864, 2
      %v3926 = vsel %vm767, %v3923, %v3925
      %v3927 = vrot.slane %v3865, 2
      %v3928 = vrot.slane %v3866, 2
      %v3929 = vsel %vm767, %v3927, %v3928
      %v3930 = vrot.slane %v3867, 2
      %v3931 = vsel %vm767, %v3928, %v3930
      %v3948 = vadd.f32 %v3824, %v3894
      %v3949 = vadd.f32 %v3825, %v3896
      %v3950 = vadd.f32 %v3826, %v3899
      %v3951 = vadd.f32 %v3827, %v3901
      %v3952 = vadd.f32 %v3828, %v3904
      %v3953 = vadd.f32 %v3829, %v3906
      %v3954 = vadd.f32 %v3830, %v3909
      %v3955 = vadd.f32 %v3831, %v3911
      %v3956 = vadd.f32 %v3832, %v3914
      %v3957 = vadd.f32 %v3833, %v3916
      %v3958 = vadd.f32 %v3834, %v3919
      %v3959 = vadd.f32 %v3835, %v3921
      %v3960 = vadd.f32 %v3836, %v3924
      %v3961 = vadd.f32 %v3837, %v3926
      %v3962 = vadd.f32 %v3838, %v3929
      %v3963 = vadd.f32 %v3839, %v3931
      %v3964 = vlaneseq
      %v3965 = vshrl.u32 %v3964, 7
      %v3966 = vsub.s32 3, %v3965
      %v3967 = vrot.slane %v498, %v3966
      %v3968 = vmul.f32 %v524, %v3967
      %v3969 = vmul.f32 %v525, %v3967
      %v3970 = vmul.f32 %v526, %v3967
      %v3971 = vmul.f32 %v527, %v3967
      %v3972 = vmul.f32 %v528, %v3967
      %v3973 = vmul.f32 %v529, %v3967
      %v3974 = vmul.f32 %v530, %v3967
      %v3975 = vmul.f32 %v531, %v3967
      %v3976 = vmul.f32 %v532, %v3967
      %v3977 = vmul.f32 %v533, %v3967
      %v3978 = vmul.f32 %v534, %v3967
      %v3979 = vmul.f32 %v535, %v3967
      %v3980 = vmul.f32 %v536, %v3967
      %v3981 = vmul.f32 %v537, %v3967
      %v3982 = vmul.f32 %v538, %v3967
      %v3983 = vmul.f32 %v539, %v3967
      %v3984 = vmul.f32 %v540, %v3967
      %v3985 = vmul.f32 %v541, %v3967
      %v3986 = vmul.f32 %v542, %v3967
      %v3987 = vmul.f32 %v543, %v3967
      %v3988 = vmul.f32 %v544, %v3967
      %v3989 = vmul.f32 %v545, %v3967
      %v3990 = vmul.f32 %v546, %v3967
      %v3991 = vmul.f32 %v547, %v3967
      %v4016 = vrot.slane %v3968, 3
      %v4017 = vrot.slane %v3969, 3
      %v4018 = vsel %vm892, %v4016, %v4017
      %v4019 = vrot.slane %v3970, 3
      %v4020 = vsel %vm892, %v4017, %v4019
      %v4021 = vrot.slane %v3971, 3
      %v4022 = vrot.slane %v3972, 3
      %v4023 = vsel %vm892, %v4021, %v4022
      %v4024 = vrot.slane %v3973, 3
      %v4025 = vsel %vm892, %v4022, %v4024
      %v4026 = vrot.slane %v3974, 3
      %v4027 = vrot.slane %v3975, 3
      %v4028 = vsel %vm892, %v4026, %v4027
      %v4029 = vrot.slane %v3976, 3
      %v4030 = vsel %vm892, %v4027, %v4029
      %v4031 = vrot.slane %v3977, 3
      %v4032 = vrot.slane %v3978, 3
      %v4033 = vsel %vm892, %v4031, %v4032
      %v4034 = vrot.slane %v3979, 3
      %v4035 = vsel %vm892, %v4032, %v4034
      %v4036 = vrot.slane %v3980, 3
      %v4037 = vrot.slane %v3981, 3
      %v4038 = vsel %vm892, %v4036, %v4037
      %v4039 = vrot.slane %v3982, 3
      %v4040 = vsel %vm892, %v4037, %v4039
      %v4041 = vrot.slane %v3983, 3
      %v4042 = vrot.slane %v3984, 3
      %v4043 = vsel %vm892, %v4041, %v4042
      %v4044 = vrot.slane %v3985, 3
      %v4045 = vsel %vm892, %v4042, %v4044
      %v4046 = vrot.slane %v3986, 3
      %v4047 = vrot.slane %v3987, 3
      %v4048 = vsel %vm892, %v4046, %v4047
      %v4049 = vrot.slane %v3988, 3
      %v4050 = vsel %vm892, %v4047, %v4049
      %v4051 = vrot.slane %v3989, 3
      %v4052 = vrot.slane %v3990, 3
      %v4053 = vsel %vm892, %v4051, %v4052
      %v4054 = vrot.slane %v3991, 3
      %v4055 = vsel %vm892, %v4052, %v4054
      %v4072 = vadd.f32 %v3948, %v4018
      %v4073 = vadd.f32 %v3949, %v4020
      %v4074 = vadd.f32 %v3950, %v4023
      %v4075 = vadd.f32 %v3951, %v4025
      %v4076 = vadd.f32 %v3952, %v4028
      %v4077 = vadd.f32 %v3953, %v4030
      %v4078 = vadd.f32 %v3954, %v4033
      %v4079 = vadd.f32 %v3955, %v4035
      %v4080 = vadd.f32 %v3956, %v4038
      %v4081 = vadd.f32 %v3957, %v4040
      %v4082 = vadd.f32 %v3958, %v4043
      %v4083 = vadd.f32 %v3959, %v4045
      %v4084 = vadd.f32 %v3960, %v4048
      %v4085 = vadd.f32 %v3961, %v4050
      %v4086 = vadd.f32 %v3962, %v4053
      %v4087 = vadd.f32 %v3963, %v4055
      %v4088 = vlaneseq
      %v4089 = vshrl.u32 %v4088, 7
      %v4090 = vsub.s32 4, %v4089
      %v4091 = vrot.slane %v498, %v4090
      %v4092 = vmul.f32 %v524, %v4091
      %v4093 = vmul.f32 %v525, %v4091
      %v4094 = vmul.f32 %v526, %v4091
      %v4095 = vmul.f32 %v527, %v4091
      %v4096 = vmul.f32 %v528, %v4091
      %v4097 = vmul.f32 %v529, %v4091
      %v4098 = vmul.f32 %v530, %v4091
      %v4099 = vmul.f32 %v531, %v4091
      %v4100 = vmul.f32 %v532, %v4091
      %v4101 = vmul.f32 %v533, %v4091
      %v4102 = vmul.f32 %v534, %v4091
      %v4103 = vmul.f32 %v535, %v4091
      %v4104 = vmul.f32 %v536, %v4091
      %v4105 = vmul.f32 %v537, %v4091
      %v4106 = vmul.f32 %v538, %v4091
      %v4107 = vmul.f32 %v539, %v4091
      %v4108 = vmul.f32 %v540, %v4091
      %v4109 = vmul.f32 %v541, %v4091
      %v4110 = vmul.f32 %v542, %v4091
      %v4111 = vmul.f32 %v543, %v4091
      %v4112 = vmul.f32 %v544, %v4091
      %v4113 = vmul.f32 %v545, %v4091
      %v4114 = vmul.f32 %v546, %v4091
      %v4115 = vmul.f32 %v547, %v4091
      %v4140 = vrot.slane %v4092, 4
      %v4141 = vrot.slane %v4093, 4
      %v4142 = vsel %vm1017, %v4140, %v4141
      %v4143 = vrot.slane %v4094, 4
      %v4144 = vsel %vm1017, %v4141, %v4143
      %v4145 = vrot.slane %v4095, 4
      %v4146 = vrot.slane %v4096, 4
      %v4147 = vsel %vm1017, %v4145, %v4146
      %v4148 = vrot.slane %v4097, 4
      %v4149 = vsel %vm1017, %v4146, %v4148
      %v4150 = vrot.slane %v4098, 4
      %v4151 = vrot.slane %v4099, 4
      %v4152 = vsel %vm1017, %v4150, %v4151
      %v4153 = vrot.slane %v4100, 4
      %v4154 = vsel %vm1017, %v4151, %v4153
      %v4155 = vrot.slane %v4101, 4
      %v4156 = vrot.slane %v4102, 4
      %v4157 = vsel %vm1017, %v4155, %v4156
      %v4158 = vrot.slane %v4103, 4
      %v4159 = vsel %vm1017, %v4156, %v4158
      %v4160 = vrot.slane %v4104, 4
      %v4161 = vrot.slane %v4105, 4
      %v4162 = vsel %vm1017, %v4160, %v4161
      %v4163 = vrot.slane %v4106, 4
      %v4164 = vsel %vm1017, %v4161, %v4163
      %v4165 = vrot.slane %v4107, 4
      %v4166 = vrot.slane %v4108, 4
      %v4167 = vsel %vm1017, %v4165, %v4166
      %v4168 = vrot.slane %v4109, 4
      %v4169 = vsel %vm1017, %v4166, %v4168
      %v4170 = vrot.slane %v4110, 4
      %v4171 = vrot.slane %v4111, 4
      %v4172 = vsel %vm1017, %v4170, %v4171
      %v4173 = vrot.slane %v4112, 4
      %v4174 = vsel %vm1017, %v4171, %v4173
      %v4175 = vrot.slane %v4113, 4
      %v4176 = vrot.slane %v4114, 4
      %v4177 = vsel %vm1017, %v4175, %v4176
      %v4178 = vrot.slane %v4115, 4
      %v4179 = vsel %vm1017, %v4176, %v4178
      %v4196 = vadd.f32 %v4072, %v4142
      %v4197 = vadd.f32 %v4073, %v4144
      %v4198 = vadd.f32 %v4074, %v4147
      %v4199 = vadd.f32 %v4075, %v4149
      %v4200 = vadd.f32 %v4076, %v4152
      %v4201 = vadd.f32 %v4077, %v4154
      %v4202 = vadd.f32 %v4078, %v4157
      %v4203 = vadd.f32 %v4079, %v4159
      %v4204 = vadd.f32 %v4080, %v4162
      %v4205 = vadd.f32 %v4081, %v4164
      %v4206 = vadd.f32 %v4082, %v4167
      %v4207 = vadd.f32 %v4083, %v4169
      %v4208 = vadd.f32 %v4084, %v4172
      %v4209 = vadd.f32 %v4085, %v4174
      %v4210 = vadd.f32 %v4086, %v4177
      %v4211 = vadd.f32 %v4087, %v4179
      %v4212 = vlaneseq
      %v4213 = vshrl.u32 %v4212, 7
      %v4214 = vsub.s32 5, %v4213
      %v4215 = vrot.slane %v498, %v4214
      %v4216 = vmul.f32 %v524, %v4215
      %v4217 = vmul.f32 %v525, %v4215
      %v4218 = vmul.f32 %v526, %v4215
      %v4219 = vmul.f32 %v527, %v4215
      %v4220 = vmul.f32 %v528, %v4215
      %v4221 = vmul.f32 %v529, %v4215
      %v4222 = vmul.f32 %v530, %v4215
      %v4223 = vmul.f32 %v531, %v4215
      %v4224 = vmul.f32 %v532, %v4215
      %v4225 = vmul.f32 %v533, %v4215
      %v4226 = vmul.f32 %v534, %v4215
      %v4227 = vmul.f32 %v535, %v4215
      %v4228 = vmul.f32 %v536, %v4215
      %v4229 = vmul.f32 %v537, %v4215
      %v4230 = vmul.f32 %v538, %v4215
      %v4231 = vmul.f32 %v539, %v4215
      %v4232 = vmul.f32 %v540, %v4215
      %v4233 = vmul.f32 %v541, %v4215
      %v4234 = vmul.f32 %v542, %v4215
      %v4235 = vmul.f32 %v543, %v4215
      %v4236 = vmul.f32 %v544, %v4215
      %v4237 = vmul.f32 %v545, %v4215
      %v4238 = vmul.f32 %v546, %v4215
      %v4239 = vmul.f32 %v547, %v4215
      %v4264 = vrot.slane %v4216, 5
      %v4265 = vrot.slane %v4217, 5
      %v4266 = vsel %vm1142, %v4264, %v4265
      %v4267 = vrot.slane %v4218, 5
      %v4268 = vsel %vm1142, %v4265, %v4267
      %v4269 = vrot.slane %v4219, 5
      %v4270 = vrot.slane %v4220, 5
      %v4271 = vsel %vm1142, %v4269, %v4270
      %v4272 = vrot.slane %v4221, 5
      %v4273 = vsel %vm1142, %v4270, %v4272
      %v4274 = vrot.slane %v4222, 5
      %v4275 = vrot.slane %v4223, 5
      %v4276 = vsel %vm1142, %v4274, %v4275
      %v4277 = vrot.slane %v4224, 5
      %v4278 = vsel %vm1142, %v4275, %v4277
      %v4279 = vrot.slane %v4225, 5
      %v4280 = vrot.slane %v4226, 5
      %v4281 = vsel %vm1142, %v4279, %v4280
      %v4282 = vrot.slane %v4227, 5
      %v4283 = vsel %vm1142, %v4280, %v4282
      %v4284 = vrot.slane %v4228, 5
      %v4285 = vrot.slane %v4229, 5
      %v4286 = vsel %vm1142, %v4284, %v4285
      %v4287 = vrot.slane %v4230, 5
      %v4288 = vsel %vm1142, %v4285, %v4287
      %v4289 = vrot.slane %v4231, 5
      %v4290 = vrot.slane %v4232, 5
      %v4291 = vsel %vm1142, %v4289, %v4290
      %v4292 = vrot.slane %v4233, 5
      %v4293 = vsel %vm1142, %v4290, %v4292
      %v4294 = vrot.slane %v4234, 5
      %v4295 = vrot.slane %v4235, 5
      %v4296 = vsel %vm1142, %v4294, %v4295
      %v4297 = vrot.slane %v4236, 5
      %v4298 = vsel %vm1142, %v4295, %v4297
      %v4299 = vrot.slane %v4237, 5
      %v4300 = vrot.slane %v4238, 5
      %v4301 = vsel %vm1142, %v4299, %v4300
      %v4302 = vrot.slane %v4239, 5
      %v4303 = vsel %vm1142, %v4300, %v4302
      %v4320 = vadd.f32 %v4196, %v4266
      %v4321 = vadd.f32 %v4197, %v4268
      %v4322 = vadd.f32 %v4198, %v4271
      %v4323 = vadd.f32 %v4199, %v4273
      %v4324 = vadd.f32 %v4200, %v4276
      %v4325 = vadd.f32 %v4201, %v4278
      %v4326 = vadd.f32 %v4202, %v4281
      %v4327 = vadd.f32 %v4203, %v4283
      %v4328 = vadd.f32 %v4204, %v4286
      %v4329 = vadd.f32 %v4205, %v4288
      %v4330 = vadd.f32 %v4206, %v4291
      %v4331 = vadd.f32 %v4207, %v4293
      %v4332 = vadd.f32 %v4208, %v4296
      %v4333 = vadd.f32 %v4209, %v4298
      %v4334 = vadd.f32 %v4210, %v4301
      %v4335 = vadd.f32 %v4211, %v4303
      %v4336 = vlaneseq
      %v4337 = vshrl.u32 %v4336, 7
      %v4338 = vsub.s32 6, %v4337
      %v4339 = vrot.slane %v498, %v4338
      %v4340 = vmul.f32 %v524, %v4339
      %v4341 = vmul.f32 %v525, %v4339
      %v4342 = vmul.f32 %v526, %v4339
      %v4343 = vmul.f32 %v527, %v4339
      %v4344 = vmul.f32 %v528, %v4339
      %v4345 = vmul.f32 %v529, %v4339
      %v4346 = vmul.f32 %v530, %v4339
      %v4347 = vmul.f32 %v531, %v4339
      %v4348 = vmul.f32 %v532, %v4339
      %v4349 = vmul.f32 %v533, %v4339
      %v4350 = vmul.f32 %v534, %v4339
      %v4351 = vmul.f32 %v535, %v4339
      %v4352 = vmul.f32 %v536, %v4339
      %v4353 = vmul.f32 %v537, %v4339
      %v4354 = vmul.f32 %v538, %v4339
      %v4355 = vmul.f32 %v539, %v4339
      %v4356 = vmul.f32 %v540, %v4339
      %v4357 = vmul.f32 %v541, %v4339
      %v4358 = vmul.f32 %v542, %v4339
      %v4359 = vmul.f32 %v543, %v4339
      %v4360 = vmul.f32 %v544, %v4339
      %v4361 = vmul.f32 %v545, %v4339
      %v4362 = vmul.f32 %v546, %v4339
      %v4363 = vmul.f32 %v547, %v4339
      %v4388 = vrot.slane %v4340, 6
      %v4389 = vrot.slane %v4341, 6
      %v4390 = vsel %vm1267, %v4388, %v4389
      %v4391 = vrot.slane %v4342, 6
      %v4392 = vsel %vm1267, %v4389, %v4391
      %v4393 = vrot.slane %v4343, 6
      %v4394 = vrot.slane %v4344, 6
      %v4395 = vsel %vm1267, %v4393, %v4394
      %v4396 = vrot.slane %v4345, 6
      %v4397 = vsel %vm1267, %v4394, %v4396
      %v4398 = vrot.slane %v4346, 6
      %v4399 = vrot.slane %v4347, 6
      %v4400 = vsel %vm1267, %v4398, %v4399
      %v4401 = vrot.slane %v4348, 6
      %v4402 = vsel %vm1267, %v4399, %v4401
      %v4403 = vrot.slane %v4349, 6
      %v4404 = vrot.slane %v4350, 6
      %v4405 = vsel %vm1267, %v4403, %v4404
      %v4406 = vrot.slane %v4351, 6
      %v4407 = vsel %vm1267, %v4404, %v4406
      %v4408 = vrot.slane %v4352, 6
      %v4409 = vrot.slane %v4353, 6
      %v4410 = vsel %vm1267, %v4408, %v4409
      %v4411 = vrot.slane %v4354, 6
      %v4412 = vsel %vm1267, %v4409, %v4411
      %v4413 = vrot.slane %v4355, 6
      %v4414 = vrot.slane %v4356, 6
      %v4415 = vsel %vm1267, %v4413, %v4414
      %v4416 = vrot.slane %v4357, 6
      %v4417 = vsel %vm1267, %v4414, %v4416
      %v4418 = vrot.slane %v4358, 6
      %v4419 = vrot.slane %v4359, 6
      %v4420 = vsel %vm1267, %v4418, %v4419
      %v4421 = vrot.slane %v4360, 6
      %v4422 = vsel %vm1267, %v4419, %v4421
      %v4423 = vrot.slane %v4361, 6
      %v4424 = vrot.slane %v4362, 6
      %v4425 = vsel %vm1267, %v4423, %v4424
      %v4426 = vrot.slane %v4363, 6
      %v4427 = vsel %vm1267, %v4424, %v4426
      %v4444 = vadd.f32 %v4320, %v4390
      %v4445 = vadd.f32 %v4321, %v4392
      %v4446 = vadd.f32 %v4322, %v4395
      %v4447 = vadd.f32 %v4323, %v4397
      %v4448 = vadd.f32 %v4324, %v4400
      %v4449 = vadd.f32 %v4325, %v4402
      %v4450 = vadd.f32 %v4326, %v4405
      %v4451 = vadd.f32 %v4327, %v4407
      %v4452 = vadd.f32 %v4328, %v4410
      %v4453 = vadd.f32 %v4329, %v4412
      %v4454 = vadd.f32 %v4330, %v4415
      %v4455 = vadd.f32 %v4331, %v4417
      %v4456 = vadd.f32 %v4332, %v4420
      %v4457 = vadd.f32 %v4333, %v4422
      %v4458 = vadd.f32 %v4334, %v4425
      %v4459 = vadd.f32 %v4335, %v4427
      %v4460 = vlaneseq
      %v4461 = vshrl.u32 %v4460, 7
      %v4462 = vsub.s32 0, %v4461
      %v4463 = vrot.slane %v499, %v4462
      %v4464 = vmul.f32 %v527, %v4463
      %v4465 = vmul.f32 %v528, %v4463
      %v4466 = vmul.f32 %v530, %v4463
      %v4467 = vmul.f32 %v531, %v4463
      %v4468 = vmul.f32 %v533, %v4463
      %v4469 = vmul.f32 %v534, %v4463
      %v4470 = vmul.f32 %v536, %v4463
      %v4471 = vmul.f32 %v537, %v4463
      %v4472 = vmul.f32 %v539, %v4463
      %v4473 = vmul.f32 %v540, %v4463
      %v4474 = vmul.f32 %v542, %v4463
      %v4475 = vmul.f32 %v543, %v4463
      %v4476 = vmul.f32 %v545, %v4463
      %v4477 = vmul.f32 %v546, %v4463
      %v4478 = vmul.f32 %v548, %v4463
      %v4479 = vmul.f32 %v549, %v4463
      %v4480 = vadd.f32 %v4444, %v4464
      %v4481 = vadd.f32 %v4445, %v4465
      %v4482 = vadd.f32 %v4446, %v4466
      %v4483 = vadd.f32 %v4447, %v4467
      %v4484 = vadd.f32 %v4448, %v4468
      %v4485 = vadd.f32 %v4449, %v4469
      %v4486 = vadd.f32 %v4450, %v4470
      %v4487 = vadd.f32 %v4451, %v4471
      %v4488 = vadd.f32 %v4452, %v4472
      %v4489 = vadd.f32 %v4453, %v4473
      %v4490 = vadd.f32 %v4454, %v4474
      %v4491 = vadd.f32 %v4455, %v4475
      %v4492 = vadd.f32 %v4456, %v4476
      %v4493 = vadd.f32 %v4457, %v4477
      %v4494 = vadd.f32 %v4458, %v4478
      %v4495 = vadd.f32 %v4459, %v4479
      %v4496 = vlaneseq
      %v4497 = vshrl.u32 %v4496, 7
      %v4498 = vsub.s32 1, %v4497
      %v4499 = vrot.slane %v499, %v4498
      %v4500 = vmul.f32 %v527, %v4499
      %v4501 = vmul.f32 %v528, %v4499
      %v4502 = vmul.f32 %v529, %v4499
      %v4503 = vmul.f32 %v530, %v4499
      %v4504 = vmul.f32 %v531, %v4499
      %v4505 = vmul.f32 %v532, %v4499
      %v4506 = vmul.f32 %v533, %v4499
      %v4507 = vmul.f32 %v534, %v4499
      %v4508 = vmul.f32 %v535, %v4499
      %v4509 = vmul.f32 %v536, %v4499
      %v4510 = vmul.f32 %v537, %v4499
      %v4511 = vmul.f32 %v538, %v4499
      %v4512 = vmul.f32 %v539, %v4499
      %v4513 = vmul.f32 %v540, %v4499
      %v4514 = vmul.f32 %v541, %v4499
      %v4515 = vmul.f32 %v542, %v4499
      %v4516 = vmul.f32 %v543, %v4499
      %v4517 = vmul.f32 %v544, %v4499
      %v4518 = vmul.f32 %v545, %v4499
      %v4519 = vmul.f32 %v546, %v4499
      %v4520 = vmul.f32 %v547, %v4499
      %v4521 = vmul.f32 %v548, %v4499
      %v4522 = vmul.f32 %v549, %v4499
      %v4523 = vmul.f32 %v550, %v4499
      %v4548 = vrot.slane %v4500, 1
      %v4549 = vrot.slane %v4501, 1
      %v4550 = vsel %vm642, %v4548, %v4549
      %v4551 = vrot.slane %v4502, 1
      %v4552 = vsel %vm642, %v4549, %v4551
      %v4553 = vrot.slane %v4503, 1
      %v4554 = vrot.slane %v4504, 1
      %v4555 = vsel %vm642, %v4553, %v4554
      %v4556 = vrot.slane %v4505, 1
      %v4557 = vsel %vm642, %v4554, %v4556
      %v4558 = vrot.slane %v4506, 1
      %v4559 = vrot.slane %v4507, 1
      %v4560 = vsel %vm642, %v4558, %v4559
      %v4561 = vrot.slane %v4508, 1
      %v4562 = vsel %vm642, %v4559, %v4561
      %v4563 = vrot.slane %v4509, 1
      %v4564 = vrot.slane %v4510, 1
      %v4565 = vsel %vm642, %v4563, %v4564
      %v4566 = vrot.slane %v4511, 1
      %v4567 = vsel %vm642, %v4564, %v4566
      %v4568 = vrot.slane %v4512, 1
      %v4569 = vrot.slane %v4513, 1
      %v4570 = vsel %vm642, %v4568, %v4569
      %v4571 = vrot.slane %v4514, 1
      %v4572 = vsel %vm642, %v4569, %v4571
      %v4573 = vrot.slane %v4515, 1
      %v4574 = vrot.slane %v4516, 1
      %v4575 = vsel %vm642, %v4573, %v4574
      %v4576 = vrot.slane %v4517, 1
      %v4577 = vsel %vm642, %v4574, %v4576
      %v4578 = vrot.slane %v4518, 1
      %v4579 = vrot.slane %v4519, 1
      %v4580 = vsel %vm642, %v4578, %v4579
      %v4581 = vrot.slane %v4520, 1
      %v4582 = vsel %vm642, %v4579, %v4581
      %v4583 = vrot.slane %v4521, 1
      %v4584 = vrot.slane %v4522, 1
      %v4585 = vsel %vm642, %v4583, %v4584
      %v4586 = vrot.slane %v4523, 1
      %v4587 = vsel %vm642, %v4584, %v4586
      %v4604 = vadd.f32 %v4480, %v4550
      %v4605 = vadd.f32 %v4481, %v4552
      %v4606 = vadd.f32 %v4482, %v4555
      %v4607 = vadd.f32 %v4483, %v4557
      %v4608 = vadd.f32 %v4484, %v4560
      %v4609 = vadd.f32 %v4485, %v4562
      %v4610 = vadd.f32 %v4486, %v4565
      %v4611 = vadd.f32 %v4487, %v4567
      %v4612 = vadd.f32 %v4488, %v4570
      %v4613 = vadd.f32 %v4489, %v4572
      %v4614 = vadd.f32 %v4490, %v4575
      %v4615 = vadd.f32 %v4491, %v4577
      %v4616 = vadd.f32 %v4492, %v4580
      %v4617 = vadd.f32 %v4493, %v4582
      %v4618 = vadd.f32 %v4494, %v4585
      %v4619 = vadd.f32 %v4495, %v4587
      %v4620 = vlaneseq
      %v4621 = vshrl.u32 %v4620, 7
      %v4622 = vsub.s32 2, %v4621
      %v4623 = vrot.slane %v499, %v4622
      %v4624 = vmul.f32 %v527, %v4623
      %v4625 = vmul.f32 %v528, %v4623
      %v4626 = vmul.f32 %v529, %v4623
      %v4627 = vmul.f32 %v530, %v4623
      %v4628 = vmul.f32 %v531, %v4623
      %v4629 = vmul.f32 %v532, %v4623
      %v4630 = vmul.f32 %v533, %v4623
      %v4631 = vmul.f32 %v534, %v4623
      %v4632 = vmul.f32 %v535, %v4623
      %v4633 = vmul.f32 %v536, %v4623
      %v4634 = vmul.f32 %v537, %v4623
      %v4635 = vmul.f32 %v538, %v4623
      %v4636 = vmul.f32 %v539, %v4623
      %v4637 = vmul.f32 %v540, %v4623
      %v4638 = vmul.f32 %v541, %v4623
      %v4639 = vmul.f32 %v542, %v4623
      %v4640 = vmul.f32 %v543, %v4623
      %v4641 = vmul.f32 %v544, %v4623
      %v4642 = vmul.f32 %v545, %v4623
      %v4643 = vmul.f32 %v546, %v4623
      %v4644 = vmul.f32 %v547, %v4623
      %v4645 = vmul.f32 %v548, %v4623
      %v4646 = vmul.f32 %v549, %v4623
      %v4647 = vmul.f32 %v550, %v4623
      %v4672 = vrot.slane %v4624, 2
      %v4673 = vrot.slane %v4625, 2
      %v4674 = vsel %vm767, %v4672, %v4673
      %v4675 = vrot.slane %v4626, 2
      %v4676 = vsel %vm767, %v4673, %v4675
      %v4677 = vrot.slane %v4627, 2
      %v4678 = vrot.slane %v4628, 2
      %v4679 = vsel %vm767, %v4677, %v4678
      %v4680 = vrot.slane %v4629, 2
      %v4681 = vsel %vm767, %v4678, %v4680
      %v4682 = vrot.slane %v4630, 2
      %v4683 = vrot.slane %v4631, 2
      %v4684 = vsel %vm767, %v4682, %v4683
      %v4685 = vrot.slane %v4632, 2
      %v4686 = vsel %vm767, %v4683, %v4685
      %v4687 = vrot.slane %v4633, 2
      %v4688 = vrot.slane %v4634, 2
      %v4689 = vsel %vm767, %v4687, %v4688
      %v4690 = vrot.slane %v4635, 2
      %v4691 = vsel %vm767, %v4688, %v4690
      %v4692 = vrot.slane %v4636, 2
      %v4693 = vrot.slane %v4637, 2
      %v4694 = vsel %vm767, %v4692, %v4693
      %v4695 = vrot.slane %v4638, 2
      %v4696 = vsel %vm767, %v4693, %v4695
      %v4697 = vrot.slane %v4639, 2
      %v4698 = vrot.slane %v4640, 2
      %v4699 = vsel %vm767, %v4697, %v4698
      %v4700 = vrot.slane %v4641, 2
      %v4701 = vsel %vm767, %v4698, %v4700
      %v4702 = vrot.slane %v4642, 2
      %v4703 = vrot.slane %v4643, 2
      %v4704 = vsel %vm767, %v4702, %v4703
      %v4705 = vrot.slane %v4644, 2
      %v4706 = vsel %vm767, %v4703, %v4705
      %v4707 = vrot.slane %v4645, 2
      %v4708 = vrot.slane %v4646, 2
      %v4709 = vsel %vm767, %v4707, %v4708
      %v4710 = vrot.slane %v4647, 2
      %v4711 = vsel %vm767, %v4708, %v4710
      %v4728 = vadd.f32 %v4604, %v4674
      %v4729 = vadd.f32 %v4605, %v4676
      %v4730 = vadd.f32 %v4606, %v4679
      %v4731 = vadd.f32 %v4607, %v4681
      %v4732 = vadd.f32 %v4608, %v4684
      %v4733 = vadd.f32 %v4609, %v4686
      %v4734 = vadd.f32 %v4610, %v4689
      %v4735 = vadd.f32 %v4611, %v4691
      %v4736 = vadd.f32 %v4612, %v4694
      %v4737 = vadd.f32 %v4613, %v4696
      %v4738 = vadd.f32 %v4614, %v4699
      %v4739 = vadd.f32 %v4615, %v4701
      %v4740 = vadd.f32 %v4616, %v4704
      %v4741 = vadd.f32 %v4617, %v4706
      %v4742 = vadd.f32 %v4618, %v4709
      %v4743 = vadd.f32 %v4619, %v4711
      %v4744 = vlaneseq
      %v4745 = vshrl.u32 %v4744, 7
      %v4746 = vsub.s32 3, %v4745
      %v4747 = vrot.slane %v499, %v4746
      %v4748 = vmul.f32 %v527, %v4747
      %v4749 = vmul.f32 %v528, %v4747
      %v4750 = vmul.f32 %v529, %v4747
      %v4751 = vmul.f32 %v530, %v4747
      %v4752 = vmul.f32 %v531, %v4747
      %v4753 = vmul.f32 %v532, %v4747
      %v4754 = vmul.f32 %v533, %v4747
      %v4755 = vmul.f32 %v534, %v4747
      %v4756 = vmul.f32 %v535, %v4747
      %v4757 = vmul.f32 %v536, %v4747
      %v4758 = vmul.f32 %v537, %v4747
      %v4759 = vmul.f32 %v538, %v4747
      %v4760 = vmul.f32 %v539, %v4747
      %v4761 = vmul.f32 %v540, %v4747
      %v4762 = vmul.f32 %v541, %v4747
      %v4763 = vmul.f32 %v542, %v4747
      %v4764 = vmul.f32 %v543, %v4747
      %v4765 = vmul.f32 %v544, %v4747
      %v4766 = vmul.f32 %v545, %v4747
      %v4767 = vmul.f32 %v546, %v4747
      %v4768 = vmul.f32 %v547, %v4747
      %v4769 = vmul.f32 %v548, %v4747
      %v4770 = vmul.f32 %v549, %v4747
      %v4771 = vmul.f32 %v550, %v4747
      %v4796 = vrot.slane %v4748, 3
      %v4797 = vrot.slane %v4749, 3
      %v4798 = vsel %vm892, %v4796, %v4797
      %v4799 = vrot.slane %v4750, 3
      %v4800 = vsel %vm892, %v4797, %v4799
      %v4801 = vrot.slane %v4751, 3
      %v4802 = vrot.slane %v4752, 3
      %v4803 = vsel %vm892, %v4801, %v4802
      %v4804 = vrot.slane %v4753, 3
      %v4805 = vsel %vm892, %v4802, %v4804
      %v4806 = vrot.slane %v4754, 3
      %v4807 = vrot.slane %v4755, 3
      %v4808 = vsel %vm892, %v4806, %v4807
      %v4809 = vrot.slane %v4756, 3
      %v4810 = vsel %vm892, %v4807, %v4809
      %v4811 = vrot.slane %v4757, 3
      %v4812 = vrot.slane %v4758, 3
      %v4813 = vsel %vm892, %v4811, %v4812
      %v4814 = vrot.slane %v4759, 3
      %v4815 = vsel %vm892, %v4812, %v4814
      %v4816 = vrot.slane %v4760, 3
      %v4817 = vrot.slane %v4761, 3
      %v4818 = vsel %vm892, %v4816, %v4817
      %v4819 = vrot.slane %v4762, 3
      %v4820 = vsel %vm892, %v4817, %v4819
      %v4821 = vrot.slane %v4763, 3
      %v4822 = vrot.slane %v4764, 3
      %v4823 = vsel %vm892, %v4821, %v4822
      %v4824 = vrot.slane %v4765, 3
      %v4825 = vsel %vm892, %v4822, %v4824
      %v4826 = vrot.slane %v4766, 3
      %v4827 = vrot.slane %v4767, 3
      %v4828 = vsel %vm892, %v4826, %v4827
      %v4829 = vrot.slane %v4768, 3
      %v4830 = vsel %vm892, %v4827, %v4829
      %v4831 = vrot.slane %v4769, 3
      %v4832 = vrot.slane %v4770, 3
      %v4833 = vsel %vm892, %v4831, %v4832
      %v4834 = vrot.slane %v4771, 3
      %v4835 = vsel %vm892, %v4832, %v4834
      %v4852 = vadd.f32 %v4728, %v4798
      %v4853 = vadd.f32 %v4729, %v4800
      %v4854 = vadd.f32 %v4730, %v4803
      %v4855 = vadd.f32 %v4731, %v4805
      %v4856 = vadd.f32 %v4732, %v4808
      %v4857 = vadd.f32 %v4733, %v4810
      %v4858 = vadd.f32 %v4734, %v4813
      %v4859 = vadd.f32 %v4735, %v4815
      %v4860 = vadd.f32 %v4736, %v4818
      %v4861 = vadd.f32 %v4737, %v4820
      %v4862 = vadd.f32 %v4738, %v4823
      %v4863 = vadd.f32 %v4739, %v4825
      %v4864 = vadd.f32 %v4740, %v4828
      %v4865 = vadd.f32 %v4741, %v4830
      %v4866 = vadd.f32 %v4742, %v4833
      %v4867 = vadd.f32 %v4743, %v4835
      %v4868 = vlaneseq
      %v4869 = vshrl.u32 %v4868, 7
      %v4870 = vsub.s32 4, %v4869
      %v4871 = vrot.slane %v499, %v4870
      %v4872 = vmul.f32 %v527, %v4871
      %v4873 = vmul.f32 %v528, %v4871
      %v4874 = vmul.f32 %v529, %v4871
      %v4875 = vmul.f32 %v530, %v4871
      %v4876 = vmul.f32 %v531, %v4871
      %v4877 = vmul.f32 %v532, %v4871
      %v4878 = vmul.f32 %v533, %v4871
      %v4879 = vmul.f32 %v534, %v4871
      %v4880 = vmul.f32 %v535, %v4871
      %v4881 = vmul.f32 %v536, %v4871
      %v4882 = vmul.f32 %v537, %v4871
      %v4883 = vmul.f32 %v538, %v4871
      %v4884 = vmul.f32 %v539, %v4871
      %v4885 = vmul.f32 %v540, %v4871
      %v4886 = vmul.f32 %v541, %v4871
      %v4887 = vmul.f32 %v542, %v4871
      %v4888 = vmul.f32 %v543, %v4871
      %v4889 = vmul.f32 %v544, %v4871
      %v4890 = vmul.f32 %v545, %v4871
      %v4891 = vmul.f32 %v546, %v4871
      %v4892 = vmul.f32 %v547, %v4871
      %v4893 = vmul.f32 %v548, %v4871
      %v4894 = vmul.f32 %v549, %v4871
      %v4895 = vmul.f32 %v550, %v4871
      %v4920 = vrot.slane %v4872, 4
      %v4921 = vrot.slane %v4873, 4
      %v4922 = vsel %vm1017, %v4920, %v4921
      %v4923 = vrot.slane %v4874, 4
      %v4924 = vsel %vm1017, %v4921, %v4923
      %v4925 = vrot.slane %v4875, 4
      %v4926 = vrot.slane %v4876, 4
      %v4927 = vsel %vm1017, %v4925, %v4926
      %v4928 = vrot.slane %v4877, 4
      %v4929 = vsel %vm1017, %v4926, %v4928
      %v4930 = vrot.slane %v4878, 4
      %v4931 = vrot.slane %v4879, 4
      %v4932 = vsel %vm1017, %v4930, %v4931
      %v4933 = vrot.slane %v4880, 4
      %v4934 = vsel %vm1017, %v4931, %v4933
      %v4935 = vrot.slane %v4881, 4
      %v4936 = vrot.slane %v4882, 4
      %v4937 = vsel %vm1017, %v4935, %v4936
      %v4938 = vrot.slane %v4883, 4
      %v4939 = vsel %vm1017, %v4936, %v4938
      %v4940 = vrot.slane %v4884, 4
      %v4941 = vrot.slane %v4885, 4
      %v4942 = vsel %vm1017, %v4940, %v4941
      %v4943 = vrot.slane %v4886, 4
      %v4944 = vsel %vm1017, %v4941, %v4943
      %v4945 = vrot.slane %v4887, 4
      %v4946 = vrot.slane %v4888, 4
      %v4947 = vsel %vm1017, %v4945, %v4946
      %v4948 = vrot.slane %v4889, 4
      %v4949 = vsel %vm1017, %v4946, %v4948
      %v4950 = vrot.slane %v4890, 4
      %v4951 = vrot.slane %v4891, 4
      %v4952 = vsel %vm1017, %v4950, %v4951
      %v4953 = vrot.slane %v4892, 4
      %v4954 = vsel %vm1017, %v4951, %v4953
      %v4955 = vrot.slane %v4893, 4
      %v4956 = vrot.slane %v4894, 4
      %v4957 = vsel %vm1017, %v4955, %v4956
      %v4958 = vrot.slane %v4895, 4
      %v4959 = vsel %vm1017, %v4956, %v4958
      %v4976 = vadd.f32 %v4852, %v4922
      %v4977 = vadd.f32 %v4853, %v4924
      %v4978 = vadd.f32 %v4854, %v4927
      %v4979 = vadd.f32 %v4855, %v4929
      %v4980 = vadd.f32 %v4856, %v4932
      %v4981 = vadd.f32 %v4857, %v4934
      %v4982 = vadd.f32 %v4858, %v4937
      %v4983 = vadd.f32 %v4859, %v4939
      %v4984 = vadd.f32 %v4860, %v4942
      %v4985 = vadd.f32 %v4861, %v4944
      %v4986 = vadd.f32 %v4862, %v4947
      %v4987 = vadd.f32 %v4863, %v4949
      %v4988 = vadd.f32 %v4864, %v4952
      %v4989 = vadd.f32 %v4865, %v4954
      %v4990 = vadd.f32 %v4866, %v4957
      %v4991 = vadd.f32 %v4867, %v4959
      %v4992 = vlaneseq
      %v4993 = vshrl.u32 %v4992, 7
      %v4994 = vsub.s32 5, %v4993
      %v4995 = vrot.slane %v499, %v4994
      %v4996 = vmul.f32 %v527, %v4995
      %v4997 = vmul.f32 %v528, %v4995
      %v4998 = vmul.f32 %v529, %v4995
      %v4999 = vmul.f32 %v530, %v4995
      %v5000 = vmul.f32 %v531, %v4995
      %v5001 = vmul.f32 %v532, %v4995
      %v5002 = vmul.f32 %v533, %v4995
      %v5003 = vmul.f32 %v534, %v4995
      %v5004 = vmul.f32 %v535, %v4995
      %v5005 = vmul.f32 %v536, %v4995
      %v5006 = vmul.f32 %v537, %v4995
      %v5007 = vmul.f32 %v538, %v4995
      %v5008 = vmul.f32 %v539, %v4995
      %v5009 = vmul.f32 %v540, %v4995
      %v5010 = vmul.f32 %v541, %v4995
      %v5011 = vmul.f32 %v542, %v4995
      %v5012 = vmul.f32 %v543, %v4995
      %v5013 = vmul.f32 %v544, %v4995
      %v5014 = vmul.f32 %v545, %v4995
      %v5015 = vmul.f32 %v546, %v4995
      %v5016 = vmul.f32 %v547, %v4995
      %v5017 = vmul.f32 %v548, %v4995
      %v5018 = vmul.f32 %v549, %v4995
      %v5019 = vmul.f32 %v550, %v4995
      %v5044 = vrot.slane %v4996, 5
      %v5045 = vrot.slane %v4997, 5
      %v5046 = vsel %vm1142, %v5044, %v5045
      %v5047 = vrot.slane %v4998, 5
      %v5048 = vsel %vm1142, %v5045, %v5047
      %v5049 = vrot.slane %v4999, 5
      %v5050 = vrot.slane %v5000, 5
      %v5051 = vsel %vm1142, %v5049, %v5050
      %v5052 = vrot.slane %v5001, 5
      %v5053 = vsel %vm1142, %v5050, %v5052
      %v5054 = vrot.slane %v5002, 5
      %v5055 = vrot.slane %v5003, 5
      %v5056 = vsel %vm1142, %v5054, %v5055
      %v5057 = vrot.slane %v5004, 5
      %v5058 = vsel %vm1142, %v5055, %v5057
      %v5059 = vrot.slane %v5005, 5
      %v5060 = vrot.slane %v5006, 5
      %v5061 = vsel %vm1142, %v5059, %v5060
      %v5062 = vrot.slane %v5007, 5
      %v5063 = vsel %vm1142, %v5060, %v5062
      %v5064 = vrot.slane %v5008, 5
      %v5065 = vrot.slane %v5009, 5
      %v5066 = vsel %vm1142, %v5064, %v5065
      %v5067 = vrot.slane %v5010, 5
      %v5068 = vsel %vm1142, %v5065, %v5067
      %v5069 = vrot.slane %v5011, 5
      %v5070 = vrot.slane %v5012, 5
      %v5071 = vsel %vm1142, %v5069, %v5070
      %v5072 = vrot.slane %v5013, 5
      %v5073 = vsel %vm1142, %v5070, %v5072
      %v5074 = vrot.slane %v5014, 5
      %v5075 = vrot.slane %v5015, 5
      %v5076 = vsel %vm1142, %v5074, %v5075
      %v5077 = vrot.slane %v5016, 5
      %v5078 = vsel %vm1142, %v5075, %v5077
      %v5079 = vrot.slane %v5017, 5
      %v5080 = vrot.slane %v5018, 5
      %v5081 = vsel %vm1142, %v5079, %v5080
      %v5082 = vrot.slane %v5019, 5
      %v5083 = vsel %vm1142, %v5080, %v5082
      %v5100 = vadd.f32 %v4976, %v5046
      %v5101 = vadd.f32 %v4977, %v5048
      %v5102 = vadd.f32 %v4978, %v5051
      %v5103 = vadd.f32 %v4979, %v5053
      %v5104 = vadd.f32 %v4980, %v5056
      %v5105 = vadd.f32 %v4981, %v5058
      %v5106 = vadd.f32 %v4982, %v5061
      %v5107 = vadd.f32 %v4983, %v5063
      %v5108 = vadd.f32 %v4984, %v5066
      %v5109 = vadd.f32 %v4985, %v5068
      %v5110 = vadd.f32 %v4986, %v5071
      %v5111 = vadd.f32 %v4987, %v5073
      %v5112 = vadd.f32 %v4988, %v5076
      %v5113 = vadd.f32 %v4989, %v5078
      %v5114 = vadd.f32 %v4990, %v5081
      %v5115 = vadd.f32 %v4991, %v5083
      %v5116 = vlaneseq
      %v5117 = vshrl.u32 %v5116, 7
      %v5118 = vsub.s32 6, %v5117
      %v5119 = vrot.slane %v499, %v5118
      %v5120 = vmul.f32 %v527, %v5119
      %v5121 = vmul.f32 %v528, %v5119
      %v5122 = vmul.f32 %v529, %v5119
      %v5123 = vmul.f32 %v530, %v5119
      %v5124 = vmul.f32 %v531, %v5119
      %v5125 = vmul.f32 %v532, %v5119
      %v5126 = vmul.f32 %v533, %v5119
      %v5127 = vmul.f32 %v534, %v5119
      %v5128 = vmul.f32 %v535, %v5119
      %v5129 = vmul.f32 %v536, %v5119
      %v5130 = vmul.f32 %v537, %v5119
      %v5131 = vmul.f32 %v538, %v5119
      %v5132 = vmul.f32 %v539, %v5119
      %v5133 = vmul.f32 %v540, %v5119
      %v5134 = vmul.f32 %v541, %v5119
      %v5135 = vmul.f32 %v542, %v5119
      %v5136 = vmul.f32 %v543, %v5119
      %v5137 = vmul.f32 %v544, %v5119
      %v5138 = vmul.f32 %v545, %v5119
      %v5139 = vmul.f32 %v546, %v5119
      %v5140 = vmul.f32 %v547, %v5119
      %v5141 = vmul.f32 %v548, %v5119
      %v5142 = vmul.f32 %v549, %v5119
      %v5143 = vmul.f32 %v550, %v5119
      %v5168 = vrot.slane %v5120, 6
      %v5169 = vrot.slane %v5121, 6
      %v5170 = vsel %vm1267, %v5168, %v5169
      %v5171 = vrot.slane %v5122, 6
      %v5172 = vsel %vm1267, %v5169, %v5171
      %v5173 = vrot.slane %v5123, 6
      %v5174 = vrot.slane %v5124, 6
      %v5175 = vsel %vm1267, %v5173, %v5174
      %v5176 = vrot.slane %v5125, 6
      %v5177 = vsel %vm1267, %v5174, %v5176
      %v5178 = vrot.slane %v5126, 6
      %v5179 = vrot.slane %v5127, 6
      %v5180 = vsel %vm1267, %v5178, %v5179
      %v5181 = vrot.slane %v5128, 6
      %v5182 = vsel %vm1267, %v5179, %v5181
      %v5183 = vrot.slane %v5129, 6
      %v5184 = vrot.slane %v5130, 6
      %v5185 = vsel %vm1267, %v5183, %v5184
      %v5186 = vrot.slane %v5131, 6
      %v5187 = vsel %vm1267, %v5184, %v5186
      %v5188 = vrot.slane %v5132, 6
      %v5189 = vrot.slane %v5133, 6
      %v5190 = vsel %vm1267, %v5188, %v5189
      %v5191 = vrot.slane %v5134, 6
      %v5192 = vsel %vm1267, %v5189, %v5191
      %v5193 = vrot.slane %v5135, 6
      %v5194 = vrot.slane %v5136, 6
      %v5195 = vsel %vm1267, %v5193, %v5194
      %v5196 = vrot.slane %v5137, 6
      %v5197 = vsel %vm1267, %v5194, %v5196
      %v5198 = vrot.slane %v5138, 6
      %v5199 = vrot.slane %v5139, 6
      %v5200 = vsel %vm1267, %v5198, %v5199
      %v5201 = vrot.slane %v5140, 6
      %v5202 = vsel %vm1267, %v5199, %v5201
      %v5203 = vrot.slane %v5141, 6
      %v5204 = vrot.slane %v5142, 6
      %v5205 = vsel %vm1267, %v5203, %v5204
      %v5206 = vrot.slane %v5143, 6
      %v5207 = vsel %vm1267, %v5204, %v5206
      %v5224 = vadd.f32 %v5100, %v5170
      %v5225 = vadd.f32 %v5101, %v5172
      %v5226 = vadd.f32 %v5102, %v5175
      %v5227 = vadd.f32 %v5103, %v5177
      %v5228 = vadd.f32 %v5104, %v5180
      %v5229 = vadd.f32 %v5105, %v5182
      %v5230 = vadd.f32 %v5106, %v5185
      %v5231 = vadd.f32 %v5107, %v5187
      %v5232 = vadd.f32 %v5108, %v5190
      %v5233 = vadd.f32 %v5109, %v5192
      %v5234 = vadd.f32 %v5110, %v5195
      %v5235 = vadd.f32 %v5111, %v5197
      %v5236 = vadd.f32 %v5112, %v5200
      %v5237 = vadd.f32 %v5113, %v5202
      %v5238 = vadd.f32 %v5114, %v5205
      %v5239 = vadd.f32 %v5115, %v5207
      %v5240 = vlaneseq
      %v5241 = vshrl.u32 %v5240, 7
      %v5242 = vsub.s32 0, %v5241
      %v5243 = vrot.slane %v500, %v5242
      %v5244 = vmul.f32 %v530, %v5243
      %v5245 = vmul.f32 %v531, %v5243
      %v5246 = vmul.f32 %v533, %v5243
      %v5247 = vmul.f32 %v534, %v5243
      %v5248 = vmul.f32 %v536, %v5243
      %v5249 = vmul.f32 %v537, %v5243
      %v5250 = vmul.f32 %v539, %v5243
      %v5251 = vmul.f32 %v540, %v5243
      %v5252 = vmul.f32 %v542, %v5243
      %v5253 = vmul.f32 %v543, %v5243
      %v5254 = vmul.f32 %v545, %v5243
      %v5255 = vmul.f32 %v546, %v5243
      %v5256 = vmul.f32 %v548, %v5243
      %v5257 = vmul.f32 %v549, %v5243
      %v5258 = vmul.f32 %v551, %v5243
      %v5259 = vmul.f32 %v552, %v5243
      %v5260 = vadd.f32 %v5224, %v5244
      %v5261 = vadd.f32 %v5225, %v5245
      %v5262 = vadd.f32 %v5226, %v5246
      %v5263 = vadd.f32 %v5227, %v5247
      %v5264 = vadd.f32 %v5228, %v5248
      %v5265 = vadd.f32 %v5229, %v5249
      %v5266 = vadd.f32 %v5230, %v5250
      %v5267 = vadd.f32 %v5231, %v5251
      %v5268 = vadd.f32 %v5232, %v5252
      %v5269 = vadd.f32 %v5233, %v5253
      %v5270 = vadd.f32 %v5234, %v5254
      %v5271 = vadd.f32 %v5235, %v5255
      %v5272 = vadd.f32 %v5236, %v5256
      %v5273 = vadd.f32 %v5237, %v5257
      %v5274 = vadd.f32 %v5238, %v5258
      %v5275 = vadd.f32 %v5239, %v5259
      %v5276 = vlaneseq
      %v5277 = vshrl.u32 %v5276, 7
      %v5278 = vsub.s32 1, %v5277
      %v5279 = vrot.slane %v500, %v5278
      %v5280 = vmul.f32 %v530, %v5279
      %v5281 = vmul.f32 %v531, %v5279
      %v5282 = vmul.f32 %v532, %v5279
      %v5283 = vmul.f32 %v533, %v5279
      %v5284 = vmul.f32 %v534, %v5279
      %v5285 = vmul.f32 %v535, %v5279
      %v5286 = vmul.f32 %v536, %v5279
      %v5287 = vmul.f32 %v537, %v5279
      %v5288 = vmul.f32 %v538, %v5279
      %v5289 = vmul.f32 %v539, %v5279
      %v5290 = vmul.f32 %v540, %v5279
      %v5291 = vmul.f32 %v541, %v5279
      %v5292 = vmul.f32 %v542, %v5279
      %v5293 = vmul.f32 %v543, %v5279
      %v5294 = vmul.f32 %v544, %v5279
      %v5295 = vmul.f32 %v545, %v5279
      %v5296 = vmul.f32 %v546, %v5279
      %v5297 = vmul.f32 %v547, %v5279
      %v5298 = vmul.f32 %v548, %v5279
      %v5299 = vmul.f32 %v549, %v5279
      %v5300 = vmul.f32 %v550, %v5279
      %v5301 = vmul.f32 %v551, %v5279
      %v5302 = vmul.f32 %v552, %v5279
      %v5303 = vmul.f32 %v553, %v5279
      %v5328 = vrot.slane %v5280, 1
      %v5329 = vrot.slane %v5281, 1
      %v5330 = vsel %vm642, %v5328, %v5329
      %v5331 = vrot.slane %v5282, 1
      %v5332 = vsel %vm642, %v5329, %v5331
      %v5333 = vrot.slane %v5283, 1
      %v5334 = vrot.slane %v5284, 1
      %v5335 = vsel %vm642, %v5333, %v5334
      %v5336 = vrot.slane %v5285, 1
      %v5337 = vsel %vm642, %v5334, %v5336
      %v5338 = vrot.slane %v5286, 1
      %v5339 = vrot.slane %v5287, 1
      %v5340 = vsel %vm642, %v5338, %v5339
      %v5341 = vrot.slane %v5288, 1
      %v5342 = vsel %vm642, %v5339, %v5341
      %v5343 = vrot.slane %v5289, 1
      %v5344 = vrot.slane %v5290, 1
      %v5345 = vsel %vm642, %v5343, %v5344
      %v5346 = vrot.slane %v5291, 1
      %v5347 = vsel %vm642, %v5344, %v5346
      %v5348 = vrot.slane %v5292, 1
      %v5349 = vrot.slane %v5293, 1
      %v5350 = vsel %vm642, %v5348, %v5349
      %v5351 = vrot.slane %v5294, 1
      %v5352 = vsel %vm642, %v5349, %v5351
      %v5353 = vrot.slane %v5295, 1
      %v5354 = vrot.slane %v5296, 1
      %v5355 = vsel %vm642, %v5353, %v5354
      %v5356 = vrot.slane %v5297, 1
      %v5357 = vsel %vm642, %v5354, %v5356
      %v5358 = vrot.slane %v5298, 1
      %v5359 = vrot.slane %v5299, 1
      %v5360 = vsel %vm642, %v5358, %v5359
      %v5361 = vrot.slane %v5300, 1
      %v5362 = vsel %vm642, %v5359, %v5361
      %v5363 = vrot.slane %v5301, 1
      %v5364 = vrot.slane %v5302, 1
      %v5365 = vsel %vm642, %v5363, %v5364
      %v5366 = vrot.slane %v5303, 1
      %v5367 = vsel %vm642, %v5364, %v5366
      %v5384 = vadd.f32 %v5260, %v5330
      %v5385 = vadd.f32 %v5261, %v5332
      %v5386 = vadd.f32 %v5262, %v5335
      %v5387 = vadd.f32 %v5263, %v5337
      %v5388 = vadd.f32 %v5264, %v5340
      %v5389 = vadd.f32 %v5265, %v5342
      %v5390 = vadd.f32 %v5266, %v5345
      %v5391 = vadd.f32 %v5267, %v5347
      %v5392 = vadd.f32 %v5268, %v5350
      %v5393 = vadd.f32 %v5269, %v5352
      %v5394 = vadd.f32 %v5270, %v5355
      %v5395 = vadd.f32 %v5271, %v5357
      %v5396 = vadd.f32 %v5272, %v5360
      %v5397 = vadd.f32 %v5273, %v5362
      %v5398 = vadd.f32 %v5274, %v5365
      %v5399 = vadd.f32 %v5275, %v5367
      %v5400 = vlaneseq
      %v5401 = vshrl.u32 %v5400, 7
      %v5402 = vsub.s32 2, %v5401
      %v5403 = vrot.slane %v500, %v5402
      %v5404 = vmul.f32 %v530, %v5403
      %v5405 = vmul.f32 %v531, %v5403
      %v5406 = vmul.f32 %v532, %v5403
      %v5407 = vmul.f32 %v533, %v5403
      %v5408 = vmul.f32 %v534, %v5403
      %v5409 = vmul.f32 %v535, %v5403
      %v5410 = vmul.f32 %v536, %v5403
      %v5411 = vmul.f32 %v537, %v5403
      %v5412 = vmul.f32 %v538, %v5403
      %v5413 = vmul.f32 %v539, %v5403
      %v5414 = vmul.f32 %v540, %v5403
      %v5415 = vmul.f32 %v541, %v5403
      %v5416 = vmul.f32 %v542, %v5403
      %v5417 = vmul.f32 %v543, %v5403
      %v5418 = vmul.f32 %v544, %v5403
      %v5419 = vmul.f32 %v545, %v5403
      %v5420 = vmul.f32 %v546, %v5403
      %v5421 = vmul.f32 %v547, %v5403
      %v5422 = vmul.f32 %v548, %v5403
      %v5423 = vmul.f32 %v549, %v5403
      %v5424 = vmul.f32 %v550, %v5403
      %v5425 = vmul.f32 %v551, %v5403
      %v5426 = vmul.f32 %v552, %v5403
      %v5427 = vmul.f32 %v553, %v5403
      %v5452 = vrot.slane %v5404, 2
      %v5453 = vrot.slane %v5405, 2
      %v5454 = vsel %vm767, %v5452, %v5453
      %v5455 = vrot.slane %v5406, 2
      %v5456 = vsel %vm767, %v5453, %v5455
      %v5457 = vrot.slane %v5407, 2
      %v5458 = vrot.slane %v5408, 2
      %v5459 = vsel %vm767, %v5457, %v5458
      %v5460 = vrot.slane %v5409, 2
      %v5461 = vsel %vm767, %v5458, %v5460
      %v5462 = vrot.slane %v5410, 2
      %v5463 = vrot.slane %v5411, 2
      %v5464 = vsel %vm767, %v5462, %v5463
      %v5465 = vrot.slane %v5412, 2
      %v5466 = vsel %vm767, %v5463, %v5465
      %v5467 = vrot.slane %v5413, 2
      %v5468 = vrot.slane %v5414, 2
      %v5469 = vsel %vm767, %v5467, %v5468
      %v5470 = vrot.slane %v5415, 2
      %v5471 = vsel %vm767, %v5468, %v5470
      %v5472 = vrot.slane %v5416, 2
      %v5473 = vrot.slane %v5417, 2
      %v5474 = vsel %vm767, %v5472, %v5473
      %v5475 = vrot.slane %v5418, 2
      %v5476 = vsel %vm767, %v5473, %v5475
      %v5477 = vrot.slane %v5419, 2
      %v5478 = vrot.slane %v5420, 2
      %v5479 = vsel %vm767, %v5477, %v5478
      %v5480 = vrot.slane %v5421, 2
      %v5481 = vsel %vm767, %v5478, %v5480
      %v5482 = vrot.slane %v5422, 2
      %v5483 = vrot.slane %v5423, 2
      %v5484 = vsel %vm767, %v5482, %v5483
      %v5485 = vrot.slane %v5424, 2
      %v5486 = vsel %vm767, %v5483, %v5485
      %v5487 = vrot.slane %v5425, 2
      %v5488 = vrot.slane %v5426, 2
      %v5489 = vsel %vm767, %v5487, %v5488
      %v5490 = vrot.slane %v5427, 2
      %v5491 = vsel %vm767, %v5488, %v5490
      %v5508 = vadd.f32 %v5384, %v5454
      %v5509 = vadd.f32 %v5385, %v5456
      %v5510 = vadd.f32 %v5386, %v5459
      %v5511 = vadd.f32 %v5387, %v5461
      %v5512 = vadd.f32 %v5388, %v5464
      %v5513 = vadd.f32 %v5389, %v5466
      %v5514 = vadd.f32 %v5390, %v5469
      %v5515 = vadd.f32 %v5391, %v5471
      %v5516 = vadd.f32 %v5392, %v5474
      %v5517 = vadd.f32 %v5393, %v5476
      %v5518 = vadd.f32 %v5394, %v5479
      %v5519 = vadd.f32 %v5395, %v5481
      %v5520 = vadd.f32 %v5396, %v5484
      %v5521 = vadd.f32 %v5397, %v5486
      %v5522 = vadd.f32 %v5398, %v5489
      %v5523 = vadd.f32 %v5399, %v5491
      %v5524 = vlaneseq
      %v5525 = vshrl.u32 %v5524, 7
      %v5526 = vsub.s32 3, %v5525
      %v5527 = vrot.slane %v500, %v5526
      %v5528 = vmul.f32 %v530, %v5527
      %v5529 = vmul.f32 %v531, %v5527
      %v5530 = vmul.f32 %v532, %v5527
      %v5531 = vmul.f32 %v533, %v5527
      %v5532 = vmul.f32 %v534, %v5527
      %v5533 = vmul.f32 %v535, %v5527
      %v5534 = vmul.f32 %v536, %v5527
      %v5535 = vmul.f32 %v537, %v5527
      %v5536 = vmul.f32 %v538, %v5527
      %v5537 = vmul.f32 %v539, %v5527
      %v5538 = vmul.f32 %v540, %v5527
      %v5539 = vmul.f32 %v541, %v5527
      %v5540 = vmul.f32 %v542, %v5527
      %v5541 = vmul.f32 %v543, %v5527
      %v5542 = vmul.f32 %v544, %v5527
      %v5543 = vmul.f32 %v545, %v5527
      %v5544 = vmul.f32 %v546, %v5527
      %v5545 = vmul.f32 %v547, %v5527
      %v5546 = vmul.f32 %v548, %v5527
      %v5547 = vmul.f32 %v549, %v5527
      %v5548 = vmul.f32 %v550, %v5527
      %v5549 = vmul.f32 %v551, %v5527
      %v5550 = vmul.f32 %v552, %v5527
      %v5551 = vmul.f32 %v553, %v5527
      %v5576 = vrot.slane %v5528, 3
      %v5577 = vrot.slane %v5529, 3
      %v5578 = vsel %vm892, %v5576, %v5577
      %v5579 = vrot.slane %v5530, 3
      %v5580 = vsel %vm892, %v5577, %v5579
      %v5581 = vrot.slane %v5531, 3
      %v5582 = vrot.slane %v5532, 3
      %v5583 = vsel %vm892, %v5581, %v5582
      %v5584 = vrot.slane %v5533, 3
      %v5585 = vsel %vm892, %v5582, %v5584
      %v5586 = vrot.slane %v5534, 3
      %v5587 = vrot.slane %v5535, 3
      %v5588 = vsel %vm892, %v5586, %v5587
      %v5589 = vrot.slane %v5536, 3
      %v5590 = vsel %vm892, %v5587, %v5589
      %v5591 = vrot.slane %v5537, 3
      %v5592 = vrot.slane %v5538, 3
      %v5593 = vsel %vm892, %v5591, %v5592
      %v5594 = vrot.slane %v5539, 3
      %v5595 = vsel %vm892, %v5592, %v5594
      %v5596 = vrot.slane %v5540, 3
      %v5597 = vrot.slane %v5541, 3
      %v5598 = vsel %vm892, %v5596, %v5597
      %v5599 = vrot.slane %v5542, 3
      %v5600 = vsel %vm892, %v5597, %v5599
      %v5601 = vrot.slane %v5543, 3
      %v5602 = vrot.slane %v5544, 3
      %v5603 = vsel %vm892, %v5601, %v5602
      %v5604 = vrot.slane %v5545, 3
      %v5605 = vsel %vm892, %v5602, %v5604
      %v5606 = vrot.slane %v5546, 3
      %v5607 = vrot.slane %v5547, 3
      %v5608 = vsel %vm892, %v5606, %v5607
      %v5609 = vrot.slane %v5548, 3
      %v5610 = vsel %vm892, %v5607, %v5609
      %v5611 = vrot.slane %v5549, 3
      %v5612 = vrot.slane %v5550, 3
      %v5613 = vsel %vm892, %v5611, %v5612
      %v5614 = vrot.slane %v5551, 3
      %v5615 = vsel %vm892, %v5612, %v5614
      %v5632 = vadd.f32 %v5508, %v5578
      %v5633 = vadd.f32 %v5509, %v5580
      %v5634 = vadd.f32 %v5510, %v5583
      %v5635 = vadd.f32 %v5511, %v5585
      %v5636 = vadd.f32 %v5512, %v5588
      %v5637 = vadd.f32 %v5513, %v5590
      %v5638 = vadd.f32 %v5514, %v5593
      %v5639 = vadd.f32 %v5515, %v5595
      %v5640 = vadd.f32 %v5516, %v5598
      %v5641 = vadd.f32 %v5517, %v5600
      %v5642 = vadd.f32 %v5518, %v5603
      %v5643 = vadd.f32 %v5519, %v5605
      %v5644 = vadd.f32 %v5520, %v5608
      %v5645 = vadd.f32 %v5521, %v5610
      %v5646 = vadd.f32 %v5522, %v5613
      %v5647 = vadd.f32 %v5523, %v5615
      %v5648 = vlaneseq
      %v5649 = vshrl.u32 %v5648, 7
      %v5650 = vsub.s32 4, %v5649
      %v5651 = vrot.slane %v500, %v5650
      %v5652 = vmul.f32 %v530, %v5651
      %v5653 = vmul.f32 %v531, %v5651
      %v5654 = vmul.f32 %v532, %v5651
      %v5655 = vmul.f32 %v533, %v5651
      %v5656 = vmul.f32 %v534, %v5651
      %v5657 = vmul.f32 %v535, %v5651
      %v5658 = vmul.f32 %v536, %v5651
      %v5659 = vmul.f32 %v537, %v5651
      %v5660 = vmul.f32 %v538, %v5651
      %v5661 = vmul.f32 %v539, %v5651
      %v5662 = vmul.f32 %v540, %v5651
      %v5663 = vmul.f32 %v541, %v5651
      %v5664 = vmul.f32 %v542, %v5651
      %v5665 = vmul.f32 %v543, %v5651
      %v5666 = vmul.f32 %v544, %v5651
      %v5667 = vmul.f32 %v545, %v5651
      %v5668 = vmul.f32 %v546, %v5651
      %v5669 = vmul.f32 %v547, %v5651
      %v5670 = vmul.f32 %v548, %v5651
      %v5671 = vmul.f32 %v549, %v5651
      %v5672 = vmul.f32 %v550, %v5651
      %v5673 = vmul.f32 %v551, %v5651
      %v5674 = vmul.f32 %v552, %v5651
      %v5675 = vmul.f32 %v553, %v5651
      %v5700 = vrot.slane %v5652, 4
      %v5701 = vrot.slane %v5653, 4
      %v5702 = vsel %vm1017, %v5700, %v5701
      %v5703 = vrot.slane %v5654, 4
      %v5704 = vsel %vm1017, %v5701, %v5703
      %v5705 = vrot.slane %v5655, 4
      %v5706 = vrot.slane %v5656, 4
      %v5707 = vsel %vm1017, %v5705, %v5706
      %v5708 = vrot.slane %v5657, 4
      %v5709 = vsel %vm1017, %v5706, %v5708
      %v5710 = vrot.slane %v5658, 4
      %v5711 = vrot.slane %v5659, 4
      %v5712 = vsel %vm1017, %v5710, %v5711
      %v5713 = vrot.slane %v5660, 4
      %v5714 = vsel %vm1017, %v5711, %v5713
      %v5715 = vrot.slane %v5661, 4
      %v5716 = vrot.slane %v5662, 4
      %v5717 = vsel %vm1017, %v5715, %v5716
      %v5718 = vrot.slane %v5663, 4
      %v5719 = vsel %vm1017, %v5716, %v5718
      %v5720 = vrot.slane %v5664, 4
      %v5721 = vrot.slane %v5665, 4
      %v5722 = vsel %vm1017, %v5720, %v5721
      %v5723 = vrot.slane %v5666, 4
      %v5724 = vsel %vm1017, %v5721, %v5723
      %v5725 = vrot.slane %v5667, 4
      %v5726 = vrot.slane %v5668, 4
      %v5727 = vsel %vm1017, %v5725, %v5726
      %v5728 = vrot.slane %v5669, 4
      %v5729 = vsel %vm1017, %v5726, %v5728
      %v5730 = vrot.slane %v5670, 4
      %v5731 = vrot.slane %v5671, 4
      %v5732 = vsel %vm1017, %v5730, %v5731
      %v5733 = vrot.slane %v5672, 4
      %v5734 = vsel %vm1017, %v5731, %v5733
      %v5735 = vrot.slane %v5673, 4
      %v5736 = vrot.slane %v5674, 4
      %v5737 = vsel %vm1017, %v5735, %v5736
      %v5738 = vrot.slane %v5675, 4
      %v5739 = vsel %vm1017, %v5736, %v5738
      %v5756 = vadd.f32 %v5632, %v5702
      %v5757 = vadd.f32 %v5633, %v5704
      %v5758 = vadd.f32 %v5634, %v5707
      %v5759 = vadd.f32 %v5635, %v5709
      %v5760 = vadd.f32 %v5636, %v5712
      %v5761 = vadd.f32 %v5637, %v5714
      %v5762 = vadd.f32 %v5638, %v5717
      %v5763 = vadd.f32 %v5639, %v5719
      %v5764 = vadd.f32 %v5640, %v5722
      %v5765 = vadd.f32 %v5641, %v5724
      %v5766 = vadd.f32 %v5642, %v5727
      %v5767 = vadd.f32 %v5643, %v5729
      %v5768 = vadd.f32 %v5644, %v5732
      %v5769 = vadd.f32 %v5645, %v5734
      %v5770 = vadd.f32 %v5646, %v5737
      %v5771 = vadd.f32 %v5647, %v5739
      %v5772 = vlaneseq
      %v5773 = vshrl.u32 %v5772, 7
      %v5774 = vsub.s32 5, %v5773
      %v5775 = vrot.slane %v500, %v5774
      %v5776 = vmul.f32 %v530, %v5775
      %v5777 = vmul.f32 %v531, %v5775
      %v5778 = vmul.f32 %v532, %v5775
      %v5779 = vmul.f32 %v533, %v5775
      %v5780 = vmul.f32 %v534, %v5775
      %v5781 = vmul.f32 %v535, %v5775
      %v5782 = vmul.f32 %v536, %v5775
      %v5783 = vmul.f32 %v537, %v5775
      %v5784 = vmul.f32 %v538, %v5775
      %v5785 = vmul.f32 %v539, %v5775
      %v5786 = vmul.f32 %v540, %v5775
      %v5787 = vmul.f32 %v541, %v5775
      %v5788 = vmul.f32 %v542, %v5775
      %v5789 = vmul.f32 %v543, %v5775
      %v5790 = vmul.f32 %v544, %v5775
      %v5791 = vmul.f32 %v545, %v5775
      %v5792 = vmul.f32 %v546, %v5775
      %v5793 = vmul.f32 %v547, %v5775
      %v5794 = vmul.f32 %v548, %v5775
      %v5795 = vmul.f32 %v549, %v5775
      %v5796 = vmul.f32 %v550, %v5775
      %v5797 = vmul.f32 %v551, %v5775
      %v5798 = vmul.f32 %v552, %v5775
      %v5799 = vmul.f32 %v553, %v5775
      %v5824 = vrot.slane %v5776, 5
      %v5825 = vrot.slane %v5777, 5
      %v5826 = vsel %vm1142, %v5824, %v5825
      %v5827 = vrot.slane %v5778, 5
      %v5828 = vsel %vm1142, %v5825, %v5827
      %v5829 = vrot.slane %v5779, 5
      %v5830 = vrot.slane %v5780, 5
      %v5831 = vsel %vm1142, %v5829, %v5830
      %v5832 = vrot.slane %v5781, 5
      %v5833 = vsel %vm1142, %v5830, %v5832
      %v5834 = vrot.slane %v5782, 5
      %v5835 = vrot.slane %v5783, 5
      %v5836 = vsel %vm1142, %v5834, %v5835
      %v5837 = vrot.slane %v5784, 5
      %v5838 = vsel %vm1142, %v5835, %v5837
      %v5839 = vrot.slane %v5785, 5
      %v5840 = vrot.slane %v5786, 5
      %v5841 = vsel %vm1142, %v5839, %v5840
      %v5842 = vrot.slane %v5787, 5
      %v5843 = vsel %vm1142, %v5840, %v5842
      %v5844 = vrot.slane %v5788, 5
      %v5845 = vrot.slane %v5789, 5
      %v5846 = vsel %vm1142, %v5844, %v5845
      %v5847 = vrot.slane %v5790, 5
      %v5848 = vsel %vm1142, %v5845, %v5847
      %v5849 = vrot.slane %v5791, 5
      %v5850 = vrot.slane %v5792, 5
      %v5851 = vsel %vm1142, %v5849, %v5850
      %v5852 = vrot.slane %v5793, 5
      %v5853 = vsel %vm1142, %v5850, %v5852
      %v5854 = vrot.slane %v5794, 5
      %v5855 = vrot.slane %v5795, 5
      %v5856 = vsel %vm1142, %v5854, %v5855
      %v5857 = vrot.slane %v5796, 5
      %v5858 = vsel %vm1142, %v5855, %v5857
      %v5859 = vrot.slane %v5797, 5
      %v5860 = vrot.slane %v5798, 5
      %v5861 = vsel %vm1142, %v5859, %v5860
      %v5862 = vrot.slane %v5799, 5
      %v5863 = vsel %vm1142, %v5860, %v5862
      %v5880 = vadd.f32 %v5756, %v5826
      %v5881 = vadd.f32 %v5757, %v5828
      %v5882 = vadd.f32 %v5758, %v5831
      %v5883 = vadd.f32 %v5759, %v5833
      %v5884 = vadd.f32 %v5760, %v5836
      %v5885 = vadd.f32 %v5761, %v5838
      %v5886 = vadd.f32 %v5762, %v5841
      %v5887 = vadd.f32 %v5763, %v5843
      %v5888 = vadd.f32 %v5764, %v5846
      %v5889 = vadd.f32 %v5765, %v5848
      %v5890 = vadd.f32 %v5766, %v5851
      %v5891 = vadd.f32 %v5767, %v5853
      %v5892 = vadd.f32 %v5768, %v5856
      %v5893 = vadd.f32 %v5769, %v5858
      %v5894 = vadd.f32 %v5770, %v5861
      %v5895 = vadd.f32 %v5771, %v5863
      %v5896 = vlaneseq
      %v5897 = vshrl.u32 %v5896, 7
      %v5898 = vsub.s32 6, %v5897
      %v5899 = vrot.slane %v500, %v5898
      %v5900 = vmul.f32 %v530, %v5899
      %v5901 = vmul.f32 %v531, %v5899
      %v5902 = vmul.f32 %v532, %v5899
      %v5903 = vmul.f32 %v533, %v5899
      %v5904 = vmul.f32 %v534, %v5899
      %v5905 = vmul.f32 %v535, %v5899
      %v5906 = vmul.f32 %v536, %v5899
      %v5907 = vmul.f32 %v537, %v5899
      %v5908 = vmul.f32 %v538, %v5899
      %v5909 = vmul.f32 %v539, %v5899
      %v5910 = vmul.f32 %v540, %v5899
      %v5911 = vmul.f32 %v541, %v5899
      %v5912 = vmul.f32 %v542, %v5899
      %v5913 = vmul.f32 %v543, %v5899
      %v5914 = vmul.f32 %v544, %v5899
      %v5915 = vmul.f32 %v545, %v5899
      %v5916 = vmul.f32 %v546, %v5899
      %v5917 = vmul.f32 %v547, %v5899
      %v5918 = vmul.f32 %v548, %v5899
      %v5919 = vmul.f32 %v549, %v5899
      %v5920 = vmul.f32 %v550, %v5899
      %v5921 = vmul.f32 %v551, %v5899
      %v5922 = vmul.f32 %v552, %v5899
      %v5923 = vmul.f32 %v553, %v5899
      %v5948 = vrot.slane %v5900, 6
      %v5949 = vrot.slane %v5901, 6
      %v5950 = vsel %vm1267, %v5948, %v5949
      %v5951 = vrot.slane %v5902, 6
      %v5952 = vsel %vm1267, %v5949, %v5951
      %v5953 = vrot.slane %v5903, 6
      %v5954 = vrot.slane %v5904, 6
      %v5955 = vsel %vm1267, %v5953, %v5954
      %v5956 = vrot.slane %v5905, 6
      %v5957 = vsel %vm1267, %v5954, %v5956
      %v5958 = vrot.slane %v5906, 6
      %v5959 = vrot.slane %v5907, 6
      %v5960 = vsel %vm1267, %v5958, %v5959
      %v5961 = vrot.slane %v5908, 6
      %v5962 = vsel %vm1267, %v5959, %v5961
      %v5963 = vrot.slane %v5909, 6
      %v5964 = vrot.slane %v5910, 6
      %v5965 = vsel %vm1267, %v5963, %v5964
      %v5966 = vrot.slane %v5911, 6
      %v5967 = vsel %vm1267, %v5964, %v5966
      %v5968 = vrot.slane %v5912, 6
      %v5969 = vrot.slane %v5913, 6
      %v5970 = vsel %vm1267, %v5968, %v5969
      %v5971 = vrot.slane %v5914, 6
      %v5972 = vsel %vm1267, %v5969, %v5971
      %v5973 = vrot.slane %v5915, 6
      %v5974 = vrot.slane %v5916, 6
      %v5975 = vsel %vm1267, %v5973, %v5974
      %v5976 = vrot.slane %v5917, 6
      %v5977 = vsel %vm1267, %v5974, %v5976
      %v5978 = vrot.slane %v5918, 6
      %v5979 = vrot.slane %v5919, 6
      %v5980 = vsel %vm1267, %v5978, %v5979
      %v5981 = vrot.slane %v5920, 6
      %v5982 = vsel %vm1267, %v5979, %v5981
      %v5983 = vrot.slane %v5921, 6
      %v5984 = vrot.slane %v5922, 6
      %v5985 = vsel %vm1267, %v5983, %v5984
      %v5986 = vrot.slane %v5923, 6
      %v5987 = vsel %vm1267, %v5984, %v5986
      %v6004 = vadd.f32 %v5880, %v5950
      %v6005 = vadd.f32 %v5881, %v5952
      %v6006 = vadd.f32 %v5882, %v5955
      %v6007 = vadd.f32 %v5883, %v5957
      %v6008 = vadd.f32 %v5884, %v5960
      %v6009 = vadd.f32 %v5885, %v5962
      %v6010 = vadd.f32 %v5886, %v5965
      %v6011 = vadd.f32 %v5887, %v5967
      %v6012 = vadd.f32 %v5888, %v5970
      %v6013 = vadd.f32 %v5889, %v5972
      %v6014 = vadd.f32 %v5890, %v5975
      %v6015 = vadd.f32 %v5891, %v5977
      %v6016 = vadd.f32 %v5892, %v5980
      %v6017 = vadd.f32 %v5893, %v5982
      %v6018 = vadd.f32 %v5894, %v5985
      %v6019 = vadd.f32 %v5895, %v5987
      %v6021 = vlaneseq
      %v6022 = vshrl.u32 %v6021, 7
      %v6023 = vsub.s32 0, %v6022
      %v6024 = vrot.slane %v501, %v6023
      %v6026 = vadd.f32 %v6004, %v6024
      %v6027 = vadd.f32 %v6005, %v6024
      %v6028 = vadd.f32 %v6006, %v6024
      %v6029 = vadd.f32 %v6007, %v6024
      %v6030 = vadd.f32 %v6008, %v6024
      %v6031 = vadd.f32 %v6009, %v6024
      %v6032 = vadd.f32 %v6010, %v6024
      %v6033 = vadd.f32 %v6011, %v6024
      %v6034 = vadd.f32 %v6012, %v6024
      %v6035 = vadd.f32 %v6013, %v6024
      %v6036 = vadd.f32 %v6014, %v6024
      %v6037 = vadd.f32 %v6015, %v6024
      %v6038 = vadd.f32 %v6016, %v6024
      %v6039 = vadd.f32 %v6017, %v6024
      %v6040 = vadd.f32 %v6018, %v6024
      %v6041 = vadd.f32 %v6019, %v6024
      %v6042 = vsel %vm361, %v6026, 0.0
      %6043 = vadd.xlane.f32.xlu0 %v6042
      %v6044 = vpop.xlane.xlu0 %6043
      %v6045 = vsel %vm361, %v6027, 0.0
      %6046 = vadd.xlane.f32.xlu0 %v6045
      %v6047 = vpop.xlane.xlu0 %6046
      %v6048 = vsel %vm361, %v6028, 0.0
      %6049 = vadd.xlane.f32.xlu0 %v6048
      %v6050 = vpop.xlane.xlu0 %6049
      %v6051 = vsel %vm361, %v6029, 0.0
      %6052 = vadd.xlane.f32.xlu0 %v6051
      %v6053 = vpop.xlane.xlu0 %6052
      %v6054 = vsel %vm361, %v6030, 0.0
      %6055 = vadd.xlane.f32.xlu0 %v6054
      %v6056 = vpop.xlane.xlu0 %6055
      %v6057 = vsel %vm361, %v6031, 0.0
      %6058 = vadd.xlane.f32.xlu0 %v6057
      %v6059 = vpop.xlane.xlu0 %6058
      %v6060 = vsel %vm361, %v6032, 0.0
      %6061 = vadd.xlane.f32.xlu0 %v6060
      %v6062 = vpop.xlane.xlu0 %6061
      %v6063 = vsel %vm361, %v6033, 0.0
      %6064 = vadd.xlane.f32.xlu0 %v6063
      %v6065 = vpop.xlane.xlu0 %6064
      %v6066 = vsel %vm361, %v6034, 0.0
      %6067 = vadd.xlane.f32.xlu0 %v6066
      %v6068 = vpop.xlane.xlu0 %6067
      %v6069 = vsel %vm361, %v6035, 0.0
      %6070 = vadd.xlane.f32.xlu0 %v6069
      %v6071 = vpop.xlane.xlu0 %6070
      %v6072 = vsel %vm361, %v6036, 0.0
      %6073 = vadd.xlane.f32.xlu0 %v6072
      %v6074 = vpop.xlane.xlu0 %6073
      %v6075 = vsel %vm361, %v6037, 0.0
      %6076 = vadd.xlane.f32.xlu0 %v6075
      %v6077 = vpop.xlane.xlu0 %6076
      %v6078 = vsel %vm361, %v6038, 0.0
      %6079 = vadd.xlane.f32.xlu0 %v6078
      %v6080 = vpop.xlane.xlu0 %6079
      %v6081 = vsel %vm361, %v6039, 0.0
      %6082 = vadd.xlane.f32.xlu0 %v6081
      %v6083 = vpop.xlane.xlu0 %6082
      %v6084 = vsel %vm361, %v6040, 0.0
      %6085 = vadd.xlane.f32.xlu0 %v6084
      %v6086 = vpop.xlane.xlu0 %6085
      %v6087 = vsel %vm361, %v6041, 0.0
      %6088 = vadd.xlane.f32.xlu0 %v6087
      %v6089 = vpop.xlane.xlu0 %6088
      %v6090 = vrcp.pop 4.0
      %v6091 = vmul.f32 %v6044, %v6090
      %v6092 = vmul.f32 %v6047, %v6090
      %v6093 = vmul.f32 %v6050, %v6090
      %v6094 = vmul.f32 %v6053, %v6090
      %v6095 = vmul.f32 %v6056, %v6090
      %v6096 = vmul.f32 %v6059, %v6090
      %v6097 = vmul.f32 %v6062, %v6090
      %v6098 = vmul.f32 %v6065, %v6090
      %v6099 = vmul.f32 %v6068, %v6090
      %v6100 = vmul.f32 %v6071, %v6090
      %v6101 = vmul.f32 %v6074, %v6090
      %v6102 = vmul.f32 %v6077, %v6090
      %v6103 = vmul.f32 %v6080, %v6090
      %v6104 = vmul.f32 %v6083, %v6090
      %v6105 = vmul.f32 %v6086, %v6090
      %v6106 = vmul.f32 %v6089, %v6090
      %v6107 = vsub.f32 %v6026, %v6091
      %v6108 = vsub.f32 %v6027, %v6092
      %v6109 = vsub.f32 %v6028, %v6093
      %v6110 = vsub.f32 %v6029, %v6094
      %v6111 = vsub.f32 %v6030, %v6095
      %v6112 = vsub.f32 %v6031, %v6096
      %v6113 = vsub.f32 %v6032, %v6097
      %v6114 = vsub.f32 %v6033, %v6098
      %v6115 = vsub.f32 %v6034, %v6099
      %v6116 = vsub.f32 %v6035, %v6100
      %v6117 = vsub.f32 %v6036, %v6101
      %v6118 = vsub.f32 %v6037, %v6102
      %v6119 = vsub.f32 %v6038, %v6103
      %v6120 = vsub.f32 %v6039, %v6104
      %v6121 = vsub.f32 %v6040, %v6105
      %v6122 = vsub.f32 %v6041, %v6106
      %v6123 = vmul.f32 %v6107, %v6107
      %v6124 = vmul.f32 %v6108, %v6108
      %v6125 = vmul.f32 %v6109, %v6109
      %v6126 = vmul.f32 %v6110, %v6110
      %v6127 = vmul.f32 %v6111, %v6111
      %v6128 = vmul.f32 %v6112, %v6112
      %v6129 = vmul.f32 %v6113, %v6113
      %v6130 = vmul.f32 %v6114, %v6114
      %v6131 = vmul.f32 %v6115, %v6115
      %v6132 = vmul.f32 %v6116, %v6116
      %v6133 = vmul.f32 %v6117, %v6117
      %v6134 = vmul.f32 %v6118, %v6118
      %v6135 = vmul.f32 %v6119, %v6119
      %v6136 = vmul.f32 %v6120, %v6120
      %v6137 = vmul.f32 %v6121, %v6121
      %v6138 = vmul.f32 %v6122, %v6122
      %v6139 = vsel %vm361, %v6123, 0.0
      %6140 = vadd.xlane.f32.xlu0 %v6139
      %v6141 = vpop.xlane.xlu0 %6140
      %v6142 = vsel %vm361, %v6124, 0.0
      %6143 = vadd.xlane.f32.xlu0 %v6142
      %v6144 = vpop.xlane.xlu0 %6143
      %v6145 = vsel %vm361, %v6125, 0.0
      %6146 = vadd.xlane.f32.xlu0 %v6145
      %v6147 = vpop.xlane.xlu0 %6146
      %v6148 = vsel %vm361, %v6126, 0.0
      %6149 = vadd.xlane.f32.xlu0 %v6148
      %v6150 = vpop.xlane.xlu0 %6149
      %v6151 = vsel %vm361, %v6127, 0.0
      %6152 = vadd.xlane.f32.xlu0 %v6151
      %v6153 = vpop.xlane.xlu0 %6152
      %v6154 = vsel %vm361, %v6128, 0.0
      %6155 = vadd.xlane.f32.xlu0 %v6154
      %v6156 = vpop.xlane.xlu0 %6155
      %v6157 = vsel %vm361, %v6129, 0.0
      %6158 = vadd.xlane.f32.xlu0 %v6157
      %v6159 = vpop.xlane.xlu0 %6158
      %v6160 = vsel %vm361, %v6130, 0.0
      %6161 = vadd.xlane.f32.xlu0 %v6160
      %v6162 = vpop.xlane.xlu0 %6161
      %v6163 = vsel %vm361, %v6131, 0.0
      %6164 = vadd.xlane.f32.xlu0 %v6163
      %v6165 = vpop.xlane.xlu0 %6164
      %v6166 = vsel %vm361, %v6132, 0.0
      %6167 = vadd.xlane.f32.xlu0 %v6166
      %v6168 = vpop.xlane.xlu0 %6167
      %v6169 = vsel %vm361, %v6133, 0.0
      %6170 = vadd.xlane.f32.xlu0 %v6169
      %v6171 = vpop.xlane.xlu0 %6170
      %v6172 = vsel %vm361, %v6134, 0.0
      %6173 = vadd.xlane.f32.xlu0 %v6172
      %v6174 = vpop.xlane.xlu0 %6173
      %v6175 = vsel %vm361, %v6135, 0.0
      %6176 = vadd.xlane.f32.xlu0 %v6175
      %v6177 = vpop.xlane.xlu0 %6176
      %v6178 = vsel %vm361, %v6136, 0.0
      %6179 = vadd.xlane.f32.xlu0 %v6178
      %v6180 = vpop.xlane.xlu0 %6179
      %v6181 = vsel %vm361, %v6137, 0.0
      %6182 = vadd.xlane.f32.xlu0 %v6181
      %v6183 = vpop.xlane.xlu0 %6182
      %v6184 = vsel %vm361, %v6138, 0.0
      %6185 = vadd.xlane.f32.xlu0 %v6184
      %v6186 = vpop.xlane.xlu0 %6185
      %v6187 = vmul.f32 %v6141, %v6090
      %v6188 = vmul.f32 %v6144, %v6090
      %v6189 = vmul.f32 %v6147, %v6090
      %v6190 = vmul.f32 %v6150, %v6090
      %v6191 = vmul.f32 %v6153, %v6090
      %v6192 = vmul.f32 %v6156, %v6090
      %v6193 = vmul.f32 %v6159, %v6090
      %v6194 = vmul.f32 %v6162, %v6090
      %v6195 = vmul.f32 %v6165, %v6090
      %v6196 = vmul.f32 %v6168, %v6090
      %v6197 = vmul.f32 %v6171, %v6090
      %v6198 = vmul.f32 %v6174, %v6090
      %v6199 = vmul.f32 %v6177, %v6090
      %v6200 = vmul.f32 %v6180, %v6090
      %v6201 = vmul.f32 %v6183, %v6090
      %v6202 = vmul.f32 %v6186, %v6090
      %v6203 = vrsqrt.pop %v6187
      %v6204 = vmul.f32 %v6187, %v6203
      %vm6205 = vcmp.eq.f32.partialorder %v6187, inf
      %v6206 = vsel %vm6205, %v6187, %v6204
      %vm6207 = vcmp.eq.f32.partialorder %v6187, 0.0
      %v6208 = vand.u32 %v6187, 2147483648
      %v6209 = vsel %vm6207, %v6208, %v6206
      %v6210 = vrsqrt.pop %v6188
      %v6211 = vmul.f32 %v6188, %v6210
      %vm6212 = vcmp.eq.f32.partialorder %v6188, inf
      %v6213 = vsel %vm6212, %v6188, %v6211
      %vm6214 = vcmp.eq.f32.partialorder %v6188, 0.0
      %v6215 = vand.u32 %v6188, 2147483648
      %v6216 = vsel %vm6214, %v6215, %v6213
      %v6217 = vrsqrt.pop %v6189
      %v6218 = vmul.f32 %v6189, %v6217
      %vm6219 = vcmp.eq.f32.partialorder %v6189, inf
      %v6220 = vsel %vm6219, %v6189, %v6218
      %vm6221 = vcmp.eq.f32.partialorder %v6189, 0.0
      %v6222 = vand.u32 %v6189, 2147483648
      %v6223 = vsel %vm6221, %v6222, %v6220
      %v6224 = vrsqrt.pop %v6190
      %v6225 = vmul.f32 %v6190, %v6224
      %vm6226 = vcmp.eq.f32.partialorder %v6190, inf
      %v6227 = vsel %vm6226, %v6190, %v6225
      %vm6228 = vcmp.eq.f32.partialorder %v6190, 0.0
      %v6229 = vand.u32 %v6190, 2147483648
      %v6230 = vsel %vm6228, %v6229, %v6227
      %v6231 = vrsqrt.pop %v6191
      %v6232 = vmul.f32 %v6191, %v6231
      %vm6233 = vcmp.eq.f32.partialorder %v6191, inf
      %v6234 = vsel %vm6233, %v6191, %v6232
      %vm6235 = vcmp.eq.f32.partialorder %v6191, 0.0
      %v6236 = vand.u32 %v6191, 2147483648
      %v6237 = vsel %vm6235, %v6236, %v6234
      %v6238 = vrsqrt.pop %v6192
      %v6239 = vmul.f32 %v6192, %v6238
      %vm6240 = vcmp.eq.f32.partialorder %v6192, inf
      %v6241 = vsel %vm6240, %v6192, %v6239
      %vm6242 = vcmp.eq.f32.partialorder %v6192, 0.0
      %v6243 = vand.u32 %v6192, 2147483648
      %v6244 = vsel %vm6242, %v6243, %v6241
      %v6245 = vrsqrt.pop %v6193
      %v6246 = vmul.f32 %v6193, %v6245
      %vm6247 = vcmp.eq.f32.partialorder %v6193, inf
      %v6248 = vsel %vm6247, %v6193, %v6246
      %vm6249 = vcmp.eq.f32.partialorder %v6193, 0.0
      %v6250 = vand.u32 %v6193, 2147483648
      %v6251 = vsel %vm6249, %v6250, %v6248
      %v6252 = vrsqrt.pop %v6194
      %v6253 = vmul.f32 %v6194, %v6252
      %vm6254 = vcmp.eq.f32.partialorder %v6194, inf
      %v6255 = vsel %vm6254, %v6194, %v6253
      %vm6256 = vcmp.eq.f32.partialorder %v6194, 0.0
      %v6257 = vand.u32 %v6194, 2147483648
      %v6258 = vsel %vm6256, %v6257, %v6255
      %v6259 = vrsqrt.pop %v6195
      %v6260 = vmul.f32 %v6195, %v6259
      %vm6261 = vcmp.eq.f32.partialorder %v6195, inf
      %v6262 = vsel %vm6261, %v6195, %v6260
      %vm6263 = vcmp.eq.f32.partialorder %v6195, 0.0
      %v6264 = vand.u32 %v6195, 2147483648
      %v6265 = vsel %vm6263, %v6264, %v6262
      %v6266 = vrsqrt.pop %v6196
      %v6267 = vmul.f32 %v6196, %v6266
      %vm6268 = vcmp.eq.f32.partialorder %v6196, inf
      %v6269 = vsel %vm6268, %v6196, %v6267
      %vm6270 = vcmp.eq.f32.partialorder %v6196, 0.0
      %v6271 = vand.u32 %v6196, 2147483648
      %v6272 = vsel %vm6270, %v6271, %v6269
      %v6273 = vrsqrt.pop %v6197
      %v6274 = vmul.f32 %v6197, %v6273
      %vm6275 = vcmp.eq.f32.partialorder %v6197, inf
      %v6276 = vsel %vm6275, %v6197, %v6274
      %vm6277 = vcmp.eq.f32.partialorder %v6197, 0.0
      %v6278 = vand.u32 %v6197, 2147483648
      %v6279 = vsel %vm6277, %v6278, %v6276
      %v6280 = vrsqrt.pop %v6198
      %v6281 = vmul.f32 %v6198, %v6280
      %vm6282 = vcmp.eq.f32.partialorder %v6198, inf
      %v6283 = vsel %vm6282, %v6198, %v6281
      %vm6284 = vcmp.eq.f32.partialorder %v6198, 0.0
      %v6285 = vand.u32 %v6198, 2147483648
      %v6286 = vsel %vm6284, %v6285, %v6283
      %v6287 = vrsqrt.pop %v6199
      %v6288 = vmul.f32 %v6199, %v6287
      %vm6289 = vcmp.eq.f32.partialorder %v6199, inf
      %v6290 = vsel %vm6289, %v6199, %v6288
      %vm6291 = vcmp.eq.f32.partialorder %v6199, 0.0
      %v6292 = vand.u32 %v6199, 2147483648
      %v6293 = vsel %vm6291, %v6292, %v6290
      %v6294 = vrsqrt.pop %v6200
      %v6295 = vmul.f32 %v6200, %v6294
      %vm6296 = vcmp.eq.f32.partialorder %v6200, inf
      %v6297 = vsel %vm6296, %v6200, %v6295
      %vm6298 = vcmp.eq.f32.partialorder %v6200, 0.0
      %v6299 = vand.u32 %v6200, 2147483648
      %v6300 = vsel %vm6298, %v6299, %v6297
      %v6301 = vrsqrt.pop %v6201
      %v6302 = vmul.f32 %v6201, %v6301
      %vm6303 = vcmp.eq.f32.partialorder %v6201, inf
      %v6304 = vsel %vm6303, %v6201, %v6302
      %vm6305 = vcmp.eq.f32.partialorder %v6201, 0.0
      %v6306 = vand.u32 %v6201, 2147483648
      %v6307 = vsel %vm6305, %v6306, %v6304
      %v6308 = vrsqrt.pop %v6202
      %v6309 = vmul.f32 %v6202, %v6308
      %vm6310 = vcmp.eq.f32.partialorder %v6202, inf
      %v6311 = vsel %vm6310, %v6202, %v6309
      %vm6312 = vcmp.eq.f32.partialorder %v6202, 0.0
      %v6313 = vand.u32 %v6202, 2147483648
      %v6314 = vsel %vm6312, %v6313, %v6311
      %v6315 = vadd.f32 %v6209, 1e-06
      %v6316 = vadd.f32 %v6216, 1e-06
      %v6317 = vadd.f32 %v6223, 1e-06
      %v6318 = vadd.f32 %v6230, 1e-06
      %v6319 = vadd.f32 %v6237, 1e-06
      %v6320 = vadd.f32 %v6244, 1e-06
      %v6321 = vadd.f32 %v6251, 1e-06
      %v6322 = vadd.f32 %v6258, 1e-06
      %v6323 = vadd.f32 %v6265, 1e-06
      %v6324 = vadd.f32 %v6272, 1e-06
      %v6325 = vadd.f32 %v6279, 1e-06
      %v6326 = vadd.f32 %v6286, 1e-06
      %v6327 = vadd.f32 %v6293, 1e-06
      %v6328 = vadd.f32 %v6300, 1e-06
      %v6329 = vadd.f32 %v6307, 1e-06
      %v6330 = vadd.f32 %v6314, 1e-06
      %v6331 = vrcp.pop %v6315
      %v6332 = vmul.f32 %v6107, %v6331
      %v6333 = vrcp.pop %v6316
      %v6334 = vmul.f32 %v6108, %v6333
      %v6335 = vrcp.pop %v6317
      %v6336 = vmul.f32 %v6109, %v6335
      %v6337 = vrcp.pop %v6318
      %v6338 = vmul.f32 %v6110, %v6337
      %v6339 = vrcp.pop %v6319
      %v6340 = vmul.f32 %v6111, %v6339
      %v6341 = vrcp.pop %v6320
      %v6342 = vmul.f32 %v6112, %v6341
      %v6343 = vrcp.pop %v6321
      %v6344 = vmul.f32 %v6113, %v6343
      %v6345 = vrcp.pop %v6322
      %v6346 = vmul.f32 %v6114, %v6345
      %v6347 = vrcp.pop %v6323
      %v6348 = vmul.f32 %v6115, %v6347
      %v6349 = vrcp.pop %v6324
      %v6350 = vmul.f32 %v6116, %v6349
      %v6351 = vrcp.pop %v6325
      %v6352 = vmul.f32 %v6117, %v6351
      %v6353 = vrcp.pop %v6326
      %v6354 = vmul.f32 %v6118, %v6353
      %v6355 = vrcp.pop %v6327
      %v6356 = vmul.f32 %v6119, %v6355
      %v6357 = vrcp.pop %v6328
      %v6358 = vmul.f32 %v6120, %v6357
      %v6359 = vrcp.pop %v6329
      %v6360 = vmul.f32 %v6121, %v6359
      %v6361 = vrcp.pop %v6330
      %v6362 = vmul.f32 %v6122, %v6361
      %v6364 = vlaneseq
      %v6365 = vshrl.u32 %v6364, 7
      %v6366 = vsub.s32 0, %v6365
      %v6367 = vrot.slane %v502, %v6366
      %v6369 = vmul.f32 %v6332, %v6367
      %v6370 = vmul.f32 %v6334, %v6367
      %v6371 = vmul.f32 %v6336, %v6367
      %v6372 = vmul.f32 %v6338, %v6367
      %v6373 = vmul.f32 %v6340, %v6367
      %v6374 = vmul.f32 %v6342, %v6367
      %v6375 = vmul.f32 %v6344, %v6367
      %v6376 = vmul.f32 %v6346, %v6367
      %v6377 = vmul.f32 %v6348, %v6367
      %v6378 = vmul.f32 %v6350, %v6367
      %v6379 = vmul.f32 %v6352, %v6367
      %v6380 = vmul.f32 %v6354, %v6367
      %v6381 = vmul.f32 %v6356, %v6367
      %v6382 = vmul.f32 %v6358, %v6367
      %v6383 = vmul.f32 %v6360, %v6367
      %v6384 = vmul.f32 %v6362, %v6367
      %v6386 = vlaneseq
      %v6387 = vshrl.u32 %v6386, 7
      %v6388 = vsub.s32 0, %v6387
      %v6389 = vrot.slane %v503, %v6388
      %v6391 = vadd.f32 %v6369, %v6389
      %v6392 = vadd.f32 %v6370, %v6389
      %v6393 = vadd.f32 %v6371, %v6389
      %v6394 = vadd.f32 %v6372, %v6389
      %v6395 = vadd.f32 %v6373, %v6389
      %v6396 = vadd.f32 %v6374, %v6389
      %v6397 = vadd.f32 %v6375, %v6389
      %v6398 = vadd.f32 %v6376, %v6389
      %v6399 = vadd.f32 %v6377, %v6389
      %v6400 = vadd.f32 %v6378, %v6389
      %v6401 = vadd.f32 %v6379, %v6389
      %v6402 = vadd.f32 %v6380, %v6389
      %v6403 = vadd.f32 %v6381, %v6389
      %v6404 = vadd.f32 %v6382, %v6389
      %v6405 = vadd.f32 %v6383, %v6389
      %v6406 = vadd.f32 %v6384, %v6389
      %v6407 = vpack.c.bf16 %v6392, %v6391
      %v6408 = vpack.c.bf16 %v6394, %v6393
      %v6409 = vpack.c.bf16 %v6396, %v6395
      %v6410 = vpack.c.bf16 %v6398, %v6397
      %v6411 = vpack.c.bf16 %v6400, %v6399
      %v6412 = vpack.c.bf16 %v6402, %v6401
      %v6413 = vpack.c.bf16 %v6404, %v6403
      %v6414 = vpack.c.bf16 %v6406, %v6405
      %v6416 = vlaneseq
      %v6417 = vshrl.u32 %v6416, 7
      %v6418 = vsub.s32 0, %v6417
      %v6419 = vrot.slane %v505, %v6418
      %v6422 = vsel %vm361, %v6407, 0
      %v6425 = vsel %vm361, %v6408, 0
      %v6428 = vsel %vm361, %v6409, 0
      %v6431 = vsel %vm361, %v6410, 0
      %v6434 = vsel %vm361, %v6411, 0
      %v6437 = vsel %vm361, %v6412, 0
      %v6440 = vsel %vm361, %v6413, 0
      %v6443 = vsel %vm361, %v6414, 0
      %v6446 = vsel %vm1267, %v504, 0
      %6448 = vmatprep.subr.bf16.mxu0 0
      %6449 = vmatpush1.bf16.msra.mxu0 %v6446
      %6450 = vmatprep.subr.bf16.mxu0 0
      %6451 = vmatpush1.bf16.msra.mxu0 0
      %6452 = vmatprep.subr.bf16.mxu0 0
      %6453 = vmatpush1.bf16.msra.mxu0 0
      %6454 = vmatprep.subr.bf16.mxu0 0
      %6455 = vmatpush1.bf16.msra.mxu0 0
      %6456 = vmatprep.subr.bf16.mxu0 0
      %6457 = vmatpush1.bf16.msra.mxu0 0
      %6458 = vmatprep.subr.bf16.mxu0 0
      %6459 = vmatpush1.bf16.msra.mxu0 0
      %6460 = vmatprep.subr.bf16.mxu0 0
      %6461 = vmatpush1.bf16.msra.mxu0 0
      %6462 = vmatprep.subr.bf16.mxu0 0
      %6463 = vmatpush1.bf16.msra.mxu0 0
      %6464 = vmatprep.subr.bf16.mxu0 0
      %6465 = vmatpush1.bf16.msra.mxu0 0
      %6466 = vmatprep.subr.bf16.mxu0 0
      %6467 = vmatpush1.bf16.msra.mxu0 0
      %6468 = vmatprep.subr.bf16.mxu0 0
      %6469 = vmatpush1.bf16.msra.mxu0 0
      %6470 = vmatprep.subr.bf16.mxu0 0
      %6471 = vmatpush1.bf16.msra.mxu0 0
      %6472 = vmatprep.subr.bf16.mxu0 0
      %6473 = vmatpush1.bf16.msra.mxu0 0
      %6474 = vmatprep.subr.bf16.mxu0 0
      %6475 = vmatpush1.bf16.msra.mxu0 0
      %6476 = vmatprep.subr.bf16.mxu0 0
      %6477 = vmatpush1.bf16.msra.mxu0 0
      %6478 = vmatprep.subr.bf16.mxu0 0
      %6479 = vmatpush1.bf16.msra.mxu0 0
      %6480 = vmatprep.mubr.bf16.mxu0 0
      %6481 = vmatmul.mubr.bf16.gmra.mrb[0].mxu0 %v6422
      %v6482 = vpop.f32.mrb[0].mxu0
      %v6483 = vadd.f32 %v6419, %v6482
      %v6484 = vpop.f32.mrb[0].mxu0
      %v6485 = vpop.f32.mrb[0].mxu0
      %v6486 = vadd.f32 %v6419, %v6485
      %v6487 = vpop.f32.mrb[0].mxu0
      %6488 = vmatprep.mubr.bf16.mxu0 0
      %6489 = vmatmul.mubr.bf16.gmra.mrb[0].mxu0 %v6425
      %v6490 = vpop.f32.mrb[0].mxu0
      %v6491 = vadd.f32 %v6419, %v6490
      %v6492 = vpop.f32.mrb[0].mxu0
      %v6493 = vpop.f32.mrb[0].mxu0
      %v6494 = vadd.f32 %v6419, %v6493
      %v6495 = vpop.f32.mrb[0].mxu0
      %6496 = vmatprep.mubr.bf16.mxu0 0
      %6497 = vmatmul.mubr.bf16.gmra.mrb[0].mxu0 %v6428
      %v6498 = vpop.f32.mrb[0].mxu0
      %v6499 = vadd.f32 %v6419, %v6498
      %v6500 = vpop.f32.mrb[0].mxu0
      %v6501 = vpop.f32.mrb[0].mxu0
      %v6502 = vadd.f32 %v6419, %v6501
      %v6503 = vpop.f32.mrb[0].mxu0
      %6504 = vmatprep.mubr.bf16.mxu0 0
      %6505 = vmatmul.mubr.bf16.gmra.mrb[0].mxu0 %v6431
      %v6506 = vpop.f32.mrb[0].mxu0
      %v6507 = vadd.f32 %v6419, %v6506
      %v6508 = vpop.f32.mrb[0].mxu0
      %v6509 = vpop.f32.mrb[0].mxu0
      %v6510 = vadd.f32 %v6419, %v6509
      %v6511 = vpop.f32.mrb[0].mxu0
      %6512 = vmatprep.mubr.bf16.mxu0 0
      %6513 = vmatmul.mubr.bf16.gmra.mrb[0].mxu0 %v6434
      %v6514 = vpop.f32.mrb[0].mxu0
      %v6515 = vadd.f32 %v6419, %v6514
      %v6516 = vpop.f32.mrb[0].mxu0
      %v6517 = vpop.f32.mrb[0].mxu0
      %v6518 = vadd.f32 %v6419, %v6517
      %v6519 = vpop.f32.mrb[0].mxu0
      %6520 = vmatprep.mubr.bf16.mxu0 0
      %6521 = vmatmul.mubr.bf16.gmra.mrb[0].mxu0 %v6437
      %v6522 = vpop.f32.mrb[0].mxu0
      %v6523 = vadd.f32 %v6419, %v6522
      %v6524 = vpop.f32.mrb[0].mxu0
      %v6525 = vpop.f32.mrb[0].mxu0
      %v6526 = vadd.f32 %v6419, %v6525
      %v6527 = vpop.f32.mrb[0].mxu0
      %6528 = vmatprep.mubr.bf16.mxu0 0
      %6529 = vmatmul.mubr.bf16.gmra.mrb[0].mxu0 %v6440
      %v6530 = vpop.f32.mrb[0].mxu0
      %v6531 = vadd.f32 %v6419, %v6530
      %v6532 = vpop.f32.mrb[0].mxu0
      %v6533 = vpop.f32.mrb[0].mxu0
      %v6534 = vadd.f32 %v6419, %v6533
      %v6535 = vpop.f32.mrb[0].mxu0
      %6536 = vmatprep.mubr.bf16.mxu0 0
      %6537 = vmatmul.mubr.bf16.gmra.mrb[0].mxu0 %v6443
      %v6538 = vpop.f32.mrb[0].mxu0
      %v6539 = vadd.f32 %v6419, %v6538
      %v6540 = vpop.f32.mrb[0].mxu0
      %v6541 = vpop.f32.mrb[0].mxu0
      %v6542 = vadd.f32 %v6419, %v6541
      %v6543 = vpop.f32.mrb[0].mxu0
      %6544 = vdwg.mxu0
      %v6545 = vmul.f32 %v6483, -1.702
      %v6546 = vmul.f32 %v6486, -1.702
      %v6547 = vmul.f32 %v6491, -1.702
      %v6548 = vmul.f32 %v6494, -1.702
      %v6549 = vmul.f32 %v6499, -1.702
      %v6550 = vmul.f32 %v6502, -1.702
      %v6551 = vmul.f32 %v6507, -1.702
      %v6552 = vmul.f32 %v6510, -1.702
      %v6553 = vmul.f32 %v6515, -1.702
      %v6554 = vmul.f32 %v6518, -1.702
      %v6555 = vmul.f32 %v6523, -1.702
      %v6556 = vmul.f32 %v6526, -1.702
      %v6557 = vmul.f32 %v6531, -1.702
      %v6558 = vmul.f32 %v6534, -1.702
      %v6559 = vmul.f32 %v6539, -1.702
      %v6560 = vmul.f32 %v6542, -1.702
      %v6561 = vmul.f32 %v6545, 1.442695
      %v6562 = vpow.pop %v6561
      %v6563 = vmul.f32 %v6546, 1.442695
      %v6564 = vpow.pop %v6563
      %v6565 = vmul.f32 %v6547, 1.442695
      %v6566 = vpow.pop %v6565
      %v6567 = vmul.f32 %v6548, 1.442695
      %v6568 = vpow.pop %v6567
      %v6569 = vmul.f32 %v6549, 1.442695
      %v6570 = vpow.pop %v6569
      %v6571 = vmul.f32 %v6550, 1.442695
      %v6572 = vpow.pop %v6571
      %v6573 = vmul.f32 %v6551, 1.442695
      %v6574 = vpow.pop %v6573
      %v6575 = vmul.f32 %v6552, 1.442695
      %v6576 = vpow.pop %v6575
      %v6577 = vmul.f32 %v6553, 1.442695
      %v6578 = vpow.pop %v6577
      %v6579 = vmul.f32 %v6554, 1.442695
      %v6580 = vpow.pop %v6579
      %v6581 = vmul.f32 %v6555, 1.442695
      %v6582 = vpow.pop %v6581
      %v6583 = vmul.f32 %v6556, 1.442695
      %v6584 = vpow.pop %v6583
      %v6585 = vmul.f32 %v6557, 1.442695
      %v6586 = vpow.pop %v6585
      %v6587 = vmul.f32 %v6558, 1.442695
      %v6588 = vpow.pop %v6587
      %v6589 = vmul.f32 %v6559, 1.442695
      %v6590 = vpow.pop %v6589
      %v6591 = vmul.f32 %v6560, 1.442695
      %v6592 = vpow.pop %v6591
      %v6593 = vadd.f32 %v6562, 1.0
      %v6594 = vadd.f32 %v6564, 1.0
      %v6595 = vadd.f32 %v6566, 1.0
      %v6596 = vadd.f32 %v6568, 1.0
      %v6597 = vadd.f32 %v6570, 1.0
      %v6598 = vadd.f32 %v6572, 1.0
      %v6599 = vadd.f32 %v6574, 1.0
      %v6600 = vadd.f32 %v6576, 1.0
      %v6601 = vadd.f32 %v6578, 1.0
      %v6602 = vadd.f32 %v6580, 1.0
      %v6603 = vadd.f32 %v6582, 1.0
      %v6604 = vadd.f32 %v6584, 1.0
      %v6605 = vadd.f32 %v6586, 1.0
      %v6606 = vadd.f32 %v6588, 1.0
      %v6607 = vadd.f32 %v6590, 1.0
      %v6608 = vadd.f32 %v6592, 1.0
      %v6609 = vrcp.pop %v6593
      %v6610 = vrcp.pop %v6594
      %v6611 = vrcp.pop %v6595
      %v6612 = vrcp.pop %v6596
      %v6613 = vrcp.pop %v6597
      %v6614 = vrcp.pop %v6598
      %v6615 = vrcp.pop %v6599
      %v6616 = vrcp.pop %v6600
      %v6617 = vrcp.pop %v6601
      %v6618 = vrcp.pop %v6602
      %v6619 = vrcp.pop %v6603
      %v6620 = vrcp.pop %v6604
      %v6621 = vrcp.pop %v6605
      %v6622 = vrcp.pop %v6606
      %v6623 = vrcp.pop %v6607
      %v6624 = vrcp.pop %v6608
      %v6625 = vmul.f32 %v6483, %v6609
      %v6626 = vmul.f32 %v6486, %v6610
      %v6627 = vmul.f32 %v6491, %v6611
      %v6628 = vmul.f32 %v6494, %v6612
      %v6629 = vmul.f32 %v6499, %v6613
      %v6630 = vmul.f32 %v6502, %v6614
      %v6631 = vmul.f32 %v6507, %v6615
      %v6632 = vmul.f32 %v6510, %v6616
      %v6633 = vmul.f32 %v6515, %v6617
      %v6634 = vmul.f32 %v6518, %v6618
      %v6635 = vmul.f32 %v6523, %v6619
      %v6636 = vmul.f32 %v6526, %v6620
      %v6637 = vmul.f32 %v6531, %v6621
      %v6638 = vmul.f32 %v6534, %v6622
      %v6639 = vmul.f32 %v6539, %v6623
      %v6640 = vmul.f32 %v6542, %v6624
      %v6641 = vpack.c.bf16 %v6626, %v6625
      %v6642 = vpack.c.bf16 %v6628, %v6627
      %v6643 = vpack.c.bf16 %v6630, %v6629
      %v6644 = vpack.c.bf16 %v6632, %v6631
      %v6645 = vpack.c.bf16 %v6634, %v6633
      %v6646 = vpack.c.bf16 %v6636, %v6635
      %v6647 = vpack.c.bf16 %v6638, %v6637
      %v6648 = vpack.c.bf16 %v6640, %v6639
      %v6650 = vlaneseq
      %v6651 = vshrl.u32 %v6650, 7
      %v6652 = vsub.s32 0, %v6651
      %v6653 = vrot.slane %v508, %v6652
      %v6657 = vunpack.c.l.b16 %v506
      %v6658 = vunpack.c.l.b16 %v507
      %v6659 = vpack.c.b16 %v6658, %v6657
      %vm6661 = vcmask 130048
      %v6663 = vsel %vm6661, %v6641, 0
      %v6666 = vsel %vm6661, %v6642, 0
      %v6669 = vsel %vm6661, %v6643, 0
      %v6672 = vsel %vm6661, %v6644, 0
      %v6675 = vsel %vm6661, %v6645, 0
      %v6678 = vsel %vm6661, %v6646, 0
      %v6681 = vsel %vm6661, %v6647, 0
      %v6684 = vsel %vm6661, %v6648, 0
      %6686 = vmatprep.subr.bf16.mxu0 0
      %6687 = vmatpush1.bf16.msra.mxu0 %v6659
      %6688 = vmatprep.subr.bf16.mxu0 0
      %6689 = vmatpush1.bf16.msra.mxu0 0
      %6690 = vmatprep.subr.bf16.mxu0 0
      %6691 = vmatpush1.bf16.msra.mxu0 0
      %6692 = vmatprep.subr.bf16.mxu0 0
      %6693 = vmatpush1.bf16.msra.mxu0 0
      %6694 = vmatprep.subr.bf16.mxu0 0
      %6695 = vmatpush1.bf16.msra.mxu0 0
      %6696 = vmatprep.subr.bf16.mxu0 0
      %6697 = vmatpush1.bf16.msra.mxu0 0
      %6698 = vmatprep.subr.bf16.mxu0 0
      %6699 = vmatpush1.bf16.msra.mxu0 0
      %6700 = vmatprep.subr.bf16.mxu0 0
      %6701 = vmatpush1.bf16.msra.mxu0 0
      %6702 = vmatprep.subr.bf16.mxu0 0
      %6703 = vmatpush1.bf16.msra.mxu0 0
      %6704 = vmatprep.subr.bf16.mxu0 0
      %6705 = vmatpush1.bf16.msra.mxu0 0
      %6706 = vmatprep.subr.bf16.mxu0 0
      %6707 = vmatpush1.bf16.msra.mxu0 0
      %6708 = vmatprep.subr.bf16.mxu0 0
      %6709 = vmatpush1.bf16.msra.mxu0 0
      %6710 = vmatprep.subr.bf16.mxu0 0
      %6711 = vmatpush1.bf16.msra.mxu0 0
      %6712 = vmatprep.subr.bf16.mxu0 0
      %6713 = vmatpush1.bf16.msra.mxu0 0
      %6714 = vmatprep.subr.bf16.mxu0 0
      %6715 = vmatpush1.bf16.msra.mxu0 0
      %6716 = vmatprep.subr.bf16.mxu0 0
      %6717 = vmatpush1.bf16.msra.mxu0 0
      %6718 = vmatprep.mubr.bf16.mxu0 0
      %6719 = vmatmul.mubr.bf16.gmra.mrb[0].mxu0 %v6663
      %v6720 = vpop.f32.mrb[0].mxu0
      %v6721 = vadd.f32 %v6653, %v6720
      %v6722 = vpop.f32.mrb[0].mxu0
      %v6723 = vpop.f32.mrb[0].mxu0
      %v6724 = vadd.f32 %v6653, %v6723
      %v6725 = vpop.f32.mrb[0].mxu0
      %6726 = vmatprep.mubr.bf16.mxu0 0
      %6727 = vmatmul.mubr.bf16.gmra.mrb[0].mxu0 %v6666
      %v6728 = vpop.f32.mrb[0].mxu0
      %v6729 = vadd.f32 %v6653, %v6728
      %v6730 = vpop.f32.mrb[0].mxu0
      %v6731 = vpop.f32.mrb[0].mxu0
      %v6732 = vadd.f32 %v6653, %v6731
      %v6733 = vpop.f32.mrb[0].mxu0
      %6734 = vmatprep.mubr.bf16.mxu0 0
      %6735 = vmatmul.mubr.bf16.gmra.mrb[0].mxu0 %v6669
      %v6736 = vpop.f32.mrb[0].mxu0
      %v6737 = vadd.f32 %v6653, %v6736
      %v6738 = vpop.f32.mrb[0].mxu0
      %v6739 = vpop.f32.mrb[0].mxu0
      %v6740 = vadd.f32 %v6653, %v6739
      %v6741 = vpop.f32.mrb[0].mxu0
      %6742 = vmatprep.mubr.bf16.mxu0 0
      %6743 = vmatmul.mubr.bf16.gmra.mrb[0].mxu0 %v6672
      %v6744 = vpop.f32.mrb[0].mxu0
      %v6745 = vadd.f32 %v6653, %v6744
      %v6746 = vpop.f32.mrb[0].mxu0
      %v6747 = vpop.f32.mrb[0].mxu0
      %v6748 = vadd.f32 %v6653, %v6747
      %v6749 = vpop.f32.mrb[0].mxu0
      %6750 = vmatprep.mubr.bf16.mxu0 0
      %6751 = vmatmul.mubr.bf16.gmra.mrb[0].mxu0 %v6675
      %v6752 = vpop.f32.mrb[0].mxu0
      %v6753 = vadd.f32 %v6653, %v6752
      %v6754 = vpop.f32.mrb[0].mxu0
      %v6755 = vpop.f32.mrb[0].mxu0
      %v6756 = vadd.f32 %v6653, %v6755
      %v6757 = vpop.f32.mrb[0].mxu0
      %6758 = vmatprep.mubr.bf16.mxu0 0
      %6759 = vmatmul.mubr.bf16.gmra.mrb[0].mxu0 %v6678
      %v6760 = vpop.f32.mrb[0].mxu0
      %v6761 = vadd.f32 %v6653, %v6760
      %v6762 = vpop.f32.mrb[0].mxu0
      %v6763 = vpop.f32.mrb[0].mxu0
      %v6764 = vadd.f32 %v6653, %v6763
      %v6765 = vpop.f32.mrb[0].mxu0
      %6766 = vmatprep.mubr.bf16.mxu0 0
      %6767 = vmatmul.mubr.bf16.gmra.mrb[0].mxu0 %v6681
      %v6768 = vpop.f32.mrb[0].mxu0
      %v6769 = vadd.f32 %v6653, %v6768
      %v6770 = vpop.f32.mrb[0].mxu0
      %v6771 = vpop.f32.mrb[0].mxu0
      %v6772 = vadd.f32 %v6653, %v6771
      %v6773 = vpop.f32.mrb[0].mxu0
      %6774 = vmatprep.mubr.bf16.mxu0 0
      %6775 = vmatmul.mubr.bf16.gmra.mrb[0].mxu0 %v6684
      %v6776 = vpop.f32.mrb[0].mxu0
      %v6777 = vadd.f32 %v6653, %v6776
      %v6778 = vpop.f32.mrb[0].mxu0
      %v6779 = vpop.f32.mrb[0].mxu0
      %v6780 = vadd.f32 %v6653, %v6779
      %v6781 = vpop.f32.mrb[0].mxu0
      %6782 = vdwg.mxu0
      %v6784 = vlaneseq
      %v6785 = vshrl.u32 %v6784, 7
      %v6786 = vsub.s32 0, %v6785
      %v6787 = vrot.slane %v509, %v6786
      %v6789 = vmul.f32 %v6721, %v6787
      %v6790 = vmul.f32 %v6724, %v6787
      %v6791 = vmul.f32 %v6729, %v6787
      %v6792 = vmul.f32 %v6732, %v6787
      %v6793 = vmul.f32 %v6737, %v6787
      %v6794 = vmul.f32 %v6740, %v6787
      %v6795 = vmul.f32 %v6745, %v6787
      %v6796 = vmul.f32 %v6748, %v6787
      %v6797 = vmul.f32 %v6753, %v6787
      %v6798 = vmul.f32 %v6756, %v6787
      %v6799 = vmul.f32 %v6761, %v6787
      %v6800 = vmul.f32 %v6764, %v6787
      %v6801 = vmul.f32 %v6769, %v6787
      %v6802 = vmul.f32 %v6772, %v6787
      %v6803 = vmul.f32 %v6777, %v6787
      %v6804 = vmul.f32 %v6780, %v6787
      %s6805 = smul.u32 0, 16
      %s6806 = scalar_lea.vmem %s354, %s6805
      %v6807 = vld [vmem:[%s6806] sm:$0xff]
      %v6808 = vld [vmem:[%s6806 + $0x8] sm:$0xff]
      %v6809 = vld [vmem:[%s6806 + $0x10] sm:$0xff]
      %v6810 = vld [vmem:[%s6806 + $0x18] sm:$0xff]
      %v6811 = vld [vmem:[%s6806 + $0x20] sm:$0xff]
      %v6812 = vld [vmem:[%s6806 + $0x28] sm:$0xff]
      %v6813 = vld [vmem:[%s6806 + $0x30] sm:$0xff]
      %v6814 = vld [vmem:[%s6806 + $0x38] sm:$0xff]
      %v6815 = vld [vmem:[%s6806 + $0x40] sm:$0xff]
      %v6816 = vld [vmem:[%s6806 + $0x48] sm:$0xff]
      %v6817 = vld [vmem:[%s6806 + $0x50] sm:$0xff]
      %v6818 = vld [vmem:[%s6806 + $0x58] sm:$0xff]
      %v6819 = vld [vmem:[%s6806 + $0x60] sm:$0xff]
      %v6820 = vld [vmem:[%s6806 + $0x68] sm:$0xff]
      %v6821 = vld [vmem:[%s6806 + $0x70] sm:$0xff]
      %v6822 = vld [vmem:[%s6806 + $0x78] sm:$0xff]
      %v6823 = vadd.f32 %v6807, %v6789
      %v6824 = vadd.f32 %v6808, %v6790
      %v6825 = vadd.f32 %v6809, %v6791
      %v6826 = vadd.f32 %v6810, %v6792
      %v6827 = vadd.f32 %v6811, %v6793
      %v6828 = vadd.f32 %v6812, %v6794
      %v6829 = vadd.f32 %v6813, %v6795
      %v6830 = vadd.f32 %v6814, %v6796
      %v6831 = vadd.f32 %v6815, %v6797
      %v6832 = vadd.f32 %v6816, %v6798
      %v6833 = vadd.f32 %v6817, %v6799
      %v6834 = vadd.f32 %v6818, %v6800
      %v6835 = vadd.f32 %v6819, %v6801
      %v6836 = vadd.f32 %v6820, %v6802
      %v6837 = vadd.f32 %v6821, %v6803
      %v6838 = vadd.f32 %v6822, %v6804
      %s6839 = scalar_lea.vmem %s359, %s6805
      %6840 = vst.msk [vmem:[%s6839] sm:$0xff] %vm361, %v6823
      %6841 = vst.msk [vmem:[%s6839 + $0x8] sm:$0xff] %vm361, %v6824
      %6842 = vst.msk [vmem:[%s6839 + $0x10] sm:$0xff] %vm361, %v6825
      %6843 = vst.msk [vmem:[%s6839 + $0x18] sm:$0xff] %vm361, %v6826
      %6844 = vst.msk [vmem:[%s6839 + $0x20] sm:$0xff] %vm361, %v6827
      %6845 = vst.msk [vmem:[%s6839 + $0x28] sm:$0xff] %vm361, %v6828
      %6846 = vst.msk [vmem:[%s6839 + $0x30] sm:$0xff] %vm361, %v6829
      %6847 = vst.msk [vmem:[%s6839 + $0x38] sm:$0xff] %vm361, %v6830
      %6848 = vst.msk [vmem:[%s6839 + $0x40] sm:$0xff] %vm361, %v6831
      %6849 = vst.msk [vmem:[%s6839 + $0x48] sm:$0xff] %vm361, %v6832
      %6850 = vst.msk [vmem:[%s6839 + $0x50] sm:$0xff] %vm361, %v6833
      %6851 = vst.msk [vmem:[%s6839 + $0x58] sm:$0xff] %vm361, %v6834
      %6852 = vst.msk [vmem:[%s6839 + $0x60] sm:$0xff] %vm361, %v6835
      %6853 = vst.msk [vmem:[%s6839 + $0x68] sm:$0xff] %vm361, %v6836
      %6854 = vst.msk [vmem:[%s6839 + $0x70] sm:$0xff] %vm361, %v6837
      %6855 = vst.msk [vmem:[%s6839 + $0x78] sm:$0xff] %vm361, %v6838
      %s6856 = smul.u32 8, 24
      %s6857 = scalar_lea.vmem [#allocation2], %s6856
      %v6858 = vld [vmem:[%s6857] sm:$0xff]
      %v6859 = vld [vmem:[%s6857 + $0x8] sm:$0xff]
      %v6860 = vld [vmem:[%s6857 + $0x10] sm:$0x3f]
      %v6861 = vld [vmem:[%s6857 + $0x18] sm:$0xff]
      %v6862 = vld [vmem:[%s6857 + $0x20] sm:$0xff]
      %v6863 = vld [vmem:[%s6857 + $0x28] sm:$0x3f]
      %v6864 = vld [vmem:[%s6857 + $0x30] sm:$0xff]
      %v6865 = vld [vmem:[%s6857 + $0x38] sm:$0xff]
      %v6866 = vld [vmem:[%s6857 + $0x40] sm:$0x3f]
      %v6867 = vld [vmem:[%s6857 + $0x48] sm:$0xff]
      %v6868 = vld [vmem:[%s6857 + $0x50] sm:$0xff]
      %v6869 = vld [vmem:[%s6857 + $0x58] sm:$0x3f]
      %v6870 = vld [vmem:[%s6857 + $0x60] sm:$0xff]
      %v6871 = vld [vmem:[%s6857 + $0x68] sm:$0xff]
      %v6872 = vld [vmem:[%s6857 + $0x70] sm:$0x3f]
      %v6873 = vld [vmem:[%s6857 + $0x78] sm:$0xff]
      %v6874 = vld [vmem:[%s6857 + $0x80] sm:$0xff]
      %v6875 = vld [vmem:[%s6857 + $0x88] sm:$0x3f]
      %v6876 = vld [vmem:[%s6857 + $0x90] sm:$0xff]
      %v6877 = vld [vmem:[%s6857 + $0x98] sm:$0xff]
      %v6878 = vld [vmem:[%s6857 + $0xa0] sm:$0x3f]
      %v6879 = vld [vmem:[%s6857 + $0xa8] sm:$0xff]
      %v6880 = vld [vmem:[%s6857 + $0xb0] sm:$0xff]
      %v6881 = vld [vmem:[%s6857 + $0xb8] sm:$0x3f]
      %v6882 = vld [vmem:[%s6857 + $0xc0] sm:$0xff]
      %v6883 = vld [vmem:[%s6857 + $0xc8] sm:$0xff]
      %v6884 = vld [vmem:[%s6857 + $0xd0] sm:$0x3f]
      %v6885 = vld [vmem:[%s6857 + $0xd8] sm:$0xff]
      %v6886 = vld [vmem:[%s6857 + $0xe0] sm:$0xff]
      %v6887 = vld [vmem:[%s6857 + $0xe8] sm:$0x3f]
      %v6888 = vld [vmem:[%s6857 + $0xf0] sm:$0xff]
      %v6889 = vld [vmem:[%s6857 + $0xf8] sm:$0xff]
      %v6890 = vld [vmem:[%s6857 + $0x100] sm:$0x3f]
      %v6891 = vld [vmem:[%s6857 + $0x108] sm:$0xff]
      %v6892 = vld [vmem:[%s6857 + $0x110] sm:$0xff]
      %v6893 = vld [vmem:[%s6857 + $0x118] sm:$0x3f]
      %v6894 = vld [vmem:[%s6857 + $0x120] sm:$0xff]
      %v6895 = vld [vmem:[%s6857 + $0x128] sm:$0xff]
      %v6896 = vld [vmem:[%s6857 + $0x130] sm:$0x3f]
      %v6897 = vld [vmem:[%s6857 + $0x138] sm:$0xff]
      %v6898 = vld [vmem:[%s6857 + $0x140] sm:$0xff]
      %v6899 = vld [vmem:[%s6857 + $0x148] sm:$0x3f]
      %v6900 = vmul.f32 %v6858, %v557
      %v6901 = vmul.f32 %v6859, %v557
      %v6902 = vmul.f32 %v6861, %v557
      %v6903 = vmul.f32 %v6862, %v557
      %v6904 = vmul.f32 %v6864, %v557
      %v6905 = vmul.f32 %v6865, %v557
      %v6906 = vmul.f32 %v6867, %v557
      %v6907 = vmul.f32 %v6868, %v557
      %v6908 = vmul.f32 %v6870, %v557
      %v6909 = vmul.f32 %v6871, %v557
      %v6910 = vmul.f32 %v6873, %v557
      %v6911 = vmul.f32 %v6874, %v557
      %v6912 = vmul.f32 %v6876, %v557
      %v6913 = vmul.f32 %v6877, %v557
      %v6914 = vmul.f32 %v6879, %v557
      %v6915 = vmul.f32 %v6880, %v557
      %v6916 = vadd.f32 %v6900, 0.0
      %v6917 = vadd.f32 %v6901, 0.0
      %v6918 = vadd.f32 %v6902, 0.0
      %v6919 = vadd.f32 %v6903, 0.0
      %v6920 = vadd.f32 %v6904, 0.0
      %v6921 = vadd.f32 %v6905, 0.0
      %v6922 = vadd.f32 %v6906, 0.0
      %v6923 = vadd.f32 %v6907, 0.0
      %v6924 = vadd.f32 %v6908, 0.0
      %v6925 = vadd.f32 %v6909, 0.0
      %v6926 = vadd.f32 %v6910, 0.0
      %v6927 = vadd.f32 %v6911, 0.0
      %v6928 = vadd.f32 %v6912, 0.0
      %v6929 = vadd.f32 %v6913, 0.0
      %v6930 = vadd.f32 %v6914, 0.0
      %v6931 = vadd.f32 %v6915, 0.0
      %v6932 = vmul.f32 %v6858, %v593
      %v6933 = vmul.f32 %v6859, %v593
      %v6934 = vmul.f32 %v6860, %v593
      %v6935 = vmul.f32 %v6861, %v593
      %v6936 = vmul.f32 %v6862, %v593
      %v6937 = vmul.f32 %v6863, %v593
      %v6938 = vmul.f32 %v6864, %v593
      %v6939 = vmul.f32 %v6865, %v593
      %v6940 = vmul.f32 %v6866, %v593
      %v6941 = vmul.f32 %v6867, %v593
      %v6942 = vmul.f32 %v6868, %v593
      %v6943 = vmul.f32 %v6869, %v593
      %v6944 = vmul.f32 %v6870, %v593
      %v6945 = vmul.f32 %v6871, %v593
      %v6946 = vmul.f32 %v6872, %v593
      %v6947 = vmul.f32 %v6873, %v593
      %v6948 = vmul.f32 %v6874, %v593
      %v6949 = vmul.f32 %v6875, %v593
      %v6950 = vmul.f32 %v6876, %v593
      %v6951 = vmul.f32 %v6877, %v593
      %v6952 = vmul.f32 %v6878, %v593
      %v6953 = vmul.f32 %v6879, %v593
      %v6954 = vmul.f32 %v6880, %v593
      %v6955 = vmul.f32 %v6881, %v593
      %v6980 = vrot.slane %v6932, 1
      %v6981 = vrot.slane %v6933, 1
      %v6982 = vsel %vm642, %v6980, %v6981
      %v6983 = vrot.slane %v6934, 1
      %v6984 = vsel %vm642, %v6981, %v6983
      %v6985 = vrot.slane %v6935, 1
      %v6986 = vrot.slane %v6936, 1
      %v6987 = vsel %vm642, %v6985, %v6986
      %v6988 = vrot.slane %v6937, 1
      %v6989 = vsel %vm642, %v6986, %v6988
      %v6990 = vrot.slane %v6938, 1
      %v6991 = vrot.slane %v6939, 1
      %v6992 = vsel %vm642, %v6990, %v6991
      %v6993 = vrot.slane %v6940, 1
      %v6994 = vsel %vm642, %v6991, %v6993
      %v6995 = vrot.slane %v6941, 1
      %v6996 = vrot.slane %v6942, 1
      %v6997 = vsel %vm642, %v6995, %v6996
      %v6998 = vrot.slane %v6943, 1
      %v6999 = vsel %vm642, %v6996, %v6998
      %v7000 = vrot.slane %v6944, 1
      %v7001 = vrot.slane %v6945, 1
      %v7002 = vsel %vm642, %v7000, %v7001
      %v7003 = vrot.slane %v6946, 1
      %v7004 = vsel %vm642, %v7001, %v7003
      %v7005 = vrot.slane %v6947, 1
      %v7006 = vrot.slane %v6948, 1
      %v7007 = vsel %vm642, %v7005, %v7006
      %v7008 = vrot.slane %v6949, 1
      %v7009 = vsel %vm642, %v7006, %v7008
      %v7010 = vrot.slane %v6950, 1
      %v7011 = vrot.slane %v6951, 1
      %v7012 = vsel %vm642, %v7010, %v7011
      %v7013 = vrot.slane %v6952, 1
      %v7014 = vsel %vm642, %v7011, %v7013
      %v7015 = vrot.slane %v6953, 1
      %v7016 = vrot.slane %v6954, 1
      %v7017 = vsel %vm642, %v7015, %v7016
      %v7018 = vrot.slane %v6955, 1
      %v7019 = vsel %vm642, %v7016, %v7018
      %v7036 = vadd.f32 %v6916, %v6982
      %v7037 = vadd.f32 %v6917, %v6984
      %v7038 = vadd.f32 %v6918, %v6987
      %v7039 = vadd.f32 %v6919, %v6989
      %v7040 = vadd.f32 %v6920, %v6992
      %v7041 = vadd.f32 %v6921, %v6994
      %v7042 = vadd.f32 %v6922, %v6997
      %v7043 = vadd.f32 %v6923, %v6999
      %v7044 = vadd.f32 %v6924, %v7002
      %v7045 = vadd.f32 %v6925, %v7004
      %v7046 = vadd.f32 %v6926, %v7007
      %v7047 = vadd.f32 %v6927, %v7009
      %v7048 = vadd.f32 %v6928, %v7012
      %v7049 = vadd.f32 %v6929, %v7014
      %v7050 = vadd.f32 %v6930, %v7017
      %v7051 = vadd.f32 %v6931, %v7019
      %v7052 = vmul.f32 %v6858, %v718
      %v7053 = vmul.f32 %v6859, %v718
      %v7054 = vmul.f32 %v6860, %v718
      %v7055 = vmul.f32 %v6861, %v718
      %v7056 = vmul.f32 %v6862, %v718
      %v7057 = vmul.f32 %v6863, %v718
      %v7058 = vmul.f32 %v6864, %v718
      %v7059 = vmul.f32 %v6865, %v718
      %v7060 = vmul.f32 %v6866, %v718
      %v7061 = vmul.f32 %v6867, %v718
      %v7062 = vmul.f32 %v6868, %v718
      %v7063 = vmul.f32 %v6869, %v718
      %v7064 = vmul.f32 %v6870, %v718
      %v7065 = vmul.f32 %v6871, %v718
      %v7066 = vmul.f32 %v6872, %v718
      %v7067 = vmul.f32 %v6873, %v718
      %v7068 = vmul.f32 %v6874, %v718
      %v7069 = vmul.f32 %v6875, %v718
      %v7070 = vmul.f32 %v6876, %v718
      %v7071 = vmul.f32 %v6877, %v718
      %v7072 = vmul.f32 %v6878, %v718
      %v7073 = vmul.f32 %v6879, %v718
      %v7074 = vmul.f32 %v6880, %v718
      %v7075 = vmul.f32 %v6881, %v718
      %v7100 = vrot.slane %v7052, 2
      %v7101 = vrot.slane %v7053, 2
      %v7102 = vsel %vm767, %v7100, %v7101
      %v7103 = vrot.slane %v7054, 2
      %v7104 = vsel %vm767, %v7101, %v7103
      %v7105 = vrot.slane %v7055, 2
      %v7106 = vrot.slane %v7056, 2
      %v7107 = vsel %vm767, %v7105, %v7106
      %v7108 = vrot.slane %v7057, 2
      %v7109 = vsel %vm767, %v7106, %v7108
      %v7110 = vrot.slane %v7058, 2
      %v7111 = vrot.slane %v7059, 2
      %v7112 = vsel %vm767, %v7110, %v7111
      %v7113 = vrot.slane %v7060, 2
      %v7114 = vsel %vm767, %v7111, %v7113
      %v7115 = vrot.slane %v7061, 2
      %v7116 = vrot.slane %v7062, 2
      %v7117 = vsel %vm767, %v7115, %v7116
      %v7118 = vrot.slane %v7063, 2
      %v7119 = vsel %vm767, %v7116, %v7118
      %v7120 = vrot.slane %v7064, 2
      %v7121 = vrot.slane %v7065, 2
      %v7122 = vsel %vm767, %v7120, %v7121
      %v7123 = vrot.slane %v7066, 2
      %v7124 = vsel %vm767, %v7121, %v7123
      %v7125 = vrot.slane %v7067, 2
      %v7126 = vrot.slane %v7068, 2
      %v7127 = vsel %vm767, %v7125, %v7126
      %v7128 = vrot.slane %v7069, 2
      %v7129 = vsel %vm767, %v7126, %v7128
      %v7130 = vrot.slane %v7070, 2
      %v7131 = vrot.slane %v7071, 2
      %v7132 = vsel %vm767, %v7130, %v7131
      %v7133 = vrot.slane %v7072, 2
      %v7134 = vsel %vm767, %v7131, %v7133
      %v7135 = vrot.slane %v7073, 2
      %v7136 = vrot.slane %v7074, 2
      %v7137 = vsel %vm767, %v7135, %v7136
      %v7138 = vrot.slane %v7075, 2
      %v7139 = vsel %vm767, %v7136, %v7138
      %v7156 = vadd.f32 %v7036, %v7102
      %v7157 = vadd.f32 %v7037, %v7104
      %v7158 = vadd.f32 %v7038, %v7107
      %v7159 = vadd.f32 %v7039, %v7109
      %v7160 = vadd.f32 %v7040, %v7112
      %v7161 = vadd.f32 %v7041, %v7114
      %v7162 = vadd.f32 %v7042, %v7117
      %v7163 = vadd.f32 %v7043, %v7119
      %v7164 = vadd.f32 %v7044, %v7122
      %v7165 = vadd.f32 %v7045, %v7124
      %v7166 = vadd.f32 %v7046, %v7127
      %v7167 = vadd.f32 %v7047, %v7129
      %v7168 = vadd.f32 %v7048, %v7132
      %v7169 = vadd.f32 %v7049, %v7134
      %v7170 = vadd.f32 %v7050, %v7137
      %v7171 = vadd.f32 %v7051, %v7139
      %v7172 = vmul.f32 %v6858, %v843
      %v7173 = vmul.f32 %v6859, %v843
      %v7174 = vmul.f32 %v6860, %v843
      %v7175 = vmul.f32 %v6861, %v843
      %v7176 = vmul.f32 %v6862, %v843
      %v7177 = vmul.f32 %v6863, %v843
      %v7178 = vmul.f32 %v6864, %v843
      %v7179 = vmul.f32 %v6865, %v843
      %v7180 = vmul.f32 %v6866, %v843
      %v7181 = vmul.f32 %v6867, %v843
      %v7182 = vmul.f32 %v6868, %v843
      %v7183 = vmul.f32 %v6869, %v843
      %v7184 = vmul.f32 %v6870, %v843
      %v7185 = vmul.f32 %v6871, %v843
      %v7186 = vmul.f32 %v6872, %v843
      %v7187 = vmul.f32 %v6873, %v843
      %v7188 = vmul.f32 %v6874, %v843
      %v7189 = vmul.f32 %v6875, %v843
      %v7190 = vmul.f32 %v6876, %v843
      %v7191 = vmul.f32 %v6877, %v843
      %v7192 = vmul.f32 %v6878, %v843
      %v7193 = vmul.f32 %v6879, %v843
      %v7194 = vmul.f32 %v6880, %v843
      %v7195 = vmul.f32 %v6881, %v843
      %v7220 = vrot.slane %v7172, 3
      %v7221 = vrot.slane %v7173, 3
      %v7222 = vsel %vm892, %v7220, %v7221
      %v7223 = vrot.slane %v7174, 3
      %v7224 = vsel %vm892, %v7221, %v7223
      %v7225 = vrot.slane %v7175, 3
      %v7226 = vrot.slane %v7176, 3
      %v7227 = vsel %vm892, %v7225, %v7226
      %v7228 = vrot.slane %v7177, 3
      %v7229 = vsel %vm892, %v7226, %v7228
      %v7230 = vrot.slane %v7178, 3
      %v7231 = vrot.slane %v7179, 3
      %v7232 = vsel %vm892, %v7230, %v7231
      %v7233 = vrot.slane %v7180, 3
      %v7234 = vsel %vm892, %v7231, %v7233
      %v7235 = vrot.slane %v7181, 3
      %v7236 = vrot.slane %v7182, 3
      %v7237 = vsel %vm892, %v7235, %v7236
      %v7238 = vrot.slane %v7183, 3
      %v7239 = vsel %vm892, %v7236, %v7238
      %v7240 = vrot.slane %v7184, 3
      %v7241 = vrot.slane %v7185, 3
      %v7242 = vsel %vm892, %v7240, %v7241
      %v7243 = vrot.slane %v7186, 3
      %v7244 = vsel %vm892, %v7241, %v7243
      %v7245 = vrot.slane %v7187, 3
      %v7246 = vrot.slane %v7188, 3
      %v7247 = vsel %vm892, %v7245, %v7246
      %v7248 = vrot.slane %v7189, 3
      %v7249 = vsel %vm892, %v7246, %v7248
      %v7250 = vrot.slane %v7190, 3
      %v7251 = vrot.slane %v7191, 3
      %v7252 = vsel %vm892, %v7250, %v7251
      %v7253 = vrot.slane %v7192, 3
      %v7254 = vsel %vm892, %v7251, %v7253
      %v7255 = vrot.slane %v7193, 3
      %v7256 = vrot.slane %v7194, 3
      %v7257 = vsel %vm892, %v7255, %v7256
      %v7258 = vrot.slane %v7195, 3
      %v7259 = vsel %vm892, %v7256, %v7258
      %v7276 = vadd.f32 %v7156, %v7222
      %v7277 = vadd.f32 %v7157, %v7224
      %v7278 = vadd.f32 %v7158, %v7227
      %v7279 = vadd.f32 %v7159, %v7229
      %v7280 = vadd.f32 %v7160, %v7232
      %v7281 = vadd.f32 %v7161, %v7234
      %v7282 = vadd.f32 %v7162, %v7237
      %v7283 = vadd.f32 %v7163, %v7239
      %v7284 = vadd.f32 %v7164, %v7242
      %v7285 = vadd.f32 %v7165, %v7244
      %v7286 = vadd.f32 %v7166, %v7247
      %v7287 = vadd.f32 %v7167, %v7249
      %v7288 = vadd.f32 %v7168, %v7252
      %v7289 = vadd.f32 %v7169, %v7254
      %v7290 = vadd.f32 %v7170, %v7257
      %v7291 = vadd.f32 %v7171, %v7259
      %v7292 = vmul.f32 %v6858, %v968
      %v7293 = vmul.f32 %v6859, %v968
      %v7294 = vmul.f32 %v6860, %v968
      %v7295 = vmul.f32 %v6861, %v968
      %v7296 = vmul.f32 %v6862, %v968
      %v7297 = vmul.f32 %v6863, %v968
      %v7298 = vmul.f32 %v6864, %v968
      %v7299 = vmul.f32 %v6865, %v968
      %v7300 = vmul.f32 %v6866, %v968
      %v7301 = vmul.f32 %v6867, %v968
      %v7302 = vmul.f32 %v6868, %v968
      %v7303 = vmul.f32 %v6869, %v968
      %v7304 = vmul.f32 %v6870, %v968
      %v7305 = vmul.f32 %v6871, %v968
      %v7306 = vmul.f32 %v6872, %v968
      %v7307 = vmul.f32 %v6873, %v968
      %v7308 = vmul.f32 %v6874, %v968
      %v7309 = vmul.f32 %v6875, %v968
      %v7310 = vmul.f32 %v6876, %v968
      %v7311 = vmul.f32 %v6877, %v968
      %v7312 = vmul.f32 %v6878, %v968
      %v7313 = vmul.f32 %v6879, %v968
      %v7314 = vmul.f32 %v6880, %v968
      %v7315 = vmul.f32 %v6881, %v968
      %v7340 = vrot.slane %v7292, 4
      %v7341 = vrot.slane %v7293, 4
      %v7342 = vsel %vm1017, %v7340, %v7341
      %v7343 = vrot.slane %v7294, 4
      %v7344 = vsel %vm1017, %v7341, %v7343
      %v7345 = vrot.slane %v7295, 4
      %v7346 = vrot.slane %v7296, 4
      %v7347 = vsel %vm1017, %v7345, %v7346
      %v7348 = vrot.slane %v7297, 4
      %v7349 = vsel %vm1017, %v7346, %v7348
      %v7350 = vrot.slane %v7298, 4
      %v7351 = vrot.slane %v7299, 4
      %v7352 = vsel %vm1017, %v7350, %v7351
      %v7353 = vrot.slane %v7300, 4
      %v7354 = vsel %vm1017, %v7351, %v7353
      %v7355 = vrot.slane %v7301, 4
      %v7356 = vrot.slane %v7302, 4
      %v7357 = vsel %vm1017, %v7355, %v7356
      %v7358 = vrot.slane %v7303, 4
      %v7359 = vsel %vm1017, %v7356, %v7358
      %v7360 = vrot.slane %v7304, 4
      %v7361 = vrot.slane %v7305, 4
      %v7362 = vsel %vm1017, %v7360, %v7361
      %v7363 = vrot.slane %v7306, 4
      %v7364 = vsel %vm1017, %v7361, %v7363
      %v7365 = vrot.slane %v7307, 4
      %v7366 = vrot.slane %v7308, 4
      %v7367 = vsel %vm1017, %v7365, %v7366
      %v7368 = vrot.slane %v7309, 4
      %v7369 = vsel %vm1017, %v7366, %v7368
      %v7370 = vrot.slane %v7310, 4
      %v7371 = vrot.slane %v7311, 4
      %v7372 = vsel %vm1017, %v7370, %v7371
      %v7373 = vrot.slane %v7312, 4
      %v7374 = vsel %vm1017, %v7371, %v7373
      %v7375 = vrot.slane %v7313, 4
      %v7376 = vrot.slane %v7314, 4
      %v7377 = vsel %vm1017, %v7375, %v7376
      %v7378 = vrot.slane %v7315, 4
      %v7379 = vsel %vm1017, %v7376, %v7378
      %v7396 = vadd.f32 %v7276, %v7342
      %v7397 = vadd.f32 %v7277, %v7344
      %v7398 = vadd.f32 %v7278, %v7347
      %v7399 = vadd.f32 %v7279, %v7349
      %v7400 = vadd.f32 %v7280, %v7352
      %v7401 = vadd.f32 %v7281, %v7354
      %v7402 = vadd.f32 %v7282, %v7357
      %v7403 = vadd.f32 %v7283, %v7359
      %v7404 = vadd.f32 %v7284, %v7362
      %v7405 = vadd.f32 %v7285, %v7364
      %v7406 = vadd.f32 %v7286, %v7367
      %v7407 = vadd.f32 %v7287, %v7369
      %v7408 = vadd.f32 %v7288, %v7372
      %v7409 = vadd.f32 %v7289, %v7374
      %v7410 = vadd.f32 %v7290, %v7377
      %v7411 = vadd.f32 %v7291, %v7379
      %v7412 = vmul.f32 %v6858, %v1093
      %v7413 = vmul.f32 %v6859, %v1093
      %v7414 = vmul.f32 %v6860, %v1093
      %v7415 = vmul.f32 %v6861, %v1093
      %v7416 = vmul.f32 %v6862, %v1093
      %v7417 = vmul.f32 %v6863, %v1093
      %v7418 = vmul.f32 %v6864, %v1093
      %v7419 = vmul.f32 %v6865, %v1093
      %v7420 = vmul.f32 %v6866, %v1093
      %v7421 = vmul.f32 %v6867, %v1093
      %v7422 = vmul.f32 %v6868, %v1093
      %v7423 = vmul.f32 %v6869, %v1093
      %v7424 = vmul.f32 %v6870, %v1093
      %v7425 = vmul.f32 %v6871, %v1093
      %v7426 = vmul.f32 %v6872, %v1093
      %v7427 = vmul.f32 %v6873, %v1093
      %v7428 = vmul.f32 %v6874, %v1093
      %v7429 = vmul.f32 %v6875, %v1093
      %v7430 = vmul.f32 %v6876, %v1093
      %v7431 = vmul.f32 %v6877, %v1093
      %v7432 = vmul.f32 %v6878, %v1093
      %v7433 = vmul.f32 %v6879, %v1093
      %v7434 = vmul.f32 %v6880, %v1093
      %v7435 = vmul.f32 %v6881, %v1093
      %v7460 = vrot.slane %v7412, 5
      %v7461 = vrot.slane %v7413, 5
      %v7462 = vsel %vm1142, %v7460, %v7461
      %v7463 = vrot.slane %v7414, 5
      %v7464 = vsel %vm1142, %v7461, %v7463
      %v7465 = vrot.slane %v7415, 5
      %v7466 = vrot.slane %v7416, 5
      %v7467 = vsel %vm1142, %v7465, %v7466
      %v7468 = vrot.slane %v7417, 5
      %v7469 = vsel %vm1142, %v7466, %v7468
      %v7470 = vrot.slane %v7418, 5
      %v7471 = vrot.slane %v7419, 5
      %v7472 = vsel %vm1142, %v7470, %v7471
      %v7473 = vrot.slane %v7420, 5
      %v7474 = vsel %vm1142, %v7471, %v7473
      %v7475 = vrot.slane %v7421, 5
      %v7476 = vrot.slane %v7422, 5
      %v7477 = vsel %vm1142, %v7475, %v7476
      %v7478 = vrot.slane %v7423, 5
      %v7479 = vsel %vm1142, %v7476, %v7478
      %v7480 = vrot.slane %v7424, 5
      %v7481 = vrot.slane %v7425, 5
      %v7482 = vsel %vm1142, %v7480, %v7481
      %v7483 = vrot.slane %v7426, 5
      %v7484 = vsel %vm1142, %v7481, %v7483
      %v7485 = vrot.slane %v7427, 5
      %v7486 = vrot.slane %v7428, 5
      %v7487 = vsel %vm1142, %v7485, %v7486
      %v7488 = vrot.slane %v7429, 5
      %v7489 = vsel %vm1142, %v7486, %v7488
      %v7490 = vrot.slane %v7430, 5
      %v7491 = vrot.slane %v7431, 5
      %v7492 = vsel %vm1142, %v7490, %v7491
      %v7493 = vrot.slane %v7432, 5
      %v7494 = vsel %vm1142, %v7491, %v7493
      %v7495 = vrot.slane %v7433, 5
      %v7496 = vrot.slane %v7434, 5
      %v7497 = vsel %vm1142, %v7495, %v7496
      %v7498 = vrot.slane %v7435, 5
      %v7499 = vsel %vm1142, %v7496, %v7498
      %v7516 = vadd.f32 %v7396, %v7462
      %v7517 = vadd.f32 %v7397, %v7464
      %v7518 = vadd.f32 %v7398, %v7467
      %v7519 = vadd.f32 %v7399, %v7469
      %v7520 = vadd.f32 %v7400, %v7472
      %v7521 = vadd.f32 %v7401, %v7474
      %v7522 = vadd.f32 %v7402, %v7477
      %v7523 = vadd.f32 %v7403, %v7479
      %v7524 = vadd.f32 %v7404, %v7482
      %v7525 = vadd.f32 %v7405, %v7484
      %v7526 = vadd.f32 %v7406, %v7487
      %v7527 = vadd.f32 %v7407, %v7489
      %v7528 = vadd.f32 %v7408, %v7492
      %v7529 = vadd.f32 %v7409, %v7494
      %v7530 = vadd.f32 %v7410, %v7497
      %v7531 = vadd.f32 %v7411, %v7499
      %v7532 = vmul.f32 %v6858, %v1218
      %v7533 = vmul.f32 %v6859, %v1218
      %v7534 = vmul.f32 %v6860, %v1218
      %v7535 = vmul.f32 %v6861, %v1218
      %v7536 = vmul.f32 %v6862, %v1218
      %v7537 = vmul.f32 %v6863, %v1218
      %v7538 = vmul.f32 %v6864, %v1218
      %v7539 = vmul.f32 %v6865, %v1218
      %v7540 = vmul.f32 %v6866, %v1218
      %v7541 = vmul.f32 %v6867, %v1218
      %v7542 = vmul.f32 %v6868, %v1218
      %v7543 = vmul.f32 %v6869, %v1218
      %v7544 = vmul.f32 %v6870, %v1218
      %v7545 = vmul.f32 %v6871, %v1218
      %v7546 = vmul.f32 %v6872, %v1218
      %v7547 = vmul.f32 %v6873, %v1218
      %v7548 = vmul.f32 %v6874, %v1218
      %v7549 = vmul.f32 %v6875, %v1218
      %v7550 = vmul.f32 %v6876, %v1218
      %v7551 = vmul.f32 %v6877, %v1218
      %v7552 = vmul.f32 %v6878, %v1218
      %v7553 = vmul.f32 %v6879, %v1218
      %v7554 = vmul.f32 %v6880, %v1218
      %v7555 = vmul.f32 %v6881, %v1218
      %v7580 = vrot.slane %v7532, 6
      %v7581 = vrot.slane %v7533, 6
      %v7582 = vsel %vm1267, %v7580, %v7581
      %v7583 = vrot.slane %v7534, 6
      %v7584 = vsel %vm1267, %v7581, %v7583
      %v7585 = vrot.slane %v7535, 6
      %v7586 = vrot.slane %v7536, 6
      %v7587 = vsel %vm1267, %v7585, %v7586
      %v7588 = vrot.slane %v7537, 6
      %v7589 = vsel %vm1267, %v7586, %v7588
      %v7590 = vrot.slane %v7538, 6
      %v7591 = vrot.slane %v7539, 6
      %v7592 = vsel %vm1267, %v7590, %v7591
      %v7593 = vrot.slane %v7540, 6
      %v7594 = vsel %vm1267, %v7591, %v7593
      %v7595 = vrot.slane %v7541, 6
      %v7596 = vrot.slane %v7542, 6
      %v7597 = vsel %vm1267, %v7595, %v7596
      %v7598 = vrot.slane %v7543, 6
      %v7599 = vsel %vm1267, %v7596, %v7598
      %v7600 = vrot.slane %v7544, 6
      %v7601 = vrot.slane %v7545, 6
      %v7602 = vsel %vm1267, %v7600, %v7601
      %v7603 = vrot.slane %v7546, 6
      %v7604 = vsel %vm1267, %v7601, %v7603
      %v7605 = vrot.slane %v7547, 6
      %v7606 = vrot.slane %v7548, 6
      %v7607 = vsel %vm1267, %v7605, %v7606
      %v7608 = vrot.slane %v7549, 6
      %v7609 = vsel %vm1267, %v7606, %v7608
      %v7610 = vrot.slane %v7550, 6
      %v7611 = vrot.slane %v7551, 6
      %v7612 = vsel %vm1267, %v7610, %v7611
      %v7613 = vrot.slane %v7552, 6
      %v7614 = vsel %vm1267, %v7611, %v7613
      %v7615 = vrot.slane %v7553, 6
      %v7616 = vrot.slane %v7554, 6
      %v7617 = vsel %vm1267, %v7615, %v7616
      %v7618 = vrot.slane %v7555, 6
      %v7619 = vsel %vm1267, %v7616, %v7618
      %v7636 = vadd.f32 %v7516, %v7582
      %v7637 = vadd.f32 %v7517, %v7584
      %v7638 = vadd.f32 %v7518, %v7587
      %v7639 = vadd.f32 %v7519, %v7589
      %v7640 = vadd.f32 %v7520, %v7592
      %v7641 = vadd.f32 %v7521, %v7594
      %v7642 = vadd.f32 %v7522, %v7597
      %v7643 = vadd.f32 %v7523, %v7599
      %v7644 = vadd.f32 %v7524, %v7602
      %v7645 = vadd.f32 %v7525, %v7604
      %v7646 = vadd.f32 %v7526, %v7607
      %v7647 = vadd.f32 %v7527, %v7609
      %v7648 = vadd.f32 %v7528, %v7612
      %v7649 = vadd.f32 %v7529, %v7614
      %v7650 = vadd.f32 %v7530, %v7617
      %v7651 = vadd.f32 %v7531, %v7619
      %v7652 = vmul.f32 %v6861, %v1343
      %v7653 = vmul.f32 %v6862, %v1343
      %v7654 = vmul.f32 %v6864, %v1343
      %v7655 = vmul.f32 %v6865, %v1343
      %v7656 = vmul.f32 %v6867, %v1343
      %v7657 = vmul.f32 %v6868, %v1343
      %v7658 = vmul.f32 %v6870, %v1343
      %v7659 = vmul.f32 %v6871, %v1343
      %v7660 = vmul.f32 %v6873, %v1343
      %v7661 = vmul.f32 %v6874, %v1343
      %v7662 = vmul.f32 %v6876, %v1343
      %v7663 = vmul.f32 %v6877, %v1343
      %v7664 = vmul.f32 %v6879, %v1343
      %v7665 = vmul.f32 %v6880, %v1343
      %v7666 = vmul.f32 %v6882, %v1343
      %v7667 = vmul.f32 %v6883, %v1343
      %v7668 = vadd.f32 %v7636, %v7652
      %v7669 = vadd.f32 %v7637, %v7653
      %v7670 = vadd.f32 %v7638, %v7654
      %v7671 = vadd.f32 %v7639, %v7655
      %v7672 = vadd.f32 %v7640, %v7656
      %v7673 = vadd.f32 %v7641, %v7657
      %v7674 = vadd.f32 %v7642, %v7658
      %v7675 = vadd.f32 %v7643, %v7659
      %v7676 = vadd.f32 %v7644, %v7660
      %v7677 = vadd.f32 %v7645, %v7661
      %v7678 = vadd.f32 %v7646, %v7662
      %v7679 = vadd.f32 %v7647, %v7663
      %v7680 = vadd.f32 %v7648, %v7664
      %v7681 = vadd.f32 %v7649, %v7665
      %v7682 = vadd.f32 %v7650, %v7666
      %v7683 = vadd.f32 %v7651, %v7667
      %v7684 = vmul.f32 %v6861, %v1379
      %v7685 = vmul.f32 %v6862, %v1379
      %v7686 = vmul.f32 %v6863, %v1379
      %v7687 = vmul.f32 %v6864, %v1379
      %v7688 = vmul.f32 %v6865, %v1379
      %v7689 = vmul.f32 %v6866, %v1379
      %v7690 = vmul.f32 %v6867, %v1379
      %v7691 = vmul.f32 %v6868, %v1379
      %v7692 = vmul.f32 %v6869, %v1379
      %v7693 = vmul.f32 %v6870, %v1379
      %v7694 = vmul.f32 %v6871, %v1379
      %v7695 = vmul.f32 %v6872, %v1379
      %v7696 = vmul.f32 %v6873, %v1379
      %v7697 = vmul.f32 %v6874, %v1379
      %v7698 = vmul.f32 %v6875, %v1379
      %v7699 = vmul.f32 %v6876, %v1379
      %v7700 = vmul.f32 %v6877, %v1379
      %v7701 = vmul.f32 %v6878, %v1379
      %v7702 = vmul.f32 %v6879, %v1379
      %v7703 = vmul.f32 %v6880, %v1379
      %v7704 = vmul.f32 %v6881, %v1379
      %v7705 = vmul.f32 %v6882, %v1379
      %v7706 = vmul.f32 %v6883, %v1379
      %v7707 = vmul.f32 %v6884, %v1379
      %v7732 = vrot.slane %v7684, 1
      %v7733 = vrot.slane %v7685, 1
      %v7734 = vsel %vm642, %v7732, %v7733
      %v7735 = vrot.slane %v7686, 1
      %v7736 = vsel %vm642, %v7733, %v7735
      %v7737 = vrot.slane %v7687, 1
      %v7738 = vrot.slane %v7688, 1
      %v7739 = vsel %vm642, %v7737, %v7738
      %v7740 = vrot.slane %v7689, 1
      %v7741 = vsel %vm642, %v7738, %v7740
      %v7742 = vrot.slane %v7690, 1
      %v7743 = vrot.slane %v7691, 1
      %v7744 = vsel %vm642, %v7742, %v7743
      %v7745 = vrot.slane %v7692, 1
      %v7746 = vsel %vm642, %v7743, %v7745
      %v7747 = vrot.slane %v7693, 1
      %v7748 = vrot.slane %v7694, 1
      %v7749 = vsel %vm642, %v7747, %v7748
      %v7750 = vrot.slane %v7695, 1
      %v7751 = vsel %vm642, %v7748, %v7750
      %v7752 = vrot.slane %v7696, 1
      %v7753 = vrot.slane %v7697, 1
      %v7754 = vsel %vm642, %v7752, %v7753
      %v7755 = vrot.slane %v7698, 1
      %v7756 = vsel %vm642, %v7753, %v7755
      %v7757 = vrot.slane %v7699, 1
      %v7758 = vrot.slane %v7700, 1
      %v7759 = vsel %vm642, %v7757, %v7758
      %v7760 = vrot.slane %v7701, 1
      %v7761 = vsel %vm642, %v7758, %v7760
      %v7762 = vrot.slane %v7702, 1
      %v7763 = vrot.slane %v7703, 1
      %v7764 = vsel %vm642, %v7762, %v7763
      %v7765 = vrot.slane %v7704, 1
      %v7766 = vsel %vm642, %v7763, %v7765
      %v7767 = vrot.slane %v7705, 1
      %v7768 = vrot.slane %v7706, 1
      %v7769 = vsel %vm642, %v7767, %v7768
      %v7770 = vrot.slane %v7707, 1
      %v7771 = vsel %vm642, %v7768, %v7770
      %v7788 = vadd.f32 %v7668, %v7734
      %v7789 = vadd.f32 %v7669, %v7736
      %v7790 = vadd.f32 %v7670, %v7739
      %v7791 = vadd.f32 %v7671, %v7741
      %v7792 = vadd.f32 %v7672, %v7744
      %v7793 = vadd.f32 %v7673, %v7746
      %v7794 = vadd.f32 %v7674, %v7749
      %v7795 = vadd.f32 %v7675, %v7751
      %v7796 = vadd.f32 %v7676, %v7754
      %v7797 = vadd.f32 %v7677, %v7756
      %v7798 = vadd.f32 %v7678, %v7759
      %v7799 = vadd.f32 %v7679, %v7761
      %v7800 = vadd.f32 %v7680, %v7764
      %v7801 = vadd.f32 %v7681, %v7766
      %v7802 = vadd.f32 %v7682, %v7769
      %v7803 = vadd.f32 %v7683, %v7771
      %v7804 = vmul.f32 %v6861, %v1503
      %v7805 = vmul.f32 %v6862, %v1503
      %v7806 = vmul.f32 %v6863, %v1503
      %v7807 = vmul.f32 %v6864, %v1503
      %v7808 = vmul.f32 %v6865, %v1503
      %v7809 = vmul.f32 %v6866, %v1503
      %v7810 = vmul.f32 %v6867, %v1503
      %v7811 = vmul.f32 %v6868, %v1503
      %v7812 = vmul.f32 %v6869, %v1503
      %v7813 = vmul.f32 %v6870, %v1503
      %v7814 = vmul.f32 %v6871, %v1503
      %v7815 = vmul.f32 %v6872, %v1503
      %v7816 = vmul.f32 %v6873, %v1503
      %v7817 = vmul.f32 %v6874, %v1503
      %v7818 = vmul.f32 %v6875, %v1503
      %v7819 = vmul.f32 %v6876, %v1503
      %v7820 = vmul.f32 %v6877, %v1503
      %v7821 = vmul.f32 %v6878, %v1503
      %v7822 = vmul.f32 %v6879, %v1503
      %v7823 = vmul.f32 %v6880, %v1503
      %v7824 = vmul.f32 %v6881, %v1503
      %v7825 = vmul.f32 %v6882, %v1503
      %v7826 = vmul.f32 %v6883, %v1503
      %v7827 = vmul.f32 %v6884, %v1503
      %v7852 = vrot.slane %v7804, 2
      %v7853 = vrot.slane %v7805, 2
      %v7854 = vsel %vm767, %v7852, %v7853
      %v7855 = vrot.slane %v7806, 2
      %v7856 = vsel %vm767, %v7853, %v7855
      %v7857 = vrot.slane %v7807, 2
      %v7858 = vrot.slane %v7808, 2
      %v7859 = vsel %vm767, %v7857, %v7858
      %v7860 = vrot.slane %v7809, 2
      %v7861 = vsel %vm767, %v7858, %v7860
      %v7862 = vrot.slane %v7810, 2
      %v7863 = vrot.slane %v7811, 2
      %v7864 = vsel %vm767, %v7862, %v7863
      %v7865 = vrot.slane %v7812, 2
      %v7866 = vsel %vm767, %v7863, %v7865
      %v7867 = vrot.slane %v7813, 2
      %v7868 = vrot.slane %v7814, 2
      %v7869 = vsel %vm767, %v7867, %v7868
      %v7870 = vrot.slane %v7815, 2
      %v7871 = vsel %vm767, %v7868, %v7870
      %v7872 = vrot.slane %v7816, 2
      %v7873 = vrot.slane %v7817, 2
      %v7874 = vsel %vm767, %v7872, %v7873
      %v7875 = vrot.slane %v7818, 2
      %v7876 = vsel %vm767, %v7873, %v7875
      %v7877 = vrot.slane %v7819, 2
      %v7878 = vrot.slane %v7820, 2
      %v7879 = vsel %vm767, %v7877, %v7878
      %v7880 = vrot.slane %v7821, 2
      %v7881 = vsel %vm767, %v7878, %v7880
      %v7882 = vrot.slane %v7822, 2
      %v7883 = vrot.slane %v7823, 2
      %v7884 = vsel %vm767, %v7882, %v7883
      %v7885 = vrot.slane %v7824, 2
      %v7886 = vsel %vm767, %v7883, %v7885
      %v7887 = vrot.slane %v7825, 2
      %v7888 = vrot.slane %v7826, 2
      %v7889 = vsel %vm767, %v7887, %v7888
      %v7890 = vrot.slane %v7827, 2
      %v7891 = vsel %vm767, %v7888, %v7890
      %v7908 = vadd.f32 %v7788, %v7854
      %v7909 = vadd.f32 %v7789, %v7856
      %v7910 = vadd.f32 %v7790, %v7859
      %v7911 = vadd.f32 %v7791, %v7861
      %v7912 = vadd.f32 %v7792, %v7864
      %v7913 = vadd.f32 %v7793, %v7866
      %v7914 = vadd.f32 %v7794, %v7869
      %v7915 = vadd.f32 %v7795, %v7871
      %v7916 = vadd.f32 %v7796, %v7874
      %v7917 = vadd.f32 %v7797, %v7876
      %v7918 = vadd.f32 %v7798, %v7879
      %v7919 = vadd.f32 %v7799, %v7881
      %v7920 = vadd.f32 %v7800, %v7884
      %v7921 = vadd.f32 %v7801, %v7886
      %v7922 = vadd.f32 %v7802, %v7889
      %v7923 = vadd.f32 %v7803, %v7891
      %v7924 = vmul.f32 %v6861, %v1627
      %v7925 = vmul.f32 %v6862, %v1627
      %v7926 = vmul.f32 %v6863, %v1627
      %v7927 = vmul.f32 %v6864, %v1627
      %v7928 = vmul.f32 %v6865, %v1627
      %v7929 = vmul.f32 %v6866, %v1627
      %v7930 = vmul.f32 %v6867, %v1627
      %v7931 = vmul.f32 %v6868, %v1627
      %v7932 = vmul.f32 %v6869, %v1627
      %v7933 = vmul.f32 %v6870, %v1627
      %v7934 = vmul.f32 %v6871, %v1627
      %v7935 = vmul.f32 %v6872, %v1627
      %v7936 = vmul.f32 %v6873, %v1627
      %v7937 = vmul.f32 %v6874, %v1627
      %v7938 = vmul.f32 %v6875, %v1627
      %v7939 = vmul.f32 %v6876, %v1627
      %v7940 = vmul.f32 %v6877, %v1627
      %v7941 = vmul.f32 %v6878, %v1627
      %v7942 = vmul.f32 %v6879, %v1627
      %v7943 = vmul.f32 %v6880, %v1627
      %v7944 = vmul.f32 %v6881, %v1627
      %v7945 = vmul.f32 %v6882, %v1627
      %v7946 = vmul.f32 %v6883, %v1627
      %v7947 = vmul.f32 %v6884, %v1627
      %v7972 = vrot.slane %v7924, 3
      %v7973 = vrot.slane %v7925, 3
      %v7974 = vsel %vm892, %v7972, %v7973
      %v7975 = vrot.slane %v7926, 3
      %v7976 = vsel %vm892, %v7973, %v7975
      %v7977 = vrot.slane %v7927, 3
      %v7978 = vrot.slane %v7928, 3
      %v7979 = vsel %vm892, %v7977, %v7978
      %v7980 = vrot.slane %v7929, 3
      %v7981 = vsel %vm892, %v7978, %v7980
      %v7982 = vrot.slane %v7930, 3
      %v7983 = vrot.slane %v7931, 3
      %v7984 = vsel %vm892, %v7982, %v7983
      %v7985 = vrot.slane %v7932, 3
      %v7986 = vsel %vm892, %v7983, %v7985
      %v7987 = vrot.slane %v7933, 3
      %v7988 = vrot.slane %v7934, 3
      %v7989 = vsel %vm892, %v7987, %v7988
      %v7990 = vrot.slane %v7935, 3
      %v7991 = vsel %vm892, %v7988, %v7990
      %v7992 = vrot.slane %v7936, 3
      %v7993 = vrot.slane %v7937, 3
      %v7994 = vsel %vm892, %v7992, %v7993
      %v7995 = vrot.slane %v7938, 3
      %v7996 = vsel %vm892, %v7993, %v7995
      %v7997 = vrot.slane %v7939, 3
      %v7998 = vrot.slane %v7940, 3
      %v7999 = vsel %vm892, %v7997, %v7998
      %v8000 = vrot.slane %v7941, 3
      %v8001 = vsel %vm892, %v7998, %v8000
      %v8002 = vrot.slane %v7942, 3
      %v8003 = vrot.slane %v7943, 3
      %v8004 = vsel %vm892, %v8002, %v8003
      %v8005 = vrot.slane %v7944, 3
      %v8006 = vsel %vm892, %v8003, %v8005
      %v8007 = vrot.slane %v7945, 3
      %v8008 = vrot.slane %v7946, 3
      %v8009 = vsel %vm892, %v8007, %v8008
      %v8010 = vrot.slane %v7947, 3
      %v8011 = vsel %vm892, %v8008, %v8010
      %v8028 = vadd.f32 %v7908, %v7974
      %v8029 = vadd.f32 %v7909, %v7976
      %v8030 = vadd.f32 %v7910, %v7979
      %v8031 = vadd.f32 %v7911, %v7981
      %v8032 = vadd.f32 %v7912, %v7984
      %v8033 = vadd.f32 %v7913, %v7986
      %v8034 = vadd.f32 %v7914, %v7989
      %v8035 = vadd.f32 %v7915, %v7991
      %v8036 = vadd.f32 %v7916, %v7994
      %v8037 = vadd.f32 %v7917, %v7996
      %v8038 = vadd.f32 %v7918, %v7999
      %v8039 = vadd.f32 %v7919, %v8001
      %v8040 = vadd.f32 %v7920, %v8004
      %v8041 = vadd.f32 %v7921, %v8006
      %v8042 = vadd.f32 %v7922, %v8009
      %v8043 = vadd.f32 %v7923, %v8011
      %v8044 = vmul.f32 %v6861, %v1751
      %v8045 = vmul.f32 %v6862, %v1751
      %v8046 = vmul.f32 %v6863, %v1751
      %v8047 = vmul.f32 %v6864, %v1751
      %v8048 = vmul.f32 %v6865, %v1751
      %v8049 = vmul.f32 %v6866, %v1751
      %v8050 = vmul.f32 %v6867, %v1751
      %v8051 = vmul.f32 %v6868, %v1751
      %v8052 = vmul.f32 %v6869, %v1751
      %v8053 = vmul.f32 %v6870, %v1751
      %v8054 = vmul.f32 %v6871, %v1751
      %v8055 = vmul.f32 %v6872, %v1751
      %v8056 = vmul.f32 %v6873, %v1751
      %v8057 = vmul.f32 %v6874, %v1751
      %v8058 = vmul.f32 %v6875, %v1751
      %v8059 = vmul.f32 %v6876, %v1751
      %v8060 = vmul.f32 %v6877, %v1751
      %v8061 = vmul.f32 %v6878, %v1751
      %v8062 = vmul.f32 %v6879, %v1751
      %v8063 = vmul.f32 %v6880, %v1751
      %v8064 = vmul.f32 %v6881, %v1751
      %v8065 = vmul.f32 %v6882, %v1751
      %v8066 = vmul.f32 %v6883, %v1751
      %v8067 = vmul.f32 %v6884, %v1751
      %v8092 = vrot.slane %v8044, 4
      %v8093 = vrot.slane %v8045, 4
      %v8094 = vsel %vm1017, %v8092, %v8093
      %v8095 = vrot.slane %v8046, 4
      %v8096 = vsel %vm1017, %v8093, %v8095
      %v8097 = vrot.slane %v8047, 4
      %v8098 = vrot.slane %v8048, 4
      %v8099 = vsel %vm1017, %v8097, %v8098
      %v8100 = vrot.slane %v8049, 4
      %v8101 = vsel %vm1017, %v8098, %v8100
      %v8102 = vrot.slane %v8050, 4
      %v8103 = vrot.slane %v8051, 4
      %v8104 = vsel %vm1017, %v8102, %v8103
      %v8105 = vrot.slane %v8052, 4
      %v8106 = vsel %vm1017, %v8103, %v8105
      %v8107 = vrot.slane %v8053, 4
      %v8108 = vrot.slane %v8054, 4
      %v8109 = vsel %vm1017, %v8107, %v8108
      %v8110 = vrot.slane %v8055, 4
      %v8111 = vsel %vm1017, %v8108, %v8110
      %v8112 = vrot.slane %v8056, 4
      %v8113 = vrot.slane %v8057, 4
      %v8114 = vsel %vm1017, %v8112, %v8113
      %v8115 = vrot.slane %v8058, 4
      %v8116 = vsel %vm1017, %v8113, %v8115
      %v8117 = vrot.slane %v8059, 4
      %v8118 = vrot.slane %v8060, 4
      %v8119 = vsel %vm1017, %v8117, %v8118
      %v8120 = vrot.slane %v8061, 4
      %v8121 = vsel %vm1017, %v8118, %v8120
      %v8122 = vrot.slane %v8062, 4
      %v8123 = vrot.slane %v8063, 4
      %v8124 = vsel %vm1017, %v8122, %v8123
      %v8125 = vrot.slane %v8064, 4
      %v8126 = vsel %vm1017, %v8123, %v8125
      %v8127 = vrot.slane %v8065, 4
      %v8128 = vrot.slane %v8066, 4
      %v8129 = vsel %vm1017, %v8127, %v8128
      %v8130 = vrot.slane %v8067, 4
      %v8131 = vsel %vm1017, %v8128, %v8130
      %v8148 = vadd.f32 %v8028, %v8094
      %v8149 = vadd.f32 %v8029, %v8096
      %v8150 = vadd.f32 %v8030, %v8099
      %v8151 = vadd.f32 %v8031, %v8101
      %v8152 = vadd.f32 %v8032, %v8104
      %v8153 = vadd.f32 %v8033, %v8106
      %v8154 = vadd.f32 %v8034, %v8109
      %v8155 = vadd.f32 %v8035, %v8111
      %v8156 = vadd.f32 %v8036, %v8114
      %v8157 = vadd.f32 %v8037, %v8116
      %v8158 = vadd.f32 %v8038, %v8119
      %v8159 = vadd.f32 %v8039, %v8121
      %v8160 = vadd.f32 %v8040, %v8124
      %v8161 = vadd.f32 %v8041, %v8126
      %v8162 = vadd.f32 %v8042, %v8129
      %v8163 = vadd.f32 %v8043, %v8131
      %v8164 = vmul.f32 %v6861, %v1875
      %v8165 = vmul.f32 %v6862, %v1875
      %v8166 = vmul.f32 %v6863, %v1875
      %v8167 = vmul.f32 %v6864, %v1875
      %v8168 = vmul.f32 %v6865, %v1875
      %v8169 = vmul.f32 %v6866, %v1875
      %v8170 = vmul.f32 %v6867, %v1875
      %v8171 = vmul.f32 %v6868, %v1875
      %v8172 = vmul.f32 %v6869, %v1875
      %v8173 = vmul.f32 %v6870, %v1875
      %v8174 = vmul.f32 %v6871, %v1875
      %v8175 = vmul.f32 %v6872, %v1875
      %v8176 = vmul.f32 %v6873, %v1875
      %v8177 = vmul.f32 %v6874, %v1875
      %v8178 = vmul.f32 %v6875, %v1875
      %v8179 = vmul.f32 %v6876, %v1875
      %v8180 = vmul.f32 %v6877, %v1875
      %v8181 = vmul.f32 %v6878, %v1875
      %v8182 = vmul.f32 %v6879, %v1875
      %v8183 = vmul.f32 %v6880, %v1875
      %v8184 = vmul.f32 %v6881, %v1875
      %v8185 = vmul.f32 %v6882, %v1875
      %v8186 = vmul.f32 %v6883, %v1875
      %v8187 = vmul.f32 %v6884, %v1875
      %v8212 = vrot.slane %v8164, 5
      %v8213 = vrot.slane %v8165, 5
      %v8214 = vsel %vm1142, %v8212, %v8213
      %v8215 = vrot.slane %v8166, 5
      %v8216 = vsel %vm1142, %v8213, %v8215
      %v8217 = vrot.slane %v8167, 5
      %v8218 = vrot.slane %v8168, 5
      %v8219 = vsel %vm1142, %v8217, %v8218
      %v8220 = vrot.slane %v8169, 5
      %v8221 = vsel %vm1142, %v8218, %v8220
      %v8222 = vrot.slane %v8170, 5
      %v8223 = vrot.slane %v8171, 5
      %v8224 = vsel %vm1142, %v8222, %v8223
      %v8225 = vrot.slane %v8172, 5
      %v8226 = vsel %vm1142, %v8223, %v8225
      %v8227 = vrot.slane %v8173, 5
      %v8228 = vrot.slane %v8174, 5
      %v8229 = vsel %vm1142, %v8227, %v8228
      %v8230 = vrot.slane %v8175, 5
      %v8231 = vsel %vm1142, %v8228, %v8230
      %v8232 = vrot.slane %v8176, 5
      %v8233 = vrot.slane %v8177, 5
      %v8234 = vsel %vm1142, %v8232, %v8233
      %v8235 = vrot.slane %v8178, 5
      %v8236 = vsel %vm1142, %v8233, %v8235
      %v8237 = vrot.slane %v8179, 5
      %v8238 = vrot.slane %v8180, 5
      %v8239 = vsel %vm1142, %v8237, %v8238
      %v8240 = vrot.slane %v8181, 5
      %v8241 = vsel %vm1142, %v8238, %v8240
      %v8242 = vrot.slane %v8182, 5
      %v8243 = vrot.slane %v8183, 5
      %v8244 = vsel %vm1142, %v8242, %v8243
      %v8245 = vrot.slane %v8184, 5
      %v8246 = vsel %vm1142, %v8243, %v8245
      %v8247 = vrot.slane %v8185, 5
      %v8248 = vrot.slane %v8186, 5
      %v8249 = vsel %vm1142, %v8247, %v8248
      %v8250 = vrot.slane %v8187, 5
      %v8251 = vsel %vm1142, %v8248, %v8250
      %v8268 = vadd.f32 %v8148, %v8214
      %v8269 = vadd.f32 %v8149, %v8216
      %v8270 = vadd.f32 %v8150, %v8219
      %v8271 = vadd.f32 %v8151, %v8221
      %v8272 = vadd.f32 %v8152, %v8224
      %v8273 = vadd.f32 %v8153, %v8226
      %v8274 = vadd.f32 %v8154, %v8229
      %v8275 = vadd.f32 %v8155, %v8231
      %v8276 = vadd.f32 %v8156, %v8234
      %v8277 = vadd.f32 %v8157, %v8236
      %v8278 = vadd.f32 %v8158, %v8239
      %v8279 = vadd.f32 %v8159, %v8241
      %v8280 = vadd.f32 %v8160, %v8244
      %v8281 = vadd.f32 %v8161, %v8246
      %v8282 = vadd.f32 %v8162, %v8249
      %v8283 = vadd.f32 %v8163, %v8251
      %v8284 = vmul.f32 %v6861, %v1999
      %v8285 = vmul.f32 %v6862, %v1999
      %v8286 = vmul.f32 %v6863, %v1999
      %v8287 = vmul.f32 %v6864, %v1999
      %v8288 = vmul.f32 %v6865, %v1999
      %v8289 = vmul.f32 %v6866, %v1999
      %v8290 = vmul.f32 %v6867, %v1999
      %v8291 = vmul.f32 %v6868, %v1999
      %v8292 = vmul.f32 %v6869, %v1999
      %v8293 = vmul.f32 %v6870, %v1999
      %v8294 = vmul.f32 %v6871, %v1999
      %v8295 = vmul.f32 %v6872, %v1999
      %v8296 = vmul.f32 %v6873, %v1999
      %v8297 = vmul.f32 %v6874, %v1999
      %v8298 = vmul.f32 %v6875, %v1999
      %v8299 = vmul.f32 %v6876, %v1999
      %v8300 = vmul.f32 %v6877, %v1999
      %v8301 = vmul.f32 %v6878, %v1999
      %v8302 = vmul.f32 %v6879, %v1999
      %v8303 = vmul.f32 %v6880, %v1999
      %v8304 = vmul.f32 %v6881, %v1999
      %v8305 = vmul.f32 %v6882, %v1999
      %v8306 = vmul.f32 %v6883, %v1999
      %v8307 = vmul.f32 %v6884, %v1999
      %v8332 = vrot.slane %v8284, 6
      %v8333 = vrot.slane %v8285, 6
      %v8334 = vsel %vm1267, %v8332, %v8333
      %v8335 = vrot.slane %v8286, 6
      %v8336 = vsel %vm1267, %v8333, %v8335
      %v8337 = vrot.slane %v8287, 6
      %v8338 = vrot.slane %v8288, 6
      %v8339 = vsel %vm1267, %v8337, %v8338
      %v8340 = vrot.slane %v8289, 6
      %v8341 = vsel %vm1267, %v8338, %v8340
      %v8342 = vrot.slane %v8290, 6
      %v8343 = vrot.slane %v8291, 6
      %v8344 = vsel %vm1267, %v8342, %v8343
      %v8345 = vrot.slane %v8292, 6
      %v8346 = vsel %vm1267, %v8343, %v8345
      %v8347 = vrot.slane %v8293, 6
      %v8348 = vrot.slane %v8294, 6
      %v8349 = vsel %vm1267, %v8347, %v8348
      %v8350 = vrot.slane %v8295, 6
      %v8351 = vsel %vm1267, %v8348, %v8350
      %v8352 = vrot.slane %v8296, 6
      %v8353 = vrot.slane %v8297, 6
      %v8354 = vsel %vm1267, %v8352, %v8353
      %v8355 = vrot.slane %v8298, 6
      %v8356 = vsel %vm1267, %v8353, %v8355
      %v8357 = vrot.slane %v8299, 6
      %v8358 = vrot.slane %v8300, 6
      %v8359 = vsel %vm1267, %v8357, %v8358
      %v8360 = vrot.slane %v8301, 6
      %v8361 = vsel %vm1267, %v8358, %v8360
      %v8362 = vrot.slane %v8302, 6
      %v8363 = vrot.slane %v8303, 6
      %v8364 = vsel %vm1267, %v8362, %v8363
      %v8365 = vrot.slane %v8304, 6
      %v8366 = vsel %vm1267, %v8363, %v8365
      %v8367 = vrot.slane %v8305, 6
      %v8368 = vrot.slane %v8306, 6
      %v8369 = vsel %vm1267, %v8367, %v8368
      %v8370 = vrot.slane %v8307, 6
      %v8371 = vsel %vm1267, %v8368, %v8370
      %v8388 = vadd.f32 %v8268, %v8334
      %v8389 = vadd.f32 %v8269, %v8336
      %v8390 = vadd.f32 %v8270, %v8339
      %v8391 = vadd.f32 %v8271, %v8341
      %v8392 = vadd.f32 %v8272, %v8344
      %v8393 = vadd.f32 %v8273, %v8346
      %v8394 = vadd.f32 %v8274, %v8349
      %v8395 = vadd.f32 %v8275, %v8351
      %v8396 = vadd.f32 %v8276, %v8354
      %v8397 = vadd.f32 %v8277, %v8356
      %v8398 = vadd.f32 %v8278, %v8359
      %v8399 = vadd.f32 %v8279, %v8361
      %v8400 = vadd.f32 %v8280, %v8364
      %v8401 = vadd.f32 %v8281, %v8366
      %v8402 = vadd.f32 %v8282, %v8369
      %v8403 = vadd.f32 %v8283, %v8371
      %v8404 = vmul.f32 %v6864, %v2123
      %v8405 = vmul.f32 %v6865, %v2123
      %v8406 = vmul.f32 %v6867, %v2123
      %v8407 = vmul.f32 %v6868, %v2123
      %v8408 = vmul.f32 %v6870, %v2123
      %v8409 = vmul.f32 %v6871, %v2123
      %v8410 = vmul.f32 %v6873, %v2123
      %v8411 = vmul.f32 %v6874, %v2123
      %v8412 = vmul.f32 %v6876, %v2123
      %v8413 = vmul.f32 %v6877, %v2123
      %v8414 = vmul.f32 %v6879, %v2123
      %v8415 = vmul.f32 %v6880, %v2123
      %v8416 = vmul.f32 %v6882, %v2123
      %v8417 = vmul.f32 %v6883, %v2123
      %v8418 = vmul.f32 %v6885, %v2123
      %v8419 = vmul.f32 %v6886, %v2123
      %v8420 = vadd.f32 %v8388, %v8404
      %v8421 = vadd.f32 %v8389, %v8405
      %v8422 = vadd.f32 %v8390, %v8406
      %v8423 = vadd.f32 %v8391, %v8407
      %v8424 = vadd.f32 %v8392, %v8408
      %v8425 = vadd.f32 %v8393, %v8409
      %v8426 = vadd.f32 %v8394, %v8410
      %v8427 = vadd.f32 %v8395, %v8411
      %v8428 = vadd.f32 %v8396, %v8412
      %v8429 = vadd.f32 %v8397, %v8413
      %v8430 = vadd.f32 %v8398, %v8414
      %v8431 = vadd.f32 %v8399, %v8415
      %v8432 = vadd.f32 %v8400, %v8416
      %v8433 = vadd.f32 %v8401, %v8417
      %v8434 = vadd.f32 %v8402, %v8418
      %v8435 = vadd.f32 %v8403, %v8419
      %v8436 = vmul.f32 %v6864, %v2159
      %v8437 = vmul.f32 %v6865, %v2159
      %v8438 = vmul.f32 %v6866, %v2159
      %v8439 = vmul.f32 %v6867, %v2159
      %v8440 = vmul.f32 %v6868, %v2159
      %v8441 = vmul.f32 %v6869, %v2159
      %v8442 = vmul.f32 %v6870, %v2159
      %v8443 = vmul.f32 %v6871, %v2159
      %v8444 = vmul.f32 %v6872, %v2159
      %v8445 = vmul.f32 %v6873, %v2159
      %v8446 = vmul.f32 %v6874, %v2159
      %v8447 = vmul.f32 %v6875, %v2159
      %v8448 = vmul.f32 %v6876, %v2159
      %v8449 = vmul.f32 %v6877, %v2159
      %v8450 = vmul.f32 %v6878, %v2159
      %v8451 = vmul.f32 %v6879, %v2159
      %v8452 = vmul.f32 %v6880, %v2159
      %v8453 = vmul.f32 %v6881, %v2159
      %v8454 = vmul.f32 %v6882, %v2159
      %v8455 = vmul.f32 %v6883, %v2159
      %v8456 = vmul.f32 %v6884, %v2159
      %v8457 = vmul.f32 %v6885, %v2159
      %v8458 = vmul.f32 %v6886, %v2159
      %v8459 = vmul.f32 %v6887, %v2159
      %v8484 = vrot.slane %v8436, 1
      %v8485 = vrot.slane %v8437, 1
      %v8486 = vsel %vm642, %v8484, %v8485
      %v8487 = vrot.slane %v8438, 1
      %v8488 = vsel %vm642, %v8485, %v8487
      %v8489 = vrot.slane %v8439, 1
      %v8490 = vrot.slane %v8440, 1
      %v8491 = vsel %vm642, %v8489, %v8490
      %v8492 = vrot.slane %v8441, 1
      %v8493 = vsel %vm642, %v8490, %v8492
      %v8494 = vrot.slane %v8442, 1
      %v8495 = vrot.slane %v8443, 1
      %v8496 = vsel %vm642, %v8494, %v8495
      %v8497 = vrot.slane %v8444, 1
      %v8498 = vsel %vm642, %v8495, %v8497
      %v8499 = vrot.slane %v8445, 1
      %v8500 = vrot.slane %v8446, 1
      %v8501 = vsel %vm642, %v8499, %v8500
      %v8502 = vrot.slane %v8447, 1
      %v8503 = vsel %vm642, %v8500, %v8502
      %v8504 = vrot.slane %v8448, 1
      %v8505 = vrot.slane %v8449, 1
      %v8506 = vsel %vm642, %v8504, %v8505
      %v8507 = vrot.slane %v8450, 1
      %v8508 = vsel %vm642, %v8505, %v8507
      %v8509 = vrot.slane %v8451, 1
      %v8510 = vrot.slane %v8452, 1
      %v8511 = vsel %vm642, %v8509, %v8510
      %v8512 = vrot.slane %v8453, 1
      %v8513 = vsel %vm642, %v8510, %v8512
      %v8514 = vrot.slane %v8454, 1
      %v8515 = vrot.slane %v8455, 1
      %v8516 = vsel %vm642, %v8514, %v8515
      %v8517 = vrot.slane %v8456, 1
      %v8518 = vsel %vm642, %v8515, %v8517
      %v8519 = vrot.slane %v8457, 1
      %v8520 = vrot.slane %v8458, 1
      %v8521 = vsel %vm642, %v8519, %v8520
      %v8522 = vrot.slane %v8459, 1
      %v8523 = vsel %vm642, %v8520, %v8522
      %v8540 = vadd.f32 %v8420, %v8486
      %v8541 = vadd.f32 %v8421, %v8488
      %v8542 = vadd.f32 %v8422, %v8491
      %v8543 = vadd.f32 %v8423, %v8493
      %v8544 = vadd.f32 %v8424, %v8496
      %v8545 = vadd.f32 %v8425, %v8498
      %v8546 = vadd.f32 %v8426, %v8501
      %v8547 = vadd.f32 %v8427, %v8503
      %v8548 = vadd.f32 %v8428, %v8506
      %v8549 = vadd.f32 %v8429, %v8508
      %v8550 = vadd.f32 %v8430, %v8511
      %v8551 = vadd.f32 %v8431, %v8513
      %v8552 = vadd.f32 %v8432, %v8516
      %v8553 = vadd.f32 %v8433, %v8518
      %v8554 = vadd.f32 %v8434, %v8521
      %v8555 = vadd.f32 %v8435, %v8523
      %v8556 = vmul.f32 %v6864, %v2283
      %v8557 = vmul.f32 %v6865, %v2283
      %v8558 = vmul.f32 %v6866, %v2283
      %v8559 = vmul.f32 %v6867, %v2283
      %v8560 = vmul.f32 %v6868, %v2283
      %v8561 = vmul.f32 %v6869, %v2283
      %v8562 = vmul.f32 %v6870, %v2283
      %v8563 = vmul.f32 %v6871, %v2283
      %v8564 = vmul.f32 %v6872, %v2283
      %v8565 = vmul.f32 %v6873, %v2283
      %v8566 = vmul.f32 %v6874, %v2283
      %v8567 = vmul.f32 %v6875, %v2283
      %v8568 = vmul.f32 %v6876, %v2283
      %v8569 = vmul.f32 %v6877, %v2283
      %v8570 = vmul.f32 %v6878, %v2283
      %v8571 = vmul.f32 %v6879, %v2283
      %v8572 = vmul.f32 %v6880, %v2283
      %v8573 = vmul.f32 %v6881, %v2283
      %v8574 = vmul.f32 %v6882, %v2283
      %v8575 = vmul.f32 %v6883, %v2283
      %v8576 = vmul.f32 %v6884, %v2283
      %v8577 = vmul.f32 %v6885, %v2283
      %v8578 = vmul.f32 %v6886, %v2283
      %v8579 = vmul.f32 %v6887, %v2283
      %v8604 = vrot.slane %v8556, 2
      %v8605 = vrot.slane %v8557, 2
      %v8606 = vsel %vm767, %v8604, %v8605
      %v8607 = vrot.slane %v8558, 2
      %v8608 = vsel %vm767, %v8605, %v8607
      %v8609 = vrot.slane %v8559, 2
      %v8610 = vrot.slane %v8560, 2
      %v8611 = vsel %vm767, %v8609, %v8610
      %v8612 = vrot.slane %v8561, 2
      %v8613 = vsel %vm767, %v8610, %v8612
      %v8614 = vrot.slane %v8562, 2
      %v8615 = vrot.slane %v8563, 2
      %v8616 = vsel %vm767, %v8614, %v8615
      %v8617 = vrot.slane %v8564, 2
      %v8618 = vsel %vm767, %v8615, %v8617
      %v8619 = vrot.slane %v8565, 2
      %v8620 = vrot.slane %v8566, 2
      %v8621 = vsel %vm767, %v8619, %v8620
      %v8622 = vrot.slane %v8567, 2
      %v8623 = vsel %vm767, %v8620, %v8622
      %v8624 = vrot.slane %v8568, 2
      %v8625 = vrot.slane %v8569, 2
      %v8626 = vsel %vm767, %v8624, %v8625
      %v8627 = vrot.slane %v8570, 2
      %v8628 = vsel %vm767, %v8625, %v8627
      %v8629 = vrot.slane %v8571, 2
      %v8630 = vrot.slane %v8572, 2
      %v8631 = vsel %vm767, %v8629, %v8630
      %v8632 = vrot.slane %v8573, 2
      %v8633 = vsel %vm767, %v8630, %v8632
      %v8634 = vrot.slane %v8574, 2
      %v8635 = vrot.slane %v8575, 2
      %v8636 = vsel %vm767, %v8634, %v8635
      %v8637 = vrot.slane %v8576, 2
      %v8638 = vsel %vm767, %v8635, %v8637
      %v8639 = vrot.slane %v8577, 2
      %v8640 = vrot.slane %v8578, 2
      %v8641 = vsel %vm767, %v8639, %v8640
      %v8642 = vrot.slane %v8579, 2
      %v8643 = vsel %vm767, %v8640, %v8642
      %v8660 = vadd.f32 %v8540, %v8606
      %v8661 = vadd.f32 %v8541, %v8608
      %v8662 = vadd.f32 %v8542, %v8611
      %v8663 = vadd.f32 %v8543, %v8613
      %v8664 = vadd.f32 %v8544, %v8616
      %v8665 = vadd.f32 %v8545, %v8618
      %v8666 = vadd.f32 %v8546, %v8621
      %v8667 = vadd.f32 %v8547, %v8623
      %v8668 = vadd.f32 %v8548, %v8626
      %v8669 = vadd.f32 %v8549, %v8628
      %v8670 = vadd.f32 %v8550, %v8631
      %v8671 = vadd.f32 %v8551, %v8633
      %v8672 = vadd.f32 %v8552, %v8636
      %v8673 = vadd.f32 %v8553, %v8638
      %v8674 = vadd.f32 %v8554, %v8641
      %v8675 = vadd.f32 %v8555, %v8643
      %v8676 = vmul.f32 %v6864, %v2407
      %v8677 = vmul.f32 %v6865, %v2407
      %v8678 = vmul.f32 %v6866, %v2407
      %v8679 = vmul.f32 %v6867, %v2407
      %v8680 = vmul.f32 %v6868, %v2407
      %v8681 = vmul.f32 %v6869, %v2407
      %v8682 = vmul.f32 %v6870, %v2407
      %v8683 = vmul.f32 %v6871, %v2407
      %v8684 = vmul.f32 %v6872, %v2407
      %v8685 = vmul.f32 %v6873, %v2407
      %v8686 = vmul.f32 %v6874, %v2407
      %v8687 = vmul.f32 %v6875, %v2407
      %v8688 = vmul.f32 %v6876, %v2407
      %v8689 = vmul.f32 %v6877, %v2407
      %v8690 = vmul.f32 %v6878, %v2407
      %v8691 = vmul.f32 %v6879, %v2407
      %v8692 = vmul.f32 %v6880, %v2407
      %v8693 = vmul.f32 %v6881, %v2407
      %v8694 = vmul.f32 %v6882, %v2407
      %v8695 = vmul.f32 %v6883, %v2407
      %v8696 = vmul.f32 %v6884, %v2407
      %v8697 = vmul.f32 %v6885, %v2407
      %v8698 = vmul.f32 %v6886, %v2407
      %v8699 = vmul.f32 %v6887, %v2407
      %v8724 = vrot.slane %v8676, 3
      %v8725 = vrot.slane %v8677, 3
      %v8726 = vsel %vm892, %v8724, %v8725
      %v8727 = vrot.slane %v8678, 3
      %v8728 = vsel %vm892, %v8725, %v8727
      %v8729 = vrot.slane %v8679, 3
      %v8730 = vrot.slane %v8680, 3
      %v8731 = vsel %vm892, %v8729, %v8730
      %v8732 = vrot.slane %v8681, 3
      %v8733 = vsel %vm892, %v8730, %v8732
      %v8734 = vrot.slane %v8682, 3
      %v8735 = vrot.slane %v8683, 3
      %v8736 = vsel %vm892, %v8734, %v8735
      %v8737 = vrot.slane %v8684, 3
      %v8738 = vsel %vm892, %v8735, %v8737
      %v8739 = vrot.slane %v8685, 3
      %v8740 = vrot.slane %v8686, 3
      %v8741 = vsel %vm892, %v8739, %v8740
      %v8742 = vrot.slane %v8687, 3
      %v8743 = vsel %vm892, %v8740, %v8742
      %v8744 = vrot.slane %v8688, 3
      %v8745 = vrot.slane %v8689, 3
      %v8746 = vsel %vm892, %v8744, %v8745
      %v8747 = vrot.slane %v8690, 3
      %v8748 = vsel %vm892, %v8745, %v8747
      %v8749 = vrot.slane %v8691, 3
      %v8750 = vrot.slane %v8692, 3
      %v8751 = vsel %vm892, %v8749, %v8750
      %v8752 = vrot.slane %v8693, 3
      %v8753 = vsel %vm892, %v8750, %v8752
      %v8754 = vrot.slane %v8694, 3
      %v8755 = vrot.slane %v8695, 3
      %v8756 = vsel %vm892, %v8754, %v8755
      %v8757 = vrot.slane %v8696, 3
      %v8758 = vsel %vm892, %v8755, %v8757
      %v8759 = vrot.slane %v8697, 3
      %v8760 = vrot.slane %v8698, 3
      %v8761 = vsel %vm892, %v8759, %v8760
      %v8762 = vrot.slane %v8699, 3
      %v8763 = vsel %vm892, %v8760, %v8762
      %v8780 = vadd.f32 %v8660, %v8726
      %v8781 = vadd.f32 %v8661, %v8728
      %v8782 = vadd.f32 %v8662, %v8731
      %v8783 = vadd.f32 %v8663, %v8733
      %v8784 = vadd.f32 %v8664, %v8736
      %v8785 = vadd.f32 %v8665, %v8738
      %v8786 = vadd.f32 %v8666, %v8741
      %v8787 = vadd.f32 %v8667, %v8743
      %v8788 = vadd.f32 %v8668, %v8746
      %v8789 = vadd.f32 %v8669, %v8748
      %v8790 = vadd.f32 %v8670, %v8751
      %v8791 = vadd.f32 %v8671, %v8753
      %v8792 = vadd.f32 %v8672, %v8756
      %v8793 = vadd.f32 %v8673, %v8758
      %v8794 = vadd.f32 %v8674, %v8761
      %v8795 = vadd.f32 %v8675, %v8763
      %v8796 = vmul.f32 %v6864, %v2531
      %v8797 = vmul.f32 %v6865, %v2531
      %v8798 = vmul.f32 %v6866, %v2531
      %v8799 = vmul.f32 %v6867, %v2531
      %v8800 = vmul.f32 %v6868, %v2531
      %v8801 = vmul.f32 %v6869, %v2531
      %v8802 = vmul.f32 %v6870, %v2531
      %v8803 = vmul.f32 %v6871, %v2531
      %v8804 = vmul.f32 %v6872, %v2531
      %v8805 = vmul.f32 %v6873, %v2531
      %v8806 = vmul.f32 %v6874, %v2531
      %v8807 = vmul.f32 %v6875, %v2531
      %v8808 = vmul.f32 %v6876, %v2531
      %v8809 = vmul.f32 %v6877, %v2531
      %v8810 = vmul.f32 %v6878, %v2531
      %v8811 = vmul.f32 %v6879, %v2531
      %v8812 = vmul.f32 %v6880, %v2531
      %v8813 = vmul.f32 %v6881, %v2531
      %v8814 = vmul.f32 %v6882, %v2531
      %v8815 = vmul.f32 %v6883, %v2531
      %v8816 = vmul.f32 %v6884, %v2531
      %v8817 = vmul.f32 %v6885, %v2531
      %v8818 = vmul.f32 %v6886, %v2531
      %v8819 = vmul.f32 %v6887, %v2531
      %v8844 = vrot.slane %v8796, 4
      %v8845 = vrot.slane %v8797, 4
      %v8846 = vsel %vm1017, %v8844, %v8845
      %v8847 = vrot.slane %v8798, 4
      %v8848 = vsel %vm1017, %v8845, %v8847
      %v8849 = vrot.slane %v8799, 4
      %v8850 = vrot.slane %v8800, 4
      %v8851 = vsel %vm1017, %v8849, %v8850
      %v8852 = vrot.slane %v8801, 4
      %v8853 = vsel %vm1017, %v8850, %v8852
      %v8854 = vrot.slane %v8802, 4
      %v8855 = vrot.slane %v8803, 4
      %v8856 = vsel %vm1017, %v8854, %v8855
      %v8857 = vrot.slane %v8804, 4
      %v8858 = vsel %vm1017, %v8855, %v8857
      %v8859 = vrot.slane %v8805, 4
      %v8860 = vrot.slane %v8806, 4
      %v8861 = vsel %vm1017, %v8859, %v8860
      %v8862 = vrot.slane %v8807, 4
      %v8863 = vsel %vm1017, %v8860, %v8862
      %v8864 = vrot.slane %v8808, 4
      %v8865 = vrot.slane %v8809, 4
      %v8866 = vsel %vm1017, %v8864, %v8865
      %v8867 = vrot.slane %v8810, 4
      %v8868 = vsel %vm1017, %v8865, %v8867
      %v8869 = vrot.slane %v8811, 4
      %v8870 = vrot.slane %v8812, 4
      %v8871 = vsel %vm1017, %v8869, %v8870
      %v8872 = vrot.slane %v8813, 4
      %v8873 = vsel %vm1017, %v8870, %v8872
      %v8874 = vrot.slane %v8814, 4
      %v8875 = vrot.slane %v8815, 4
      %v8876 = vsel %vm1017, %v8874, %v8875
      %v8877 = vrot.slane %v8816, 4
      %v8878 = vsel %vm1017, %v8875, %v8877
      %v8879 = vrot.slane %v8817, 4
      %v8880 = vrot.slane %v8818, 4
      %v8881 = vsel %vm1017, %v8879, %v8880
      %v8882 = vrot.slane %v8819, 4
      %v8883 = vsel %vm1017, %v8880, %v8882
      %v8900 = vadd.f32 %v8780, %v8846
      %v8901 = vadd.f32 %v8781, %v8848
      %v8902 = vadd.f32 %v8782, %v8851
      %v8903 = vadd.f32 %v8783, %v8853
      %v8904 = vadd.f32 %v8784, %v8856
      %v8905 = vadd.f32 %v8785, %v8858
      %v8906 = vadd.f32 %v8786, %v8861
      %v8907 = vadd.f32 %v8787, %v8863
      %v8908 = vadd.f32 %v8788, %v8866
      %v8909 = vadd.f32 %v8789, %v8868
      %v8910 = vadd.f32 %v8790, %v8871
      %v8911 = vadd.f32 %v8791, %v8873
      %v8912 = vadd.f32 %v8792, %v8876
      %v8913 = vadd.f32 %v8793, %v8878
      %v8914 = vadd.f32 %v8794, %v8881
      %v8915 = vadd.f32 %v8795, %v8883
      %v8916 = vmul.f32 %v6864, %v2655
      %v8917 = vmul.f32 %v6865, %v2655
      %v8918 = vmul.f32 %v6866, %v2655
      %v8919 = vmul.f32 %v6867, %v2655
      %v8920 = vmul.f32 %v6868, %v2655
      %v8921 = vmul.f32 %v6869, %v2655
      %v8922 = vmul.f32 %v6870, %v2655
      %v8923 = vmul.f32 %v6871, %v2655
      %v8924 = vmul.f32 %v6872, %v2655
      %v8925 = vmul.f32 %v6873, %v2655
      %v8926 = vmul.f32 %v6874, %v2655
      %v8927 = vmul.f32 %v6875, %v2655
      %v8928 = vmul.f32 %v6876, %v2655
      %v8929 = vmul.f32 %v6877, %v2655
      %v8930 = vmul.f32 %v6878, %v2655
      %v8931 = vmul.f32 %v6879, %v2655
      %v8932 = vmul.f32 %v6880, %v2655
      %v8933 = vmul.f32 %v6881, %v2655
      %v8934 = vmul.f32 %v6882, %v2655
      %v8935 = vmul.f32 %v6883, %v2655
      %v8936 = vmul.f32 %v6884, %v2655
      %v8937 = vmul.f32 %v6885, %v2655
      %v8938 = vmul.f32 %v6886, %v2655
      %v8939 = vmul.f32 %v6887, %v2655
      %v8964 = vrot.slane %v8916, 5
      %v8965 = vrot.slane %v8917, 5
      %v8966 = vsel %vm1142, %v8964, %v8965
      %v8967 = vrot.slane %v8918, 5
      %v8968 = vsel %vm1142, %v8965, %v8967
      %v8969 = vrot.slane %v8919, 5
      %v8970 = vrot.slane %v8920, 5
      %v8971 = vsel %vm1142, %v8969, %v8970
      %v8972 = vrot.slane %v8921, 5
      %v8973 = vsel %vm1142, %v8970, %v8972
      %v8974 = vrot.slane %v8922, 5
      %v8975 = vrot.slane %v8923, 5
      %v8976 = vsel %vm1142, %v8974, %v8975
      %v8977 = vrot.slane %v8924, 5
      %v8978 = vsel %vm1142, %v8975, %v8977
      %v8979 = vrot.slane %v8925, 5
      %v8980 = vrot.slane %v8926, 5
      %v8981 = vsel %vm1142, %v8979, %v8980
      %v8982 = vrot.slane %v8927, 5
      %v8983 = vsel %vm1142, %v8980, %v8982
      %v8984 = vrot.slane %v8928, 5
      %v8985 = vrot.slane %v8929, 5
      %v8986 = vsel %vm1142, %v8984, %v8985
      %v8987 = vrot.slane %v8930, 5
      %v8988 = vsel %vm1142, %v8985, %v8987
      %v8989 = vrot.slane %v8931, 5
      %v8990 = vrot.slane %v8932, 5
      %v8991 = vsel %vm1142, %v8989, %v8990
      %v8992 = vrot.slane %v8933, 5
      %v8993 = vsel %vm1142, %v8990, %v8992
      %v8994 = vrot.slane %v8934, 5
      %v8995 = vrot.slane %v8935, 5
      %v8996 = vsel %vm1142, %v8994, %v8995
      %v8997 = vrot.slane %v8936, 5
      %v8998 = vsel %vm1142, %v8995, %v8997
      %v8999 = vrot.slane %v8937, 5
      %v9000 = vrot.slane %v8938, 5
      %v9001 = vsel %vm1142, %v8999, %v9000
      %v9002 = vrot.slane %v8939, 5
      %v9003 = vsel %vm1142, %v9000, %v9002
      %v9020 = vadd.f32 %v8900, %v8966
      %v9021 = vadd.f32 %v8901, %v8968
      %v9022 = vadd.f32 %v8902, %v8971
      %v9023 = vadd.f32 %v8903, %v8973
      %v9024 = vadd.f32 %v8904, %v8976
      %v9025 = vadd.f32 %v8905, %v8978
      %v9026 = vadd.f32 %v8906, %v8981
      %v9027 = vadd.f32 %v8907, %v8983
      %v9028 = vadd.f32 %v8908, %v8986
      %v9029 = vadd.f32 %v8909, %v8988
      %v9030 = vadd.f32 %v8910, %v8991
      %v9031 = vadd.f32 %v8911, %v8993
      %v9032 = vadd.f32 %v8912, %v8996
      %v9033 = vadd.f32 %v8913, %v8998
      %v9034 = vadd.f32 %v8914, %v9001
      %v9035 = vadd.f32 %v8915, %v9003
      %v9036 = vmul.f32 %v6864, %v2779
      %v9037 = vmul.f32 %v6865, %v2779
      %v9038 = vmul.f32 %v6866, %v2779
      %v9039 = vmul.f32 %v6867, %v2779
      %v9040 = vmul.f32 %v6868, %v2779
      %v9041 = vmul.f32 %v6869, %v2779
      %v9042 = vmul.f32 %v6870, %v2779
      %v9043 = vmul.f32 %v6871, %v2779
      %v9044 = vmul.f32 %v6872, %v2779
      %v9045 = vmul.f32 %v6873, %v2779
      %v9046 = vmul.f32 %v6874, %v2779
      %v9047 = vmul.f32 %v6875, %v2779
      %v9048 = vmul.f32 %v6876, %v2779
      %v9049 = vmul.f32 %v6877, %v2779
      %v9050 = vmul.f32 %v6878, %v2779
      %v9051 = vmul.f32 %v6879, %v2779
      %v9052 = vmul.f32 %v6880, %v2779
      %v9053 = vmul.f32 %v6881, %v2779
      %v9054 = vmul.f32 %v6882, %v2779
      %v9055 = vmul.f32 %v6883, %v2779
      %v9056 = vmul.f32 %v6884, %v2779
      %v9057 = vmul.f32 %v6885, %v2779
      %v9058 = vmul.f32 %v6886, %v2779
      %v9059 = vmul.f32 %v6887, %v2779
      %v9084 = vrot.slane %v9036, 6
      %v9085 = vrot.slane %v9037, 6
      %v9086 = vsel %vm1267, %v9084, %v9085
      %v9087 = vrot.slane %v9038, 6
      %v9088 = vsel %vm1267, %v9085, %v9087
      %v9089 = vrot.slane %v9039, 6
      %v9090 = vrot.slane %v9040, 6
      %v9091 = vsel %vm1267, %v9089, %v9090
      %v9092 = vrot.slane %v9041, 6
      %v9093 = vsel %vm1267, %v9090, %v9092
      %v9094 = vrot.slane %v9042, 6
      %v9095 = vrot.slane %v9043, 6
      %v9096 = vsel %vm1267, %v9094, %v9095
      %v9097 = vrot.slane %v9044, 6
      %v9098 = vsel %vm1267, %v9095, %v9097
      %v9099 = vrot.slane %v9045, 6
      %v9100 = vrot.slane %v9046, 6
      %v9101 = vsel %vm1267, %v9099, %v9100
      %v9102 = vrot.slane %v9047, 6
      %v9103 = vsel %vm1267, %v9100, %v9102
      %v9104 = vrot.slane %v9048, 6
      %v9105 = vrot.slane %v9049, 6
      %v9106 = vsel %vm1267, %v9104, %v9105
      %v9107 = vrot.slane %v9050, 6
      %v9108 = vsel %vm1267, %v9105, %v9107
      %v9109 = vrot.slane %v9051, 6
      %v9110 = vrot.slane %v9052, 6
      %v9111 = vsel %vm1267, %v9109, %v9110
      %v9112 = vrot.slane %v9053, 6
      %v9113 = vsel %vm1267, %v9110, %v9112
      %v9114 = vrot.slane %v9054, 6
      %v9115 = vrot.slane %v9055, 6
      %v9116 = vsel %vm1267, %v9114, %v9115
      %v9117 = vrot.slane %v9056, 6
      %v9118 = vsel %vm1267, %v9115, %v9117
      %v9119 = vrot.slane %v9057, 6
      %v9120 = vrot.slane %v9058, 6
      %v9121 = vsel %vm1267, %v9119, %v9120
      %v9122 = vrot.slane %v9059, 6
      %v9123 = vsel %vm1267, %v9120, %v9122
      %v9140 = vadd.f32 %v9020, %v9086
      %v9141 = vadd.f32 %v9021, %v9088
      %v9142 = vadd.f32 %v9022, %v9091
      %v9143 = vadd.f32 %v9023, %v9093
      %v9144 = vadd.f32 %v9024, %v9096
      %v9145 = vadd.f32 %v9025, %v9098
      %v9146 = vadd.f32 %v9026, %v9101
      %v9147 = vadd.f32 %v9027, %v9103
      %v9148 = vadd.f32 %v9028, %v9106
      %v9149 = vadd.f32 %v9029, %v9108
      %v9150 = vadd.f32 %v9030, %v9111
      %v9151 = vadd.f32 %v9031, %v9113
      %v9152 = vadd.f32 %v9032, %v9116
      %v9153 = vadd.f32 %v9033, %v9118
      %v9154 = vadd.f32 %v9034, %v9121
      %v9155 = vadd.f32 %v9035, %v9123
      %v9156 = vmul.f32 %v6867, %v2903
      %v9157 = vmul.f32 %v6868, %v2903
      %v9158 = vmul.f32 %v6870, %v2903
      %v9159 = vmul.f32 %v6871, %v2903
      %v9160 = vmul.f32 %v6873, %v2903
      %v9161 = vmul.f32 %v6874, %v2903
      %v9162 = vmul.f32 %v6876, %v2903
      %v9163 = vmul.f32 %v6877, %v2903
      %v9164 = vmul.f32 %v6879, %v2903
      %v9165 = vmul.f32 %v6880, %v2903
      %v9166 = vmul.f32 %v6882, %v2903
      %v9167 = vmul.f32 %v6883, %v2903
      %v9168 = vmul.f32 %v6885, %v2903
      %v9169 = vmul.f32 %v6886, %v2903
      %v9170 = vmul.f32 %v6888, %v2903
      %v9171 = vmul.f32 %v6889, %v2903
      %v9172 = vadd.f32 %v9140, %v9156
      %v9173 = vadd.f32 %v9141, %v9157
      %v9174 = vadd.f32 %v9142, %v9158
      %v9175 = vadd.f32 %v9143, %v9159
      %v9176 = vadd.f32 %v9144, %v9160
      %v9177 = vadd.f32 %v9145, %v9161
      %v9178 = vadd.f32 %v9146, %v9162
      %v9179 = vadd.f32 %v9147, %v9163
      %v9180 = vadd.f32 %v9148, %v9164
      %v9181 = vadd.f32 %v9149, %v9165
      %v9182 = vadd.f32 %v9150, %v9166
      %v9183 = vadd.f32 %v9151, %v9167
      %v9184 = vadd.f32 %v9152, %v9168
      %v9185 = vadd.f32 %v9153, %v9169
      %v9186 = vadd.f32 %v9154, %v9170
      %v9187 = vadd.f32 %v9155, %v9171
      %v9188 = vmul.f32 %v6867, %v2939
      %v9189 = vmul.f32 %v6868, %v2939
      %v9190 = vmul.f32 %v6869, %v2939
      %v9191 = vmul.f32 %v6870, %v2939
      %v9192 = vmul.f32 %v6871, %v2939
      %v9193 = vmul.f32 %v6872, %v2939
      %v9194 = vmul.f32 %v6873, %v2939
      %v9195 = vmul.f32 %v6874, %v2939
      %v9196 = vmul.f32 %v6875, %v2939
      %v9197 = vmul.f32 %v6876, %v2939
      %v9198 = vmul.f32 %v6877, %v2939
      %v9199 = vmul.f32 %v6878, %v2939
      %v9200 = vmul.f32 %v6879, %v2939
      %v9201 = vmul.f32 %v6880, %v2939
      %v9202 = vmul.f32 %v6881, %v2939
      %v9203 = vmul.f32 %v6882, %v2939
      %v9204 = vmul.f32 %v6883, %v2939
      %v9205 = vmul.f32 %v6884, %v2939
      %v9206 = vmul.f32 %v6885, %v2939
      %v9207 = vmul.f32 %v6886, %v2939
      %v9208 = vmul.f32 %v6887, %v2939
      %v9209 = vmul.f32 %v6888, %v2939
      %v9210 = vmul.f32 %v6889, %v2939
      %v9211 = vmul.f32 %v6890, %v2939
      %v9236 = vrot.slane %v9188, 1
      %v9237 = vrot.slane %v9189, 1
      %v9238 = vsel %vm642, %v9236, %v9237
      %v9239 = vrot.slane %v9190, 1
      %v9240 = vsel %vm642, %v9237, %v9239
      %v9241 = vrot.slane %v9191, 1
      %v9242 = vrot.slane %v9192, 1
      %v9243 = vsel %vm642, %v9241, %v9242
      %v9244 = vrot.slane %v9193, 1
      %v9245 = vsel %vm642, %v9242, %v9244
      %v9246 = vrot.slane %v9194, 1
      %v9247 = vrot.slane %v9195, 1
      %v9248 = vsel %vm642, %v9246, %v9247
      %v9249 = vrot.slane %v9196, 1
      %v9250 = vsel %vm642, %v9247, %v9249
      %v9251 = vrot.slane %v9197, 1
      %v9252 = vrot.slane %v9198, 1
      %v9253 = vsel %vm642, %v9251, %v9252
      %v9254 = vrot.slane %v9199, 1
      %v9255 = vsel %vm642, %v9252, %v9254
      %v9256 = vrot.slane %v9200, 1
      %v9257 = vrot.slane %v9201, 1
      %v9258 = vsel %vm642, %v9256, %v9257
      %v9259 = vrot.slane %v9202, 1
      %v9260 = vsel %vm642, %v9257, %v9259
      %v9261 = vrot.slane %v9203, 1
      %v9262 = vrot.slane %v9204, 1
      %v9263 = vsel %vm642, %v9261, %v9262
      %v9264 = vrot.slane %v9205, 1
      %v9265 = vsel %vm642, %v9262, %v9264
      %v9266 = vrot.slane %v9206, 1
      %v9267 = vrot.slane %v9207, 1
      %v9268 = vsel %vm642, %v9266, %v9267
      %v9269 = vrot.slane %v9208, 1
      %v9270 = vsel %vm642, %v9267, %v9269
      %v9271 = vrot.slane %v9209, 1
      %v9272 = vrot.slane %v9210, 1
      %v9273 = vsel %vm642, %v9271, %v9272
      %v9274 = vrot.slane %v9211, 1
      %v9275 = vsel %vm642, %v9272, %v9274
      %v9292 = vadd.f32 %v9172, %v9238
      %v9293 = vadd.f32 %v9173, %v9240
      %v9294 = vadd.f32 %v9174, %v9243
      %v9295 = vadd.f32 %v9175, %v9245
      %v9296 = vadd.f32 %v9176, %v9248
      %v9297 = vadd.f32 %v9177, %v9250
      %v9298 = vadd.f32 %v9178, %v9253
      %v9299 = vadd.f32 %v9179, %v9255
      %v9300 = vadd.f32 %v9180, %v9258
      %v9301 = vadd.f32 %v9181, %v9260
      %v9302 = vadd.f32 %v9182, %v9263
      %v9303 = vadd.f32 %v9183, %v9265
      %v9304 = vadd.f32 %v9184, %v9268
      %v9305 = vadd.f32 %v9185, %v9270
      %v9306 = vadd.f32 %v9186, %v9273
      %v9307 = vadd.f32 %v9187, %v9275
      %v9308 = vmul.f32 %v6867, %v3063
      %v9309 = vmul.f32 %v6868, %v3063
      %v9310 = vmul.f32 %v6869, %v3063
      %v9311 = vmul.f32 %v6870, %v3063
      %v9312 = vmul.f32 %v6871, %v3063
      %v9313 = vmul.f32 %v6872, %v3063
      %v9314 = vmul.f32 %v6873, %v3063
      %v9315 = vmul.f32 %v6874, %v3063
      %v9316 = vmul.f32 %v6875, %v3063
      %v9317 = vmul.f32 %v6876, %v3063
      %v9318 = vmul.f32 %v6877, %v3063
      %v9319 = vmul.f32 %v6878, %v3063
      %v9320 = vmul.f32 %v6879, %v3063
      %v9321 = vmul.f32 %v6880, %v3063
      %v9322 = vmul.f32 %v6881, %v3063
      %v9323 = vmul.f32 %v6882, %v3063
      %v9324 = vmul.f32 %v6883, %v3063
      %v9325 = vmul.f32 %v6884, %v3063
      %v9326 = vmul.f32 %v6885, %v3063
      %v9327 = vmul.f32 %v6886, %v3063
      %v9328 = vmul.f32 %v6887, %v3063
      %v9329 = vmul.f32 %v6888, %v3063
      %v9330 = vmul.f32 %v6889, %v3063
      %v9331 = vmul.f32 %v6890, %v3063
      %v9356 = vrot.slane %v9308, 2
      %v9357 = vrot.slane %v9309, 2
      %v9358 = vsel %vm767, %v9356, %v9357
      %v9359 = vrot.slane %v9310, 2
      %v9360 = vsel %vm767, %v9357, %v9359
      %v9361 = vrot.slane %v9311, 2
      %v9362 = vrot.slane %v9312, 2
      %v9363 = vsel %vm767, %v9361, %v9362
      %v9364 = vrot.slane %v9313, 2
      %v9365 = vsel %vm767, %v9362, %v9364
      %v9366 = vrot.slane %v9314, 2
      %v9367 = vrot.slane %v9315, 2
      %v9368 = vsel %vm767, %v9366, %v9367
      %v9369 = vrot.slane %v9316, 2
      %v9370 = vsel %vm767, %v9367, %v9369
      %v9371 = vrot.slane %v9317, 2
      %v9372 = vrot.slane %v9318, 2
      %v9373 = vsel %vm767, %v9371, %v9372
      %v9374 = vrot.slane %v9319, 2
      %v9375 = vsel %vm767, %v9372, %v9374
      %v9376 = vrot.slane %v9320, 2
      %v9377 = vrot.slane %v9321, 2
      %v9378 = vsel %vm767, %v9376, %v9377
      %v9379 = vrot.slane %v9322, 2
      %v9380 = vsel %vm767, %v9377, %v9379
      %v9381 = vrot.slane %v9323, 2
      %v9382 = vrot.slane %v9324, 2
      %v9383 = vsel %vm767, %v9381, %v9382
      %v9384 = vrot.slane %v9325, 2
      %v9385 = vsel %vm767, %v9382, %v9384
      %v9386 = vrot.slane %v9326, 2
      %v9387 = vrot.slane %v9327, 2
      %v9388 = vsel %vm767, %v9386, %v9387
      %v9389 = vrot.slane %v9328, 2
      %v9390 = vsel %vm767, %v9387, %v9389
      %v9391 = vrot.slane %v9329, 2
      %v9392 = vrot.slane %v9330, 2
      %v9393 = vsel %vm767, %v9391, %v9392
      %v9394 = vrot.slane %v9331, 2
      %v9395 = vsel %vm767, %v9392, %v9394
      %v9412 = vadd.f32 %v9292, %v9358
      %v9413 = vadd.f32 %v9293, %v9360
      %v9414 = vadd.f32 %v9294, %v9363
      %v9415 = vadd.f32 %v9295, %v9365
      %v9416 = vadd.f32 %v9296, %v9368
      %v9417 = vadd.f32 %v9297, %v9370
      %v9418 = vadd.f32 %v9298, %v9373
      %v9419 = vadd.f32 %v9299, %v9375
      %v9420 = vadd.f32 %v9300, %v9378
      %v9421 = vadd.f32 %v9301, %v9380
      %v9422 = vadd.f32 %v9302, %v9383
      %v9423 = vadd.f32 %v9303, %v9385
      %v9424 = vadd.f32 %v9304, %v9388
      %v9425 = vadd.f32 %v9305, %v9390
      %v9426 = vadd.f32 %v9306, %v9393
      %v9427 = vadd.f32 %v9307, %v9395
      %v9428 = vmul.f32 %v6867, %v3187
      %v9429 = vmul.f32 %v6868, %v3187
      %v9430 = vmul.f32 %v6869, %v3187
      %v9431 = vmul.f32 %v6870, %v3187
      %v9432 = vmul.f32 %v6871, %v3187
      %v9433 = vmul.f32 %v6872, %v3187
      %v9434 = vmul.f32 %v6873, %v3187
      %v9435 = vmul.f32 %v6874, %v3187
      %v9436 = vmul.f32 %v6875, %v3187
      %v9437 = vmul.f32 %v6876, %v3187
      %v9438 = vmul.f32 %v6877, %v3187
      %v9439 = vmul.f32 %v6878, %v3187
      %v9440 = vmul.f32 %v6879, %v3187
      %v9441 = vmul.f32 %v6880, %v3187
      %v9442 = vmul.f32 %v6881, %v3187
      %v9443 = vmul.f32 %v6882, %v3187
      %v9444 = vmul.f32 %v6883, %v3187
      %v9445 = vmul.f32 %v6884, %v3187
      %v9446 = vmul.f32 %v6885, %v3187
      %v9447 = vmul.f32 %v6886, %v3187
      %v9448 = vmul.f32 %v6887, %v3187
      %v9449 = vmul.f32 %v6888, %v3187
      %v9450 = vmul.f32 %v6889, %v3187
      %v9451 = vmul.f32 %v6890, %v3187
      %v9476 = vrot.slane %v9428, 3
      %v9477 = vrot.slane %v9429, 3
      %v9478 = vsel %vm892, %v9476, %v9477
      %v9479 = vrot.slane %v9430, 3
      %v9480 = vsel %vm892, %v9477, %v9479
      %v9481 = vrot.slane %v9431, 3
      %v9482 = vrot.slane %v9432, 3
      %v9483 = vsel %vm892, %v9481, %v9482
      %v9484 = vrot.slane %v9433, 3
      %v9485 = vsel %vm892, %v9482, %v9484
      %v9486 = vrot.slane %v9434, 3
      %v9487 = vrot.slane %v9435, 3
      %v9488 = vsel %vm892, %v9486, %v9487
      %v9489 = vrot.slane %v9436, 3
      %v9490 = vsel %vm892, %v9487, %v9489
      %v9491 = vrot.slane %v9437, 3
      %v9492 = vrot.slane %v9438, 3
      %v9493 = vsel %vm892, %v9491, %v9492
      %v9494 = vrot.slane %v9439, 3
      %v9495 = vsel %vm892, %v9492, %v9494
      %v9496 = vrot.slane %v9440, 3
      %v9497 = vrot.slane %v9441, 3
      %v9498 = vsel %vm892, %v9496, %v9497
      %v9499 = vrot.slane %v9442, 3
      %v9500 = vsel %vm892, %v9497, %v9499
      %v9501 = vrot.slane %v9443, 3
      %v9502 = vrot.slane %v9444, 3
      %v9503 = vsel %vm892, %v9501, %v9502
      %v9504 = vrot.slane %v9445, 3
      %v9505 = vsel %vm892, %v9502, %v9504
      %v9506 = vrot.slane %v9446, 3
      %v9507 = vrot.slane %v9447, 3
      %v9508 = vsel %vm892, %v9506, %v9507
      %v9509 = vrot.slane %v9448, 3
      %v9510 = vsel %vm892, %v9507, %v9509
      %v9511 = vrot.slane %v9449, 3
      %v9512 = vrot.slane %v9450, 3
      %v9513 = vsel %vm892, %v9511, %v9512
      %v9514 = vrot.slane %v9451, 3
      %v9515 = vsel %vm892, %v9512, %v9514
      %v9532 = vadd.f32 %v9412, %v9478
      %v9533 = vadd.f32 %v9413, %v9480
      %v9534 = vadd.f32 %v9414, %v9483
      %v9535 = vadd.f32 %v9415, %v9485
      %v9536 = vadd.f32 %v9416, %v9488
      %v9537 = vadd.f32 %v9417, %v9490
      %v9538 = vadd.f32 %v9418, %v9493
      %v9539 = vadd.f32 %v9419, %v9495
      %v9540 = vadd.f32 %v9420, %v9498
      %v9541 = vadd.f32 %v9421, %v9500
      %v9542 = vadd.f32 %v9422, %v9503
      %v9543 = vadd.f32 %v9423, %v9505
      %v9544 = vadd.f32 %v9424, %v9508
      %v9545 = vadd.f32 %v9425, %v9510
      %v9546 = vadd.f32 %v9426, %v9513
      %v9547 = vadd.f32 %v9427, %v9515
      %v9548 = vmul.f32 %v6867, %v3311
      %v9549 = vmul.f32 %v6868, %v3311
      %v9550 = vmul.f32 %v6869, %v3311
      %v9551 = vmul.f32 %v6870, %v3311
      %v9552 = vmul.f32 %v6871, %v3311
      %v9553 = vmul.f32 %v6872, %v3311
      %v9554 = vmul.f32 %v6873, %v3311
      %v9555 = vmul.f32 %v6874, %v3311
      %v9556 = vmul.f32 %v6875, %v3311
      %v9557 = vmul.f32 %v6876, %v3311
      %v9558 = vmul.f32 %v6877, %v3311
      %v9559 = vmul.f32 %v6878, %v3311
      %v9560 = vmul.f32 %v6879, %v3311
      %v9561 = vmul.f32 %v6880, %v3311
      %v9562 = vmul.f32 %v6881, %v3311
      %v9563 = vmul.f32 %v6882, %v3311
      %v9564 = vmul.f32 %v6883, %v3311
      %v9565 = vmul.f32 %v6884, %v3311
      %v9566 = vmul.f32 %v6885, %v3311
      %v9567 = vmul.f32 %v6886, %v3311
      %v9568 = vmul.f32 %v6887, %v3311
      %v9569 = vmul.f32 %v6888, %v3311
      %v9570 = vmul.f32 %v6889, %v3311
      %v9571 = vmul.f32 %v6890, %v3311
      %v9596 = vrot.slane %v9548, 4
      %v9597 = vrot.slane %v9549, 4
      %v9598 = vsel %vm1017, %v9596, %v9597
      %v9599 = vrot.slane %v9550, 4
      %v9600 = vsel %vm1017, %v9597, %v9599
      %v9601 = vrot.slane %v9551, 4
      %v9602 = vrot.slane %v9552, 4
      %v9603 = vsel %vm1017, %v9601, %v9602
      %v9604 = vrot.slane %v9553, 4
      %v9605 = vsel %vm1017, %v9602, %v9604
      %v9606 = vrot.slane %v9554, 4
      %v9607 = vrot.slane %v9555, 4
      %v9608 = vsel %vm1017, %v9606, %v9607
      %v9609 = vrot.slane %v9556, 4
      %v9610 = vsel %vm1017, %v9607, %v9609
      %v9611 = vrot.slane %v9557, 4
      %v9612 = vrot.slane %v9558, 4
      %v9613 = vsel %vm1017, %v9611, %v9612
      %v9614 = vrot.slane %v9559, 4
      %v9615 = vsel %vm1017, %v9612, %v9614
      %v9616 = vrot.slane %v9560, 4
      %v9617 = vrot.slane %v9561, 4
      %v9618 = vsel %vm1017, %v9616, %v9617
      %v9619 = vrot.slane %v9562, 4
      %v9620 = vsel %vm1017, %v9617, %v9619
      %v9621 = vrot.slane %v9563, 4
      %v9622 = vrot.slane %v9564, 4
      %v9623 = vsel %vm1017, %v9621, %v9622
      %v9624 = vrot.slane %v9565, 4
      %v9625 = vsel %vm1017, %v9622, %v9624
      %v9626 = vrot.slane %v9566, 4
      %v9627 = vrot.slane %v9567, 4
      %v9628 = vsel %vm1017, %v9626, %v9627
      %v9629 = vrot.slane %v9568, 4
      %v9630 = vsel %vm1017, %v9627, %v9629
      %v9631 = vrot.slane %v9569, 4
      %v9632 = vrot.slane %v9570, 4
      %v9633 = vsel %vm1017, %v9631, %v9632
      %v9634 = vrot.slane %v9571, 4
      %v9635 = vsel %vm1017, %v9632, %v9634
      %v9652 = vadd.f32 %v9532, %v9598
      %v9653 = vadd.f32 %v9533, %v9600
      %v9654 = vadd.f32 %v9534, %v9603
      %v9655 = vadd.f32 %v9535, %v9605
      %v9656 = vadd.f32 %v9536, %v9608
      %v9657 = vadd.f32 %v9537, %v9610
      %v9658 = vadd.f32 %v9538, %v9613
      %v9659 = vadd.f32 %v9539, %v9615
      %v9660 = vadd.f32 %v9540, %v9618
      %v9661 = vadd.f32 %v9541, %v9620
      %v9662 = vadd.f32 %v9542, %v9623
      %v9663 = vadd.f32 %v9543, %v9625
      %v9664 = vadd.f32 %v9544, %v9628
      %v9665 = vadd.f32 %v9545, %v9630
      %v9666 = vadd.f32 %v9546, %v9633
      %v9667 = vadd.f32 %v9547, %v9635
      %v9668 = vmul.f32 %v6867, %v3435
      %v9669 = vmul.f32 %v6868, %v3435
      %v9670 = vmul.f32 %v6869, %v3435
      %v9671 = vmul.f32 %v6870, %v3435
      %v9672 = vmul.f32 %v6871, %v3435
      %v9673 = vmul.f32 %v6872, %v3435
      %v9674 = vmul.f32 %v6873, %v3435
      %v9675 = vmul.f32 %v6874, %v3435
      %v9676 = vmul.f32 %v6875, %v3435
      %v9677 = vmul.f32 %v6876, %v3435
      %v9678 = vmul.f32 %v6877, %v3435
      %v9679 = vmul.f32 %v6878, %v3435
      %v9680 = vmul.f32 %v6879, %v3435
      %v9681 = vmul.f32 %v6880, %v3435
      %v9682 = vmul.f32 %v6881, %v3435
      %v9683 = vmul.f32 %v6882, %v3435
      %v9684 = vmul.f32 %v6883, %v3435
      %v9685 = vmul.f32 %v6884, %v3435
      %v9686 = vmul.f32 %v6885, %v3435
      %v9687 = vmul.f32 %v6886, %v3435
      %v9688 = vmul.f32 %v6887, %v3435
      %v9689 = vmul.f32 %v6888, %v3435
      %v9690 = vmul.f32 %v6889, %v3435
      %v9691 = vmul.f32 %v6890, %v3435
      %v9716 = vrot.slane %v9668, 5
      %v9717 = vrot.slane %v9669, 5
      %v9718 = vsel %vm1142, %v9716, %v9717
      %v9719 = vrot.slane %v9670, 5
      %v9720 = vsel %vm1142, %v9717, %v9719
      %v9721 = vrot.slane %v9671, 5
      %v9722 = vrot.slane %v9672, 5
      %v9723 = vsel %vm1142, %v9721, %v9722
      %v9724 = vrot.slane %v9673, 5
      %v9725 = vsel %vm1142, %v9722, %v9724
      %v9726 = vrot.slane %v9674, 5
      %v9727 = vrot.slane %v9675, 5
      %v9728 = vsel %vm1142, %v9726, %v9727
      %v9729 = vrot.slane %v9676, 5
      %v9730 = vsel %vm1142, %v9727, %v9729
      %v9731 = vrot.slane %v9677, 5
      %v9732 = vrot.slane %v9678, 5
      %v9733 = vsel %vm1142, %v9731, %v9732
      %v9734 = vrot.slane %v9679, 5
      %v9735 = vsel %vm1142, %v9732, %v9734
      %v9736 = vrot.slane %v9680, 5
      %v9737 = vrot.slane %v9681, 5
      %v9738 = vsel %vm1142, %v9736, %v9737
      %v9739 = vrot.slane %v9682, 5
      %v9740 = vsel %vm1142, %v9737, %v9739
      %v9741 = vrot.slane %v9683, 5
      %v9742 = vrot.slane %v9684, 5
      %v9743 = vsel %vm1142, %v9741, %v9742
      %v9744 = vrot.slane %v9685, 5
      %v9745 = vsel %vm1142, %v9742, %v9744
      %v9746 = vrot.slane %v9686, 5
      %v9747 = vrot.slane %v9687, 5
      %v9748 = vsel %vm1142, %v9746, %v9747
      %v9749 = vrot.slane %v9688, 5
      %v9750 = vsel %vm1142, %v9747, %v9749
      %v9751 = vrot.slane %v9689, 5
      %v9752 = vrot.slane %v9690, 5
      %v9753 = vsel %vm1142, %v9751, %v9752
      %v9754 = vrot.slane %v9691, 5
      %v9755 = vsel %vm1142, %v9752, %v9754
      %v9772 = vadd.f32 %v9652, %v9718
      %v9773 = vadd.f32 %v9653, %v9720
      %v9774 = vadd.f32 %v9654, %v9723
      %v9775 = vadd.f32 %v9655, %v9725
      %v9776 = vadd.f32 %v9656, %v9728
      %v9777 = vadd.f32 %v9657, %v9730
      %v9778 = vadd.f32 %v9658, %v9733
      %v9779 = vadd.f32 %v9659, %v9735
      %v9780 = vadd.f32 %v9660, %v9738
      %v9781 = vadd.f32 %v9661, %v9740
      %v9782 = vadd.f32 %v9662, %v9743
      %v9783 = vadd.f32 %v9663, %v9745
      %v9784 = vadd.f32 %v9664, %v9748
      %v9785 = vadd.f32 %v9665, %v9750
      %v9786 = vadd.f32 %v9666, %v9753
      %v9787 = vadd.f32 %v9667, %v9755
      %v9788 = vmul.f32 %v6867, %v3559
      %v9789 = vmul.f32 %v6868, %v3559
      %v9790 = vmul.f32 %v6869, %v3559
      %v9791 = vmul.f32 %v6870, %v3559
      %v9792 = vmul.f32 %v6871, %v3559
      %v9793 = vmul.f32 %v6872, %v3559
      %v9794 = vmul.f32 %v6873, %v3559
      %v9795 = vmul.f32 %v6874, %v3559
      %v9796 = vmul.f32 %v6875, %v3559
      %v9797 = vmul.f32 %v6876, %v3559
      %v9798 = vmul.f32 %v6877, %v3559
      %v9799 = vmul.f32 %v6878, %v3559
      %v9800 = vmul.f32 %v6879, %v3559
      %v9801 = vmul.f32 %v6880, %v3559
      %v9802 = vmul.f32 %v6881, %v3559
      %v9803 = vmul.f32 %v6882, %v3559
      %v9804 = vmul.f32 %v6883, %v3559
      %v9805 = vmul.f32 %v6884, %v3559
      %v9806 = vmul.f32 %v6885, %v3559
      %v9807 = vmul.f32 %v6886, %v3559
      %v9808 = vmul.f32 %v6887, %v3559
      %v9809 = vmul.f32 %v6888, %v3559
      %v9810 = vmul.f32 %v6889, %v3559
      %v9811 = vmul.f32 %v6890, %v3559
      %v9836 = vrot.slane %v9788, 6
      %v9837 = vrot.slane %v9789, 6
      %v9838 = vsel %vm1267, %v9836, %v9837
      %v9839 = vrot.slane %v9790, 6
      %v9840 = vsel %vm1267, %v9837, %v9839
      %v9841 = vrot.slane %v9791, 6
      %v9842 = vrot.slane %v9792, 6
      %v9843 = vsel %vm1267, %v9841, %v9842
      %v9844 = vrot.slane %v9793, 6
      %v9845 = vsel %vm1267, %v9842, %v9844
      %v9846 = vrot.slane %v9794, 6
      %v9847 = vrot.slane %v9795, 6
      %v9848 = vsel %vm1267, %v9846, %v9847
      %v9849 = vrot.slane %v9796, 6
      %v9850 = vsel %vm1267, %v9847, %v9849
      %v9851 = vrot.slane %v9797, 6
      %v9852 = vrot.slane %v9798, 6
      %v9853 = vsel %vm1267, %v9851, %v9852
      %v9854 = vrot.slane %v9799, 6
      %v9855 = vsel %vm1267, %v9852, %v9854
      %v9856 = vrot.slane %v9800, 6
      %v9857 = vrot.slane %v9801, 6
      %v9858 = vsel %vm1267, %v9856, %v9857
      %v9859 = vrot.slane %v9802, 6
      %v9860 = vsel %vm1267, %v9857, %v9859
      %v9861 = vrot.slane %v9803, 6
      %v9862 = vrot.slane %v9804, 6
      %v9863 = vsel %vm1267, %v9861, %v9862
      %v9864 = vrot.slane %v9805, 6
      %v9865 = vsel %vm1267, %v9862, %v9864
      %v9866 = vrot.slane %v9806, 6
      %v9867 = vrot.slane %v9807, 6
      %v9868 = vsel %vm1267, %v9866, %v9867
      %v9869 = vrot.slane %v9808, 6
      %v9870 = vsel %vm1267, %v9867, %v9869
      %v9871 = vrot.slane %v9809, 6
      %v9872 = vrot.slane %v9810, 6
      %v9873 = vsel %vm1267, %v9871, %v9872
      %v9874 = vrot.slane %v9811, 6
      %v9875 = vsel %vm1267, %v9872, %v9874
      %v9892 = vadd.f32 %v9772, %v9838
      %v9893 = vadd.f32 %v9773, %v9840
      %v9894 = vadd.f32 %v9774, %v9843
      %v9895 = vadd.f32 %v9775, %v9845
      %v9896 = vadd.f32 %v9776, %v9848
      %v9897 = vadd.f32 %v9777, %v9850
      %v9898 = vadd.f32 %v9778, %v9853
      %v9899 = vadd.f32 %v9779, %v9855
      %v9900 = vadd.f32 %v9780, %v9858
      %v9901 = vadd.f32 %v9781, %v9860
      %v9902 = vadd.f32 %v9782, %v9863
      %v9903 = vadd.f32 %v9783, %v9865
      %v9904 = vadd.f32 %v9784, %v9868
      %v9905 = vadd.f32 %v9785, %v9870
      %v9906 = vadd.f32 %v9786, %v9873
      %v9907 = vadd.f32 %v9787, %v9875
      %v9908 = vmul.f32 %v6870, %v3683
      %v9909 = vmul.f32 %v6871, %v3683
      %v9910 = vmul.f32 %v6873, %v3683
      %v9911 = vmul.f32 %v6874, %v3683
      %v9912 = vmul.f32 %v6876, %v3683
      %v9913 = vmul.f32 %v6877, %v3683
      %v9914 = vmul.f32 %v6879, %v3683
      %v9915 = vmul.f32 %v6880, %v3683
      %v9916 = vmul.f32 %v6882, %v3683
      %v9917 = vmul.f32 %v6883, %v3683
      %v9918 = vmul.f32 %v6885, %v3683
      %v9919 = vmul.f32 %v6886, %v3683
      %v9920 = vmul.f32 %v6888, %v3683
      %v9921 = vmul.f32 %v6889, %v3683
      %v9922 = vmul.f32 %v6891, %v3683
      %v9923 = vmul.f32 %v6892, %v3683
      %v9924 = vadd.f32 %v9892, %v9908
      %v9925 = vadd.f32 %v9893, %v9909
      %v9926 = vadd.f32 %v9894, %v9910
      %v9927 = vadd.f32 %v9895, %v9911
      %v9928 = vadd.f32 %v9896, %v9912
      %v9929 = vadd.f32 %v9897, %v9913
      %v9930 = vadd.f32 %v9898, %v9914
      %v9931 = vadd.f32 %v9899, %v9915
      %v9932 = vadd.f32 %v9900, %v9916
      %v9933 = vadd.f32 %v9901, %v9917
      %v9934 = vadd.f32 %v9902, %v9918
      %v9935 = vadd.f32 %v9903, %v9919
      %v9936 = vadd.f32 %v9904, %v9920
      %v9937 = vadd.f32 %v9905, %v9921
      %v9938 = vadd.f32 %v9906, %v9922
      %v9939 = vadd.f32 %v9907, %v9923
      %v9940 = vmul.f32 %v6870, %v3719
      %v9941 = vmul.f32 %v6871, %v3719
      %v9942 = vmul.f32 %v6872, %v3719
      %v9943 = vmul.f32 %v6873, %v3719
      %v9944 = vmul.f32 %v6874, %v3719
      %v9945 = vmul.f32 %v6875, %v3719
      %v9946 = vmul.f32 %v6876, %v3719
      %v9947 = vmul.f32 %v6877, %v3719
      %v9948 = vmul.f32 %v6878, %v3719
      %v9949 = vmul.f32 %v6879, %v3719
      %v9950 = vmul.f32 %v6880, %v3719
      %v9951 = vmul.f32 %v6881, %v3719
      %v9952 = vmul.f32 %v6882, %v3719
      %v9953 = vmul.f32 %v6883, %v3719
      %v9954 = vmul.f32 %v6884, %v3719
      %v9955 = vmul.f32 %v6885, %v3719
      %v9956 = vmul.f32 %v6886, %v3719
      %v9957 = vmul.f32 %v6887, %v3719
      %v9958 = vmul.f32 %v6888, %v3719
      %v9959 = vmul.f32 %v6889, %v3719
      %v9960 = vmul.f32 %v6890, %v3719
      %v9961 = vmul.f32 %v6891, %v3719
      %v9962 = vmul.f32 %v6892, %v3719
      %v9963 = vmul.f32 %v6893, %v3719
      %v9988 = vrot.slane %v9940, 1
      %v9989 = vrot.slane %v9941, 1
      %v9990 = vsel %vm642, %v9988, %v9989
      %v9991 = vrot.slane %v9942, 1
      %v9992 = vsel %vm642, %v9989, %v9991
      %v9993 = vrot.slane %v9943, 1
      %v9994 = vrot.slane %v9944, 1
      %v9995 = vsel %vm642, %v9993, %v9994
      %v9996 = vrot.slane %v9945, 1
      %v9997 = vsel %vm642, %v9994, %v9996
      %v9998 = vrot.slane %v9946, 1
      %v9999 = vrot.slane %v9947, 1
      %v10000 = vsel %vm642, %v9998, %v9999
      %v10001 = vrot.slane %v9948, 1
      %v10002 = vsel %vm642, %v9999, %v10001
      %v10003 = vrot.slane %v9949, 1
      %v10004 = vrot.slane %v9950, 1
      %v10005 = vsel %vm642, %v10003, %v10004
      %v10006 = vrot.slane %v9951, 1
      %v10007 = vsel %vm642, %v10004, %v10006
      %v10008 = vrot.slane %v9952, 1
      %v10009 = vrot.slane %v9953, 1
      %v10010 = vsel %vm642, %v10008, %v10009
      %v10011 = vrot.slane %v9954, 1
      %v10012 = vsel %vm642, %v10009, %v10011
      %v10013 = vrot.slane %v9955, 1
      %v10014 = vrot.slane %v9956, 1
      %v10015 = vsel %vm642, %v10013, %v10014
      %v10016 = vrot.slane %v9957, 1
      %v10017 = vsel %vm642, %v10014, %v10016
      %v10018 = vrot.slane %v9958, 1
      %v10019 = vrot.slane %v9959, 1
      %v10020 = vsel %vm642, %v10018, %v10019
      %v10021 = vrot.slane %v9960, 1
      %v10022 = vsel %vm642, %v10019, %v10021
      %v10023 = vrot.slane %v9961, 1
      %v10024 = vrot.slane %v9962, 1
      %v10025 = vsel %vm642, %v10023, %v10024
      %v10026 = vrot.slane %v9963, 1
      %v10027 = vsel %vm642, %v10024, %v10026
      %v10044 = vadd.f32 %v9924, %v9990
      %v10045 = vadd.f32 %v9925, %v9992
      %v10046 = vadd.f32 %v9926, %v9995
      %v10047 = vadd.f32 %v9927, %v9997
      %v10048 = vadd.f32 %v9928, %v10000
      %v10049 = vadd.f32 %v9929, %v10002
      %v10050 = vadd.f32 %v9930, %v10005
      %v10051 = vadd.f32 %v9931, %v10007
      %v10052 = vadd.f32 %v9932, %v10010
      %v10053 = vadd.f32 %v9933, %v10012
      %v10054 = vadd.f32 %v9934, %v10015
      %v10055 = vadd.f32 %v9935, %v10017
      %v10056 = vadd.f32 %v9936, %v10020
      %v10057 = vadd.f32 %v9937, %v10022
      %v10058 = vadd.f32 %v9938, %v10025
      %v10059 = vadd.f32 %v9939, %v10027
      %v10060 = vmul.f32 %v6870, %v3843
      %v10061 = vmul.f32 %v6871, %v3843
      %v10062 = vmul.f32 %v6872, %v3843
      %v10063 = vmul.f32 %v6873, %v3843
      %v10064 = vmul.f32 %v6874, %v3843
      %v10065 = vmul.f32 %v6875, %v3843
      %v10066 = vmul.f32 %v6876, %v3843
      %v10067 = vmul.f32 %v6877, %v3843
      %v10068 = vmul.f32 %v6878, %v3843
      %v10069 = vmul.f32 %v6879, %v3843
      %v10070 = vmul.f32 %v6880, %v3843
      %v10071 = vmul.f32 %v6881, %v3843
      %v10072 = vmul.f32 %v6882, %v3843
      %v10073 = vmul.f32 %v6883, %v3843
      %v10074 = vmul.f32 %v6884, %v3843
      %v10075 = vmul.f32 %v6885, %v3843
      %v10076 = vmul.f32 %v6886, %v3843
      %v10077 = vmul.f32 %v6887, %v3843
      %v10078 = vmul.f32 %v6888, %v3843
      %v10079 = vmul.f32 %v6889, %v3843
      %v10080 = vmul.f32 %v6890, %v3843
      %v10081 = vmul.f32 %v6891, %v3843
      %v10082 = vmul.f32 %v6892, %v3843
      %v10083 = vmul.f32 %v6893, %v3843
      %v10108 = vrot.slane %v10060, 2
      %v10109 = vrot.slane %v10061, 2
      %v10110 = vsel %vm767, %v10108, %v10109
      %v10111 = vrot.slane %v10062, 2
      %v10112 = vsel %vm767, %v10109, %v10111
      %v10113 = vrot.slane %v10063, 2
      %v10114 = vrot.slane %v10064, 2
      %v10115 = vsel %vm767, %v10113, %v10114
      %v10116 = vrot.slane %v10065, 2
      %v10117 = vsel %vm767, %v10114, %v10116
      %v10118 = vrot.slane %v10066, 2
      %v10119 = vrot.slane %v10067, 2
      %v10120 = vsel %vm767, %v10118, %v10119
      %v10121 = vrot.slane %v10068, 2
      %v10122 = vsel %vm767, %v10119, %v10121
      %v10123 = vrot.slane %v10069, 2
      %v10124 = vrot.slane %v10070, 2
      %v10125 = vsel %vm767, %v10123, %v10124
      %v10126 = vrot.slane %v10071, 2
      %v10127 = vsel %vm767, %v10124, %v10126
      %v10128 = vrot.slane %v10072, 2
      %v10129 = vrot.slane %v10073, 2
      %v10130 = vsel %vm767, %v10128, %v10129
      %v10131 = vrot.slane %v10074, 2
      %v10132 = vsel %vm767, %v10129, %v10131
      %v10133 = vrot.slane %v10075, 2
      %v10134 = vrot.slane %v10076, 2
      %v10135 = vsel %vm767, %v10133, %v10134
      %v10136 = vrot.slane %v10077, 2
      %v10137 = vsel %vm767, %v10134, %v10136
      %v10138 = vrot.slane %v10078, 2
      %v10139 = vrot.slane %v10079, 2
      %v10140 = vsel %vm767, %v10138, %v10139
      %v10141 = vrot.slane %v10080, 2
      %v10142 = vsel %vm767, %v10139, %v10141
      %v10143 = vrot.slane %v10081, 2
      %v10144 = vrot.slane %v10082, 2
      %v10145 = vsel %vm767, %v10143, %v10144
      %v10146 = vrot.slane %v10083, 2
      %v10147 = vsel %vm767, %v10144, %v10146
      %v10164 = vadd.f32 %v10044, %v10110
      %v10165 = vadd.f32 %v10045, %v10112
      %v10166 = vadd.f32 %v10046, %v10115
      %v10167 = vadd.f32 %v10047, %v10117
      %v10168 = vadd.f32 %v10048, %v10120
      %v10169 = vadd.f32 %v10049, %v10122
      %v10170 = vadd.f32 %v10050, %v10125
      %v10171 = vadd.f32 %v10051, %v10127
      %v10172 = vadd.f32 %v10052, %v10130
      %v10173 = vadd.f32 %v10053, %v10132
      %v10174 = vadd.f32 %v10054, %v10135
      %v10175 = vadd.f32 %v10055, %v10137
      %v10176 = vadd.f32 %v10056, %v10140
      %v10177 = vadd.f32 %v10057, %v10142
      %v10178 = vadd.f32 %v10058, %v10145
      %v10179 = vadd.f32 %v10059, %v10147
      %v10180 = vmul.f32 %v6870, %v3967
      %v10181 = vmul.f32 %v6871, %v3967
      %v10182 = vmul.f32 %v6872, %v3967
      %v10183 = vmul.f32 %v6873, %v3967
      %v10184 = vmul.f32 %v6874, %v3967
      %v10185 = vmul.f32 %v6875, %v3967
      %v10186 = vmul.f32 %v6876, %v3967
      %v10187 = vmul.f32 %v6877, %v3967
      %v10188 = vmul.f32 %v6878, %v3967
      %v10189 = vmul.f32 %v6879, %v3967
      %v10190 = vmul.f32 %v6880, %v3967
      %v10191 = vmul.f32 %v6881, %v3967
      %v10192 = vmul.f32 %v6882, %v3967
      %v10193 = vmul.f32 %v6883, %v3967
      %v10194 = vmul.f32 %v6884, %v3967
      %v10195 = vmul.f32 %v6885, %v3967
      %v10196 = vmul.f32 %v6886, %v3967
      %v10197 = vmul.f32 %v6887, %v3967
      %v10198 = vmul.f32 %v6888, %v3967
      %v10199 = vmul.f32 %v6889, %v3967
      %v10200 = vmul.f32 %v6890, %v3967
      %v10201 = vmul.f32 %v6891, %v3967
      %v10202 = vmul.f32 %v6892, %v3967
      %v10203 = vmul.f32 %v6893, %v3967
      %v10228 = vrot.slane %v10180, 3
      %v10229 = vrot.slane %v10181, 3
      %v10230 = vsel %vm892, %v10228, %v10229
      %v10231 = vrot.slane %v10182, 3
      %v10232 = vsel %vm892, %v10229, %v10231
      %v10233 = vrot.slane %v10183, 3
      %v10234 = vrot.slane %v10184, 3
      %v10235 = vsel %vm892, %v10233, %v10234
      %v10236 = vrot.slane %v10185, 3
      %v10237 = vsel %vm892, %v10234, %v10236
      %v10238 = vrot.slane %v10186, 3
      %v10239 = vrot.slane %v10187, 3
      %v10240 = vsel %vm892, %v10238, %v10239
      %v10241 = vrot.slane %v10188, 3
      %v10242 = vsel %vm892, %v10239, %v10241
      %v10243 = vrot.slane %v10189, 3
      %v10244 = vrot.slane %v10190, 3
      %v10245 = vsel %vm892, %v10243, %v10244
      %v10246 = vrot.slane %v10191, 3
      %v10247 = vsel %vm892, %v10244, %v10246
      %v10248 = vrot.slane %v10192, 3
      %v10249 = vrot.slane %v10193, 3
      %v10250 = vsel %vm892, %v10248, %v10249
      %v10251 = vrot.slane %v10194, 3
      %v10252 = vsel %vm892, %v10249, %v10251
      %v10253 = vrot.slane %v10195, 3
      %v10254 = vrot.slane %v10196, 3
      %v10255 = vsel %vm892, %v10253, %v10254
      %v10256 = vrot.slane %v10197, 3
      %v10257 = vsel %vm892, %v10254, %v10256
      %v10258 = vrot.slane %v10198, 3
      %v10259 = vrot.slane %v10199, 3
      %v10260 = vsel %vm892, %v10258, %v10259
      %v10261 = vrot.slane %v10200, 3
      %v10262 = vsel %vm892, %v10259, %v10261
      %v10263 = vrot.slane %v10201, 3
      %v10264 = vrot.slane %v10202, 3
      %v10265 = vsel %vm892, %v10263, %v10264
      %v10266 = vrot.slane %v10203, 3
      %v10267 = vsel %vm892, %v10264, %v10266
      %v10284 = vadd.f32 %v10164, %v10230
      %v10285 = vadd.f32 %v10165, %v10232
      %v10286 = vadd.f32 %v10166, %v10235
      %v10287 = vadd.f32 %v10167, %v10237
      %v10288 = vadd.f32 %v10168, %v10240
      %v10289 = vadd.f32 %v10169, %v10242
      %v10290 = vadd.f32 %v10170, %v10245
      %v10291 = vadd.f32 %v10171, %v10247
      %v10292 = vadd.f32 %v10172, %v10250
      %v10293 = vadd.f32 %v10173, %v10252
      %v10294 = vadd.f32 %v10174, %v10255
      %v10295 = vadd.f32 %v10175, %v10257
      %v10296 = vadd.f32 %v10176, %v10260
      %v10297 = vadd.f32 %v10177, %v10262
      %v10298 = vadd.f32 %v10178, %v10265
      %v10299 = vadd.f32 %v10179, %v10267
      %v10300 = vmul.f32 %v6870, %v4091
      %v10301 = vmul.f32 %v6871, %v4091
      %v10302 = vmul.f32 %v6872, %v4091
      %v10303 = vmul.f32 %v6873, %v4091
      %v10304 = vmul.f32 %v6874, %v4091
      %v10305 = vmul.f32 %v6875, %v4091
      %v10306 = vmul.f32 %v6876, %v4091
      %v10307 = vmul.f32 %v6877, %v4091
      %v10308 = vmul.f32 %v6878, %v4091
      %v10309 = vmul.f32 %v6879, %v4091
      %v10310 = vmul.f32 %v6880, %v4091
      %v10311 = vmul.f32 %v6881, %v4091
      %v10312 = vmul.f32 %v6882, %v4091
      %v10313 = vmul.f32 %v6883, %v4091
      %v10314 = vmul.f32 %v6884, %v4091
      %v10315 = vmul.f32 %v6885, %v4091
      %v10316 = vmul.f32 %v6886, %v4091
      %v10317 = vmul.f32 %v6887, %v4091
      %v10318 = vmul.f32 %v6888, %v4091
      %v10319 = vmul.f32 %v6889, %v4091
      %v10320 = vmul.f32 %v6890, %v4091
      %v10321 = vmul.f32 %v6891, %v4091
      %v10322 = vmul.f32 %v6892, %v4091
      %v10323 = vmul.f32 %v6893, %v4091
      %v10348 = vrot.slane %v10300, 4
      %v10349 = vrot.slane %v10301, 4
      %v10350 = vsel %vm1017, %v10348, %v10349
      %v10351 = vrot.slane %v10302, 4
      %v10352 = vsel %vm1017, %v10349, %v10351
      %v10353 = vrot.slane %v10303, 4
      %v10354 = vrot.slane %v10304, 4
      %v10355 = vsel %vm1017, %v10353, %v10354
      %v10356 = vrot.slane %v10305, 4
      %v10357 = vsel %vm1017, %v10354, %v10356
      %v10358 = vrot.slane %v10306, 4
      %v10359 = vrot.slane %v10307, 4
      %v10360 = vsel %vm1017, %v10358, %v10359
      %v10361 = vrot.slane %v10308, 4
      %v10362 = vsel %vm1017, %v10359, %v10361
      %v10363 = vrot.slane %v10309, 4
      %v10364 = vrot.slane %v10310, 4
      %v10365 = vsel %vm1017, %v10363, %v10364
      %v10366 = vrot.slane %v10311, 4
      %v10367 = vsel %vm1017, %v10364, %v10366
      %v10368 = vrot.slane %v10312, 4
      %v10369 = vrot.slane %v10313, 4
      %v10370 = vsel %vm1017, %v10368, %v10369
      %v10371 = vrot.slane %v10314, 4
      %v10372 = vsel %vm1017, %v10369, %v10371
      %v10373 = vrot.slane %v10315, 4
      %v10374 = vrot.slane %v10316, 4
      %v10375 = vsel %vm1017, %v10373, %v10374
      %v10376 = vrot.slane %v10317, 4
      %v10377 = vsel %vm1017, %v10374, %v10376
      %v10378 = vrot.slane %v10318, 4
      %v10379 = vrot.slane %v10319, 4
      %v10380 = vsel %vm1017, %v10378, %v10379
      %v10381 = vrot.slane %v10320, 4
      %v10382 = vsel %vm1017, %v10379, %v10381
      %v10383 = vrot.slane %v10321, 4
      %v10384 = vrot.slane %v10322, 4
      %v10385 = vsel %vm1017, %v10383, %v10384
      %v10386 = vrot.slane %v10323, 4
      %v10387 = vsel %vm1017, %v10384, %v10386
      %v10404 = vadd.f32 %v10284, %v10350
      %v10405 = vadd.f32 %v10285, %v10352
      %v10406 = vadd.f32 %v10286, %v10355
      %v10407 = vadd.f32 %v10287, %v10357
      %v10408 = vadd.f32 %v10288, %v10360
      %v10409 = vadd.f32 %v10289, %v10362
      %v10410 = vadd.f32 %v10290, %v10365
      %v10411 = vadd.f32 %v10291, %v10367
      %v10412 = vadd.f32 %v10292, %v10370
      %v10413 = vadd.f32 %v10293, %v10372
      %v10414 = vadd.f32 %v10294, %v10375
      %v10415 = vadd.f32 %v10295, %v10377
      %v10416 = vadd.f32 %v10296, %v10380
      %v10417 = vadd.f32 %v10297, %v10382
      %v10418 = vadd.f32 %v10298, %v10385
      %v10419 = vadd.f32 %v10299, %v10387
      %v10420 = vmul.f32 %v6870, %v4215
      %v10421 = vmul.f32 %v6871, %v4215
      %v10422 = vmul.f32 %v6872, %v4215
      %v10423 = vmul.f32 %v6873, %v4215
      %v10424 = vmul.f32 %v6874, %v4215
      %v10425 = vmul.f32 %v6875, %v4215
      %v10426 = vmul.f32 %v6876, %v4215
      %v10427 = vmul.f32 %v6877, %v4215
      %v10428 = vmul.f32 %v6878, %v4215
      %v10429 = vmul.f32 %v6879, %v4215
      %v10430 = vmul.f32 %v6880, %v4215
      %v10431 = vmul.f32 %v6881, %v4215
      %v10432 = vmul.f32 %v6882, %v4215
      %v10433 = vmul.f32 %v6883, %v4215
      %v10434 = vmul.f32 %v6884, %v4215
      %v10435 = vmul.f32 %v6885, %v4215
      %v10436 = vmul.f32 %v6886, %v4215
      %v10437 = vmul.f32 %v6887, %v4215
      %v10438 = vmul.f32 %v6888, %v4215
      %v10439 = vmul.f32 %v6889, %v4215
      %v10440 = vmul.f32 %v6890, %v4215
      %v10441 = vmul.f32 %v6891, %v4215
      %v10442 = vmul.f32 %v6892, %v4215
      %v10443 = vmul.f32 %v6893, %v4215
      %v10468 = vrot.slane %v10420, 5
      %v10469 = vrot.slane %v10421, 5
      %v10470 = vsel %vm1142, %v10468, %v10469
      %v10471 = vrot.slane %v10422, 5
      %v10472 = vsel %vm1142, %v10469, %v10471
      %v10473 = vrot.slane %v10423, 5
      %v10474 = vrot.slane %v10424, 5
      %v10475 = vsel %vm1142, %v10473, %v10474
      %v10476 = vrot.slane %v10425, 5
      %v10477 = vsel %vm1142, %v10474, %v10476
      %v10478 = vrot.slane %v10426, 5
      %v10479 = vrot.slane %v10427, 5
      %v10480 = vsel %vm1142, %v10478, %v10479
      %v10481 = vrot.slane %v10428, 5
      %v10482 = vsel %vm1142, %v10479, %v10481
      %v10483 = vrot.slane %v10429, 5
      %v10484 = vrot.slane %v10430, 5
      %v10485 = vsel %vm1142, %v10483, %v10484
      %v10486 = vrot.slane %v10431, 5
      %v10487 = vsel %vm1142, %v10484, %v10486
      %v10488 = vrot.slane %v10432, 5
      %v10489 = vrot.slane %v10433, 5
      %v10490 = vsel %vm1142, %v10488, %v10489
      %v10491 = vrot.slane %v10434, 5
      %v10492 = vsel %vm1142, %v10489, %v10491
      %v10493 = vrot.slane %v10435, 5
      %v10494 = vrot.slane %v10436, 5
      %v10495 = vsel %vm1142, %v10493, %v10494
      %v10496 = vrot.slane %v10437, 5
      %v10497 = vsel %vm1142, %v10494, %v10496
      %v10498 = vrot.slane %v10438, 5
      %v10499 = vrot.slane %v10439, 5
      %v10500 = vsel %vm1142, %v10498, %v10499
      %v10501 = vrot.slane %v10440, 5
      %v10502 = vsel %vm1142, %v10499, %v10501
      %v10503 = vrot.slane %v10441, 5
      %v10504 = vrot.slane %v10442, 5
      %v10505 = vsel %vm1142, %v10503, %v10504
      %v10506 = vrot.slane %v10443, 5
      %v10507 = vsel %vm1142, %v10504, %v10506
      %v10524 = vadd.f32 %v10404, %v10470
      %v10525 = vadd.f32 %v10405, %v10472
      %v10526 = vadd.f32 %v10406, %v10475
      %v10527 = vadd.f32 %v10407, %v10477
      %v10528 = vadd.f32 %v10408, %v10480
      %v10529 = vadd.f32 %v10409, %v10482
      %v10530 = vadd.f32 %v10410, %v10485
      %v10531 = vadd.f32 %v10411, %v10487
      %v10532 = vadd.f32 %v10412, %v10490
      %v10533 = vadd.f32 %v10413, %v10492
      %v10534 = vadd.f32 %v10414, %v10495
      %v10535 = vadd.f32 %v10415, %v10497
      %v10536 = vadd.f32 %v10416, %v10500
      %v10537 = vadd.f32 %v10417, %v10502
      %v10538 = vadd.f32 %v10418, %v10505
      %v10539 = vadd.f32 %v10419, %v10507
      %v10540 = vmul.f32 %v6870, %v4339
      %v10541 = vmul.f32 %v6871, %v4339
      %v10542 = vmul.f32 %v6872, %v4339
      %v10543 = vmul.f32 %v6873, %v4339
      %v10544 = vmul.f32 %v6874, %v4339
      %v10545 = vmul.f32 %v6875, %v4339
      %v10546 = vmul.f32 %v6876, %v4339
      %v10547 = vmul.f32 %v6877, %v4339
      %v10548 = vmul.f32 %v6878, %v4339
      %v10549 = vmul.f32 %v6879, %v4339
      %v10550 = vmul.f32 %v6880, %v4339
      %v10551 = vmul.f32 %v6881, %v4339
      %v10552 = vmul.f32 %v6882, %v4339
      %v10553 = vmul.f32 %v6883, %v4339
      %v10554 = vmul.f32 %v6884, %v4339
      %v10555 = vmul.f32 %v6885, %v4339
      %v10556 = vmul.f32 %v6886, %v4339
      %v10557 = vmul.f32 %v6887, %v4339
      %v10558 = vmul.f32 %v6888, %v4339
      %v10559 = vmul.f32 %v6889, %v4339
      %v10560 = vmul.f32 %v6890, %v4339
      %v10561 = vmul.f32 %v6891, %v4339
      %v10562 = vmul.f32 %v6892, %v4339
      %v10563 = vmul.f32 %v6893, %v4339
      %v10588 = vrot.slane %v10540, 6
      %v10589 = vrot.slane %v10541, 6
      %v10590 = vsel %vm1267, %v10588, %v10589
      %v10591 = vrot.slane %v10542, 6
      %v10592 = vsel %vm1267, %v10589, %v10591
      %v10593 = vrot.slane %v10543, 6
      %v10594 = vrot.slane %v10544, 6
      %v10595 = vsel %vm1267, %v10593, %v10594
      %v10596 = vrot.slane %v10545, 6
      %v10597 = vsel %vm1267, %v10594, %v10596
      %v10598 = vrot.slane %v10546, 6
      %v10599 = vrot.slane %v10547, 6
      %v10600 = vsel %vm1267, %v10598, %v10599
      %v10601 = vrot.slane %v10548, 6
      %v10602 = vsel %vm1267, %v10599, %v10601
      %v10603 = vrot.slane %v10549, 6
      %v10604 = vrot.slane %v10550, 6
      %v10605 = vsel %vm1267, %v10603, %v10604
      %v10606 = vrot.slane %v10551, 6
      %v10607 = vsel %vm1267, %v10604, %v10606
      %v10608 = vrot.slane %v10552, 6
      %v10609 = vrot.slane %v10553, 6
      %v10610 = vsel %vm1267, %v10608, %v10609
      %v10611 = vrot.slane %v10554, 6
      %v10612 = vsel %vm1267, %v10609, %v10611
      %v10613 = vrot.slane %v10555, 6
      %v10614 = vrot.slane %v10556, 6
      %v10615 = vsel %vm1267, %v10613, %v10614
      %v10616 = vrot.slane %v10557, 6
      %v10617 = vsel %vm1267, %v10614, %v10616
      %v10618 = vrot.slane %v10558, 6
      %v10619 = vrot.slane %v10559, 6
      %v10620 = vsel %vm1267, %v10618, %v10619
      %v10621 = vrot.slane %v10560, 6
      %v10622 = vsel %vm1267, %v10619, %v10621
      %v10623 = vrot.slane %v10561, 6
      %v10624 = vrot.slane %v10562, 6
      %v10625 = vsel %vm1267, %v10623, %v10624
      %v10626 = vrot.slane %v10563, 6
      %v10627 = vsel %vm1267, %v10624, %v10626
      %v10644 = vadd.f32 %v10524, %v10590
      %v10645 = vadd.f32 %v10525, %v10592
      %v10646 = vadd.f32 %v10526, %v10595
      %v10647 = vadd.f32 %v10527, %v10597
      %v10648 = vadd.f32 %v10528, %v10600
      %v10649 = vadd.f32 %v10529, %v10602
      %v10650 = vadd.f32 %v10530, %v10605
      %v10651 = vadd.f32 %v10531, %v10607
      %v10652 = vadd.f32 %v10532, %v10610
      %v10653 = vadd.f32 %v10533, %v10612
      %v10654 = vadd.f32 %v10534, %v10615
      %v10655 = vadd.f32 %v10535, %v10617
      %v10656 = vadd.f32 %v10536, %v10620
      %v10657 = vadd.f32 %v10537, %v10622
      %v10658 = vadd.f32 %v10538, %v10625
      %v10659 = vadd.f32 %v10539, %v10627
      %v10660 = vmul.f32 %v6873, %v4463
      %v10661 = vmul.f32 %v6874, %v4463
      %v10662 = vmul.f32 %v6876, %v4463
      %v10663 = vmul.f32 %v6877, %v4463
      %v10664 = vmul.f32 %v6879, %v4463
      %v10665 = vmul.f32 %v6880, %v4463
      %v10666 = vmul.f32 %v6882, %v4463
      %v10667 = vmul.f32 %v6883, %v4463
      %v10668 = vmul.f32 %v6885, %v4463
      %v10669 = vmul.f32 %v6886, %v4463
      %v10670 = vmul.f32 %v6888, %v4463
      %v10671 = vmul.f32 %v6889, %v4463
      %v10672 = vmul.f32 %v6891, %v4463
      %v10673 = vmul.f32 %v6892, %v4463
      %v10674 = vmul.f32 %v6894, %v4463
      %v10675 = vmul.f32 %v6895, %v4463
      %v10676 = vadd.f32 %v10644, %v10660
      %v10677 = vadd.f32 %v10645, %v10661
      %v10678 = vadd.f32 %v10646, %v10662
      %v10679 = vadd.f32 %v10647, %v10663
      %v10680 = vadd.f32 %v10648, %v10664
      %v10681 = vadd.f32 %v10649, %v10665
      %v10682 = vadd.f32 %v10650, %v10666
      %v10683 = vadd.f32 %v10651, %v10667
      %v10684 = vadd.f32 %v10652, %v10668
      %v10685 = vadd.f32 %v10653, %v10669
      %v10686 = vadd.f32 %v10654, %v10670
      %v10687 = vadd.f32 %v10655, %v10671
      %v10688 = vadd.f32 %v10656, %v10672
      %v10689 = vadd.f32 %v10657, %v10673
      %v10690 = vadd.f32 %v10658, %v10674
      %v10691 = vadd.f32 %v10659, %v10675
      %v10692 = vmul.f32 %v6873, %v4499
      %v10693 = vmul.f32 %v6874, %v4499
      %v10694 = vmul.f32 %v6875, %v4499
      %v10695 = vmul.f32 %v6876, %v4499
      %v10696 = vmul.f32 %v6877, %v4499
      %v10697 = vmul.f32 %v6878, %v4499
      %v10698 = vmul.f32 %v6879, %v4499
      %v10699 = vmul.f32 %v6880, %v4499
      %v10700 = vmul.f32 %v6881, %v4499
      %v10701 = vmul.f32 %v6882, %v4499
      %v10702 = vmul.f32 %v6883, %v4499
      %v10703 = vmul.f32 %v6884, %v4499
      %v10704 = vmul.f32 %v6885, %v4499
      %v10705 = vmul.f32 %v6886, %v4499
      %v10706 = vmul.f32 %v6887, %v4499
      %v10707 = vmul.f32 %v6888, %v4499
      %v10708 = vmul.f32 %v6889, %v4499
      %v10709 = vmul.f32 %v6890, %v4499
      %v10710 = vmul.f32 %v6891, %v4499
      %v10711 = vmul.f32 %v6892, %v4499
      %v10712 = vmul.f32 %v6893, %v4499
      %v10713 = vmul.f32 %v6894, %v4499
      %v10714 = vmul.f32 %v6895, %v4499
      %v10715 = vmul.f32 %v6896, %v4499
      %v10740 = vrot.slane %v10692, 1
      %v10741 = vrot.slane %v10693, 1
      %v10742 = vsel %vm642, %v10740, %v10741
      %v10743 = vrot.slane %v10694, 1
      %v10744 = vsel %vm642, %v10741, %v10743
      %v10745 = vrot.slane %v10695, 1
      %v10746 = vrot.slane %v10696, 1
      %v10747 = vsel %vm642, %v10745, %v10746
      %v10748 = vrot.slane %v10697, 1
      %v10749 = vsel %vm642, %v10746, %v10748
      %v10750 = vrot.slane %v10698, 1
      %v10751 = vrot.slane %v10699, 1
      %v10752 = vsel %vm642, %v10750, %v10751
      %v10753 = vrot.slane %v10700, 1
      %v10754 = vsel %vm642, %v10751, %v10753
      %v10755 = vrot.slane %v10701, 1
      %v10756 = vrot.slane %v10702, 1
      %v10757 = vsel %vm642, %v10755, %v10756
      %v10758 = vrot.slane %v10703, 1
      %v10759 = vsel %vm642, %v10756, %v10758
      %v10760 = vrot.slane %v10704, 1
      %v10761 = vrot.slane %v10705, 1
      %v10762 = vsel %vm642, %v10760, %v10761
      %v10763 = vrot.slane %v10706, 1
      %v10764 = vsel %vm642, %v10761, %v10763
      %v10765 = vrot.slane %v10707, 1
      %v10766 = vrot.slane %v10708, 1
      %v10767 = vsel %vm642, %v10765, %v10766
      %v10768 = vrot.slane %v10709, 1
      %v10769 = vsel %vm642, %v10766, %v10768
      %v10770 = vrot.slane %v10710, 1
      %v10771 = vrot.slane %v10711, 1
      %v10772 = vsel %vm642, %v10770, %v10771
      %v10773 = vrot.slane %v10712, 1
      %v10774 = vsel %vm642, %v10771, %v10773
      %v10775 = vrot.slane %v10713, 1
      %v10776 = vrot.slane %v10714, 1
      %v10777 = vsel %vm642, %v10775, %v10776
      %v10778 = vrot.slane %v10715, 1
      %v10779 = vsel %vm642, %v10776, %v10778
      %v10796 = vadd.f32 %v10676, %v10742
      %v10797 = vadd.f32 %v10677, %v10744
      %v10798 = vadd.f32 %v10678, %v10747
      %v10799 = vadd.f32 %v10679, %v10749
      %v10800 = vadd.f32 %v10680, %v10752
      %v10801 = vadd.f32 %v10681, %v10754
      %v10802 = vadd.f32 %v10682, %v10757
      %v10803 = vadd.f32 %v10683, %v10759
      %v10804 = vadd.f32 %v10684, %v10762
      %v10805 = vadd.f32 %v10685, %v10764
      %v10806 = vadd.f32 %v10686, %v10767
      %v10807 = vadd.f32 %v10687, %v10769
      %v10808 = vadd.f32 %v10688, %v10772
      %v10809 = vadd.f32 %v10689, %v10774
      %v10810 = vadd.f32 %v10690, %v10777
      %v10811 = vadd.f32 %v10691, %v10779
      %v10812 = vmul.f32 %v6873, %v4623
      %v10813 = vmul.f32 %v6874, %v4623
      %v10814 = vmul.f32 %v6875, %v4623
      %v10815 = vmul.f32 %v6876, %v4623
      %v10816 = vmul.f32 %v6877, %v4623
      %v10817 = vmul.f32 %v6878, %v4623
      %v10818 = vmul.f32 %v6879, %v4623
      %v10819 = vmul.f32 %v6880, %v4623
      %v10820 = vmul.f32 %v6881, %v4623
      %v10821 = vmul.f32 %v6882, %v4623
      %v10822 = vmul.f32 %v6883, %v4623
      %v10823 = vmul.f32 %v6884, %v4623
      %v10824 = vmul.f32 %v6885, %v4623
      %v10825 = vmul.f32 %v6886, %v4623
      %v10826 = vmul.f32 %v6887, %v4623
      %v10827 = vmul.f32 %v6888, %v4623
      %v10828 = vmul.f32 %v6889, %v4623
      %v10829 = vmul.f32 %v6890, %v4623
      %v10830 = vmul.f32 %v6891, %v4623
      %v10831 = vmul.f32 %v6892, %v4623
      %v10832 = vmul.f32 %v6893, %v4623
      %v10833 = vmul.f32 %v6894, %v4623
      %v10834 = vmul.f32 %v6895, %v4623
      %v10835 = vmul.f32 %v6896, %v4623
      %v10860 = vrot.slane %v10812, 2
      %v10861 = vrot.slane %v10813, 2
      %v10862 = vsel %vm767, %v10860, %v10861
      %v10863 = vrot.slane %v10814, 2
      %v10864 = vsel %vm767, %v10861, %v10863
      %v10865 = vrot.slane %v10815, 2
      %v10866 = vrot.slane %v10816, 2
      %v10867 = vsel %vm767, %v10865, %v10866
      %v10868 = vrot.slane %v10817, 2
      %v10869 = vsel %vm767, %v10866, %v10868
      %v10870 = vrot.slane %v10818, 2
      %v10871 = vrot.slane %v10819, 2
      %v10872 = vsel %vm767, %v10870, %v10871
      %v10873 = vrot.slane %v10820, 2
      %v10874 = vsel %vm767, %v10871, %v10873
      %v10875 = vrot.slane %v10821, 2
      %v10876 = vrot.slane %v10822, 2
      %v10877 = vsel %vm767, %v10875, %v10876
      %v10878 = vrot.slane %v10823, 2
      %v10879 = vsel %vm767, %v10876, %v10878
      %v10880 = vrot.slane %v10824, 2
      %v10881 = vrot.slane %v10825, 2
      %v10882 = vsel %vm767, %v10880, %v10881
      %v10883 = vrot.slane %v10826, 2
      %v10884 = vsel %vm767, %v10881, %v10883
      %v10885 = vrot.slane %v10827, 2
      %v10886 = vrot.slane %v10828, 2
      %v10887 = vsel %vm767, %v10885, %v10886
      %v10888 = vrot.slane %v10829, 2
      %v10889 = vsel %vm767, %v10886, %v10888
      %v10890 = vrot.slane %v10830, 2
      %v10891 = vrot.slane %v10831, 2
      %v10892 = vsel %vm767, %v10890, %v10891
      %v10893 = vrot.slane %v10832, 2
      %v10894 = vsel %vm767, %v10891, %v10893
      %v10895 = vrot.slane %v10833, 2
      %v10896 = vrot.slane %v10834, 2
      %v10897 = vsel %vm767, %v10895, %v10896
      %v10898 = vrot.slane %v10835, 2
      %v10899 = vsel %vm767, %v10896, %v10898
      %v10916 = vadd.f32 %v10796, %v10862
      %v10917 = vadd.f32 %v10797, %v10864
      %v10918 = vadd.f32 %v10798, %v10867
      %v10919 = vadd.f32 %v10799, %v10869
      %v10920 = vadd.f32 %v10800, %v10872
      %v10921 = vadd.f32 %v10801, %v10874
      %v10922 = vadd.f32 %v10802, %v10877
      %v10923 = vadd.f32 %v10803, %v10879
      %v10924 = vadd.f32 %v10804, %v10882
      %v10925 = vadd.f32 %v10805, %v10884
      %v10926 = vadd.f32 %v10806, %v10887
      %v10927 = vadd.f32 %v10807, %v10889
      %v10928 = vadd.f32 %v10808, %v10892
      %v10929 = vadd.f32 %v10809, %v10894
      %v10930 = vadd.f32 %v10810, %v10897
      %v10931 = vadd.f32 %v10811, %v10899
      %v10932 = vmul.f32 %v6873, %v4747
      %v10933 = vmul.f32 %v6874, %v4747
      %v10934 = vmul.f32 %v6875, %v4747
      %v10935 = vmul.f32 %v6876, %v4747
      %v10936 = vmul.f32 %v6877, %v4747
      %v10937 = vmul.f32 %v6878, %v4747
      %v10938 = vmul.f32 %v6879, %v4747
      %v10939 = vmul.f32 %v6880, %v4747
      %v10940 = vmul.f32 %v6881, %v4747
      %v10941 = vmul.f32 %v6882, %v4747
      %v10942 = vmul.f32 %v6883, %v4747
      %v10943 = vmul.f32 %v6884, %v4747
      %v10944 = vmul.f32 %v6885, %v4747
      %v10945 = vmul.f32 %v6886, %v4747
      %v10946 = vmul.f32 %v6887, %v4747
      %v10947 = vmul.f32 %v6888, %v4747
      %v10948 = vmul.f32 %v6889, %v4747
      %v10949 = vmul.f32 %v6890, %v4747
      %v10950 = vmul.f32 %v6891, %v4747
      %v10951 = vmul.f32 %v6892, %v4747
      %v10952 = vmul.f32 %v6893, %v4747
      %v10953 = vmul.f32 %v6894, %v4747
      %v10954 = vmul.f32 %v6895, %v4747
      %v10955 = vmul.f32 %v6896, %v4747
      %v10980 = vrot.slane %v10932, 3
      %v10981 = vrot.slane %v10933, 3
      %v10982 = vsel %vm892, %v10980, %v10981
      %v10983 = vrot.slane %v10934, 3
      %v10984 = vsel %vm892, %v10981, %v10983
      %v10985 = vrot.slane %v10935, 3
      %v10986 = vrot.slane %v10936, 3
      %v10987 = vsel %vm892, %v10985, %v10986
      %v10988 = vrot.slane %v10937, 3
      %v10989 = vsel %vm892, %v10986, %v10988
      %v10990 = vrot.slane %v10938, 3
      %v10991 = vrot.slane %v10939, 3
      %v10992 = vsel %vm892, %v10990, %v10991
      %v10993 = vrot.slane %v10940, 3
      %v10994 = vsel %vm892, %v10991, %v10993
      %v10995 = vrot.slane %v10941, 3
      %v10996 = vrot.slane %v10942, 3
      %v10997 = vsel %vm892, %v10995, %v10996
      %v10998 = vrot.slane %v10943, 3
      %v10999 = vsel %vm892, %v10996, %v10998
      %v11000 = vrot.slane %v10944, 3
      %v11001 = vrot.slane %v10945, 3
      %v11002 = vsel %vm892, %v11000, %v11001
      %v11003 = vrot.slane %v10946, 3
      %v11004 = vsel %vm892, %v11001, %v11003
      %v11005 = vrot.slane %v10947, 3
      %v11006 = vrot.slane %v10948, 3
      %v11007 = vsel %vm892, %v11005, %v11006
      %v11008 = vrot.slane %v10949, 3
      %v11009 = vsel %vm892, %v11006, %v11008
      %v11010 = vrot.slane %v10950, 3
      %v11011 = vrot.slane %v10951, 3
      %v11012 = vsel %vm892, %v11010, %v11011
      %v11013 = vrot.slane %v10952, 3
      %v11014 = vsel %vm892, %v11011, %v11013
      %v11015 = vrot.slane %v10953, 3
      %v11016 = vrot.slane %v10954, 3
      %v11017 = vsel %vm892, %v11015, %v11016
      %v11018 = vrot.slane %v10955, 3
      %v11019 = vsel %vm892, %v11016, %v11018
      %v11036 = vadd.f32 %v10916, %v10982
      %v11037 = vadd.f32 %v10917, %v10984
      %v11038 = vadd.f32 %v10918, %v10987
      %v11039 = vadd.f32 %v10919, %v10989
      %v11040 = vadd.f32 %v10920, %v10992
      %v11041 = vadd.f32 %v10921, %v10994
      %v11042 = vadd.f32 %v10922, %v10997
      %v11043 = vadd.f32 %v10923, %v10999
      %v11044 = vadd.f32 %v10924, %v11002
      %v11045 = vadd.f32 %v10925, %v11004
      %v11046 = vadd.f32 %v10926, %v11007
      %v11047 = vadd.f32 %v10927, %v11009
      %v11048 = vadd.f32 %v10928, %v11012
      %v11049 = vadd.f32 %v10929, %v11014
      %v11050 = vadd.f32 %v10930, %v11017
      %v11051 = vadd.f32 %v10931, %v11019
      %v11052 = vmul.f32 %v6873, %v4871
      %v11053 = vmul.f32 %v6874, %v4871
      %v11054 = vmul.f32 %v6875, %v4871
      %v11055 = vmul.f32 %v6876, %v4871
      %v11056 = vmul.f32 %v6877, %v4871
      %v11057 = vmul.f32 %v6878, %v4871
      %v11058 = vmul.f32 %v6879, %v4871
      %v11059 = vmul.f32 %v6880, %v4871
      %v11060 = vmul.f32 %v6881, %v4871
      %v11061 = vmul.f32 %v6882, %v4871
      %v11062 = vmul.f32 %v6883, %v4871
      %v11063 = vmul.f32 %v6884, %v4871
      %v11064 = vmul.f32 %v6885, %v4871
      %v11065 = vmul.f32 %v6886, %v4871
      %v11066 = vmul.f32 %v6887, %v4871
      %v11067 = vmul.f32 %v6888, %v4871
      %v11068 = vmul.f32 %v6889, %v4871
      %v11069 = vmul.f32 %v6890, %v4871
      %v11070 = vmul.f32 %v6891, %v4871
      %v11071 = vmul.f32 %v6892, %v4871
      %v11072 = vmul.f32 %v6893, %v4871
      %v11073 = vmul.f32 %v6894, %v4871
      %v11074 = vmul.f32 %v6895, %v4871
      %v11075 = vmul.f32 %v6896, %v4871
      %v11100 = vrot.slane %v11052, 4
      %v11101 = vrot.slane %v11053, 4
      %v11102 = vsel %vm1017, %v11100, %v11101
      %v11103 = vrot.slane %v11054, 4
      %v11104 = vsel %vm1017, %v11101, %v11103
      %v11105 = vrot.slane %v11055, 4
      %v11106 = vrot.slane %v11056, 4
      %v11107 = vsel %vm1017, %v11105, %v11106
      %v11108 = vrot.slane %v11057, 4
      %v11109 = vsel %vm1017, %v11106, %v11108
      %v11110 = vrot.slane %v11058, 4
      %v11111 = vrot.slane %v11059, 4
      %v11112 = vsel %vm1017, %v11110, %v11111
      %v11113 = vrot.slane %v11060, 4
      %v11114 = vsel %vm1017, %v11111, %v11113
      %v11115 = vrot.slane %v11061, 4
      %v11116 = vrot.slane %v11062, 4
      %v11117 = vsel %vm1017, %v11115, %v11116
      %v11118 = vrot.slane %v11063, 4
      %v11119 = vsel %vm1017, %v11116, %v11118
      %v11120 = vrot.slane %v11064, 4
      %v11121 = vrot.slane %v11065, 4
      %v11122 = vsel %vm1017, %v11120, %v11121
      %v11123 = vrot.slane %v11066, 4
      %v11124 = vsel %vm1017, %v11121, %v11123
      %v11125 = vrot.slane %v11067, 4
      %v11126 = vrot.slane %v11068, 4
      %v11127 = vsel %vm1017, %v11125, %v11126
      %v11128 = vrot.slane %v11069, 4
      %v11129 = vsel %vm1017, %v11126, %v11128
      %v11130 = vrot.slane %v11070, 4
      %v11131 = vrot.slane %v11071, 4
      %v11132 = vsel %vm1017, %v11130, %v11131
      %v11133 = vrot.slane %v11072, 4
      %v11134 = vsel %vm1017, %v11131, %v11133
      %v11135 = vrot.slane %v11073, 4
      %v11136 = vrot.slane %v11074, 4
      %v11137 = vsel %vm1017, %v11135, %v11136
      %v11138 = vrot.slane %v11075, 4
      %v11139 = vsel %vm1017, %v11136, %v11138
      %v11156 = vadd.f32 %v11036, %v11102
      %v11157 = vadd.f32 %v11037, %v11104
      %v11158 = vadd.f32 %v11038, %v11107
      %v11159 = vadd.f32 %v11039, %v11109
      %v11160 = vadd.f32 %v11040, %v11112
      %v11161 = vadd.f32 %v11041, %v11114
      %v11162 = vadd.f32 %v11042, %v11117
      %v11163 = vadd.f32 %v11043, %v11119
      %v11164 = vadd.f32 %v11044, %v11122
      %v11165 = vadd.f32 %v11045, %v11124
      %v11166 = vadd.f32 %v11046, %v11127
      %v11167 = vadd.f32 %v11047, %v11129
      %v11168 = vadd.f32 %v11048, %v11132
      %v11169 = vadd.f32 %v11049, %v11134
      %v11170 = vadd.f32 %v11050, %v11137
      %v11171 = vadd.f32 %v11051, %v11139
      %v11172 = vmul.f32 %v6873, %v4995
      %v11173 = vmul.f32 %v6874, %v4995
      %v11174 = vmul.f32 %v6875, %v4995
      %v11175 = vmul.f32 %v6876, %v4995
      %v11176 = vmul.f32 %v6877, %v4995
      %v11177 = vmul.f32 %v6878, %v4995
      %v11178 = vmul.f32 %v6879, %v4995
      %v11179 = vmul.f32 %v6880, %v4995
      %v11180 = vmul.f32 %v6881, %v4995
      %v11181 = vmul.f32 %v6882, %v4995
      %v11182 = vmul.f32 %v6883, %v4995
      %v11183 = vmul.f32 %v6884, %v4995
      %v11184 = vmul.f32 %v6885, %v4995
      %v11185 = vmul.f32 %v6886, %v4995
      %v11186 = vmul.f32 %v6887, %v4995
      %v11187 = vmul.f32 %v6888, %v4995
      %v11188 = vmul.f32 %v6889, %v4995
      %v11189 = vmul.f32 %v6890, %v4995
      %v11190 = vmul.f32 %v6891, %v4995
      %v11191 = vmul.f32 %v6892, %v4995
      %v11192 = vmul.f32 %v6893, %v4995
      %v11193 = vmul.f32 %v6894, %v4995
      %v11194 = vmul.f32 %v6895, %v4995
      %v11195 = vmul.f32 %v6896, %v4995
      %v11220 = vrot.slane %v11172, 5
      %v11221 = vrot.slane %v11173, 5
      %v11222 = vsel %vm1142, %v11220, %v11221
      %v11223 = vrot.slane %v11174, 5
      %v11224 = vsel %vm1142, %v11221, %v11223
      %v11225 = vrot.slane %v11175, 5
      %v11226 = vrot.slane %v11176, 5
      %v11227 = vsel %vm1142, %v11225, %v11226
      %v11228 = vrot.slane %v11177, 5
      %v11229 = vsel %vm1142, %v11226, %v11228
      %v11230 = vrot.slane %v11178, 5
      %v11231 = vrot.slane %v11179, 5
      %v11232 = vsel %vm1142, %v11230, %v11231
      %v11233 = vrot.slane %v11180, 5
      %v11234 = vsel %vm1142, %v11231, %v11233
      %v11235 = vrot.slane %v11181, 5
      %v11236 = vrot.slane %v11182, 5
      %v11237 = vsel %vm1142, %v11235, %v11236
      %v11238 = vrot.slane %v11183, 5
      %v11239 = vsel %vm1142, %v11236, %v11238
      %v11240 = vrot.slane %v11184, 5
      %v11241 = vrot.slane %v11185, 5
      %v11242 = vsel %vm1142, %v11240, %v11241
      %v11243 = vrot.slane %v11186, 5
      %v11244 = vsel %vm1142, %v11241, %v11243
      %v11245 = vrot.slane %v11187, 5
      %v11246 = vrot.slane %v11188, 5
      %v11247 = vsel %vm1142, %v11245, %v11246
      %v11248 = vrot.slane %v11189, 5
      %v11249 = vsel %vm1142, %v11246, %v11248
      %v11250 = vrot.slane %v11190, 5
      %v11251 = vrot.slane %v11191, 5
      %v11252 = vsel %vm1142, %v11250, %v11251
      %v11253 = vrot.slane %v11192, 5
      %v11254 = vsel %vm1142, %v11251, %v11253
      %v11255 = vrot.slane %v11193, 5
      %v11256 = vrot.slane %v11194, 5
      %v11257 = vsel %vm1142, %v11255, %v11256
      %v11258 = vrot.slane %v11195, 5
      %v11259 = vsel %vm1142, %v11256, %v11258
      %v11276 = vadd.f32 %v11156, %v11222
      %v11277 = vadd.f32 %v11157, %v11224
      %v11278 = vadd.f32 %v11158, %v11227
      %v11279 = vadd.f32 %v11159, %v11229
      %v11280 = vadd.f32 %v11160, %v11232
      %v11281 = vadd.f32 %v11161, %v11234
      %v11282 = vadd.f32 %v11162, %v11237
      %v11283 = vadd.f32 %v11163, %v11239
      %v11284 = vadd.f32 %v11164, %v11242
      %v11285 = vadd.f32 %v11165, %v11244
      %v11286 = vadd.f32 %v11166, %v11247
      %v11287 = vadd.f32 %v11167, %v11249
      %v11288 = vadd.f32 %v11168, %v11252
      %v11289 = vadd.f32 %v11169, %v11254
      %v11290 = vadd.f32 %v11170, %v11257
      %v11291 = vadd.f32 %v11171, %v11259
      %v11292 = vmul.f32 %v6873, %v5119
      %v11293 = vmul.f32 %v6874, %v5119
      %v11294 = vmul.f32 %v6875, %v5119
      %v11295 = vmul.f32 %v6876, %v5119
      %v11296 = vmul.f32 %v6877, %v5119
      %v11297 = vmul.f32 %v6878, %v5119
      %v11298 = vmul.f32 %v6879, %v5119
      %v11299 = vmul.f32 %v6880, %v5119
      %v11300 = vmul.f32 %v6881, %v5119
      %v11301 = vmul.f32 %v6882, %v5119
      %v11302 = vmul.f32 %v6883, %v5119
      %v11303 = vmul.f32 %v6884, %v5119
      %v11304 = vmul.f32 %v6885, %v5119
      %v11305 = vmul.f32 %v6886, %v5119
      %v11306 = vmul.f32 %v6887, %v5119
      %v11307 = vmul.f32 %v6888, %v5119
      %v11308 = vmul.f32 %v6889, %v5119
      %v11309 = vmul.f32 %v6890, %v5119
      %v11310 = vmul.f32 %v6891, %v5119
      %v11311 = vmul.f32 %v6892, %v5119
      %v11312 = vmul.f32 %v6893, %v5119
      %v11313 = vmul.f32 %v6894, %v5119
      %v11314 = vmul.f32 %v6895, %v5119
      %v11315 = vmul.f32 %v6896, %v5119
      %v11340 = vrot.slane %v11292, 6
      %v11341 = vrot.slane %v11293, 6
      %v11342 = vsel %vm1267, %v11340, %v11341
      %v11343 = vrot.slane %v11294, 6
      %v11344 = vsel %vm1267, %v11341, %v11343
      %v11345 = vrot.slane %v11295, 6
      %v11346 = vrot.slane %v11296, 6
      %v11347 = vsel %vm1267, %v11345, %v11346
      %v11348 = vrot.slane %v11297, 6
      %v11349 = vsel %vm1267, %v11346, %v11348
      %v11350 = vrot.slane %v11298, 6
      %v11351 = vrot.slane %v11299, 6
      %v11352 = vsel %vm1267, %v11350, %v11351
      %v11353 = vrot.slane %v11300, 6
      %v11354 = vsel %vm1267, %v11351, %v11353
      %v11355 = vrot.slane %v11301, 6
      %v11356 = vrot.slane %v11302, 6
      %v11357 = vsel %vm1267, %v11355, %v11356
      %v11358 = vrot.slane %v11303, 6
      %v11359 = vsel %vm1267, %v11356, %v11358
      %v11360 = vrot.slane %v11304, 6
      %v11361 = vrot.slane %v11305, 6
      %v11362 = vsel %vm1267, %v11360, %v11361
      %v11363 = vrot.slane %v11306, 6
      %v11364 = vsel %vm1267, %v11361, %v11363
      %v11365 = vrot.slane %v11307, 6
      %v11366 = vrot.slane %v11308, 6
      %v11367 = vsel %vm1267, %v11365, %v11366
      %v11368 = vrot.slane %v11309, 6
      %v11369 = vsel %vm1267, %v11366, %v11368
      %v11370 = vrot.slane %v11310, 6
      %v11371 = vrot.slane %v11311, 6
      %v11372 = vsel %vm1267, %v11370, %v11371
      %v11373 = vrot.slane %v11312, 6
      %v11374 = vsel %vm1267, %v11371, %v11373
      %v11375 = vrot.slane %v11313, 6
      %v11376 = vrot.slane %v11314, 6
      %v11377 = vsel %vm1267, %v11375, %v11376
      %v11378 = vrot.slane %v11315, 6
      %v11379 = vsel %vm1267, %v11376, %v11378
      %v11396 = vadd.f32 %v11276, %v11342
      %v11397 = vadd.f32 %v11277, %v11344
      %v11398 = vadd.f32 %v11278, %v11347
      %v11399 = vadd.f32 %v11279, %v11349
      %v11400 = vadd.f32 %v11280, %v11352
      %v11401 = vadd.f32 %v11281, %v11354
      %v11402 = vadd.f32 %v11282, %v11357
      %v11403 = vadd.f32 %v11283, %v11359
      %v11404 = vadd.f32 %v11284, %v11362
      %v11405 = vadd.f32 %v11285, %v11364
      %v11406 = vadd.f32 %v11286, %v11367
      %v11407 = vadd.f32 %v11287, %v11369
      %v11408 = vadd.f32 %v11288, %v11372
      %v11409 = vadd.f32 %v11289, %v11374
      %v11410 = vadd.f32 %v11290, %v11377
      %v11411 = vadd.f32 %v11291, %v11379
      %v11412 = vmul.f32 %v6876, %v5243
      %v11413 = vmul.f32 %v6877, %v5243
      %v11414 = vmul.f32 %v6879, %v5243
      %v11415 = vmul.f32 %v6880, %v5243
      %v11416 = vmul.f32 %v6882, %v5243
      %v11417 = vmul.f32 %v6883, %v5243
      %v11418 = vmul.f32 %v6885, %v5243
      %v11419 = vmul.f32 %v6886, %v5243
      %v11420 = vmul.f32 %v6888, %v5243
      %v11421 = vmul.f32 %v6889, %v5243
      %v11422 = vmul.f32 %v6891, %v5243
      %v11423 = vmul.f32 %v6892, %v5243
      %v11424 = vmul.f32 %v6894, %v5243
      %v11425 = vmul.f32 %v6895, %v5243
      %v11426 = vmul.f32 %v6897, %v5243
      %v11427 = vmul.f32 %v6898, %v5243
      %v11428 = vadd.f32 %v11396, %v11412
      %v11429 = vadd.f32 %v11397, %v11413
      %v11430 = vadd.f32 %v11398, %v11414
      %v11431 = vadd.f32 %v11399, %v11415
      %v11432 = vadd.f32 %v11400, %v11416
      %v11433 = vadd.f32 %v11401, %v11417
      %v11434 = vadd.f32 %v11402, %v11418
      %v11435 = vadd.f32 %v11403, %v11419
      %v11436 = vadd.f32 %v11404, %v11420
      %v11437 = vadd.f32 %v11405, %v11421
      %v11438 = vadd.f32 %v11406, %v11422
      %v11439 = vadd.f32 %v11407, %v11423
      %v11440 = vadd.f32 %v11408, %v11424
      %v11441 = vadd.f32 %v11409, %v11425
      %v11442 = vadd.f32 %v11410, %v11426
      %v11443 = vadd.f32 %v11411, %v11427
      %v11444 = vmul.f32 %v6876, %v5279
      %v11445 = vmul.f32 %v6877, %v5279
      %v11446 = vmul.f32 %v6878, %v5279
      %v11447 = vmul.f32 %v6879, %v5279
      %v11448 = vmul.f32 %v6880, %v5279
      %v11449 = vmul.f32 %v6881, %v5279
      %v11450 = vmul.f32 %v6882, %v5279
      %v11451 = vmul.f32 %v6883, %v5279
      %v11452 = vmul.f32 %v6884, %v5279
      %v11453 = vmul.f32 %v6885, %v5279
      %v11454 = vmul.f32 %v6886, %v5279
      %v11455 = vmul.f32 %v6887, %v5279
      %v11456 = vmul.f32 %v6888, %v5279
      %v11457 = vmul.f32 %v6889, %v5279
      %v11458 = vmul.f32 %v6890, %v5279
      %v11459 = vmul.f32 %v6891, %v5279
      %v11460 = vmul.f32 %v6892, %v5279
      %v11461 = vmul.f32 %v6893, %v5279
      %v11462 = vmul.f32 %v6894, %v5279
      %v11463 = vmul.f32 %v6895, %v5279
      %v11464 = vmul.f32 %v6896, %v5279
      %v11465 = vmul.f32 %v6897, %v5279
      %v11466 = vmul.f32 %v6898, %v5279
      %v11467 = vmul.f32 %v6899, %v5279
      %v11492 = vrot.slane %v11444, 1
      %v11493 = vrot.slane %v11445, 1
      %v11494 = vsel %vm642, %v11492, %v11493
      %v11495 = vrot.slane %v11446, 1
      %v11496 = vsel %vm642, %v11493, %v11495
      %v11497 = vrot.slane %v11447, 1
      %v11498 = vrot.slane %v11448, 1
      %v11499 = vsel %vm642, %v11497, %v11498
      %v11500 = vrot.slane %v11449, 1
      %v11501 = vsel %vm642, %v11498, %v11500
      %v11502 = vrot.slane %v11450, 1
      %v11503 = vrot.slane %v11451, 1
      %v11504 = vsel %vm642, %v11502, %v11503
      %v11505 = vrot.slane %v11452, 1
      %v11506 = vsel %vm642, %v11503, %v11505
      %v11507 = vrot.slane %v11453, 1
      %v11508 = vrot.slane %v11454, 1
      %v11509 = vsel %vm642, %v11507, %v11508
      %v11510 = vrot.slane %v11455, 1
      %v11511 = vsel %vm642, %v11508, %v11510
      %v11512 = vrot.slane %v11456, 1
      %v11513 = vrot.slane %v11457, 1
      %v11514 = vsel %vm642, %v11512, %v11513
      %v11515 = vrot.slane %v11458, 1
      %v11516 = vsel %vm642, %v11513, %v11515
      %v11517 = vrot.slane %v11459, 1
      %v11518 = vrot.slane %v11460, 1
      %v11519 = vsel %vm642, %v11517, %v11518
      %v11520 = vrot.slane %v11461, 1
      %v11521 = vsel %vm642, %v11518, %v11520
      %v11522 = vrot.slane %v11462, 1
      %v11523 = vrot.slane %v11463, 1
      %v11524 = vsel %vm642, %v11522, %v11523
      %v11525 = vrot.slane %v11464, 1
      %v11526 = vsel %vm642, %v11523, %v11525
      %v11527 = vrot.slane %v11465, 1
      %v11528 = vrot.slane %v11466, 1
      %v11529 = vsel %vm642, %v11527, %v11528
      %v11530 = vrot.slane %v11467, 1
      %v11531 = vsel %vm642, %v11528, %v11530
      %v11548 = vadd.f32 %v11428, %v11494
      %v11549 = vadd.f32 %v11429, %v11496
      %v11550 = vadd.f32 %v11430, %v11499
      %v11551 = vadd.f32 %v11431, %v11501
      %v11552 = vadd.f32 %v11432, %v11504
      %v11553 = vadd.f32 %v11433, %v11506
      %v11554 = vadd.f32 %v11434, %v11509
      %v11555 = vadd.f32 %v11435, %v11511
      %v11556 = vadd.f32 %v11436, %v11514
      %v11557 = vadd.f32 %v11437, %v11516
      %v11558 = vadd.f32 %v11438, %v11519
      %v11559 = vadd.f32 %v11439, %v11521
      %v11560 = vadd.f32 %v11440, %v11524
      %v11561 = vadd.f32 %v11441, %v11526
      %v11562 = vadd.f32 %v11442, %v11529
      %v11563 = vadd.f32 %v11443, %v11531
      %v11564 = vmul.f32 %v6876, %v5403
      %v11565 = vmul.f32 %v6877, %v5403
      %v11566 = vmul.f32 %v6878, %v5403
      %v11567 = vmul.f32 %v6879, %v5403
      %v11568 = vmul.f32 %v6880, %v5403
      %v11569 = vmul.f32 %v6881, %v5403
      %v11570 = vmul.f32 %v6882, %v5403
      %v11571 = vmul.f32 %v6883, %v5403
      %v11572 = vmul.f32 %v6884, %v5403
      %v11573 = vmul.f32 %v6885, %v5403
      %v11574 = vmul.f32 %v6886, %v5403
      %v11575 = vmul.f32 %v6887, %v5403
      %v11576 = vmul.f32 %v6888, %v5403
      %v11577 = vmul.f32 %v6889, %v5403
      %v11578 = vmul.f32 %v6890, %v5403
      %v11579 = vmul.f32 %v6891, %v5403
      %v11580 = vmul.f32 %v6892, %v5403
      %v11581 = vmul.f32 %v6893, %v5403
      %v11582 = vmul.f32 %v6894, %v5403
      %v11583 = vmul.f32 %v6895, %v5403
      %v11584 = vmul.f32 %v6896, %v5403
      %v11585 = vmul.f32 %v6897, %v5403
      %v11586 = vmul.f32 %v6898, %v5403
      %v11587 = vmul.f32 %v6899, %v5403
      %v11612 = vrot.slane %v11564, 2
      %v11613 = vrot.slane %v11565, 2
      %v11614 = vsel %vm767, %v11612, %v11613
      %v11615 = vrot.slane %v11566, 2
      %v11616 = vsel %vm767, %v11613, %v11615
      %v11617 = vrot.slane %v11567, 2
      %v11618 = vrot.slane %v11568, 2
      %v11619 = vsel %vm767, %v11617, %v11618
      %v11620 = vrot.slane %v11569, 2
      %v11621 = vsel %vm767, %v11618, %v11620
      %v11622 = vrot.slane %v11570, 2
      %v11623 = vrot.slane %v11571, 2
      %v11624 = vsel %vm767, %v11622, %v11623
      %v11625 = vrot.slane %v11572, 2
      %v11626 = vsel %vm767, %v11623, %v11625
      %v11627 = vrot.slane %v11573, 2
      %v11628 = vrot.slane %v11574, 2
      %v11629 = vsel %vm767, %v11627, %v11628
      %v11630 = vrot.slane %v11575, 2
      %v11631 = vsel %vm767, %v11628, %v11630
      %v11632 = vrot.slane %v11576, 2
      %v11633 = vrot.slane %v11577, 2
      %v11634 = vsel %vm767, %v11632, %v11633
      %v11635 = vrot.slane %v11578, 2
      %v11636 = vsel %vm767, %v11633, %v11635
      %v11637 = vrot.slane %v11579, 2
      %v11638 = vrot.slane %v11580, 2
      %v11639 = vsel %vm767, %v11637, %v11638
      %v11640 = vrot.slane %v11581, 2
      %v11641 = vsel %vm767, %v11638, %v11640
      %v11642 = vrot.slane %v11582, 2
      %v11643 = vrot.slane %v11583, 2
      %v11644 = vsel %vm767, %v11642, %v11643
      %v11645 = vrot.slane %v11584, 2
      %v11646 = vsel %vm767, %v11643, %v11645
      %v11647 = vrot.slane %v11585, 2
      %v11648 = vrot.slane %v11586, 2
      %v11649 = vsel %vm767, %v11647, %v11648
      %v11650 = vrot.slane %v11587, 2
      %v11651 = vsel %vm767, %v11648, %v11650
      %v11668 = vadd.f32 %v11548, %v11614
      %v11669 = vadd.f32 %v11549, %v11616
      %v11670 = vadd.f32 %v11550, %v11619
      %v11671 = vadd.f32 %v11551, %v11621
      %v11672 = vadd.f32 %v11552, %v11624
      %v11673 = vadd.f32 %v11553, %v11626
      %v11674 = vadd.f32 %v11554, %v11629
      %v11675 = vadd.f32 %v11555, %v11631
      %v11676 = vadd.f32 %v11556, %v11634
      %v11677 = vadd.f32 %v11557, %v11636
      %v11678 = vadd.f32 %v11558, %v11639
      %v11679 = vadd.f32 %v11559, %v11641
      %v11680 = vadd.f32 %v11560, %v11644
      %v11681 = vadd.f32 %v11561, %v11646
      %v11682 = vadd.f32 %v11562, %v11649
      %v11683 = vadd.f32 %v11563, %v11651
      %v11684 = vmul.f32 %v6876, %v5527
      %v11685 = vmul.f32 %v6877, %v5527
      %v11686 = vmul.f32 %v6878, %v5527
      %v11687 = vmul.f32 %v6879, %v5527
      %v11688 = vmul.f32 %v6880, %v5527
      %v11689 = vmul.f32 %v6881, %v5527
      %v11690 = vmul.f32 %v6882, %v5527
      %v11691 = vmul.f32 %v6883, %v5527
      %v11692 = vmul.f32 %v6884, %v5527
      %v11693 = vmul.f32 %v6885, %v5527
      %v11694 = vmul.f32 %v6886, %v5527
      %v11695 = vmul.f32 %v6887, %v5527
      %v11696 = vmul.f32 %v6888, %v5527
      %v11697 = vmul.f32 %v6889, %v5527
      %v11698 = vmul.f32 %v6890, %v5527
      %v11699 = vmul.f32 %v6891, %v5527
      %v11700 = vmul.f32 %v6892, %v5527
      %v11701 = vmul.f32 %v6893, %v5527
      %v11702 = vmul.f32 %v6894, %v5527
      %v11703 = vmul.f32 %v6895, %v5527
      %v11704 = vmul.f32 %v6896, %v5527
      %v11705 = vmul.f32 %v6897, %v5527
      %v11706 = vmul.f32 %v6898, %v5527
      %v11707 = vmul.f32 %v6899, %v5527
      %v11732 = vrot.slane %v11684, 3
      %v11733 = vrot.slane %v11685, 3
      %v11734 = vsel %vm892, %v11732, %v11733
      %v11735 = vrot.slane %v11686, 3
      %v11736 = vsel %vm892, %v11733, %v11735
      %v11737 = vrot.slane %v11687, 3
      %v11738 = vrot.slane %v11688, 3
      %v11739 = vsel %vm892, %v11737, %v11738
      %v11740 = vrot.slane %v11689, 3
      %v11741 = vsel %vm892, %v11738, %v11740
      %v11742 = vrot.slane %v11690, 3
      %v11743 = vrot.slane %v11691, 3
      %v11744 = vsel %vm892, %v11742, %v11743
      %v11745 = vrot.slane %v11692, 3
      %v11746 = vsel %vm892, %v11743, %v11745
      %v11747 = vrot.slane %v11693, 3
      %v11748 = vrot.slane %v11694, 3
      %v11749 = vsel %vm892, %v11747, %v11748
      %v11750 = vrot.slane %v11695, 3
      %v11751 = vsel %vm892, %v11748, %v11750
      %v11752 = vrot.slane %v11696, 3
      %v11753 = vrot.slane %v11697, 3
      %v11754 = vsel %vm892, %v11752, %v11753
      %v11755 = vrot.slane %v11698, 3
      %v11756 = vsel %vm892, %v11753, %v11755
      %v11757 = vrot.slane %v11699, 3
      %v11758 = vrot.slane %v11700, 3
      %v11759 = vsel %vm892, %v11757, %v11758
      %v11760 = vrot.slane %v11701, 3
      %v11761 = vsel %vm892, %v11758, %v11760
      %v11762 = vrot.slane %v11702, 3
      %v11763 = vrot.slane %v11703, 3
      %v11764 = vsel %vm892, %v11762, %v11763
      %v11765 = vrot.slane %v11704, 3
      %v11766 = vsel %vm892, %v11763, %v11765
      %v11767 = vrot.slane %v11705, 3
      %v11768 = vrot.slane %v11706, 3
      %v11769 = vsel %vm892, %v11767, %v11768
      %v11770 = vrot.slane %v11707, 3
      %v11771 = vsel %vm892, %v11768, %v11770
      %v11788 = vadd.f32 %v11668, %v11734
      %v11789 = vadd.f32 %v11669, %v11736
      %v11790 = vadd.f32 %v11670, %v11739
      %v11791 = vadd.f32 %v11671, %v11741
      %v11792 = vadd.f32 %v11672, %v11744
      %v11793 = vadd.f32 %v11673, %v11746
      %v11794 = vadd.f32 %v11674, %v11749
      %v11795 = vadd.f32 %v11675, %v11751
      %v11796 = vadd.f32 %v11676, %v11754
      %v11797 = vadd.f32 %v11677, %v11756
      %v11798 = vadd.f32 %v11678, %v11759
      %v11799 = vadd.f32 %v11679, %v11761
      %v11800 = vadd.f32 %v11680, %v11764
      %v11801 = vadd.f32 %v11681, %v11766
      %v11802 = vadd.f32 %v11682, %v11769
      %v11803 = vadd.f32 %v11683, %v11771
      %v11804 = vmul.f32 %v6876, %v5651
      %v11805 = vmul.f32 %v6877, %v5651
      %v11806 = vmul.f32 %v6878, %v5651
      %v11807 = vmul.f32 %v6879, %v5651
      %v11808 = vmul.f32 %v6880, %v5651
      %v11809 = vmul.f32 %v6881, %v5651
      %v11810 = vmul.f32 %v6882, %v5651
      %v11811 = vmul.f32 %v6883, %v5651
      %v11812 = vmul.f32 %v6884, %v5651
      %v11813 = vmul.f32 %v6885, %v5651
      %v11814 = vmul.f32 %v6886, %v5651
      %v11815 = vmul.f32 %v6887, %v5651
      %v11816 = vmul.f32 %v6888, %v5651
      %v11817 = vmul.f32 %v6889, %v5651
      %v11818 = vmul.f32 %v6890, %v5651
      %v11819 = vmul.f32 %v6891, %v5651
      %v11820 = vmul.f32 %v6892, %v5651
      %v11821 = vmul.f32 %v6893, %v5651
      %v11822 = vmul.f32 %v6894, %v5651
      %v11823 = vmul.f32 %v6895, %v5651
      %v11824 = vmul.f32 %v6896, %v5651
      %v11825 = vmul.f32 %v6897, %v5651
      %v11826 = vmul.f32 %v6898, %v5651
      %v11827 = vmul.f32 %v6899, %v5651
      %v11852 = vrot.slane %v11804, 4
      %v11853 = vrot.slane %v11805, 4
      %v11854 = vsel %vm1017, %v11852, %v11853
      %v11855 = vrot.slane %v11806, 4
      %v11856 = vsel %vm1017, %v11853, %v11855
      %v11857 = vrot.slane %v11807, 4
      %v11858 = vrot.slane %v11808, 4
      %v11859 = vsel %vm1017, %v11857, %v11858
      %v11860 = vrot.slane %v11809, 4
      %v11861 = vsel %vm1017, %v11858, %v11860
      %v11862 = vrot.slane %v11810, 4
      %v11863 = vrot.slane %v11811, 4
      %v11864 = vsel %vm1017, %v11862, %v11863
      %v11865 = vrot.slane %v11812, 4
      %v11866 = vsel %vm1017, %v11863, %v11865
      %v11867 = vrot.slane %v11813, 4
      %v11868 = vrot.slane %v11814, 4
      %v11869 = vsel %vm1017, %v11867, %v11868
      %v11870 = vrot.slane %v11815, 4
      %v11871 = vsel %vm1017, %v11868, %v11870
      %v11872 = vrot.slane %v11816, 4
      %v11873 = vrot.slane %v11817, 4
      %v11874 = vsel %vm1017, %v11872, %v11873
      %v11875 = vrot.slane %v11818, 4
      %v11876 = vsel %vm1017, %v11873, %v11875
      %v11877 = vrot.slane %v11819, 4
      %v11878 = vrot.slane %v11820, 4
      %v11879 = vsel %vm1017, %v11877, %v11878
      %v11880 = vrot.slane %v11821, 4
      %v11881 = vsel %vm1017, %v11878, %v11880
      %v11882 = vrot.slane %v11822, 4
      %v11883 = vrot.slane %v11823, 4
      %v11884 = vsel %vm1017, %v11882, %v11883
      %v11885 = vrot.slane %v11824, 4
      %v11886 = vsel %vm1017, %v11883, %v11885
      %v11887 = vrot.slane %v11825, 4
      %v11888 = vrot.slane %v11826, 4
      %v11889 = vsel %vm1017, %v11887, %v11888
      %v11890 = vrot.slane %v11827, 4
      %v11891 = vsel %vm1017, %v11888, %v11890
      %v11908 = vadd.f32 %v11788, %v11854
      %v11909 = vadd.f32 %v11789, %v11856
      %v11910 = vadd.f32 %v11790, %v11859
      %v11911 = vadd.f32 %v11791, %v11861
      %v11912 = vadd.f32 %v11792, %v11864
      %v11913 = vadd.f32 %v11793, %v11866
      %v11914 = vadd.f32 %v11794, %v11869
      %v11915 = vadd.f32 %v11795, %v11871
      %v11916 = vadd.f32 %v11796, %v11874
      %v11917 = vadd.f32 %v11797, %v11876
      %v11918 = vadd.f32 %v11798, %v11879
      %v11919 = vadd.f32 %v11799, %v11881
      %v11920 = vadd.f32 %v11800, %v11884
      %v11921 = vadd.f32 %v11801, %v11886
      %v11922 = vadd.f32 %v11802, %v11889
      %v11923 = vadd.f32 %v11803, %v11891
      %v11924 = vmul.f32 %v6876, %v5775
      %v11925 = vmul.f32 %v6877, %v5775
      %v11926 = vmul.f32 %v6878, %v5775
      %v11927 = vmul.f32 %v6879, %v5775
      %v11928 = vmul.f32 %v6880, %v5775
      %v11929 = vmul.f32 %v6881, %v5775
      %v11930 = vmul.f32 %v6882, %v5775
      %v11931 = vmul.f32 %v6883, %v5775
      %v11932 = vmul.f32 %v6884, %v5775
      %v11933 = vmul.f32 %v6885, %v5775
      %v11934 = vmul.f32 %v6886, %v5775
      %v11935 = vmul.f32 %v6887, %v5775
      %v11936 = vmul.f32 %v6888, %v5775
      %v11937 = vmul.f32 %v6889, %v5775
      %v11938 = vmul.f32 %v6890, %v5775
      %v11939 = vmul.f32 %v6891, %v5775
      %v11940 = vmul.f32 %v6892, %v5775
      %v11941 = vmul.f32 %v6893, %v5775
      %v11942 = vmul.f32 %v6894, %v5775
      %v11943 = vmul.f32 %v6895, %v5775
      %v11944 = vmul.f32 %v6896, %v5775
      %v11945 = vmul.f32 %v6897, %v5775
      %v11946 = vmul.f32 %v6898, %v5775
      %v11947 = vmul.f32 %v6899, %v5775
      %v11972 = vrot.slane %v11924, 5
      %v11973 = vrot.slane %v11925, 5
      %v11974 = vsel %vm1142, %v11972, %v11973
      %v11975 = vrot.slane %v11926, 5
      %v11976 = vsel %vm1142, %v11973, %v11975
      %v11977 = vrot.slane %v11927, 5
      %v11978 = vrot.slane %v11928, 5
      %v11979 = vsel %vm1142, %v11977, %v11978
      %v11980 = vrot.slane %v11929, 5
      %v11981 = vsel %vm1142, %v11978, %v11980
      %v11982 = vrot.slane %v11930, 5
      %v11983 = vrot.slane %v11931, 5
      %v11984 = vsel %vm1142, %v11982, %v11983
      %v11985 = vrot.slane %v11932, 5
      %v11986 = vsel %vm1142, %v11983, %v11985
      %v11987 = vrot.slane %v11933, 5
      %v11988 = vrot.slane %v11934, 5
      %v11989 = vsel %vm1142, %v11987, %v11988
      %v11990 = vrot.slane %v11935, 5
      %v11991 = vsel %vm1142, %v11988, %v11990
      %v11992 = vrot.slane %v11936, 5
      %v11993 = vrot.slane %v11937, 5
      %v11994 = vsel %vm1142, %v11992, %v11993
      %v11995 = vrot.slane %v11938, 5
      %v11996 = vsel %vm1142, %v11993, %v11995
      %v11997 = vrot.slane %v11939, 5
      %v11998 = vrot.slane %v11940, 5
      %v11999 = vsel %vm1142, %v11997, %v11998
      %v12000 = vrot.slane %v11941, 5
      %v12001 = vsel %vm1142, %v11998, %v12000
      %v12002 = vrot.slane %v11942, 5
      %v12003 = vrot.slane %v11943, 5
      %v12004 = vsel %vm1142, %v12002, %v12003
      %v12005 = vrot.slane %v11944, 5
      %v12006 = vsel %vm1142, %v12003, %v12005
      %v12007 = vrot.slane %v11945, 5
      %v12008 = vrot.slane %v11946, 5
      %v12009 = vsel %vm1142, %v12007, %v12008
      %v12010 = vrot.slane %v11947, 5
      %v12011 = vsel %vm1142, %v12008, %v12010
      %v12028 = vadd.f32 %v11908, %v11974
      %v12029 = vadd.f32 %v11909, %v11976
      %v12030 = vadd.f32 %v11910, %v11979
      %v12031 = vadd.f32 %v11911, %v11981
      %v12032 = vadd.f32 %v11912, %v11984
      %v12033 = vadd.f32 %v11913, %v11986
      %v12034 = vadd.f32 %v11914, %v11989
      %v12035 = vadd.f32 %v11915, %v11991
      %v12036 = vadd.f32 %v11916, %v11994
      %v12037 = vadd.f32 %v11917, %v11996
      %v12038 = vadd.f32 %v11918, %v11999
      %v12039 = vadd.f32 %v11919, %v12001
      %v12040 = vadd.f32 %v11920, %v12004
      %v12041 = vadd.f32 %v11921, %v12006
      %v12042 = vadd.f32 %v11922, %v12009
      %v12043 = vadd.f32 %v11923, %v12011
      %v12044 = vmul.f32 %v6876, %v5899
      %v12045 = vmul.f32 %v6877, %v5899
      %v12046 = vmul.f32 %v6878, %v5899
      %v12047 = vmul.f32 %v6879, %v5899
      %v12048 = vmul.f32 %v6880, %v5899
      %v12049 = vmul.f32 %v6881, %v5899
      %v12050 = vmul.f32 %v6882, %v5899
      %v12051 = vmul.f32 %v6883, %v5899
      %v12052 = vmul.f32 %v6884, %v5899
      %v12053 = vmul.f32 %v6885, %v5899
      %v12054 = vmul.f32 %v6886, %v5899
      %v12055 = vmul.f32 %v6887, %v5899
      %v12056 = vmul.f32 %v6888, %v5899
      %v12057 = vmul.f32 %v6889, %v5899
      %v12058 = vmul.f32 %v6890, %v5899
      %v12059 = vmul.f32 %v6891, %v5899
      %v12060 = vmul.f32 %v6892, %v5899
      %v12061 = vmul.f32 %v6893, %v5899
      %v12062 = vmul.f32 %v6894, %v5899
      %v12063 = vmul.f32 %v6895, %v5899
      %v12064 = vmul.f32 %v6896, %v5899
      %v12065 = vmul.f32 %v6897, %v5899
      %v12066 = vmul.f32 %v6898, %v5899
      %v12067 = vmul.f32 %v6899, %v5899
      %v12092 = vrot.slane %v12044, 6
      %v12093 = vrot.slane %v12045, 6
      %v12094 = vsel %vm1267, %v12092, %v12093
      %v12095 = vrot.slane %v12046, 6
      %v12096 = vsel %vm1267, %v12093, %v12095
      %v12097 = vrot.slane %v12047, 6
      %v12098 = vrot.slane %v12048, 6
      %v12099 = vsel %vm1267, %v12097, %v12098
      %v12100 = vrot.slane %v12049, 6
      %v12101 = vsel %vm1267, %v12098, %v12100
      %v12102 = vrot.slane %v12050, 6
      %v12103 = vrot.slane %v12051, 6
      %v12104 = vsel %vm1267, %v12102, %v12103
      %v12105 = vrot.slane %v12052, 6
      %v12106 = vsel %vm1267, %v12103, %v12105
      %v12107 = vrot.slane %v12053, 6
      %v12108 = vrot.slane %v12054, 6
      %v12109 = vsel %vm1267, %v12107, %v12108
      %v12110 = vrot.slane %v12055, 6
      %v12111 = vsel %vm1267, %v12108, %v12110
      %v12112 = vrot.slane %v12056, 6
      %v12113 = vrot.slane %v12057, 6
      %v12114 = vsel %vm1267, %v12112, %v12113
      %v12115 = vrot.slane %v12058, 6
      %v12116 = vsel %vm1267, %v12113, %v12115
      %v12117 = vrot.slane %v12059, 6
      %v12118 = vrot.slane %v12060, 6
      %v12119 = vsel %vm1267, %v12117, %v12118
      %v12120 = vrot.slane %v12061, 6
      %v12121 = vsel %vm1267, %v12118, %v12120
      %v12122 = vrot.slane %v12062, 6
      %v12123 = vrot.slane %v12063, 6
      %v12124 = vsel %vm1267, %v12122, %v12123
      %v12125 = vrot.slane %v12064, 6
      %v12126 = vsel %vm1267, %v12123, %v12125
      %v12127 = vrot.slane %v12065, 6
      %v12128 = vrot.slane %v12066, 6
      %v12129 = vsel %vm1267, %v12127, %v12128
      %v12130 = vrot.slane %v12067, 6
      %v12131 = vsel %vm1267, %v12128, %v12130
      %v12148 = vadd.f32 %v12028, %v12094
      %v12149 = vadd.f32 %v12029, %v12096
      %v12150 = vadd.f32 %v12030, %v12099
      %v12151 = vadd.f32 %v12031, %v12101
      %v12152 = vadd.f32 %v12032, %v12104
      %v12153 = vadd.f32 %v12033, %v12106
      %v12154 = vadd.f32 %v12034, %v12109
      %v12155 = vadd.f32 %v12035, %v12111
      %v12156 = vadd.f32 %v12036, %v12114
      %v12157 = vadd.f32 %v12037, %v12116
      %v12158 = vadd.f32 %v12038, %v12119
      %v12159 = vadd.f32 %v12039, %v12121
      %v12160 = vadd.f32 %v12040, %v12124
      %v12161 = vadd.f32 %v12041, %v12126
      %v12162 = vadd.f32 %v12042, %v12129
      %v12163 = vadd.f32 %v12043, %v12131
      %v12164 = vadd.f32 %v12148, %v6024
      %v12165 = vadd.f32 %v12149, %v6024
      %v12166 = vadd.f32 %v12150, %v6024
      %v12167 = vadd.f32 %v12151, %v6024
      %v12168 = vadd.f32 %v12152, %v6024
      %v12169 = vadd.f32 %v12153, %v6024
      %v12170 = vadd.f32 %v12154, %v6024
      %v12171 = vadd.f32 %v12155, %v6024
      %v12172 = vadd.f32 %v12156, %v6024
      %v12173 = vadd.f32 %v12157, %v6024
      %v12174 = vadd.f32 %v12158, %v6024
      %v12175 = vadd.f32 %v12159, %v6024
      %v12176 = vadd.f32 %v12160, %v6024
      %v12177 = vadd.f32 %v12161, %v6024
      %v12178 = vadd.f32 %v12162, %v6024
      %v12179 = vadd.f32 %v12163, %v6024
      %v12180 = vsel %vm361, %v12164, 0.0
      %12181 = vadd.xlane.f32.xlu0 %v12180
      %v12182 = vpop.xlane.xlu0 %12181
      %v12183 = vsel %vm361, %v12165, 0.0
      %12184 = vadd.xlane.f32.xlu0 %v12183
      %v12185 = vpop.xlane.xlu0 %12184
      %v12186 = vsel %vm361, %v12166, 0.0
      %12187 = vadd.xlane.f32.xlu0 %v12186
      %v12188 = vpop.xlane.xlu0 %12187
      %v12189 = vsel %vm361, %v12167, 0.0
      %12190 = vadd.xlane.f32.xlu0 %v12189
      %v12191 = vpop.xlane.xlu0 %12190
      %v12192 = vsel %vm361, %v12168, 0.0
      %12193 = vadd.xlane.f32.xlu0 %v12192
      %v12194 = vpop.xlane.xlu0 %12193
      %v12195 = vsel %vm361, %v12169, 0.0
      %12196 = vadd.xlane.f32.xlu0 %v12195
      %v12197 = vpop.xlane.xlu0 %12196
      %v12198 = vsel %vm361, %v12170, 0.0
      %12199 = vadd.xlane.f32.xlu0 %v12198
      %v12200 = vpop.xlane.xlu0 %12199
      %v12201 = vsel %vm361, %v12171, 0.0
      %12202 = vadd.xlane.f32.xlu0 %v12201
      %v12203 = vpop.xlane.xlu0 %12202
      %v12204 = vsel %vm361, %v12172, 0.0
      %12205 = vadd.xlane.f32.xlu0 %v12204
      %v12206 = vpop.xlane.xlu0 %12205
      %v12207 = vsel %vm361, %v12173, 0.0
      %12208 = vadd.xlane.f32.xlu0 %v12207
      %v12209 = vpop.xlane.xlu0 %12208
      %v12210 = vsel %vm361, %v12174, 0.0
      %12211 = vadd.xlane.f32.xlu0 %v12210
      %v12212 = vpop.xlane.xlu0 %12211
      %v12213 = vsel %vm361, %v12175, 0.0
      %12214 = vadd.xlane.f32.xlu0 %v12213
      %v12215 = vpop.xlane.xlu0 %12214
      %v12216 = vsel %vm361, %v12176, 0.0
      %12217 = vadd.xlane.f32.xlu0 %v12216
      %v12218 = vpop.xlane.xlu0 %12217
      %v12219 = vsel %vm361, %v12177, 0.0
      %12220 = vadd.xlane.f32.xlu0 %v12219
      %v12221 = vpop.xlane.xlu0 %12220
      %v12222 = vsel %vm361, %v12178, 0.0
      %12223 = vadd.xlane.f32.xlu0 %v12222
      %v12224 = vpop.xlane.xlu0 %12223
      %v12225 = vsel %vm361, %v12179, 0.0
      %12226 = vadd.xlane.f32.xlu0 %v12225
      %v12227 = vpop.xlane.xlu0 %12226
      %v12228 = vmul.f32 %v12182, %v6090
      %v12229 = vmul.f32 %v12185, %v6090
      %v12230 = vmul.f32 %v12188, %v6090
      %v12231 = vmul.f32 %v12191, %v6090
      %v12232 = vmul.f32 %v12194, %v6090
      %v12233 = vmul.f32 %v12197, %v6090
      %v12234 = vmul.f32 %v12200, %v6090
      %v12235 = vmul.f32 %v12203, %v6090
      %v12236 = vmul.f32 %v12206, %v6090
      %v12237 = vmul.f32 %v12209, %v6090
      %v12238 = vmul.f32 %v12212, %v6090
      %v12239 = vmul.f32 %v12215, %v6090
      %v12240 = vmul.f32 %v12218, %v6090
      %v12241 = vmul.f32 %v12221, %v6090
      %v12242 = vmul.f32 %v12224, %v6090
      %v12243 = vmul.f32 %v12227, %v6090
      %v12244 = vsub.f32 %v12164, %v12228
      %v12245 = vsub.f32 %v12165, %v12229
      %v12246 = vsub.f32 %v12166, %v12230
      %v12247 = vsub.f32 %v12167, %v12231
      %v12248 = vsub.f32 %v12168, %v12232
      %v12249 = vsub.f32 %v12169, %v12233
      %v12250 = vsub.f32 %v12170, %v12234
      %v12251 = vsub.f32 %v12171, %v12235
      %v12252 = vsub.f32 %v12172, %v12236
      %v12253 = vsub.f32 %v12173, %v12237
      %v12254 = vsub.f32 %v12174, %v12238
      %v12255 = vsub.f32 %v12175, %v12239
      %v12256 = vsub.f32 %v12176, %v12240
      %v12257 = vsub.f32 %v12177, %v12241
      %v12258 = vsub.f32 %v12178, %v12242
      %v12259 = vsub.f32 %v12179, %v12243
      %v12260 = vmul.f32 %v12244, %v12244
      %v12261 = vmul.f32 %v12245, %v12245
      %v12262 = vmul.f32 %v12246, %v12246
      %v12263 = vmul.f32 %v12247, %v12247
      %v12264 = vmul.f32 %v12248, %v12248
      %v12265 = vmul.f32 %v12249, %v12249
      %v12266 = vmul.f32 %v12250, %v12250
      %v12267 = vmul.f32 %v12251, %v12251
      %v12268 = vmul.f32 %v12252, %v12252
      %v12269 = vmul.f32 %v12253, %v12253
      %v12270 = vmul.f32 %v12254, %v12254
      %v12271 = vmul.f32 %v12255, %v12255
      %v12272 = vmul.f32 %v12256, %v12256
      %v12273 = vmul.f32 %v12257, %v12257
      %v12274 = vmul.f32 %v12258, %v12258
      %v12275 = vmul.f32 %v12259, %v12259
      %v12276 = vsel %vm361, %v12260, 0.0
      %12277 = vadd.xlane.f32.xlu0 %v12276
      %v12278 = vpop.xlane.xlu0 %12277
      %v12279 = vsel %vm361, %v12261, 0.0
      %12280 = vadd.xlane.f32.xlu0 %v12279
      %v12281 = vpop.xlane.xlu0 %12280
      %v12282 = vsel %vm361, %v12262, 0.0
      %12283 = vadd.xlane.f32.xlu0 %v12282
      %v12284 = vpop.xlane.xlu0 %12283
      %v12285 = vsel %vm361, %v12263, 0.0
      %12286 = vadd.xlane.f32.xlu0 %v12285
      %v12287 = vpop.xlane.xlu0 %12286
      %v12288 = vsel %vm361, %v12264, 0.0
      %12289 = vadd.xlane.f32.xlu0 %v12288
      %v12290 = vpop.xlane.xlu0 %12289
      %v12291 = vsel %vm361, %v12265, 0.0
      %12292 = vadd.xlane.f32.xlu0 %v12291
      %v12293 = vpop.xlane.xlu0 %12292
      %v12294 = vsel %vm361, %v12266, 0.0
      %12295 = vadd.xlane.f32.xlu0 %v12294
      %v12296 = vpop.xlane.xlu0 %12295
      %v12297 = vsel %vm361, %v12267, 0.0
      %12298 = vadd.xlane.f32.xlu0 %v12297
      %v12299 = vpop.xlane.xlu0 %12298
      %v12300 = vsel %vm361, %v12268, 0.0
      %12301 = vadd.xlane.f32.xlu0 %v12300
      %v12302 = vpop.xlane.xlu0 %12301
      %v12303 = vsel %vm361, %v12269, 0.0
      %12304 = vadd.xlane.f32.xlu0 %v12303
      %v12305 = vpop.xlane.xlu0 %12304
      %v12306 = vsel %vm361, %v12270, 0.0
      %12307 = vadd.xlane.f32.xlu0 %v12306
      %v12308 = vpop.xlane.xlu0 %12307
      %v12309 = vsel %vm361, %v12271, 0.0
      %12310 = vadd.xlane.f32.xlu0 %v12309
      %v12311 = vpop.xlane.xlu0 %12310
      %v12312 = vsel %vm361, %v12272, 0.0
      %12313 = vadd.xlane.f32.xlu0 %v12312
      %v12314 = vpop.xlane.xlu0 %12313
      %v12315 = vsel %vm361, %v12273, 0.0
      %12316 = vadd.xlane.f32.xlu0 %v12315
      %v12317 = vpop.xlane.xlu0 %12316
      %v12318 = vsel %vm361, %v12274, 0.0
      %12319 = vadd.xlane.f32.xlu0 %v12318
      %v12320 = vpop.xlane.xlu0 %12319
      %v12321 = vsel %vm361, %v12275, 0.0
      %12322 = vadd.xlane.f32.xlu0 %v12321
      %v12323 = vpop.xlane.xlu0 %12322
      %v12324 = vmul.f32 %v12278, %v6090
      %v12325 = vmul.f32 %v12281, %v6090
      %v12326 = vmul.f32 %v12284, %v6090
      %v12327 = vmul.f32 %v12287, %v6090
      %v12328 = vmul.f32 %v12290, %v6090
      %v12329 = vmul.f32 %v12293, %v6090
      %v12330 = vmul.f32 %v12296, %v6090
      %v12331 = vmul.f32 %v12299, %v6090
      %v12332 = vmul.f32 %v12302, %v6090
      %v12333 = vmul.f32 %v12305, %v6090
      %v12334 = vmul.f32 %v12308, %v6090
      %v12335 = vmul.f32 %v12311, %v6090
      %v12336 = vmul.f32 %v12314, %v6090
      %v12337 = vmul.f32 %v12317, %v6090
      %v12338 = vmul.f32 %v12320, %v6090
      %v12339 = vmul.f32 %v12323, %v6090
      %v12340 = vrsqrt.pop %v12324
      %v12341 = vmul.f32 %v12324, %v12340
      %vm12342 = vcmp.eq.f32.partialorder %v12324, inf
      %v12343 = vsel %vm12342, %v12324, %v12341
      %vm12344 = vcmp.eq.f32.partialorder %v12324, 0.0
      %v12345 = vand.u32 %v12324, 2147483648
      %v12346 = vsel %vm12344, %v12345, %v12343
      %v12347 = vrsqrt.pop %v12325
      %v12348 = vmul.f32 %v12325, %v12347
      %vm12349 = vcmp.eq.f32.partialorder %v12325, inf
      %v12350 = vsel %vm12349, %v12325, %v12348
      %vm12351 = vcmp.eq.f32.partialorder %v12325, 0.0
      %v12352 = vand.u32 %v12325, 2147483648
      %v12353 = vsel %vm12351, %v12352, %v12350
      %v12354 = vrsqrt.pop %v12326
      %v12355 = vmul.f32 %v12326, %v12354
      %vm12356 = vcmp.eq.f32.partialorder %v12326, inf
      %v12357 = vsel %vm12356, %v12326, %v12355
      %vm12358 = vcmp.eq.f32.partialorder %v12326, 0.0
      %v12359 = vand.u32 %v12326, 2147483648
      %v12360 = vsel %vm12358, %v12359, %v12357
      %v12361 = vrsqrt.pop %v12327
      %v12362 = vmul.f32 %v12327, %v12361
      %vm12363 = vcmp.eq.f32.partialorder %v12327, inf
      %v12364 = vsel %vm12363, %v12327, %v12362
      %vm12365 = vcmp.eq.f32.partialorder %v12327, 0.0
      %v12366 = vand.u32 %v12327, 2147483648
      %v12367 = vsel %vm12365, %v12366, %v12364
      %v12368 = vrsqrt.pop %v12328
      %v12369 = vmul.f32 %v12328, %v12368
      %vm12370 = vcmp.eq.f32.partialorder %v12328, inf
      %v12371 = vsel %vm12370, %v12328, %v12369
      %vm12372 = vcmp.eq.f32.partialorder %v12328, 0.0
      %v12373 = vand.u32 %v12328, 2147483648
      %v12374 = vsel %vm12372, %v12373, %v12371
      %v12375 = vrsqrt.pop %v12329
      %v12376 = vmul.f32 %v12329, %v12375
      %vm12377 = vcmp.eq.f32.partialorder %v12329, inf
      %v12378 = vsel %vm12377, %v12329, %v12376
      %vm12379 = vcmp.eq.f32.partialorder %v12329, 0.0
      %v12380 = vand.u32 %v12329, 2147483648
      %v12381 = vsel %vm12379, %v12380, %v12378
      %v12382 = vrsqrt.pop %v12330
      %v12383 = vmul.f32 %v12330, %v12382
      %vm12384 = vcmp.eq.f32.partialorder %v12330, inf
      %v12385 = vsel %vm12384, %v12330, %v12383
      %vm12386 = vcmp.eq.f32.partialorder %v12330, 0.0
      %v12387 = vand.u32 %v12330, 2147483648
      %v12388 = vsel %vm12386, %v12387, %v12385
      %v12389 = vrsqrt.pop %v12331
      %v12390 = vmul.f32 %v12331, %v12389
      %vm12391 = vcmp.eq.f32.partialorder %v12331, inf
      %v12392 = vsel %vm12391, %v12331, %v12390
      %vm12393 = vcmp.eq.f32.partialorder %v12331, 0.0
      %v12394 = vand.u32 %v12331, 2147483648
      %v12395 = vsel %vm12393, %v12394, %v12392
      %v12396 = vrsqrt.pop %v12332
      %v12397 = vmul.f32 %v12332, %v12396
      %vm12398 = vcmp.eq.f32.partialorder %v12332, inf
      %v12399 = vsel %vm12398, %v12332, %v12397
      %vm12400 = vcmp.eq.f32.partialorder %v12332, 0.0
      %v12401 = vand.u32 %v12332, 2147483648
      %v12402 = vsel %vm12400, %v12401, %v12399
      %v12403 = vrsqrt.pop %v12333
      %v12404 = vmul.f32 %v12333, %v12403
      %vm12405 = vcmp.eq.f32.partialorder %v12333, inf
      %v12406 = vsel %vm12405, %v12333, %v12404
      %vm12407 = vcmp.eq.f32.partialorder %v12333, 0.0
      %v12408 = vand.u32 %v12333, 2147483648
      %v12409 = vsel %vm12407, %v12408, %v12406
      %v12410 = vrsqrt.pop %v12334
      %v12411 = vmul.f32 %v12334, %v12410
      %vm12412 = vcmp.eq.f32.partialorder %v12334, inf
      %v12413 = vsel %vm12412, %v12334, %v12411
      %vm12414 = vcmp.eq.f32.partialorder %v12334, 0.0
      %v12415 = vand.u32 %v12334, 2147483648
      %v12416 = vsel %vm12414, %v12415, %v12413
      %v12417 = vrsqrt.pop %v12335
      %v12418 = vmul.f32 %v12335, %v12417
      %vm12419 = vcmp.eq.f32.partialorder %v12335, inf
      %v12420 = vsel %vm12419, %v12335, %v12418
      %vm12421 = vcmp.eq.f32.partialorder %v12335, 0.0
      %v12422 = vand.u32 %v12335, 2147483648
      %v12423 = vsel %vm12421, %v12422, %v12420
      %v12424 = vrsqrt.pop %v12336
      %v12425 = vmul.f32 %v12336, %v12424
      %vm12426 = vcmp.eq.f32.partialorder %v12336, inf
      %v12427 = vsel %vm12426, %v12336, %v12425
      %vm12428 = vcmp.eq.f32.partialorder %v12336, 0.0
      %v12429 = vand.u32 %v12336, 2147483648
      %v12430 = vsel %vm12428, %v12429, %v12427
      %v12431 = vrsqrt.pop %v12337
      %v12432 = vmul.f32 %v12337, %v12431
      %vm12433 = vcmp.eq.f32.partialorder %v12337, inf
      %v12434 = vsel %vm12433, %v12337, %v12432
      %vm12435 = vcmp.eq.f32.partialorder %v12337, 0.0
      %v12436 = vand.u32 %v12337, 2147483648
      %v12437 = vsel %vm12435, %v12436, %v12434
      %v12438 = vrsqrt.pop %v12338
      %v12439 = vmul.f32 %v12338, %v12438
      %vm12440 = vcmp.eq.f32.partialorder %v12338, inf
      %v12441 = vsel %vm12440, %v12338, %v12439
      %vm12442 = vcmp.eq.f32.partialorder %v12338, 0.0
      %v12443 = vand.u32 %v12338, 2147483648
      %v12444 = vsel %vm12442, %v12443, %v12441
      %v12445 = vrsqrt.pop %v12339
      %v12446 = vmul.f32 %v12339, %v12445
      %vm12447 = vcmp.eq.f32.partialorder %v12339, inf
      %v12448 = vsel %vm12447, %v12339, %v12446
      %vm12449 = vcmp.eq.f32.partialorder %v12339, 0.0
      %v12450 = vand.u32 %v12339, 2147483648
      %v12451 = vsel %vm12449, %v12450, %v12448
      %v12452 = vadd.f32 %v12346, 1e-06
      %v12453 = vadd.f32 %v12353, 1e-06
      %v12454 = vadd.f32 %v12360, 1e-06
      %v12455 = vadd.f32 %v12367, 1e-06
      %v12456 = vadd.f32 %v12374, 1e-06
      %v12457 = vadd.f32 %v12381, 1e-06
      %v12458 = vadd.f32 %v12388, 1e-06
      %v12459 = vadd.f32 %v12395, 1e-06
      %v12460 = vadd.f32 %v12402, 1e-06
      %v12461 = vadd.f32 %v12409, 1e-06
      %v12462 = vadd.f32 %v12416, 1e-06
      %v12463 = vadd.f32 %v12423, 1e-06
      %v12464 = vadd.f32 %v12430, 1e-06
      %v12465 = vadd.f32 %v12437, 1e-06
      %v12466 = vadd.f32 %v12444, 1e-06
      %v12467 = vadd.f32 %v12451, 1e-06
      %v12468 = vrcp.pop %v12452
      %v12469 = vmul.f32 %v12244, %v12468
      %v12470 = vrcp.pop %v12453
      %v12471 = vmul.f32 %v12245, %v12470
      %v12472 = vrcp.pop %v12454
      %v12473 = vmul.f32 %v12246, %v12472
      %v12474 = vrcp.pop %v12455
      %v12475 = vmul.f32 %v12247, %v12474
      %v12476 = vrcp.pop %v12456
      %v12477 = vmul.f32 %v12248, %v12476
      %v12478 = vrcp.pop %v12457
      %v12479 = vmul.f32 %v12249, %v12478
      %v12480 = vrcp.pop %v12458
      %v12481 = vmul.f32 %v12250, %v12480
      %v12482 = vrcp.pop %v12459
      %v12483 = vmul.f32 %v12251, %v12482
      %v12484 = vrcp.pop %v12460
      %v12485 = vmul.f32 %v12252, %v12484
      %v12486 = vrcp.pop %v12461
      %v12487 = vmul.f32 %v12253, %v12486
      %v12488 = vrcp.pop %v12462
      %v12489 = vmul.f32 %v12254, %v12488
      %v12490 = vrcp.pop %v12463
      %v12491 = vmul.f32 %v12255, %v12490
      %v12492 = vrcp.pop %v12464
      %v12493 = vmul.f32 %v12256, %v12492
      %v12494 = vrcp.pop %v12465
      %v12495 = vmul.f32 %v12257, %v12494
      %v12496 = vrcp.pop %v12466
      %v12497 = vmul.f32 %v12258, %v12496
      %v12498 = vrcp.pop %v12467
      %v12499 = vmul.f32 %v12259, %v12498
      %v12500 = vmul.f32 %v12469, %v6367
      %v12501 = vmul.f32 %v12471, %v6367
      %v12502 = vmul.f32 %v12473, %v6367
      %v12503 = vmul.f32 %v12475, %v6367
      %v12504 = vmul.f32 %v12477, %v6367
      %v12505 = vmul.f32 %v12479, %v6367
      %v12506 = vmul.f32 %v12481, %v6367
      %v12507 = vmul.f32 %v12483, %v6367
      %v12508 = vmul.f32 %v12485, %v6367
      %v12509 = vmul.f32 %v12487, %v6367
      %v12510 = vmul.f32 %v12489, %v6367
      %v12511 = vmul.f32 %v12491, %v6367
      %v12512 = vmul.f32 %v12493, %v6367
      %v12513 = vmul.f32 %v12495, %v6367
      %v12514 = vmul.f32 %v12497, %v6367
      %v12515 = vmul.f32 %v12499, %v6367
      %v12516 = vadd.f32 %v12500, %v6389
      %v12517 = vadd.f32 %v12501, %v6389
      %v12518 = vadd.f32 %v12502, %v6389
      %v12519 = vadd.f32 %v12503, %v6389
      %v12520 = vadd.f32 %v12504, %v6389
      %v12521 = vadd.f32 %v12505, %v6389
      %v12522 = vadd.f32 %v12506, %v6389
      %v12523 = vadd.f32 %v12507, %v6389
      %v12524 = vadd.f32 %v12508, %v6389
      %v12525 = vadd.f32 %v12509, %v6389
      %v12526 = vadd.f32 %v12510, %v6389
      %v12527 = vadd.f32 %v12511, %v6389
      %v12528 = vadd.f32 %v12512, %v6389
      %v12529 = vadd.f32 %v12513, %v6389
      %v12530 = vadd.f32 %v12514, %v6389
      %v12531 = vadd.f32 %v12515, %v6389
      %v12532 = vpack.c.bf16 %v12517, %v12516
      %v12533 = vpack.c.bf16 %v12519, %v12518
      %v12534 = vpack.c.bf16 %v12521, %v12520
      %v12535 = vpack.c.bf16 %v12523, %v12522
      %v12536 = vpack.c.bf16 %v12525, %v12524
      %v12537 = vpack.c.bf16 %v12527, %v12526
      %v12538 = vpack.c.bf16 %v12529, %v12528
      %v12539 = vpack.c.bf16 %v12531, %v12530
      %v12541 = vsel %vm361, %v12532, 0
      %v12544 = vsel %vm361, %v12533, 0
      %v12547 = vsel %vm361, %v12534, 0
      %v12550 = vsel %vm361, %v12535, 0
      %v12553 = vsel %vm361, %v12536, 0
      %v12556 = vsel %vm361, %v12537, 0
      %v12559 = vsel %vm361, %v12538, 0
      %v12562 = vsel %vm361, %v12539, 0
      %12564 = vmatprep.subr.bf16.mxu0 0
      %12565 = vmatpush1.bf16.msra.mxu0 %v6446
      %12566 = vmatprep.subr.bf16.mxu0 0
      %12567 = vmatpush1.bf16.msra.mxu0 0
      %12568 = vmatprep.subr.bf16.mxu0 0
      %12569 = vmatpush1.bf16.msra.mxu0 0
      %12570 = vmatprep.subr.bf16.mxu0 0
      %12571 = vmatpush1.bf16.msra.mxu0 0
      %12572 = vmatprep.subr.bf16.mxu0 0
      %12573 = vmatpush1.bf16.msra.mxu0 0
      %12574 = vmatprep.subr.bf16.mxu0 0
      %12575 = vmatpush1.bf16.msra.mxu0 0
      %12576 = vmatprep.subr.bf16.mxu0 0
      %12577 = vmatpush1.bf16.msra.mxu0 0
      %12578 = vmatprep.subr.bf16.mxu0 0
      %12579 = vmatpush1.bf16.msra.mxu0 0
      %12580 = vmatprep.subr.bf16.mxu0 0
      %12581 = vmatpush1.bf16.msra.mxu0 0
      %12582 = vmatprep.subr.bf16.mxu0 0
      %12583 = vmatpush1.bf16.msra.mxu0 0
      %12584 = vmatprep.subr.bf16.mxu0 0
      %12585 = vmatpush1.bf16.msra.mxu0 0
      %12586 = vmatprep.subr.bf16.mxu0 0
      %12587 = vmatpush1.bf16.msra.mxu0 0
      %12588 = vmatprep.subr.bf16.mxu0 0
      %12589 = vmatpush1.bf16.msra.mxu0 0
      %12590 = vmatprep.subr.bf16.mxu0 0
      %12591 = vmatpush1.bf16.msra.mxu0 0
      %12592 = vmatprep.subr.bf16.mxu0 0
      %12593 = vmatpush1.bf16.msra.mxu0 0
      %12594 = vmatprep.subr.bf16.mxu0 0
      %12595 = vmatpush1.bf16.msra.mxu0 0
      %12596 = vmatprep.mubr.bf16.mxu0 0
      %12597 = vmatmul.mubr.bf16.gmra.mrb[0].mxu0 %v12541
      %v12598 = vpop.f32.mrb[0].mxu0
      %v12599 = vadd.f32 %v6419, %v12598
      %v12600 = vpop.f32.mrb[0].mxu0
      %v12601 = vpop.f32.mrb[0].mxu0
      %v12602 = vadd.f32 %v6419, %v12601
      %v12603 = vpop.f32.mrb[0].mxu0
      %12604 = vmatprep.mubr.bf16.mxu0 0
      %12605 = vmatmul.mubr.bf16.gmra.mrb[0].mxu0 %v12544
      %v12606 = vpop.f32.mrb[0].mxu0
      %v12607 = vadd.f32 %v6419, %v12606
      %v12608 = vpop.f32.mrb[0].mxu0
      %v12609 = vpop.f32.mrb[0].mxu0
      %v12610 = vadd.f32 %v6419, %v12609
      %v12611 = vpop.f32.mrb[0].mxu0
      %12612 = vmatprep.mubr.bf16.mxu0 0
      %12613 = vmatmul.mubr.bf16.gmra.mrb[0].mxu0 %v12547
      %v12614 = vpop.f32.mrb[0].mxu0
      %v12615 = vadd.f32 %v6419, %v12614
      %v12616 = vpop.f32.mrb[0].mxu0
      %v12617 = vpop.f32.mrb[0].mxu0
      %v12618 = vadd.f32 %v6419, %v12617
      %v12619 = vpop.f32.mrb[0].mxu0
      %12620 = vmatprep.mubr.bf16.mxu0 0
      %12621 = vmatmul.mubr.bf16.gmra.mrb[0].mxu0 %v12550
      %v12622 = vpop.f32.mrb[0].mxu0
      %v12623 = vadd.f32 %v6419, %v12622
      %v12624 = vpop.f32.mrb[0].mxu0
      %v12625 = vpop.f32.mrb[0].mxu0
      %v12626 = vadd.f32 %v6419, %v12625
      %v12627 = vpop.f32.mrb[0].mxu0
      %12628 = vmatprep.mubr.bf16.mxu0 0
      %12629 = vmatmul.mubr.bf16.gmra.mrb[0].mxu0 %v12553
      %v12630 = vpop.f32.mrb[0].mxu0
      %v12631 = vadd.f32 %v6419, %v12630
      %v12632 = vpop.f32.mrb[0].mxu0
      %v12633 = vpop.f32.mrb[0].mxu0
      %v12634 = vadd.f32 %v6419, %v12633
      %v12635 = vpop.f32.mrb[0].mxu0
      %12636 = vmatprep.mubr.bf16.mxu0 0
      %12637 = vmatmul.mubr.bf16.gmra.mrb[0].mxu0 %v12556
      %v12638 = vpop.f32.mrb[0].mxu0
      %v12639 = vadd.f32 %v6419, %v12638
      %v12640 = vpop.f32.mrb[0].mxu0
      %v12641 = vpop.f32.mrb[0].mxu0
      %v12642 = vadd.f32 %v6419, %v12641
      %v12643 = vpop.f32.mrb[0].mxu0
      %12644 = vmatprep.mubr.bf16.mxu0 0
      %12645 = vmatmul.mubr.bf16.gmra.mrb[0].mxu0 %v12559
      %v12646 = vpop.f32.mrb[0].mxu0
      %v12647 = vadd.f32 %v6419, %v12646
      %v12648 = vpop.f32.mrb[0].mxu0
      %v12649 = vpop.f32.mrb[0].mxu0
      %v12650 = vadd.f32 %v6419, %v12649
      %v12651 = vpop.f32.mrb[0].mxu0
      %12652 = vmatprep.mubr.bf16.mxu0 0
      %12653 = vmatmul.mubr.bf16.gmra.mrb[0].mxu0 %v12562
      %v12654 = vpop.f32.mrb[0].mxu0
      %v12655 = vadd.f32 %v6419, %v12654
      %v12656 = vpop.f32.mrb[0].mxu0
      %v12657 = vpop.f32.mrb[0].mxu0
      %v12658 = vadd.f32 %v6419, %v12657
      %v12659 = vpop.f32.mrb[0].mxu0
      %12660 = vdwg.mxu0
      %v12661 = vmul.f32 %v12599, -1.702
      %v12662 = vmul.f32 %v12602, -1.702
      %v12663 = vmul.f32 %v12607, -1.702
      %v12664 = vmul.f32 %v12610, -1.702
      %v12665 = vmul.f32 %v12615, -1.702
      %v12666 = vmul.f32 %v12618, -1.702
      %v12667 = vmul.f32 %v12623, -1.702
      %v12668 = vmul.f32 %v12626, -1.702
      %v12669 = vmul.f32 %v12631, -1.702
      %v12670 = vmul.f32 %v12634, -1.702
      %v12671 = vmul.f32 %v12639, -1.702
      %v12672 = vmul.f32 %v12642, -1.702
      %v12673 = vmul.f32 %v12647, -1.702
      %v12674 = vmul.f32 %v12650, -1.702
      %v12675 = vmul.f32 %v12655, -1.702
      %v12676 = vmul.f32 %v12658, -1.702
      %v12677 = vmul.f32 %v12661, 1.442695
      %v12678 = vpow.pop %v12677
      %v12679 = vmul.f32 %v12662, 1.442695
      %v12680 = vpow.pop %v12679
      %v12681 = vmul.f32 %v12663, 1.442695
      %v12682 = vpow.pop %v12681
      %v12683 = vmul.f32 %v12664, 1.442695
      %v12684 = vpow.pop %v12683
      %v12685 = vmul.f32 %v12665, 1.442695
      %v12686 = vpow.pop %v12685
      %v12687 = vmul.f32 %v12666, 1.442695
      %v12688 = vpow.pop %v12687
      %v12689 = vmul.f32 %v12667, 1.442695
      %v12690 = vpow.pop %v12689
      %v12691 = vmul.f32 %v12668, 1.442695
      %v12692 = vpow.pop %v12691
      %v12693 = vmul.f32 %v12669, 1.442695
      %v12694 = vpow.pop %v12693
      %v12695 = vmul.f32 %v12670, 1.442695
      %v12696 = vpow.pop %v12695
      %v12697 = vmul.f32 %v12671, 1.442695
      %v12698 = vpow.pop %v12697
      %v12699 = vmul.f32 %v12672, 1.442695
      %v12700 = vpow.pop %v12699
      %v12701 = vmul.f32 %v12673, 1.442695
      %v12702 = vpow.pop %v12701
      %v12703 = vmul.f32 %v12674, 1.442695
      %v12704 = vpow.pop %v12703
      %v12705 = vmul.f32 %v12675, 1.442695
      %v12706 = vpow.pop %v12705
      %v12707 = vmul.f32 %v12676, 1.442695
      %v12708 = vpow.pop %v12707
      %v12709 = vadd.f32 %v12678, 1.0
      %v12710 = vadd.f32 %v12680, 1.0
      %v12711 = vadd.f32 %v12682, 1.0
      %v12712 = vadd.f32 %v12684, 1.0
      %v12713 = vadd.f32 %v12686, 1.0
      %v12714 = vadd.f32 %v12688, 1.0
      %v12715 = vadd.f32 %v12690, 1.0
      %v12716 = vadd.f32 %v12692, 1.0
      %v12717 = vadd.f32 %v12694, 1.0
      %v12718 = vadd.f32 %v12696, 1.0
      %v12719 = vadd.f32 %v12698, 1.0
      %v12720 = vadd.f32 %v12700, 1.0
      %v12721 = vadd.f32 %v12702, 1.0
      %v12722 = vadd.f32 %v12704, 1.0
      %v12723 = vadd.f32 %v12706, 1.0
      %v12724 = vadd.f32 %v12708, 1.0
      %v12725 = vrcp.pop %v12709
      %v12726 = vrcp.pop %v12710
      %v12727 = vrcp.pop %v12711
      %v12728 = vrcp.pop %v12712
      %v12729 = vrcp.pop %v12713
      %v12730 = vrcp.pop %v12714
      %v12731 = vrcp.pop %v12715
      %v12732 = vrcp.pop %v12716
      %v12733 = vrcp.pop %v12717
      %v12734 = vrcp.pop %v12718
      %v12735 = vrcp.pop %v12719
      %v12736 = vrcp.pop %v12720
      %v12737 = vrcp.pop %v12721
      %v12738 = vrcp.pop %v12722
      %v12739 = vrcp.pop %v12723
      %v12740 = vrcp.pop %v12724
      %v12741 = vmul.f32 %v12599, %v12725
      %v12742 = vmul.f32 %v12602, %v12726
      %v12743 = vmul.f32 %v12607, %v12727
      %v12744 = vmul.f32 %v12610, %v12728
      %v12745 = vmul.f32 %v12615, %v12729
      %v12746 = vmul.f32 %v12618, %v12730
      %v12747 = vmul.f32 %v12623, %v12731
      %v12748 = vmul.f32 %v12626, %v12732
      %v12749 = vmul.f32 %v12631, %v12733
      %v12750 = vmul.f32 %v12634, %v12734
      %v12751 = vmul.f32 %v12639, %v12735
      %v12752 = vmul.f32 %v12642, %v12736
      %v12753 = vmul.f32 %v12647, %v12737
      %v12754 = vmul.f32 %v12650, %v12738
      %v12755 = vmul.f32 %v12655, %v12739
      %v12756 = vmul.f32 %v12658, %v12740
      %v12757 = vpack.c.bf16 %v12742, %v12741
      %v12758 = vpack.c.bf16 %v12744, %v12743
      %v12759 = vpack.c.bf16 %v12746, %v12745
      %v12760 = vpack.c.bf16 %v12748, %v12747
      %v12761 = vpack.c.bf16 %v12750, %v12749
      %v12762 = vpack.c.bf16 %v12752, %v12751
      %v12763 = vpack.c.bf16 %v12754, %v12753
      %v12764 = vpack.c.bf16 %v12756, %v12755
      %v12766 = vsel %vm6661, %v12757, 0
      %v12769 = vsel %vm6661, %v12758, 0
      %v12772 = vsel %vm6661, %v12759, 0
      %v12775 = vsel %vm6661, %v12760, 0
      %v12778 = vsel %vm6661, %v12761, 0
      %v12781 = vsel %vm6661, %v12762, 0
      %v12784 = vsel %vm6661, %v12763, 0
      %v12787 = vsel %vm6661, %v12764, 0
      %12789 = vmatprep.subr.bf16.mxu0 0
      %12790 = vmatpush1.bf16.msra.mxu0 %v6659
      %12791 = vmatprep.subr.bf16.mxu0 0
      %12792 = vmatpush1.bf16.msra.mxu0 0
      %12793 = vmatprep.subr.bf16.mxu0 0
      %12794 = vmatpush1.bf16.msra.mxu0 0
      %12795 = vmatprep.subr.bf16.mxu0 0
      %12796 = vmatpush1.bf16.msra.mxu0 0
      %12797 = vmatprep.subr.bf16.mxu0 0
      %12798 = vmatpush1.bf16.msra.mxu0 0
      %12799 = vmatprep.subr.bf16.mxu0 0
      %12800 = vmatpush1.bf16.msra.mxu0 0
      %12801 = vmatprep.subr.bf16.mxu0 0
      %12802 = vmatpush1.bf16.msra.mxu0 0
      %12803 = vmatprep.subr.bf16.mxu0 0
      %12804 = vmatpush1.bf16.msra.mxu0 0
      %12805 = vmatprep.subr.bf16.mxu0 0
      %12806 = vmatpush1.bf16.msra.mxu0 0
      %12807 = vmatprep.subr.bf16.mxu0 0
      %12808 = vmatpush1.bf16.msra.mxu0 0
      %12809 = vmatprep.subr.bf16.mxu0 0
      %12810 = vmatpush1.bf16.msra.mxu0 0
      %12811 = vmatprep.subr.bf16.mxu0 0
      %12812 = vmatpush1.bf16.msra.mxu0 0
      %12813 = vmatprep.subr.bf16.mxu0 0
      %12814 = vmatpush1.bf16.msra.mxu0 0
      %12815 = vmatprep.subr.bf16.mxu0 0
      %12816 = vmatpush1.bf16.msra.mxu0 0
      %12817 = vmatprep.subr.bf16.mxu0 0
      %12818 = vmatpush1.bf16.msra.mxu0 0
      %12819 = vmatprep.subr.bf16.mxu0 0
      %12820 = vmatpush1.bf16.msra.mxu0 0
      %12821 = vmatprep.mubr.bf16.mxu0 0
      %12822 = vmatmul.mubr.bf16.gmra.mrb[0].mxu0 %v12766
      %v12823 = vpop.f32.mrb[0].mxu0
      %v12824 = vadd.f32 %v6653, %v12823
      %v12825 = vpop.f32.mrb[0].mxu0
      %v12826 = vpop.f32.mrb[0].mxu0
      %v12827 = vadd.f32 %v6653, %v12826
      %v12828 = vpop.f32.mrb[0].mxu0
      %12829 = vmatprep.mubr.bf16.mxu0 0
      %12830 = vmatmul.mubr.bf16.gmra.mrb[0].mxu0 %v12769
      %v12831 = vpop.f32.mrb[0].mxu0
      %v12832 = vadd.f32 %v6653, %v12831
      %v12833 = vpop.f32.mrb[0].mxu0
      %v12834 = vpop.f32.mrb[0].mxu0
      %v12835 = vadd.f32 %v6653, %v12834
      %v12836 = vpop.f32.mrb[0].mxu0
      %12837 = vmatprep.mubr.bf16.mxu0 0
      %12838 = vmatmul.mubr.bf16.gmra.mrb[0].mxu0 %v12772
      %v12839 = vpop.f32.mrb[0].mxu0
      %v12840 = vadd.f32 %v6653, %v12839
      %v12841 = vpop.f32.mrb[0].mxu0
      %v12842 = vpop.f32.mrb[0].mxu0
      %v12843 = vadd.f32 %v6653, %v12842
      %v12844 = vpop.f32.mrb[0].mxu0
      %12845 = vmatprep.mubr.bf16.mxu0 0
      %12846 = vmatmul.mubr.bf16.gmra.mrb[0].mxu0 %v12775
      %v12847 = vpop.f32.mrb[0].mxu0
      %v12848 = vadd.f32 %v6653, %v12847
      %v12849 = vpop.f32.mrb[0].mxu0
      %v12850 = vpop.f32.mrb[0].mxu0
      %v12851 = vadd.f32 %v6653, %v12850
      %v12852 = vpop.f32.mrb[0].mxu0
      %12853 = vmatprep.mubr.bf16.mxu0 0
      %12854 = vmatmul.mubr.bf16.gmra.mrb[0].mxu0 %v12778
      %v12855 = vpop.f32.mrb[0].mxu0
      %v12856 = vadd.f32 %v6653, %v12855
      %v12857 = vpop.f32.mrb[0].mxu0
      %v12858 = vpop.f32.mrb[0].mxu0
      %v12859 = vadd.f32 %v6653, %v12858
      %v12860 = vpop.f32.mrb[0].mxu0
      %12861 = vmatprep.mubr.bf16.mxu0 0
      %12862 = vmatmul.mubr.bf16.gmra.mrb[0].mxu0 %v12781
      %v12863 = vpop.f32.mrb[0].mxu0
      %v12864 = vadd.f32 %v6653, %v12863
      %v12865 = vpop.f32.mrb[0].mxu0
      %v12866 = vpop.f32.mrb[0].mxu0
      %v12867 = vadd.f32 %v6653, %v12866
      %v12868 = vpop.f32.mrb[0].mxu0
      %12869 = vmatprep.mubr.bf16.mxu0 0
      %12870 = vmatmul.mubr.bf16.gmra.mrb[0].mxu0 %v12784
      %v12871 = vpop.f32.mrb[0].mxu0
      %v12872 = vadd.f32 %v6653, %v12871
      %v12873 = vpop.f32.mrb[0].mxu0
      %v12874 = vpop.f32.mrb[0].mxu0
      %v12875 = vadd.f32 %v6653, %v12874
      %v12876 = vpop.f32.mrb[0].mxu0
      %12877 = vmatprep.mubr.bf16.mxu0 0
      %12878 = vmatmul.mubr.bf16.gmra.mrb[0].mxu0 %v12787
      %v12879 = vpop.f32.mrb[0].mxu0
      %v12880 = vadd.f32 %v6653, %v12879
      %v12881 = vpop.f32.mrb[0].mxu0
      %v12882 = vpop.f32.mrb[0].mxu0
      %v12883 = vadd.f32 %v6653, %v12882
      %v12884 = vpop.f32.mrb[0].mxu0
      %12885 = vdwg.mxu0
      %v12886 = vmul.f32 %v12824, %v6787
      %v12887 = vmul.f32 %v12827, %v6787
      %v12888 = vmul.f32 %v12832, %v6787
      %v12889 = vmul.f32 %v12835, %v6787
      %v12890 = vmul.f32 %v12840, %v6787
      %v12891 = vmul.f32 %v12843, %v6787
      %v12892 = vmul.f32 %v12848, %v6787
      %v12893 = vmul.f32 %v12851, %v6787
      %v12894 = vmul.f32 %v12856, %v6787
      %v12895 = vmul.f32 %v12859, %v6787
      %v12896 = vmul.f32 %v12864, %v6787
      %v12897 = vmul.f32 %v12867, %v6787
      %v12898 = vmul.f32 %v12872, %v6787
      %v12899 = vmul.f32 %v12875, %v6787
      %v12900 = vmul.f32 %v12880, %v6787
      %v12901 = vmul.f32 %v12883, %v6787
      %s12902 = smul.u32 8, 16
      %s12903 = scalar_lea.vmem %s354, %s12902
      %v12904 = vld [vmem:[%s12903] sm:$0xff]
      %v12905 = vld [vmem:[%s12903 + $0x8] sm:$0xff]
      %v12906 = vld [vmem:[%s12903 + $0x10] sm:$0xff]
      %v12907 = vld [vmem:[%s12903 + $0x18] sm:$0xff]
      %v12908 = vld [vmem:[%s12903 + $0x20] sm:$0xff]
      %v12909 = vld [vmem:[%s12903 + $0x28] sm:$0xff]
      %v12910 = vld [vmem:[%s12903 + $0x30] sm:$0xff]
      %v12911 = vld [vmem:[%s12903 + $0x38] sm:$0xff]
      %v12912 = vld [vmem:[%s12903 + $0x40] sm:$0xff]
      %v12913 = vld [vmem:[%s12903 + $0x48] sm:$0xff]
      %v12914 = vld [vmem:[%s12903 + $0x50] sm:$0xff]
      %v12915 = vld [vmem:[%s12903 + $0x58] sm:$0xff]
      %v12916 = vld [vmem:[%s12903 + $0x60] sm:$0xff]
      %v12917 = vld [vmem:[%s12903 + $0x68] sm:$0xff]
      %v12918 = vld [vmem:[%s12903 + $0x70] sm:$0xff]
      %v12919 = vld [vmem:[%s12903 + $0x78] sm:$0xff]
      %v12920 = vadd.f32 %v12904, %v12886
      %v12921 = vadd.f32 %v12905, %v12887
      %v12922 = vadd.f32 %v12906, %v12888
      %v12923 = vadd.f32 %v12907, %v12889
      %v12924 = vadd.f32 %v12908, %v12890
      %v12925 = vadd.f32 %v12909, %v12891
      %v12926 = vadd.f32 %v12910, %v12892
      %v12927 = vadd.f32 %v12911, %v12893
      %v12928 = vadd.f32 %v12912, %v12894
      %v12929 = vadd.f32 %v12913, %v12895
      %v12930 = vadd.f32 %v12914, %v12896
      %v12931 = vadd.f32 %v12915, %v12897
      %v12932 = vadd.f32 %v12916, %v12898
      %v12933 = vadd.f32 %v12917, %v12899
      %v12934 = vadd.f32 %v12918, %v12900
      %v12935 = vadd.f32 %v12919, %v12901
      %s12936 = scalar_lea.vmem %s359, %s12902
      %12937 = vst.msk [vmem:[%s12936] sm:$0xff] %vm361, %v12920
      %12938 = vst.msk [vmem:[%s12936 + $0x8] sm:$0xff] %vm361, %v12921
      %12939 = vst.msk [vmem:[%s12936 + $0x10] sm:$0xff] %vm361, %v12922
      %12940 = vst.msk [vmem:[%s12936 + $0x18] sm:$0xff] %vm361, %v12923
      %12941 = vst.msk [vmem:[%s12936 + $0x20] sm:$0xff] %vm361, %v12924
      %12942 = vst.msk [vmem:[%s12936 + $0x28] sm:$0xff] %vm361, %v12925
      %12943 = vst.msk [vmem:[%s12936 + $0x30] sm:$0xff] %vm361, %v12926
      %12944 = vst.msk [vmem:[%s12936 + $0x38] sm:$0xff] %vm361, %v12927
      %12945 = vst.msk [vmem:[%s12936 + $0x40] sm:$0xff] %vm361, %v12928
      %12946 = vst.msk [vmem:[%s12936 + $0x48] sm:$0xff] %vm361, %v12929
      %12947 = vst.msk [vmem:[%s12936 + $0x50] sm:$0xff] %vm361, %v12930
      %12948 = vst.msk [vmem:[%s12936 + $0x58] sm:$0xff] %vm361, %v12931
      %12949 = vst.msk [vmem:[%s12936 + $0x60] sm:$0xff] %vm361, %v12932
      %12950 = vst.msk [vmem:[%s12936 + $0x68] sm:$0xff] %vm361, %v12933
      %12951 = vst.msk [vmem:[%s12936 + $0x70] sm:$0xff] %vm361, %v12934
      %12952 = vst.msk [vmem:[%s12936 + $0x78] sm:$0xff] %vm361, %v12935
      %p12953 = scmp.lt.s32.totalorder %s21, 1
      %s12954 = scalar_select %p12953, %s21, 1
      %s12955 = smul.addr %s12954, 32
      %s12956 = smul.addr %s12955, 8
      %s12957 = scalar_lea.vmem %s10, %s12956
      // Predicated region
      $region61: #{tpu_custom_call.1} parent=59 // pred_check
        %p12958 = pneg %p254
      $region62: #{tpu_custom_call.1} parent=59 // pred_check_branch
        %12960 = sbr.rel (%p12958) target = $region64
      $region63: #{tpu_custom_call.1} parent=59 // pred_region
        _
      $region64: #{tpu_custom_call.1} parent=59 // pred_fallthru
        _
    $region60: #{tpu_custom_call.1} parent=5 // pred_fallthru
      _
    %p12961 = scmp.le.s32.totalorder 2, %s16
    // Predicated region
    $region65: #{tpu_custom_call.1} parent=5 // pred_check
      %p12962 = pneg %p12961
    $region66: #{tpu_custom_call.1} parent=5 // pred_check_branch
      %12964 = sbr.rel (%p12962) target = $region68
    $region67: #{tpu_custom_call.1} parent=5 // pred_region
      %s12965 = ssub.s32 %s16, 2
      // Predicated region
      $region69: #{tpu_custom_call.1} parent=67 // pred_check
        %p12966 = pneg %p260
      $region70: #{tpu_custom_call.1} parent=67 // pred_check_branch
        %12968 = sbr.rel (%p12966) target = $region72
      $region71: #{tpu_custom_call.1} parent=67 // pred_region
        %p12969 = scmp.lt.s32.totalorder %s22, 1
        %s12970 = scalar_select %p12969, %s22, 1
        %s12971 = smul.addr %s12970, 32
        %s12972 = smul.addr %s12971, 8
        %s12973 = scalar_lea.vmem %s10, %s12972
      $region72: #{tpu_custom_call.1} parent=67 // pred_fallthru
        _
    $region68: #{tpu_custom_call.1} parent=5 // pred_fallthru
      _
  $region6: #{tpu_custom_call.1} parent=0 // loop_footer
    %s20 = sadd.s32 1, %s16
  $region7: #{tpu_custom_call.1} parent=0 // loop_footer_branch
    %15 = sbr.rel target = $region3
  $region8: #{tpu_custom_call.1} parent=0 // loop_exit
    _

</llo_original>
